<compile_context>
chip_gen: v5e
topology: v5e:2x2
jax: 0.10.0
libtpu: 0.0.40
codegen_flags: <defaults>
</compile_context>

<pallas_src>
import jax
import jax.numpy as jnp
from jax.experimental import pallas as pl
from jax.experimental.pallas import tpu as pltpu

# ------------------------- configuration (small, lane-aligned) ---------------
OBS_DIM = 128         # obs_space flat dim
HIDDEN = 128          # args.hidden_size (MLPBase hidden layer)
REC_HIDDEN = 128      # args.recurrent_hidden_size
REC_LAYERS = 1        # args.recurrent_hidden_layers
ACT_HIDDEN = 128      # args.act_hidden_size[0]
BATCH = 512           # N (rollout batch)
TILE_B = 256          # batch tile: 256 rows fills v6e/v7x MXU; fine on v5e too
VALUE_LANES = 128     # value head padded to a lane-dense 128-wide slab
LN_EPS = 1e-5         # nn.LayerNorm default eps

# packed small-parameter buffer row indices (each row is 128 lanes)
_R_LN0G, _R_LN0B, _R_B1, _R_LN1G, _R_LN1B = 0, 1, 2, 3, 4
_R_LNGG, _R_LNGB, _R_B2, _R_LN2G, _R_LN2B = 5, 6, 7, 8, 9
_R_BV, _R_BR, _R_BZ, _R_BIN, _R_BHN = 10, 11, 12, 13, 14
VEC_ROWS = 16         # padded to a sublane multiple of 8


# ------------------------------ Pallas kernel --------------------------------
def ppo_critic_kernel(
    obs_ref, h0_ref, masks_ref,          # batch-tiled data
    w1_ref, wg_ref, w2_ref, wv_ref,      # resident weight matrices
    vec_ref,                             # packed LN gammas/betas + biases (16,128)
    values_ref, hnew_ref,                # outputs (batch-tiled)
):
    vecs = vec_ref[...]

    def row(i):
        return vecs[i:i + 1, :]          # (1, 128), broadcasts over the tile

    def layernorm(x, g, b):
        mu = jnp.mean(x, axis=-1, keepdims=True)
        var = jnp.mean((x - mu) ** 2, axis=-1, keepdims=True)
        return (x - mu) * jax.lax.rsqrt(var + LN_EPS) * g + b

    # ---- MLPBase: LN -> Linear -> ReLU -> LN ----
    x = obs_ref[...]
    x = layernorm(x, row(_R_LN0G), row(_R_LN0B))
    x = jnp.dot(x, w1_ref[...], preferred_element_type=jnp.float32) + row(_R_B1)
    x = jnp.maximum(x, 0.0)                       # activation_id = 1 -> ReLU
    x = layernorm(x, row(_R_LN1G), row(_R_LN1B))

    # ---- GRULayer (single step, masks reset hidden state) ----
    h = h0_ref[...] * masks_ref[...]              # (TB, Hr) * (TB, 1) broadcast
    xh = jnp.concatenate([x, h], axis=-1)         # (TB, H + Hr)
    # one fused MXU push: gate blocks [r | z | i_n | h_n], each Hr=128 lanes
    g = jnp.dot(xh, wg_ref[...], preferred_element_type=jnp.float32)
    Hr = REC_HIDDEN
    r = jax.nn.sigmoid(g[:, 0 * Hr:1 * Hr] + row(_R_BR))
    z = jax.nn.sigmoid(g[:, 1 * Hr:2 * Hr] + row(_R_BZ))
    n = jnp.tanh(g[:, 2 * Hr:3 * Hr] + row(_R_BIN)
                 + r * (g[:, 3 * Hr:4 * Hr] + row(_R_BHN)))
    h_new = (1.0 - z) * n + z * h                 # PyTorch nn.GRU update rule
    hnew_ref[...] = h_new

    y = layernorm(h_new, row(_R_LNGG), row(_R_LNGB))   # GRULayer.norm

    # ---- act MLPLayer: Linear -> ReLU -> LN ----
    y = jnp.dot(y, w2_ref[...], preferred_element_type=jnp.float32) + row(_R_B2)
    y = jnp.maximum(y, 0.0)
    y = layernorm(y, row(_R_LN2G), row(_R_LN2B))

    # ---- value head: lane-dense 128-wide slab, real value in lane 0 ----
    values_ref[...] = (
        jnp.dot(y, wv_ref[...], preferred_element_type=jnp.float32) + row(_R_BV)
    )


# ------------------------------ JAX wrapper ----------------------------------
def _ppo_critic_forward(obs, rnn_states, masks, packed):
    N = obs.shape[0]
    assert N % TILE_B == 0, "batch must be a multiple of TILE_B"
    h0 = rnn_states[:, 0, :]                      # single recurrent layer

    def batch_spec(d):
        return pl.BlockSpec((TILE_B, d), lambda i: (i, 0))

    def resident_spec(arr):
        return pl.BlockSpec(arr.shape, lambda i: (0, 0))

    w1, wg, w2, wv, vecs = (
        packed["w1"], packed["w_gru"], packed["w2"], packed["wv"], packed["vecs"]
    )

    values_slab, h_new = pl.pallas_call(
        ppo_critic_kernel,
        grid=(N // TILE_B,),
        in_specs=[
            batch_spec(OBS_DIM),        # obs
            batch_spec(REC_HIDDEN),     # h0
            batch_spec(1),              # masks
            resident_spec(w1),
            resident_spec(wg),
            resident_spec(w2),
            resident_spec(wv),
            resident_spec(vecs),
        ],
        out_specs=(
            batch_spec(VALUE_LANES),    # values slab
            batch_spec(REC_HIDDEN),     # new hidden state
        ),
        out_shape=(
            jax.ShapeDtypeStruct((N, VALUE_LANES), jnp.float32),
            jax.ShapeDtypeStruct((N, REC_HIDDEN), jnp.float32),
        ),
        input_output_aliases={1: 1},    # h0 -> h_new (in-place recurrent state)
        compiler_params=pltpu.CompilerParams(
            dimension_semantics=("parallel",),   # v7x: shard batch over 2 TCs
        ),
    )(obs, h0, masks, w1, wg, w2, wv, vecs)

    values = values_slab[:, :1]
    new_rnn_states = h_new.reshape(N, REC_LAYERS, REC_HIDDEN)
    return values, new_rnn_states


ppo_critic_forward = jax.jit(_ppo_critic_forward)
# TODO(synk): for full rollout throughput, fuse T GRU timesteps per pallas_call
# (lax.fori_loop over time with per-step masks) instead of one call per step.


# --------------------------- deterministic params ----------------------------
def make_raw_params(key):
    ks = jax.random.split(key, 20)

    def mat(k, fi, fo, gain=1.0):
        return gain * jax.random.normal(k, (fi, fo), jnp.float32) / jnp.sqrt(fi)

    def vec(k, d, scale=0.05):
        return scale * jax.random.normal(k, (d,), jnp.float32)

    return dict(
        ln0_g=1.0 + vec(ks[0], OBS_DIM), ln0_b=vec(ks[1], OBS_DIM),
        w1=mat(ks[2], OBS_DIM, HIDDEN), b1=vec(ks[3], HIDDEN),
        ln1_g=1.0 + vec(ks[4], HIDDEN), ln1_b=vec(ks[5], HIDDEN),
        w_ih=mat(ks[6], HIDDEN, 3 * REC_HIDDEN), b_ih=vec(ks[7], 3 * REC_HIDDEN),
        w_hh=mat(ks[8], REC_HIDDEN, 3 * REC_HIDDEN), b_hh=vec(ks[9], 3 * REC_HIDDEN),
        lng_g=1.0 + vec(ks[10], REC_HIDDEN), lng_b=vec(ks[11], REC_HIDDEN),
        w2=mat(ks[12], REC_HIDDEN, ACT_HIDDEN), b2=vec(ks[13], ACT_HIDDEN),
        ln2_g=1.0 + vec(ks[14], ACT_HIDDEN), ln2_b=vec(ks[15], ACT_HIDDEN),
        wv=mat(ks[16], ACT_HIDDEN, 1, gain=0.01), bv=vec(ks[17], 1),
    )


def pack_params(raw):
    H, Hr = HIDDEN, REC_HIDDEN
    assert OBS_DIM == HIDDEN == REC_HIDDEN == ACT_HIDDEN == 128  # lane-aligned config

    # fused GRU weight: [x, h] @ W -> [r | z | i_n | h_n], each Hr lanes wide.
    wg = jnp.zeros((H + Hr, 4 * Hr), jnp.float32)
    wg = wg.at[:H, 0 * Hr:1 * Hr].set(raw["w_ih"][:, 0 * Hr:1 * Hr])
    wg = wg.at[H:, 0 * Hr:1 * Hr].set(raw["w_hh"][:, 0 * Hr:1 * Hr])
    wg = wg.at[:H, 1 * Hr:2 * Hr].set(raw["w_ih"][:, 1 * Hr:2 * Hr])
    wg = wg.at[H:, 1 * Hr:2 * Hr].set(raw["w_hh"][:, 1 * Hr:2 * Hr])
    wg = wg.at[:H, 2 * Hr:3 * Hr].set(raw["w_ih"][:, 2 * Hr:3 * Hr])   # i_n part
    wg = wg.at[H:, 3 * Hr:4 * Hr].set(raw["w_hh"][:, 2 * Hr:3 * Hr])   # h_n part

    # value head padded to 128 output lanes (value in lane 0).
    wv = jnp.zeros((ACT_HIDDEN, VALUE_LANES), jnp.float32).at[:, 0:1].set(raw["wv"])
    bv = jnp.zeros((VALUE_LANES,), jnp.float32).at[0].set(raw["bv"][0])

    # GRU biases: r/z biases combine; n-gate biases must stay separate.
    b_ih, b_hh = raw["b_ih"], raw["b_hh"]
    b_r = b_ih[0 * Hr:1 * Hr] + b_hh[0 * Hr:1 * Hr]
    b_z = b_ih[1 * Hr:2 * Hr] + b_hh[1 * Hr:2 * Hr]
    b_in = b_ih[2 * Hr:3 * Hr]
    b_hn = b_hh[2 * Hr:3 * Hr]

    rows = [
        raw["ln0_g"], raw["ln0_b"], raw["b1"], raw["ln1_g"], raw["ln1_b"],
        raw["lng_g"], raw["lng_b"], raw["b2"], raw["ln2_g"], raw["ln2_b"],
        bv, b_r, b_z, b_in, b_hn, jnp.zeros((128,), jnp.float32),
    ]
    vecs = jnp.stack(rows, axis=0)            # (16, 128)
    assert vecs.shape == (VEC_ROWS, 128)

    return dict(w1=raw["w1"], w_gru=wg, w2=raw["w2"], wv=wv, vecs=vecs)


# ------------------------------ pure-JAX reference ---------------------------
def ppo_critic_reference(obs, rnn_states, masks, raw):
    def ln(x, g, b):
        mu = x.mean(-1, keepdims=True)
        var = ((x - mu) ** 2).mean(-1, keepdims=True)
        return (x - mu) * jax.lax.rsqrt(var + LN_EPS) * g + b

    x = ln(obs, raw["ln0_g"], raw["ln0_b"])
    x = jnp.maximum(x @ raw["w1"] + raw["b1"], 0.0)
    x = ln(x, raw["ln1_g"], raw["ln1_b"])

    h = rnn_states[:, 0, :] * masks
    gi = x @ raw["w_ih"] + raw["b_ih"]
    gh = h @ raw["w_hh"] + raw["b_hh"]
    Hr = REC_HIDDEN
    r = jax.nn.sigmoid(gi[:, :Hr] + gh[:, :Hr])
    z = jax.nn.sigmoid(gi[:, Hr:2 * Hr] + gh[:, Hr:2 * Hr])
    n = jnp.tanh(gi[:, 2 * Hr:] + r * gh[:, 2 * Hr:])
    h_new = (1.0 - z) * n + z * h

    y = ln(h_new, raw["lng_g"], raw["lng_b"])
    y = jnp.maximum(y @ raw["w2"] + raw["b2"], 0.0)
    y = ln(y, raw["ln2_g"], raw["ln2_b"])
    values = y @ raw["wv"] + raw["bv"]
    return values, h_new.reshape(-1, REC_LAYERS, REC_HIDDEN)


if __name__ == "__main__":
    key = jax.random.PRNGKey(0)
    k_obs, k_h, k_m, k_p = jax.random.split(key, 4)

    obs = jax.random.normal(k_obs, (BATCH, OBS_DIM), jnp.float32)
    rnn_states = jax.random.normal(k_h, (BATCH, REC_LAYERS, REC_HIDDEN), jnp.float32)
    masks = (jax.random.uniform(k_m, (BATCH, 1)) > 0.2).astype(jnp.float32)

    raw = make_raw_params(k_p)
    packed = pack_params(raw)

    values, new_rnn_states = ppo_critic_forward(obs, rnn_states, masks, packed)
    jax.block_until_ready((values, new_rnn_states))

    assert values.shape == (BATCH, 1)
    assert new_rnn_states.shape == (BATCH, REC_LAYERS, REC_HIDDEN)

    # correctness check against the pure-JAX (PyTorch-equivalent) reference
    v_ref, h_ref = ppo_critic_reference(obs, rnn_states, masks, raw)
    v_err = float(jnp.max(jnp.abs(values - v_ref)))
    h_err = float(jnp.max(jnp.abs(new_rnn_states - h_ref)))
    assert v_err < 5e-3 and h_err < 5e-3, (v_err, h_err)

    print("KERNEL_OK")
</pallas_src>

<mosaic_0001>
module attributes {stable_mosaic.version = 11 : i64} {
  func.func @ppo_critic_kernel(%arg0: i32, %arg1: memref<256x128xf32, #tpu.memory_space<vmem>>, %arg2: memref<256x128xf32, #tpu.memory_space<vmem>>, %arg3: memref<256x1xf32, #tpu.memory_space<vmem>>, %arg4: memref<128x128xf32, #tpu.memory_space<vmem>>, %arg5: memref<256x512xf32, #tpu.memory_space<vmem>>, %arg6: memref<128x128xf32, #tpu.memory_space<vmem>>, %arg7: memref<128x128xf32, #tpu.memory_space<vmem>>, %arg8: memref<16x128xf32, #tpu.memory_space<vmem>>, %arg9: memref<256x128xf32, #tpu.memory_space<vmem>>, %arg10: memref<256x128xf32, #tpu.memory_space<vmem>>) attributes {dimension_semantics = [#tpu.dimension_semantics<parallel>], iteration_bounds = array<i64: 2>, scalar_prefetch = 0 : i64, scratch_operands = 0 : i64, tpu.core_type = #tpu.core_type<tc>, window_params = [{transform_indices = @transform_0, window_bounds = array<i64: 256, 128>}, {transform_indices = @transform_1, window_bounds = array<i64: 256, 128>}, {transform_indices = @transform_2, window_bounds = array<i64: 256, 1>}, {pipeline_mode = #tpu.pipeline_mode<synchronous>, transform_indices = @transform_3, window_bounds = array<i64: 128, 128>}, {pipeline_mode = #tpu.pipeline_mode<synchronous>, transform_indices = @transform_4, window_bounds = array<i64: 256, 512>}, {pipeline_mode = #tpu.pipeline_mode<synchronous>, transform_indices = @transform_5, window_bounds = array<i64: 128, 128>}, {pipeline_mode = #tpu.pipeline_mode<synchronous>, transform_indices = @transform_6, window_bounds = array<i64: 128, 128>}, {pipeline_mode = #tpu.pipeline_mode<synchronous>, transform_indices = @transform_7, window_bounds = array<i64: 16, 128>}, {transform_indices = @transform_8, window_bounds = array<i64: 256, 128>}, {transform_indices = @transform_9, window_bounds = array<i64: 256, 128>}]} {
    %c0 = arith.constant 0 : index
    %c0_0 = arith.constant 0 : index
    %0 = vector.load %arg8[%c0, %c0_0] : memref<16x128xf32, #tpu.memory_space<vmem>>, vector<16x128xf32>
    %c0_1 = arith.constant 0 : index
    %c0_2 = arith.constant 0 : index
    %1 = vector.load %arg1[%c0_1, %c0_2] : memref<256x128xf32, #tpu.memory_space<vmem>>, vector<256x128xf32>
    %2 = vector.extract_strided_slice %0 {offsets = [0, 0], sizes = [1, 128], strides = [1, 1]} : vector<16x128xf32> to vector<1x128xf32>
    %3 = vector.extract_strided_slice %0 {offsets = [1, 0], sizes = [1, 128], strides = [1, 1]} : vector<16x128xf32> to vector<1x128xf32>
    %cst = arith.constant dense<0.000000e+00> : vector<256xf32>
    %4 = vector.multi_reduction <add>, %1, %cst [1] : vector<256x128xf32> to vector<256xf32>
    %5 = vector.shape_cast %4 : vector<256xf32> to vector<256x1xf32>
    %cst_3 = arith.constant 1.280000e+02 : f32
    %6 = vector.broadcast %cst_3 : f32 to vector<256x1xf32>
    %7 = arith.divf %5, %6 : vector<256x1xf32>
    %8 = vector.broadcast %7 : vector<256x1xf32> to vector<256x128xf32>
    %9 = arith.subf %1, %8 : vector<256x128xf32>
    %10 = arith.mulf %9, %9 : vector<256x128xf32>
    %cst_4 = arith.constant dense<0.000000e+00> : vector<256xf32>
    %11 = vector.multi_reduction <add>, %10, %cst_4 [1] : vector<256x128xf32> to vector<256xf32>
    %12 = vector.shape_cast %11 : vector<256xf32> to vector<256x1xf32>
    %cst_5 = arith.constant 1.280000e+02 : f32
    %13 = vector.broadcast %cst_5 : f32 to vector<256x1xf32>
    %14 = arith.divf %12, %13 : vector<256x1xf32>
    %15 = vector.broadcast %7 : vector<256x1xf32> to vector<256x128xf32>
    %16 = arith.subf %1, %15 : vector<256x128xf32>
    %cst_6 = arith.constant 9.99999974E-6 : f32
    %17 = vector.broadcast %cst_6 : f32 to vector<256x1xf32>
    %18 = arith.addf %14, %17 : vector<256x1xf32>
    %19 = math.rsqrt %18 : vector<256x1xf32>
    %20 = vector.broadcast %19 : vector<256x1xf32> to vector<256x128xf32>
    %21 = arith.mulf %16, %20 : vector<256x128xf32>
    %22 = vector.broadcast %2 : vector<1x128xf32> to vector<256x128xf32>
    %23 = arith.mulf %21, %22 : vector<256x128xf32>
    %24 = vector.broadcast %3 : vector<1x128xf32> to vector<256x128xf32>
    %25 = arith.addf %23, %24 : vector<256x128xf32>
    %c0_7 = arith.constant 0 : index
    %c0_8 = arith.constant 0 : index
    %26 = vector.load %arg4[%c0_7, %c0_8] : memref<128x128xf32, #tpu.memory_space<vmem>>, vector<128x128xf32>
    %cst_9 = arith.constant dense<0.000000e+00> : vector<256x128xf32>
    %27 = tpu.matmul %25, %26, %cst_9 {dimension_numbers = #tpu.dot_dimension_numbers<[1], [0], [0], [1], [0, 0, 1, 1], [], []>} : vector<256x128xf32>, vector<128x128xf32>, vector<256x128xf32> -> vector<256x128xf32>
    %28 = vector.extract_strided_slice %0 {offsets = [2, 0], sizes = [1, 128], strides = [1, 1]} : vector<16x128xf32> to vector<1x128xf32>
    %29 = vector.broadcast %28 : vector<1x128xf32> to vector<256x128xf32>
    %30 = arith.addf %27, %29 : vector<256x128xf32>
    %cst_10 = arith.constant 0.000000e+00 : f32
    %31 = vector.broadcast %cst_10 : f32 to vector<256x128xf32>
    %32 = arith.maximumf %30, %31 : vector<256x128xf32>
    %33 = vector.extract_strided_slice %0 {offsets = [3, 0], sizes = [1, 128], strides = [1, 1]} : vector<16x128xf32> to vector<1x128xf32>
    %34 = vector.extract_strided_slice %0 {offsets = [4, 0], sizes = [1, 128], strides = [1, 1]} : vector<16x128xf32> to vector<1x128xf32>
    %cst_11 = arith.constant dense<0.000000e+00> : vector<256xf32>
    %35 = vector.multi_reduction <add>, %32, %cst_11 [1] : vector<256x128xf32> to vector<256xf32>
    %36 = vector.shape_cast %35 : vector<256xf32> to vector<256x1xf32>
    %cst_12 = arith.constant 1.280000e+02 : f32
    %37 = vector.broadcast %cst_12 : f32 to vector<256x1xf32>
    %38 = arith.divf %36, %37 : vector<256x1xf32>
    %39 = vector.broadcast %38 : vector<256x1xf32> to vector<256x128xf32>
    %40 = arith.subf %32, %39 : vector<256x128xf32>
    %41 = arith.mulf %40, %40 : vector<256x128xf32>
    %cst_13 = arith.constant dense<0.000000e+00> : vector<256xf32>
    %42 = vector.multi_reduction <add>, %41, %cst_13 [1] : vector<256x128xf32> to vector<256xf32>
    %43 = vector.shape_cast %42 : vector<256xf32> to vector<256x1xf32>
    %cst_14 = arith.constant 1.280000e+02 : f32
    %44 = vector.broadcast %cst_14 : f32 to vector<256x1xf32>
    %45 = arith.divf %43, %44 : vector<256x1xf32>
    %46 = vector.broadcast %38 : vector<256x1xf32> to vector<256x128xf32>
    %47 = arith.subf %32, %46 : vector<256x128xf32>
    %cst_15 = arith.constant 9.99999974E-6 : f32
    %48 = vector.broadcast %cst_15 : f32 to vector<256x1xf32>
    %49 = arith.addf %45, %48 : vector<256x1xf32>
    %50 = math.rsqrt %49 : vector<256x1xf32>
    %51 = vector.broadcast %50 : vector<256x1xf32> to vector<256x128xf32>
    %52 = arith.mulf %47, %51 : vector<256x128xf32>
    %53 = vector.broadcast %33 : vector<1x128xf32> to vector<256x128xf32>
    %54 = arith.mulf %52, %53 : vector<256x128xf32>
    %55 = vector.broadcast %34 : vector<1x128xf32> to vector<256x128xf32>
    %56 = arith.addf %54, %55 : vector<256x128xf32>
    %c0_16 = arith.constant 0 : index
    %c0_17 = arith.constant 0 : index
    %57 = vector.load %arg2[%c0_16, %c0_17] : memref<256x128xf32, #tpu.memory_space<vmem>>, vector<256x128xf32>
    %c0_18 = arith.constant 0 : index
    %c0_19 = arith.constant 0 : index
    %58 = vector.load %arg3[%c0_18, %c0_19] : memref<256x1xf32, #tpu.memory_space<vmem>>, vector<256x1xf32>
    %59 = vector.broadcast %58 : vector<256x1xf32> to vector<256x128xf32>
    %60 = arith.mulf %57, %59 : vector<256x128xf32>
    %61 = tpu.concatenate %56, %60 in 1 : vector<256x128xf32>, vector<256x128xf32> -> vector<256x256xf32>
    %c0_20 = arith.constant 0 : index
    %c0_21 = arith.constant 0 : index
    %62 = vector.load %arg5[%c0_20, %c0_21] : memref<256x512xf32, #tpu.memory_space<vmem>>, vector<256x512xf32>
    %cst_22 = arith.constant dense<0.000000e+00> : vector<256x512xf32>
    %63 = tpu.matmul %61, %62, %cst_22 {dimension_numbers = #tpu.dot_dimension_numbers<[1], [0], [0], [1], [0, 0, 1, 1], [], []>} : vector<256x256xf32>, vector<256x512xf32>, vector<256x512xf32> -> vector<256x512xf32>
    %64 = vector.extract_strided_slice %63 {offsets = [0, 0], sizes = [256, 128], strides = [1, 1]} : vector<256x512xf32> to vector<256x128xf32>
    %65 = vector.extract_strided_slice %0 {offsets = [11, 0], sizes = [1, 128], strides = [1, 1]} : vector<16x128xf32> to vector<1x128xf32>
    %66 = vector.broadcast %65 : vector<1x128xf32> to vector<256x128xf32>
    %67 = arith.addf %64, %66 : vector<256x128xf32>
    %68 = arith.negf %67 : vector<256x128xf32>
    %69 = math.exp %68 : vector<256x128xf32>
    %cst_23 = arith.constant 1.000000e+00 : f32
    %70 = vector.broadcast %cst_23 : f32 to vector<256x128xf32>
    %71 = arith.addf %70, %69 : vector<256x128xf32>
    %72 = arith.divf %70, %71 : vector<256x128xf32>
    %73 = vector.extract_strided_slice %63 {offsets = [0, 128], sizes = [256, 128], strides = [1, 1]} : vector<256x512xf32> to vector<256x128xf32>
    %74 = vector.extract_strided_slice %0 {offsets = [12, 0], sizes = [1, 128], strides = [1, 1]} : vector<16x128xf32> to vector<1x128xf32>
    %75 = vector.broadcast %74 : vector<1x128xf32> to vector<256x128xf32>
    %76 = arith.addf %73, %75 : vector<256x128xf32>
    %77 = arith.negf %76 : vector<256x128xf32>
    %78 = math.exp %77 : vector<256x128xf32>
    %cst_24 = arith.constant 1.000000e+00 : f32
    %79 = vector.broadcast %cst_24 : f32 to vector<256x128xf32>
    %80 = arith.addf %79, %78 : vector<256x128xf32>
    %81 = arith.divf %79, %80 : vector<256x128xf32>
    %82 = vector.extract_strided_slice %63 {offsets = [0, 256], sizes = [256, 128], strides = [1, 1]} : vector<256x512xf32> to vector<256x128xf32>
    %83 = vector.extract_strided_slice %0 {offsets = [13, 0], sizes = [1, 128], strides = [1, 1]} : vector<16x128xf32> to vector<1x128xf32>
    %84 = vector.broadcast %83 : vector<1x128xf32> to vector<256x128xf32>
    %85 = arith.addf %82, %84 : vector<256x128xf32>
    %86 = vector.extract_strided_slice %63 {offsets = [0, 384], sizes = [256, 128], strides = [1, 1]} : vector<256x512xf32> to vector<256x128xf32>
    %87 = vector.extract_strided_slice %0 {offsets = [14, 0], sizes = [1, 128], strides = [1, 1]} : vector<16x128xf32> to vector<1x128xf32>
    %88 = vector.broadcast %87 : vector<1x128xf32> to vector<256x128xf32>
    %89 = arith.addf %86, %88 : vector<256x128xf32>
    %90 = arith.mulf %72, %89 : vector<256x128xf32>
    %91 = arith.addf %85, %90 : vector<256x128xf32>
    %92 = math.tanh %91 : vector<256x128xf32>
    %cst_25 = arith.constant 1.000000e+00 : f32
    %93 = vector.broadcast %cst_25 : f32 to vector<256x128xf32>
    %94 = arith.subf %93, %81 : vector<256x128xf32>
    %95 = arith.mulf %94, %92 : vector<256x128xf32>
    %96 = arith.mulf %81, %60 : vector<256x128xf32>
    %97 = arith.addf %95, %96 : vector<256x128xf32>
    %c0_26 = arith.constant 0 : index
    %c0_27 = arith.constant 0 : index
    %98 = vector.load %arg10[%c0_26, %c0_27] : memref<256x128xf32, #tpu.memory_space<vmem>>, vector<256x128xf32>
    tpu.vector_store %arg10[%c0_26, %c0_27], %97 {strides = array<i32>} : memref<256x128xf32, #tpu.memory_space<vmem>>, vector<256x128xf32>,
    %99 = vector.extract_strided_slice %0 {offsets = [5, 0], sizes = [1, 128], strides = [1, 1]} : vector<16x128xf32> to vector<1x128xf32>
    %100 = vector.extract_strided_slice %0 {offsets = [6, 0], sizes = [1, 128], strides = [1, 1]} : vector<16x128xf32> to vector<1x128xf32>
    %cst_28 = arith.constant dense<0.000000e+00> : vector<256xf32>
    %101 = vector.multi_reduction <add>, %97, %cst_28 [1] : vector<256x128xf32> to vector<256xf32>
    %102 = vector.shape_cast %101 : vector<256xf32> to vector<256x1xf32>
    %cst_29 = arith.constant 1.280000e+02 : f32
    %103 = vector.broadcast %cst_29 : f32 to vector<256x1xf32>
    %104 = arith.divf %102, %103 : vector<256x1xf32>
    %105 = vector.broadcast %104 : vector<256x1xf32> to vector<256x128xf32>
    %106 = arith.subf %97, %105 : vector<256x128xf32>
    %107 = arith.mulf %106, %106 : vector<256x128xf32>
    %cst_30 = arith.constant dense<0.000000e+00> : vector<256xf32>
    %108 = vector.multi_reduction <add>, %107, %cst_30 [1] : vector<256x128xf32> to vector<256xf32>
    %109 = vector.shape_cast %108 : vector<256xf32> to vector<256x1xf32>
    %cst_31 = arith.constant 1.280000e+02 : f32
    %110 = vector.broadcast %cst_31 : f32 to vector<256x1xf32>
    %111 = arith.divf %109, %110 : vector<256x1xf32>
    %112 = vector.broadcast %104 : vector<256x1xf32> to vector<256x128xf32>
    %113 = arith.subf %97, %112 : vector<256x128xf32>
    %cst_32 = arith.constant 9.99999974E-6 : f32
    %114 = vector.broadcast %cst_32 : f32 to vector<256x1xf32>
    %115 = arith.addf %111, %114 : vector<256x1xf32>
    %116 = math.rsqrt %115 : vector<256x1xf32>
    %117 = vector.broadcast %116 : vector<256x1xf32> to vector<256x128xf32>
    %118 = arith.mulf %113, %117 : vector<256x128xf32>
    %119 = vector.broadcast %99 : vector<1x128xf32> to vector<256x128xf32>
    %120 = arith.mulf %118, %119 : vector<256x128xf32>
    %121 = vector.broadcast %100 : vector<1x128xf32> to vector<256x128xf32>
    %122 = arith.addf %120, %121 : vector<256x128xf32>
    %c0_33 = arith.constant 0 : index
    %c0_34 = arith.constant 0 : index
    %123 = vector.load %arg6[%c0_33, %c0_34] : memref<128x128xf32, #tpu.memory_space<vmem>>, vector<128x128xf32>
    %cst_35 = arith.constant dense<0.000000e+00> : vector<256x128xf32>
    %124 = tpu.matmul %122, %123, %cst_35 {dimension_numbers = #tpu.dot_dimension_numbers<[1], [0], [0], [1], [0, 0, 1, 1], [], []>} : vector<256x128xf32>, vector<128x128xf32>, vector<256x128xf32> -> vector<256x128xf32>
    %125 = vector.extract_strided_slice %0 {offsets = [7, 0], sizes = [1, 128], strides = [1, 1]} : vector<16x128xf32> to vector<1x128xf32>
    %126 = vector.broadcast %125 : vector<1x128xf32> to vector<256x128xf32>
    %127 = arith.addf %124, %126 : vector<256x128xf32>
    %cst_36 = arith.constant 0.000000e+00 : f32
    %128 = vector.broadcast %cst_36 : f32 to vector<256x128xf32>
    %129 = arith.maximumf %127, %128 : vector<256x128xf32>
    %130 = vector.extract_strided_slice %0 {offsets = [8, 0], sizes = [1, 128], strides = [1, 1]} : vector<16x128xf32> to vector<1x128xf32>
    %131 = vector.extract_strided_slice %0 {offsets = [9, 0], sizes = [1, 128], strides = [1, 1]} : vector<16x128xf32> to vector<1x128xf32>
    %cst_37 = arith.constant dense<0.000000e+00> : vector<256xf32>
    %132 = vector.multi_reduction <add>, %129, %cst_37 [1] : vector<256x128xf32> to vector<256xf32>
    %133 = vector.shape_cast %132 : vector<256xf32> to vector<256x1xf32>
    %cst_38 = arith.constant 1.280000e+02 : f32
    %134 = vector.broadcast %cst_38 : f32 to vector<256x1xf32>
    %135 = arith.divf %133, %134 : vector<256x1xf32>
    %136 = vector.broadcast %135 : vector<256x1xf32> to vector<256x128xf32>
    %137 = arith.subf %129, %136 : vector<256x128xf32>
    %138 = arith.mulf %137, %137 : vector<256x128xf32>
    %cst_39 = arith.constant dense<0.000000e+00> : vector<256xf32>
    %139 = vector.multi_reduction <add>, %138, %cst_39 [1] : vector<256x128xf32> to vector<256xf32>
    %140 = vector.shape_cast %139 : vector<256xf32> to vector<256x1xf32>
    %cst_40 = arith.constant 1.280000e+02 : f32
    %141 = vector.broadcast %cst_40 : f32 to vector<256x1xf32>
    %142 = arith.divf %140, %141 : vector<256x1xf32>
    %143 = vector.broadcast %135 : vector<256x1xf32> to vector<256x128xf32>
    %144 = arith.subf %129, %143 : vector<256x128xf32>
    %cst_41 = arith.constant 9.99999974E-6 : f32
    %145 = vector.broadcast %cst_41 : f32 to vector<256x1xf32>
    %146 = arith.addf %142, %145 : vector<256x1xf32>
    %147 = math.rsqrt %146 : vector<256x1xf32>
    %148 = vector.broadcast %147 : vector<256x1xf32> to vector<256x128xf32>
    %149 = arith.mulf %144, %148 : vector<256x128xf32>
    %150 = vector.broadcast %130 : vector<1x128xf32> to vector<256x128xf32>
    %151 = arith.mulf %149, %150 : vector<256x128xf32>
    %152 = vector.broadcast %131 : vector<1x128xf32> to vector<256x128xf32>
    %153 = arith.addf %151, %152 : vector<256x128xf32>
    %c0_42 = arith.constant 0 : index
    %c0_43 = arith.constant 0 : index
    %154 = vector.load %arg7[%c0_42, %c0_43] : memref<128x128xf32, #tpu.memory_space<vmem>>, vector<128x128xf32>
    %cst_44 = arith.constant dense<0.000000e+00> : vector<256x128xf32>
    %155 = tpu.matmul %153, %154, %cst_44 {dimension_numbers = #tpu.dot_dimension_numbers<[1], [0], [0], [1], [0, 0, 1, 1], [], []>} : vector<256x128xf32>, vector<128x128xf32>, vector<256x128xf32> -> vector<256x128xf32>
    %156 = vector.extract_strided_slice %0 {offsets = [10, 0], sizes = [1, 128], strides = [1, 1]} : vector<16x128xf32> to vector<1x128xf32>
    %157 = vector.broadcast %156 : vector<1x128xf32> to vector<256x128xf32>
    %158 = arith.addf %155, %157 : vector<256x128xf32>
    %c0_45 = arith.constant 0 : index
    %c0_46 = arith.constant 0 : index
    %159 = vector.load %arg9[%c0_45, %c0_46] : memref<256x128xf32, #tpu.memory_space<vmem>>, vector<256x128xf32>
    tpu.vector_store %arg9[%c0_45, %c0_46], %158 {strides = array<i32>} : memref<256x128xf32, #tpu.memory_space<vmem>>, vector<256x128xf32>,
    return
  }
  func.func @transform_0(%arg0: i32) -> (i32, i32) {
    %c0_i32 = arith.constant 0 : i32
    %c0_i32_0 = arith.constant 0 : i32
    return %arg0, %c0_i32 : i32, i32
  }
  func.func @transform_1(%arg0: i32) -> (i32, i32) {
    %c0_i32 = arith.constant 0 : i32
    %c0_i32_0 = arith.constant 0 : i32
    return %arg0, %c0_i32 : i32, i32
  }
  func.func @transform_2(%arg0: i32) -> (i32, i32) {
    %c0_i32 = arith.constant 0 : i32
    %c0_i32_0 = arith.constant 0 : i32
    return %arg0, %c0_i32 : i32, i32
  }
  func.func @transform_3(%arg0: i32) -> (i32, i32) {
    %c0_i32 = arith.constant 0 : i32
    %c0_i32_0 = arith.constant 0 : i32
    %c0_i32_1 = arith.constant 0 : i32
    return %c0_i32, %c0_i32_0 : i32, i32
  }
  func.func @transform_4(%arg0: i32) -> (i32, i32) {
    %c0_i32 = arith.constant 0 : i32
    %c0_i32_0 = arith.constant 0 : i32
    %c0_i32_1 = arith.constant 0 : i32
    return %c0_i32, %c0_i32_0 : i32, i32
  }
  func.func @transform_5(%arg0: i32) -> (i32, i32) {
    %c0_i32 = arith.constant 0 : i32
    %c0_i32_0 = arith.constant 0 : i32
    %c0_i32_1 = arith.constant 0 : i32
    return %c0_i32, %c0_i32_0 : i32, i32
  }
  func.func @transform_6(%arg0: i32) -> (i32, i32) {
    %c0_i32 = arith.constant 0 : i32
    %c0_i32_0 = arith.constant 0 : i32
    %c0_i32_1 = arith.constant 0 : i32
    return %c0_i32, %c0_i32_0 : i32, i32
  }
  func.func @transform_7(%arg0: i32) -> (i32, i32) {
    %c0_i32 = arith.constant 0 : i32
    %c0_i32_0 = arith.constant 0 : i32
    %c0_i32_1 = arith.constant 0 : i32
    return %c0_i32, %c0_i32_0 : i32, i32
  }
  func.func @transform_8(%arg0: i32) -> (i32, i32) {
    %c0_i32 = arith.constant 0 : i32
    %c0_i32_0 = arith.constant 0 : i32
    return %arg0, %c0_i32 : i32, i32
  }
  func.func @transform_9(%arg0: i32) -> (i32, i32) {
    %c0_i32 = arith.constant 0 : i32
    %c0_i32_0 = arith.constant 0 : i32
    return %arg0, %c0_i32 : i32, i32
  }
}

</mosaic_0001>

<llo_original>
// kernel: _ppo_critic_forward.1
$region0: #{_ppo_critic_forward.1}
  #allocation0 [shape = 'u32[]', space=smem, size = 0x4, offset = 0x4, fixed_abs, tag = 'smem constant byte address 0x4 - core index']
  #allocation1 [shape = 'u32[72,128]{1,0:T(1,128)}', space=vmem, size = 0x9000, scoped, tag = 'internal scratch']
  %s0 = inlined_call_operand.hbm [shape: f32[512,128], index: 0, kind: input, shape index: {}]
  %s1 = inlined_call_operand.vmem [shape: f32[512,128], index: 1, kind: input, shape index: {}, may-alias: {1,9}]
  %s2 = inlined_call_operand.vmem [shape: f32[512,1], index: 2, kind: input, shape index: {}]
  %s3 = inlined_call_operand.hbm [shape: f32[128,128], index: 3, kind: input, shape index: {}]
  %s4 = inlined_call_operand.vmem [shape: f32[256,512], index: 4, kind: input, shape index: {}]
  %s5 = inlined_call_operand.hbm [shape: f32[128,128], index: 5, kind: input, shape index: {}]
  %s6 = inlined_call_operand.hbm [shape: f32[128,128], index: 6, kind: input, shape index: {}]
  %s7 = inlined_call_operand.hbm [shape: f32[16,128], index: 7, kind: input, shape index: {}]
  %s8 = inlined_call_operand.vmem [shape: f32[512,128], index: 8, kind: output, shape index: {0}]
  %s9 = inlined_call_operand.vmem [shape: f32[512,128], index: 9, kind: output, shape index: {1}, may-alias: {1,9}]
  %10 = xla_tuple %s8, %s9
  %s11 = sld [smem:[#allocation0]]
  $region93: #{_ppo_critic_forward.1} parent=0
    _
  %s13 = ssub.s32 1, %s11
  %s14 = scalar_select 0, %s13, %s11
  $region1: #{_ppo_critic_forward.1} parent=0
    #allocation2 [shape = 'u8[262144]{0}', space=vmem, size = 0x40000, scoped, tag = 'input window, operand 0']
    #allocation3 [shape = 's32[2]{0}', space=sflag, size = 0x8, scoped, tag = 'scoped memory for _ppo_critic_forward.1']
    #allocation4 [shape = 'u8[65536]{0}', space=vmem, size = 0x10000, scoped, tag = 'input window, operand 3, single buffered']
    #allocation5 [shape = 's32[1]{0}', space=sflag, size = 0x4, scoped, tag = 'scoped memory for _ppo_critic_forward.1']
    #allocation6 [shape = 'u8[65536]{0}', space=vmem, size = 0x10000, scoped, tag = 'input window, operand 5, single buffered']
    #allocation7 [shape = 'u8[65536]{0}', space=vmem, size = 0x10000, scoped, tag = 'input window, operand 6, single buffered']
    #allocation8 [shape = 's32[1]{0}', space=sflag, size = 0x4, scoped, tag = 'scoped memory for _ppo_critic_forward.1']
    #allocation9 [shape = 'u8[8192]{0}', space=vmem, size = 0x2000, scoped, tag = 'input window, operand 7, single buffered']
    %15 = vsyncpa [#allocation3], 0
    %s16 = scalar_lea.sflag [#allocation3], 1
    %17 = vsyncpa %s16, 0
    %18 = vsyncpa [#allocation5], 0
    %19 = vsyncpa [#allocation8], 0
    loop: start=0, step=1, limit=4
    $region2: #{_ppo_critic_forward.1} parent=1 // loop_pre_header
      _
    $region3: #{_ppo_critic_forward.1} parent=1 // loop_header
      %s21 = sphi 0, %s25
      %p22 = scmp.ge.s32.totalorder %s21, 4
      %s31 = sphi 0, %s33
      %s34 = sphi 0, %s31
      %s35 = sphi 0, %s34
      %s51 = sphi 0, %s35
      %s57 = sphi 0, %s59
      %s60 = sphi 0, %s57
      %s61 = sphi 0, %s60
      %s77 = sphi 0, %s61
      %s83 = sphi 0, %s85
      %s86 = sphi 0, %s83
      %s87 = sphi 0, %s86
      %s103 = sphi 0, %s87
      %s107 = sphi 0, %s107
      %s109 = sphi 0, %s107
      %s110 = sphi 0, %s109
      %s124 = sphi 0, %s110
      %s128 = sphi 0, %s128
      %s130 = sphi 0, %s128
      %s131 = sphi 0, %s130
      %s145 = sphi 0, %s131
      %s149 = sphi 0, %s149
      %s151 = sphi 0, %s149
      %s152 = sphi 0, %s151
      %s166 = sphi 0, %s152
      %s170 = sphi 0, %s170
      %s172 = sphi 0, %s170
      %s173 = sphi 0, %s172
      %s187 = sphi 0, %s173
      %s191 = sphi 0, %s191
      %s193 = sphi 0, %s191
      %s194 = sphi 0, %s193
      %s208 = sphi 0, %s194
      %s214 = sphi 0, %s216
      %s217 = sphi 0, %s214
      %s218 = sphi 0, %s217
      %s234 = sphi 0, %s218
      %s240 = sphi 0, %s242
      %s243 = sphi 0, %s240
      %s244 = sphi 0, %s243
      %s260 = sphi 0, %s244
    $region4: #{_ppo_critic_forward.1} parent=1 // loop_header_branch
      %24 = sbr.rel (%p22) target = $region8
    $region5: #{_ppo_critic_forward.1} parent=1 // loop_body
      %s26 = ssub.s32 %s21, 1
      %s27 = ssub.s32 %s21, 2
      %s28 = sadd.s32 %s21, 1
      %s29 = ssub.s32 %s21, %s28
      %p30 = scmp.eq.s32.totalorder %s29, 0
      %s32 = sadd.s32 %s31, 1
      %s33 = scalar_select %p30, %s31, %s32
      %p36 = pneg %p30
      %p37 = scmp.eq.s32.totalorder %s21, 1
      %p38 = por %p36, %p37
      %p39 = scmp.ne.s32.totalorder %s31, %s34
      %p40 = scmp.eq.s32.totalorder %s21, 0
      %p41 = por %p39, %p40
      %p42 = scmp.ne.s32.totalorder %s31, %s34
      %p43 = scmp.eq.s32.totalorder %s26, 1
      %p44 = por %p42, %p43
      %p45 = scmp.ne.s32.totalorder %s34, %s35
      %p46 = scmp.eq.s32.totalorder %s26, 0
      %p47 = por %p45, %p46
      %p48 = scmp.ne.s32.totalorder %s34, %s35
      %p49 = scmp.eq.s32.totalorder %s27, 1
      %p50 = por %p48, %p49
      %p52 = scmp.ne.s32.totalorder %s35, %s51
      %p53 = scmp.eq.s32.totalorder %s27, 0
      %p54 = por %p52, %p53
      %s55 = ssub.s32 %s21, %s28
      %p56 = scmp.eq.s32.totalorder %s55, 0
      %s58 = sadd.s32 %s57, 1
      %s59 = scalar_select %p56, %s57, %s58
      %p62 = pneg %p56
      %p63 = scmp.eq.s32.totalorder %s21, 1
      %p64 = por %p62, %p63
      %p65 = scmp.ne.s32.totalorder %s57, %s60
      %p66 = scmp.eq.s32.totalorder %s21, 0
      %p67 = por %p65, %p66
      %p68 = scmp.ne.s32.totalorder %s57, %s60
      %p69 = scmp.eq.s32.totalorder %s26, 1
      %p70 = por %p68, %p69
      %p71 = scmp.ne.s32.totalorder %s60, %s61
      %p72 = scmp.eq.s32.totalorder %s26, 0
      %p73 = por %p71, %p72
      %p74 = scmp.ne.s32.totalorder %s60, %s61
      %p75 = scmp.eq.s32.totalorder %s27, 1
      %p76 = por %p74, %p75
      %p78 = scmp.ne.s32.totalorder %s61, %s77
      %p79 = scmp.eq.s32.totalorder %s27, 0
      %p80 = por %p78, %p79
      %s81 = ssub.s32 %s21, %s28
      %p82 = scmp.eq.s32.totalorder %s81, 0
      %s84 = sadd.s32 %s83, 1
      %s85 = scalar_select %p82, %s83, %s84
      %p88 = pneg %p82
      %p89 = scmp.eq.s32.totalorder %s21, 1
      %p90 = por %p88, %p89
      %p91 = scmp.ne.s32.totalorder %s83, %s86
      %p92 = scmp.eq.s32.totalorder %s21, 0
      %p93 = por %p91, %p92
      %p94 = scmp.ne.s32.totalorder %s83, %s86
      %p95 = scmp.eq.s32.totalorder %s26, 1
      %p96 = por %p94, %p95
      %p97 = scmp.ne.s32.totalorder %s86, %s87
      %p98 = scmp.eq.s32.totalorder %s26, 0
      %p99 = por %p97, %p98
      %p100 = scmp.ne.s32.totalorder %s86, %s87
      %p101 = scmp.eq.s32.totalorder %s27, 1
      %p102 = por %p100, %p101
      %p104 = scmp.ne.s32.totalorder %s87, %s103
      %p105 = scmp.eq.s32.totalorder %s27, 0
      %p106 = por %p104, %p105
      %s108 = sadd.s32 %s107, 1
      %p111 = scmp.eq.s32.totalorder %s21, 1
      %p112 = scmp.ne.s32.totalorder %s107, %s109
      %p113 = scmp.eq.s32.totalorder %s21, 0
      %p114 = por %p112, %p113
      %p115 = scmp.ne.s32.totalorder %s107, %s109
      %p116 = scmp.eq.s32.totalorder %s26, 1
      %p117 = por %p115, %p116
      %p118 = scmp.ne.s32.totalorder %s109, %s110
      %p119 = scmp.eq.s32.totalorder %s26, 0
      %p120 = por %p118, %p119
      %p121 = scmp.ne.s32.totalorder %s109, %s110
      %p122 = scmp.eq.s32.totalorder %s27, 1
      %p123 = por %p121, %p122
      %p125 = scmp.ne.s32.totalorder %s110, %s124
      %p126 = scmp.eq.s32.totalorder %s27, 0
      %p127 = por %p125, %p126
      %s129 = sadd.s32 %s128, 1
      %p132 = scmp.eq.s32.totalorder %s21, 1
      %p133 = scmp.ne.s32.totalorder %s128, %s130
      %p134 = scmp.eq.s32.totalorder %s21, 0
      %p135 = por %p133, %p134
      %p136 = scmp.ne.s32.totalorder %s128, %s130
      %p137 = scmp.eq.s32.totalorder %s26, 1
      %p138 = por %p136, %p137
      %p139 = scmp.ne.s32.totalorder %s130, %s131
      %p140 = scmp.eq.s32.totalorder %s26, 0
      %p141 = por %p139, %p140
      %p142 = scmp.ne.s32.totalorder %s130, %s131
      %p143 = scmp.eq.s32.totalorder %s27, 1
      %p144 = por %p142, %p143
      %p146 = scmp.ne.s32.totalorder %s131, %s145
      %p147 = scmp.eq.s32.totalorder %s27, 0
      %p148 = por %p146, %p147
      %s150 = sadd.s32 %s149, 1
      %p153 = scmp.eq.s32.totalorder %s21, 1
      %p154 = scmp.ne.s32.totalorder %s149, %s151
      %p155 = scmp.eq.s32.totalorder %s21, 0
      %p156 = por %p154, %p155
      %p157 = scmp.ne.s32.totalorder %s149, %s151
      %p158 = scmp.eq.s32.totalorder %s26, 1
      %p159 = por %p157, %p158
      %p160 = scmp.ne.s32.totalorder %s151, %s152
      %p161 = scmp.eq.s32.totalorder %s26, 0
      %p162 = por %p160, %p161
      %p163 = scmp.ne.s32.totalorder %s151, %s152
      %p164 = scmp.eq.s32.totalorder %s27, 1
      %p165 = por %p163, %p164
      %p167 = scmp.ne.s32.totalorder %s152, %s166
      %p168 = scmp.eq.s32.totalorder %s27, 0
      %p169 = por %p167, %p168
      %s171 = sadd.s32 %s170, 1
      %p174 = scmp.eq.s32.totalorder %s21, 1
      %p175 = scmp.ne.s32.totalorder %s170, %s172
      %p176 = scmp.eq.s32.totalorder %s21, 0
      %p177 = por %p175, %p176
      %p178 = scmp.ne.s32.totalorder %s170, %s172
      %p179 = scmp.eq.s32.totalorder %s26, 1
      %p180 = por %p178, %p179
      %p181 = scmp.ne.s32.totalorder %s172, %s173
      %p182 = scmp.eq.s32.totalorder %s26, 0
      %p183 = por %p181, %p182
      %p184 = scmp.ne.s32.totalorder %s172, %s173
      %p185 = scmp.eq.s32.totalorder %s27, 1
      %p186 = por %p184, %p185
      %p188 = scmp.ne.s32.totalorder %s173, %s187
      %p189 = scmp.eq.s32.totalorder %s27, 0
      %p190 = por %p188, %p189
      %s192 = sadd.s32 %s191, 1
      %p195 = scmp.eq.s32.totalorder %s21, 1
      %p196 = scmp.ne.s32.totalorder %s191, %s193
      %p197 = scmp.eq.s32.totalorder %s21, 0
      %p198 = por %p196, %p197
      %p199 = scmp.ne.s32.totalorder %s191, %s193
      %p200 = scmp.eq.s32.totalorder %s26, 1
      %p201 = por %p199, %p200
      %p202 = scmp.ne.s32.totalorder %s193, %s194
      %p203 = scmp.eq.s32.totalorder %s26, 0
      %p204 = por %p202, %p203
      %p205 = scmp.ne.s32.totalorder %s193, %s194
      %p206 = scmp.eq.s32.totalorder %s27, 1
      %p207 = por %p205, %p206
      %p209 = scmp.ne.s32.totalorder %s194, %s208
      %p210 = scmp.eq.s32.totalorder %s27, 0
      %p211 = por %p209, %p210
      %s212 = ssub.s32 %s21, %s28
      %p213 = scmp.eq.s32.totalorder %s212, 0
      %s215 = sadd.s32 %s214, 1
      %s216 = scalar_select %p213, %s214, %s215
      %p219 = pneg %p213
      %p220 = scmp.eq.s32.totalorder %s21, 1
      %p221 = por %p219, %p220
      %p222 = scmp.ne.s32.totalorder %s214, %s217
      %p223 = scmp.eq.s32.totalorder %s21, 0
      %p224 = por %p222, %p223
      %p225 = scmp.ne.s32.totalorder %s214, %s217
      %p226 = scmp.eq.s32.totalorder %s26, 1
      %p227 = por %p225, %p226
      %p228 = scmp.ne.s32.totalorder %s217, %s218
      %p229 = scmp.eq.s32.totalorder %s26, 0
      %p230 = por %p228, %p229
      %p231 = scmp.ne.s32.totalorder %s217, %s218
      %p232 = scmp.eq.s32.totalorder %s27, 1
      %p233 = por %p231, %p232
      %p235 = scmp.ne.s32.totalorder %s218, %s234
      %p236 = scmp.eq.s32.totalorder %s27, 0
      %p237 = por %p235, %p236
      %s238 = ssub.s32 %s21, %s28
      %p239 = scmp.eq.s32.totalorder %s238, 0
      %s241 = sadd.s32 %s240, 1
      %s242 = scalar_select %p239, %s240, %s241
      %p245 = pneg %p239
      %p246 = scmp.eq.s32.totalorder %s21, 1
      %p247 = por %p245, %p246
      %p248 = scmp.ne.s32.totalorder %s240, %s243
      %p249 = scmp.eq.s32.totalorder %s21, 0
      %p250 = por %p248, %p249
      %p251 = scmp.ne.s32.totalorder %s240, %s243
      %p252 = scmp.eq.s32.totalorder %s26, 1
      %p253 = por %p251, %p252
      %p254 = scmp.ne.s32.totalorder %s243, %s244
      %p255 = scmp.eq.s32.totalorder %s26, 0
      %p256 = por %p254, %p255
      %p257 = scmp.ne.s32.totalorder %s243, %s244
      %p258 = scmp.eq.s32.totalorder %s27, 1
      %p259 = por %p257, %p258
      %p261 = scmp.ne.s32.totalorder %s244, %s260
      %p262 = scmp.eq.s32.totalorder %s27, 0
      %p263 = por %p261, %p262
      %p264 = scmp.le.s32.totalorder 1, %s21
      %p265 = scmp.lt.s32.totalorder %s21, 3
      %p266 = pnand %p264, %p265
      %p267 = pneg %p266
      // Predicated region
      $region9: #{_ppo_critic_forward.1} parent=5 // pred_check
        _
      $region10: #{_ppo_critic_forward.1} parent=5 // pred_check_branch
        %269 = sbr.rel (%p266) target = $region12
      $region11: #{_ppo_critic_forward.1} parent=5 // pred_region
        %s270 = ssub.s32 %s21, 1
        // Predicated region
        $region13: #{_ppo_critic_forward.1} parent=11 // pred_check
          %p271 = pneg %p120
        $region14: #{_ppo_critic_forward.1} parent=11 // pred_check_branch
          %273 = sbr.rel (%p271) target = $region16
        $region15: #{_ppo_critic_forward.1} parent=11 // pred_region
          %275 = vsyncadd [#allocation5], 0
          %s276 = sshll.u32 %s3, 4
          %s277 = int_to_ptr.hbm [resolvable:$true] %s276
          %s278 = sshll.u32 [#allocation4], 4
          %s279 = int_to_ptr.vmem [resolvable:$true] %s278
          %284 = dma.hbm_to_vmem [thread:$0]  %s277, 2048, %s279, [#allocation5], 128, 128, 8
        $region16: #{_ppo_critic_forward.1} parent=11 // pred_fallthru
          _
        // Predicated region
        $region17: #{_ppo_critic_forward.1} parent=11 // pred_check
          %p285 = pneg %p141
        $region18: #{_ppo_critic_forward.1} parent=11 // pred_check_branch
          %287 = sbr.rel (%p285) target = $region20
        $region19: #{_ppo_critic_forward.1} parent=11 // pred_region
          _
        $region20: #{_ppo_critic_forward.1} parent=11 // pred_fallthru
          _
        // Predicated region
        $region21: #{_ppo_critic_forward.1} parent=11 // pred_check
          %p288 = pneg %p162
        $region22: #{_ppo_critic_forward.1} parent=11 // pred_check_branch
          %290 = sbr.rel (%p288) target = $region24
        $region23: #{_ppo_critic_forward.1} parent=11 // pred_region
          %292 = vsyncadd [#allocation5], 0
          %s293 = sshll.u32 %s5, 4
          %s294 = int_to_ptr.hbm [resolvable:$true] %s293
          %s295 = sshll.u32 [#allocation6], 4
          %s296 = int_to_ptr.vmem [resolvable:$true] %s295
          %301 = dma.hbm_to_vmem [thread:$0]  %s294, 2048, %s296, [#allocation5], 128, 128, 8
        $region24: #{_ppo_critic_forward.1} parent=11 // pred_fallthru
          _
        // Predicated region
        $region25: #{_ppo_critic_forward.1} parent=11 // pred_check
          %p302 = pneg %p183
        $region26: #{_ppo_critic_forward.1} parent=11 // pred_check_branch
          %304 = sbr.rel (%p302) target = $region28
        $region27: #{_ppo_critic_forward.1} parent=11 // pred_region
          %306 = vsyncadd [#allocation8], 0
          %s307 = sshll.u32 %s6, 4
          %s308 = int_to_ptr.hbm [resolvable:$true] %s307
          %s309 = sshll.u32 [#allocation7], 4
          %s310 = int_to_ptr.vmem [resolvable:$true] %s309
          %315 = dma.hbm_to_vmem [thread:$0]  %s308, 2048, %s310, [#allocation8], 128, 128, 8
        $region28: #{_ppo_critic_forward.1} parent=11 // pred_fallthru
          _
        // Predicated region
        $region29: #{_ppo_critic_forward.1} parent=11 // pred_check
          %p316 = pneg %p204
        $region30: #{_ppo_critic_forward.1} parent=11 // pred_check_branch
          %318 = sbr.rel (%p316) target = $region32
        $region31: #{_ppo_critic_forward.1} parent=11 // pred_region
          %320 = vsyncadd [#allocation8], 0
          %s321 = sshll.u32 %s7, 4
          %s322 = int_to_ptr.hbm [resolvable:$true] %s321
          %s323 = sshll.u32 [#allocation9], 4
          %s324 = int_to_ptr.vmem [resolvable:$true] %s323
          %329 = dma.hbm_to_vmem [thread:$0]  %s322, 256, %s324, [#allocation8], 128, 128, 8
        $region32: #{_ppo_critic_forward.1} parent=11 // pred_fallthru
          _
      $region12: #{_ppo_critic_forward.1} parent=5 // pred_fallthru
        _
      %p330 = scmp.lt.s32.totalorder %s21, 2
      // Predicated region
      $region33: #{_ppo_critic_forward.1} parent=5 // pred_check
        %p331 = pneg %p330
      $region34: #{_ppo_critic_forward.1} parent=5 // pred_check_branch
        %333 = sbr.rel (%p331) target = $region36
      $region35: #{_ppo_critic_forward.1} parent=5 // pred_region
        // Predicated region
        $region37: #{_ppo_critic_forward.1} parent=35 // pred_check
          %p334 = pneg %p41
        $region38: #{_ppo_critic_forward.1} parent=35 // pred_check_branch
          %336 = sbr.rel (%p334) target = $region40
        $region39: #{_ppo_critic_forward.1} parent=35 // pred_region
          %s337 = sand.u32 %s31, 1
          %s338 = scalar_lea.sflag [#allocation3], %s337
          %s339 = sand.u32 %s31, 1
          %s340 = smul.addr %s339, 256
          %s341 = scalar_lea.vmem [#allocation2], %s340
          %s342 = smul.u32 32, %s21
          %344 = vsyncadd %s338, 0
          %s345 = smul.addr %s342, 8
          %s346 = scalar_lea.hbm %s0, %s345
          %s347 = sshll.u32 %s346, 4
          %s348 = int_to_ptr.hbm [resolvable:$true] %s347
          %s349 = sshll.u32 %s341, 4
          %s350 = int_to_ptr.vmem [resolvable:$true] %s349
          %355 = dma.hbm_to_vmem [thread:$0]  %s348, 4096, %s350, %s338, 128, 128, 8
        $region40: #{_ppo_critic_forward.1} parent=35 // pred_fallthru
          _
        // Predicated region
        $region41: #{_ppo_critic_forward.1} parent=35 // pred_check
          %p356 = pneg %p67
        $region42: #{_ppo_critic_forward.1} parent=35 // pred_check_branch
          %358 = sbr.rel (%p356) target = $region44
        $region43: #{_ppo_critic_forward.1} parent=35 // pred_region
          %s359 = smul.u32 32, %s21
          %p360 = scmp.lt.s32.totalorder %s359, 63
          %s361 = scalar_select %p360, %s359, 63
          %s362 = smul.addr %s361, 8
          %s363 = scalar_lea.vmem %s1, %s362
          %s364 = smul.u32 32, %s21
        $region44: #{_ppo_critic_forward.1} parent=35 // pred_fallthru
          _
        // Predicated region
        $region45: #{_ppo_critic_forward.1} parent=35 // pred_check
          %p365 = pneg %p93
        $region46: #{_ppo_critic_forward.1} parent=35 // pred_check_branch
          %367 = sbr.rel (%p365) target = $region48
        $region47: #{_ppo_critic_forward.1} parent=35 // pred_region
          %s368 = smul.u32 32, %s21
          %p369 = scmp.lt.s32.totalorder %s368, 63
          %s370 = scalar_select %p369, %s368, 63
          %s371 = smul.addr %s370, 8
          %s372 = scalar_lea.vmem %s2, %s371
          %s373 = smul.u32 32, %s21
        $region48: #{_ppo_critic_forward.1} parent=35 // pred_fallthru
          _
      $region36: #{_ppo_critic_forward.1} parent=5 // pred_fallthru
        _
      %p374 = scmp.le.s32.totalorder 1, %s21
      %p375 = scmp.lt.s32.totalorder %s21, 3
      %p376 = pnand %p374, %p375
      %p377 = pneg %p376
      // Predicated region
      $region49: #{_ppo_critic_forward.1} parent=5 // pred_check
        _
      $region50: #{_ppo_critic_forward.1} parent=5 // pred_check_branch
        %379 = sbr.rel (%p376) target = $region52
      $region51: #{_ppo_critic_forward.1} parent=5 // pred_region
        %s380 = ssub.s32 %s21, 1
        %s381 = sand.u32 %s34, 1
        %s382 = scalar_lea.sflag [#allocation3], %s381
        %s383 = sand.u32 %s34, 1
        %s384 = smul.addr %s383, 256
        %s385 = scalar_lea.vmem [#allocation2], %s384
        // Predicated region
        $region53: #{_ppo_critic_forward.1} parent=51 // pred_check
          %p386 = pneg %p47
        $region54: #{_ppo_critic_forward.1} parent=51 // pred_check_branch
          %388 = sbr.rel (%p386) target = $region56
        $region55: #{_ppo_critic_forward.1} parent=51 // pred_region
          %390 = dma.done %s382, 4096
        $region56: #{_ppo_critic_forward.1} parent=51 // pred_fallthru
          _
        // Predicated region
        $region57: #{_ppo_critic_forward.1} parent=51 // pred_check
          %p391 = pneg %p120
        $region58: #{_ppo_critic_forward.1} parent=51 // pred_check_branch
          %393 = sbr.rel (%p391) target = $region60
        $region59: #{_ppo_critic_forward.1} parent=51 // pred_region
          %395 = dma.done [#allocation5], 2048
        $region60: #{_ppo_critic_forward.1} parent=51 // pred_fallthru
          _
        // Predicated region
        $region61: #{_ppo_critic_forward.1} parent=51 // pred_check
          %p396 = pneg %p162
        $region62: #{_ppo_critic_forward.1} parent=51 // pred_check_branch
          %398 = sbr.rel (%p396) target = $region64
        $region63: #{_ppo_critic_forward.1} parent=51 // pred_region
          %400 = dma.done [#allocation5], 2048
        $region64: #{_ppo_critic_forward.1} parent=51 // pred_fallthru
          _
        // Predicated region
        $region65: #{_ppo_critic_forward.1} parent=51 // pred_check
          %p401 = pneg %p183
        $region66: #{_ppo_critic_forward.1} parent=51 // pred_check_branch
          %403 = sbr.rel (%p401) target = $region68
        $region67: #{_ppo_critic_forward.1} parent=51 // pred_region
          %405 = dma.done [#allocation8], 2048
        $region68: #{_ppo_critic_forward.1} parent=51 // pred_fallthru
          _
        // Predicated region
        $region69: #{_ppo_critic_forward.1} parent=51 // pred_check
          %p406 = pneg %p204
        $region70: #{_ppo_critic_forward.1} parent=51 // pred_check_branch
          %408 = sbr.rel (%p406) target = $region72
        $region71: #{_ppo_critic_forward.1} parent=51 // pred_region
          %410 = dma.done [#allocation8], 256
        $region72: #{_ppo_critic_forward.1} parent=51 // pred_fallthru
          _
        %s411 = sand.u32 %s34, 1
        %s412 = scalar_lea.sflag [#allocation3], %s411
        %s413 = sand.u32 %s34, 1
        %s414 = smul.addr %s413, 256
        %s415 = scalar_lea.vmem [#allocation2], %s414
        %p416 = pneg %p47
        %p417 = pneg %p44
        %s418 = smul.u32 32, %s26
        %p419 = scmp.lt.s32.totalorder %s418, 63
        %s420 = scalar_select %p419, %s418, 63
        %s421 = smul.addr %s420, 8
        %s422 = scalar_lea.vmem %s1, %s421
        %p423 = pneg %p73
        %p424 = pneg %p70
        %s425 = smul.u32 32, %s26
        %p426 = scmp.lt.s32.totalorder %s425, 63
        %s427 = scalar_select %p426, %s425, 63
        %s428 = smul.addr %s427, 8
        %s429 = scalar_lea.vmem %s2, %s428
        %p430 = pneg %p99
        %p431 = pneg %p96
        %p432 = pneg %p120
        %p433 = pneg %p117
        %p434 = pneg %p141
        %p435 = pneg %p138
        %p436 = pneg %p162
        %p437 = pneg %p159
        %p438 = pneg %p183
        %p439 = pneg %p180
        %p440 = pneg %p204
        %p441 = pneg %p201
        %p442 = pneg %p230
        %p443 = pneg %p227
        %s444 = smul.u32 32, %s26
        %p445 = scmp.lt.s32.totalorder %s444, 63
        %s446 = scalar_select %p445, %s444, 63
        %s447 = smul.addr %s446, 8
        %s448 = scalar_lea.vmem %s8, %s447
        %p449 = pneg %p256
        %p450 = pneg %p253
        %s451 = smul.u32 32, %s26
        %p452 = scmp.lt.s32.totalorder %s451, 63
        %s453 = scalar_select %p452, %s451, 63
        %s454 = smul.addr %s453, 8
        %s455 = scalar_lea.vmem %s9, %s454
        %s456 = smul.u32 32, %s26
        %s457 = smul.u32 32, %s26
        %p458 = scmp.lt.s32.totalorder %s457, 63
        %s459 = scalar_select %p458, %s457, 63
        %s460 = smul.addr %s459, 8
        %s461 = scalar_lea.vmem %s1, %s460
        %s462 = smul.u32 32, %s26
        %s463 = smul.u32 32, %s26
        %p464 = scmp.lt.s32.totalorder %s463, 63
        %s465 = scalar_select %p464, %s463, 63
        %s466 = smul.addr %s465, 8
        %s467 = scalar_lea.vmem %s2, %s466
        %s468 = smul.u32 32, %s26
        %s469 = smul.u32 32, %s26
        %p470 = scmp.lt.s32.totalorder %s469, 63
        %s471 = scalar_select %p470, %s469, 63
        %s472 = smul.addr %s471, 8
        %s473 = scalar_lea.vmem %s8, %s472
        %s474 = smul.u32 32, %s26
        %s475 = smul.u32 32, %s26
        %p476 = scmp.lt.s32.totalorder %s475, 63
        %s477 = scalar_select %p476, %s475, 63
        %s478 = smul.addr %s477, 8
        %s479 = scalar_lea.vmem %s9, %s478
        %s480 = smul.u32 32, %s26
        %v481 = vld [vmem:[#allocation9] sm:$0xff]
        %v482 = vld [vmem:[#allocation9 + $0x8] sm:$0xff]
        %v483 = vld [vmem:[%s385] sm:$0xff]
        %v484 = vld [vmem:[%s385 + $0x8] sm:$0xff]
        %v485 = vld [vmem:[%s385 + $0x10] sm:$0xff]
        %v486 = vld [vmem:[%s385 + $0x18] sm:$0xff]
        %v487 = vld [vmem:[%s385 + $0x20] sm:$0xff]
        %v488 = vld [vmem:[%s385 + $0x28] sm:$0xff]
        %v489 = vld [vmem:[%s385 + $0x30] sm:$0xff]
        %v490 = vld [vmem:[%s385 + $0x38] sm:$0xff]
        %v491 = vld [vmem:[%s385 + $0x40] sm:$0xff]
        %v492 = vld [vmem:[%s385 + $0x48] sm:$0xff]
        %v493 = vld [vmem:[%s385 + $0x50] sm:$0xff]
        %v494 = vld [vmem:[%s385 + $0x58] sm:$0xff]
        %v495 = vld [vmem:[%s385 + $0x60] sm:$0xff]
        %v496 = vld [vmem:[%s385 + $0x68] sm:$0xff]
        %v497 = vld [vmem:[%s385 + $0x70] sm:$0xff]
        %v498 = vld [vmem:[%s385 + $0x78] sm:$0xff]
        %v499 = vld [vmem:[%s385 + $0x80] sm:$0xff]
        %v500 = vld [vmem:[%s385 + $0x88] sm:$0xff]
        %v501 = vld [vmem:[%s385 + $0x90] sm:$0xff]
        %v502 = vld [vmem:[%s385 + $0x98] sm:$0xff]
        %v503 = vld [vmem:[%s385 + $0xa0] sm:$0xff]
        %v504 = vld [vmem:[%s385 + $0xa8] sm:$0xff]
        %v505 = vld [vmem:[%s385 + $0xb0] sm:$0xff]
        %v506 = vld [vmem:[%s385 + $0xb8] sm:$0xff]
        %v507 = vld [vmem:[%s385 + $0xc0] sm:$0xff]
        %v508 = vld [vmem:[%s385 + $0xc8] sm:$0xff]
        %v509 = vld [vmem:[%s385 + $0xd0] sm:$0xff]
        %v510 = vld [vmem:[%s385 + $0xd8] sm:$0xff]
        %v511 = vld [vmem:[%s385 + $0xe0] sm:$0xff]
        %v512 = vld [vmem:[%s385 + $0xe8] sm:$0xff]
        %v513 = vld [vmem:[%s385 + $0xf0] sm:$0xff]
        %v514 = vld [vmem:[%s385 + $0xf8] sm:$0xff]
        %515 = vadd.xlane.f32.xlu0 %v483
        %v516 = vpop.xlane.xlu0 %515
        %517 = vadd.xlane.f32.xlu0 %v484
        %v518 = vpop.xlane.xlu0 %517
        %519 = vadd.xlane.f32.xlu0 %v485
        %v520 = vpop.xlane.xlu0 %519
        %521 = vadd.xlane.f32.xlu0 %v486
        %v522 = vpop.xlane.xlu0 %521
        %523 = vadd.xlane.f32.xlu0 %v487
        %v524 = vpop.xlane.xlu0 %523
        %525 = vadd.xlane.f32.xlu0 %v488
        %v526 = vpop.xlane.xlu0 %525
        %527 = vadd.xlane.f32.xlu0 %v489
        %v528 = vpop.xlane.xlu0 %527
        %529 = vadd.xlane.f32.xlu0 %v490
        %v530 = vpop.xlane.xlu0 %529
        %531 = vadd.xlane.f32.xlu0 %v491
        %v532 = vpop.xlane.xlu0 %531
        %533 = vadd.xlane.f32.xlu0 %v492
        %v534 = vpop.xlane.xlu0 %533
        %535 = vadd.xlane.f32.xlu0 %v493
        %v536 = vpop.xlane.xlu0 %535
        %537 = vadd.xlane.f32.xlu0 %v494
        %v538 = vpop.xlane.xlu0 %537
        %539 = vadd.xlane.f32.xlu0 %v495
        %v540 = vpop.xlane.xlu0 %539
        %541 = vadd.xlane.f32.xlu0 %v496
        %v542 = vpop.xlane.xlu0 %541
        %543 = vadd.xlane.f32.xlu0 %v497
        %v544 = vpop.xlane.xlu0 %543
        %545 = vadd.xlane.f32.xlu0 %v498
        %v546 = vpop.xlane.xlu0 %545
        %547 = vadd.xlane.f32.xlu0 %v499
        %v548 = vpop.xlane.xlu0 %547
        %549 = vadd.xlane.f32.xlu0 %v500
        %v550 = vpop.xlane.xlu0 %549
        %551 = vadd.xlane.f32.xlu0 %v501
        %v552 = vpop.xlane.xlu0 %551
        %553 = vadd.xlane.f32.xlu0 %v502
        %v554 = vpop.xlane.xlu0 %553
        %555 = vadd.xlane.f32.xlu0 %v503
        %v556 = vpop.xlane.xlu0 %555
        %557 = vadd.xlane.f32.xlu0 %v504
        %v558 = vpop.xlane.xlu0 %557
        %559 = vadd.xlane.f32.xlu0 %v505
        %v560 = vpop.xlane.xlu0 %559
        %561 = vadd.xlane.f32.xlu0 %v506
        %v562 = vpop.xlane.xlu0 %561
        %563 = vadd.xlane.f32.xlu0 %v507
        %v564 = vpop.xlane.xlu0 %563
        %565 = vadd.xlane.f32.xlu0 %v508
        %v566 = vpop.xlane.xlu0 %565
        %567 = vadd.xlane.f32.xlu0 %v509
        %v568 = vpop.xlane.xlu0 %567
        %569 = vadd.xlane.f32.xlu0 %v510
        %v570 = vpop.xlane.xlu0 %569
        %571 = vadd.xlane.f32.xlu0 %v511
        %v572 = vpop.xlane.xlu0 %571
        %573 = vadd.xlane.f32.xlu0 %v512
        %v574 = vpop.xlane.xlu0 %573
        %575 = vadd.xlane.f32.xlu0 %v513
        %v576 = vpop.xlane.xlu0 %575
        %577 = vadd.xlane.f32.xlu0 %v514
        %v578 = vpop.xlane.xlu0 %577
        %v579 = vrcp.pop 128.0
        %v580 = vmul.f32 128.0, %v579
        %v581 = vsub.f32 1.0, %v580
        %v582 = vmul.f32 %v579, %v581
        %v583 = vadd.f32 %v579, %v582
        %vm584 = vweird.f32 %v579
        %v585 = vsel %vm584, %v579, %v583
        %v586 = vmul.f32 %v516, %v585
        %v587 = vmul.f32 %v518, %v585
        %v588 = vmul.f32 %v520, %v585
        %v589 = vmul.f32 %v522, %v585
        %v590 = vmul.f32 %v524, %v585
        %v591 = vmul.f32 %v526, %v585
        %v592 = vmul.f32 %v528, %v585
        %v593 = vmul.f32 %v530, %v585
        %v594 = vmul.f32 %v532, %v585
        %v595 = vmul.f32 %v534, %v585
        %v596 = vmul.f32 %v536, %v585
        %v597 = vmul.f32 %v538, %v585
        %v598 = vmul.f32 %v540, %v585
        %v599 = vmul.f32 %v542, %v585
        %v600 = vmul.f32 %v544, %v585
        %v601 = vmul.f32 %v546, %v585
        %v602 = vmul.f32 %v548, %v585
        %v603 = vmul.f32 %v550, %v585
        %v604 = vmul.f32 %v552, %v585
        %v605 = vmul.f32 %v554, %v585
        %v606 = vmul.f32 %v556, %v585
        %v607 = vmul.f32 %v558, %v585
        %v608 = vmul.f32 %v560, %v585
        %v609 = vmul.f32 %v562, %v585
        %v610 = vmul.f32 %v564, %v585
        %v611 = vmul.f32 %v566, %v585
        %v612 = vmul.f32 %v568, %v585
        %v613 = vmul.f32 %v570, %v585
        %v614 = vmul.f32 %v572, %v585
        %v615 = vmul.f32 %v574, %v585
        %v616 = vmul.f32 %v576, %v585
        %v617 = vmul.f32 %v578, %v585
        %v618 = vsub.f32 %v483, %v586
        %v619 = vsub.f32 %v484, %v587
        %v620 = vsub.f32 %v485, %v588
        %v621 = vsub.f32 %v486, %v589
        %v622 = vsub.f32 %v487, %v590
        %v623 = vsub.f32 %v488, %v591
        %v624 = vsub.f32 %v489, %v592
        %v625 = vsub.f32 %v490, %v593
        %v626 = vsub.f32 %v491, %v594
        %v627 = vsub.f32 %v492, %v595
        %v628 = vsub.f32 %v493, %v596
        %v629 = vsub.f32 %v494, %v597
        %v630 = vsub.f32 %v495, %v598
        %v631 = vsub.f32 %v496, %v599
        %v632 = vsub.f32 %v497, %v600
        %v633 = vsub.f32 %v498, %v601
        %v634 = vsub.f32 %v499, %v602
        %v635 = vsub.f32 %v500, %v603
        %v636 = vsub.f32 %v501, %v604
        %v637 = vsub.f32 %v502, %v605
        %v638 = vsub.f32 %v503, %v606
        %v639 = vsub.f32 %v504, %v607
        %v640 = vsub.f32 %v505, %v608
        %v641 = vsub.f32 %v506, %v609
        %v642 = vsub.f32 %v507, %v610
        %v643 = vsub.f32 %v508, %v611
        %v644 = vsub.f32 %v509, %v612
        %v645 = vsub.f32 %v510, %v613
        %v646 = vsub.f32 %v511, %v614
        %v647 = vsub.f32 %v512, %v615
        %v648 = vsub.f32 %v513, %v616
        %v649 = vsub.f32 %v514, %v617
        %v650 = vmul.f32 %v618, %v618
        %v651 = vmul.f32 %v619, %v619
        %v652 = vmul.f32 %v620, %v620
        %v653 = vmul.f32 %v621, %v621
        %v654 = vmul.f32 %v622, %v622
        %v655 = vmul.f32 %v623, %v623
        %v656 = vmul.f32 %v624, %v624
        %v657 = vmul.f32 %v625, %v625
        %v658 = vmul.f32 %v626, %v626
        %v659 = vmul.f32 %v627, %v627
        %v660 = vmul.f32 %v628, %v628
        %v661 = vmul.f32 %v629, %v629
        %v662 = vmul.f32 %v630, %v630
        %v663 = vmul.f32 %v631, %v631
        %v664 = vmul.f32 %v632, %v632
        %v665 = vmul.f32 %v633, %v633
        %v666 = vmul.f32 %v634, %v634
        %v667 = vmul.f32 %v635, %v635
        %v668 = vmul.f32 %v636, %v636
        %v669 = vmul.f32 %v637, %v637
        %v670 = vmul.f32 %v638, %v638
        %v671 = vmul.f32 %v639, %v639
        %v672 = vmul.f32 %v640, %v640
        %v673 = vmul.f32 %v641, %v641
        %v674 = vmul.f32 %v642, %v642
        %v675 = vmul.f32 %v643, %v643
        %v676 = vmul.f32 %v644, %v644
        %v677 = vmul.f32 %v645, %v645
        %v678 = vmul.f32 %v646, %v646
        %v679 = vmul.f32 %v647, %v647
        %v680 = vmul.f32 %v648, %v648
        %v681 = vmul.f32 %v649, %v649
        %682 = vadd.xlane.f32.xlu0 %v650
        %v683 = vpop.xlane.xlu0 %682
        %684 = vadd.xlane.f32.xlu0 %v651
        %v685 = vpop.xlane.xlu0 %684
        %686 = vadd.xlane.f32.xlu0 %v652
        %v687 = vpop.xlane.xlu0 %686
        %688 = vadd.xlane.f32.xlu0 %v653
        %v689 = vpop.xlane.xlu0 %688
        %690 = vadd.xlane.f32.xlu0 %v654
        %v691 = vpop.xlane.xlu0 %690
        %692 = vadd.xlane.f32.xlu0 %v655
        %v693 = vpop.xlane.xlu0 %692
        %694 = vadd.xlane.f32.xlu0 %v656
        %v695 = vpop.xlane.xlu0 %694
        %696 = vadd.xlane.f32.xlu0 %v657
        %v697 = vpop.xlane.xlu0 %696
        %698 = vadd.xlane.f32.xlu0 %v658
        %v699 = vpop.xlane.xlu0 %698
        %700 = vadd.xlane.f32.xlu0 %v659
        %v701 = vpop.xlane.xlu0 %700
        %702 = vadd.xlane.f32.xlu0 %v660
        %v703 = vpop.xlane.xlu0 %702
        %704 = vadd.xlane.f32.xlu0 %v661
        %v705 = vpop.xlane.xlu0 %704
        %706 = vadd.xlane.f32.xlu0 %v662
        %v707 = vpop.xlane.xlu0 %706
        %708 = vadd.xlane.f32.xlu0 %v663
        %v709 = vpop.xlane.xlu0 %708
        %710 = vadd.xlane.f32.xlu0 %v664
        %v711 = vpop.xlane.xlu0 %710
        %712 = vadd.xlane.f32.xlu0 %v665
        %v713 = vpop.xlane.xlu0 %712
        %714 = vadd.xlane.f32.xlu0 %v666
        %v715 = vpop.xlane.xlu0 %714
        %716 = vadd.xlane.f32.xlu0 %v667
        %v717 = vpop.xlane.xlu0 %716
        %718 = vadd.xlane.f32.xlu0 %v668
        %v719 = vpop.xlane.xlu0 %718
        %720 = vadd.xlane.f32.xlu0 %v669
        %v721 = vpop.xlane.xlu0 %720
        %722 = vadd.xlane.f32.xlu0 %v670
        %v723 = vpop.xlane.xlu0 %722
        %724 = vadd.xlane.f32.xlu0 %v671
        %v725 = vpop.xlane.xlu0 %724
        %726 = vadd.xlane.f32.xlu0 %v672
        %v727 = vpop.xlane.xlu0 %726
        %728 = vadd.xlane.f32.xlu0 %v673
        %v729 = vpop.xlane.xlu0 %728
        %730 = vadd.xlane.f32.xlu0 %v674
        %v731 = vpop.xlane.xlu0 %730
        %732 = vadd.xlane.f32.xlu0 %v675
        %v733 = vpop.xlane.xlu0 %732
        %734 = vadd.xlane.f32.xlu0 %v676
        %v735 = vpop.xlane.xlu0 %734
        %736 = vadd.xlane.f32.xlu0 %v677
        %v737 = vpop.xlane.xlu0 %736
        %738 = vadd.xlane.f32.xlu0 %v678
        %v739 = vpop.xlane.xlu0 %738
        %740 = vadd.xlane.f32.xlu0 %v679
        %v741 = vpop.xlane.xlu0 %740
        %742 = vadd.xlane.f32.xlu0 %v680
        %v743 = vpop.xlane.xlu0 %742
        %744 = vadd.xlane.f32.xlu0 %v681
        %v745 = vpop.xlane.xlu0 %744
        %v746 = vmul.f32 %v683, %v585
        %v747 = vmul.f32 %v685, %v585
        %v748 = vmul.f32 %v687, %v585
        %v749 = vmul.f32 %v689, %v585
        %v750 = vmul.f32 %v691, %v585
        %v751 = vmul.f32 %v693, %v585
        %v752 = vmul.f32 %v695, %v585
        %v753 = vmul.f32 %v697, %v585
        %v754 = vmul.f32 %v699, %v585
        %v755 = vmul.f32 %v701, %v585
        %v756 = vmul.f32 %v703, %v585
        %v757 = vmul.f32 %v705, %v585
        %v758 = vmul.f32 %v707, %v585
        %v759 = vmul.f32 %v709, %v585
        %v760 = vmul.f32 %v711, %v585
        %v761 = vmul.f32 %v713, %v585
        %v762 = vmul.f32 %v715, %v585
        %v763 = vmul.f32 %v717, %v585
        %v764 = vmul.f32 %v719, %v585
        %v765 = vmul.f32 %v721, %v585
        %v766 = vmul.f32 %v723, %v585
        %v767 = vmul.f32 %v725, %v585
        %v768 = vmul.f32 %v727, %v585
        %v769 = vmul.f32 %v729, %v585
        %v770 = vmul.f32 %v731, %v585
        %v771 = vmul.f32 %v733, %v585
        %v772 = vmul.f32 %v735, %v585
        %v773 = vmul.f32 %v737, %v585
        %v774 = vmul.f32 %v739, %v585
        %v775 = vmul.f32 %v741, %v585
        %v776 = vmul.f32 %v743, %v585
        %v777 = vmul.f32 %v745, %v585
        %v778 = vadd.f32 %v746, 1e-05
        %v779 = vadd.f32 %v747, 1e-05
        %v780 = vadd.f32 %v748, 1e-05
        %v781 = vadd.f32 %v749, 1e-05
        %v782 = vadd.f32 %v750, 1e-05
        %v783 = vadd.f32 %v751, 1e-05
        %v784 = vadd.f32 %v752, 1e-05
        %v785 = vadd.f32 %v753, 1e-05
        %v786 = vadd.f32 %v754, 1e-05
        %v787 = vadd.f32 %v755, 1e-05
        %v788 = vadd.f32 %v756, 1e-05
        %v789 = vadd.f32 %v757, 1e-05
        %v790 = vadd.f32 %v758, 1e-05
        %v791 = vadd.f32 %v759, 1e-05
        %v792 = vadd.f32 %v760, 1e-05
        %v793 = vadd.f32 %v761, 1e-05
        %v794 = vadd.f32 %v762, 1e-05
        %v795 = vadd.f32 %v763, 1e-05
        %v796 = vadd.f32 %v764, 1e-05
        %v797 = vadd.f32 %v765, 1e-05
        %v798 = vadd.f32 %v766, 1e-05
        %v799 = vadd.f32 %v767, 1e-05
        %v800 = vadd.f32 %v768, 1e-05
        %v801 = vadd.f32 %v769, 1e-05
        %v802 = vadd.f32 %v770, 1e-05
        %v803 = vadd.f32 %v771, 1e-05
        %v804 = vadd.f32 %v772, 1e-05
        %v805 = vadd.f32 %v773, 1e-05
        %v806 = vadd.f32 %v774, 1e-05
        %v807 = vadd.f32 %v775, 1e-05
        %v808 = vadd.f32 %v776, 1e-05
        %v809 = vadd.f32 %v777, 1e-05
        %v810 = vrsqrt.pop %v778
        %v811 = vmul.f32 %v810, %v778
        %v812 = vmul.f32 %v811, %v810
        %v813 = vmul.f32 0.5, %v812
        %v814 = vsub.f32 1.5, %v813
        %v815 = vmul.f32 %v810, %v814
        %vm816 = vweird.f32 %v778
        %vm817 = vweird.f32 %v810
        %vm818 = vmor %vm816, %vm817
        %v819 = vsel %vm818, %v810, %v815
        %v820 = vrsqrt.pop %v779
        %v821 = vmul.f32 %v820, %v779
        %v822 = vmul.f32 %v821, %v820
        %v823 = vmul.f32 0.5, %v822
        %v824 = vsub.f32 1.5, %v823
        %v825 = vmul.f32 %v820, %v824
        %vm826 = vweird.f32 %v779
        %vm827 = vweird.f32 %v820
        %vm828 = vmor %vm826, %vm827
        %v829 = vsel %vm828, %v820, %v825
        %v830 = vrsqrt.pop %v780
        %v831 = vmul.f32 %v830, %v780
        %v832 = vmul.f32 %v831, %v830
        %v833 = vmul.f32 0.5, %v832
        %v834 = vsub.f32 1.5, %v833
        %v835 = vmul.f32 %v830, %v834
        %vm836 = vweird.f32 %v780
        %vm837 = vweird.f32 %v830
        %vm838 = vmor %vm836, %vm837
        %v839 = vsel %vm838, %v830, %v835
        %v840 = vrsqrt.pop %v781
        %v841 = vmul.f32 %v840, %v781
        %v842 = vmul.f32 %v841, %v840
        %v843 = vmul.f32 0.5, %v842
        %v844 = vsub.f32 1.5, %v843
        %v845 = vmul.f32 %v840, %v844
        %vm846 = vweird.f32 %v781
        %vm847 = vweird.f32 %v840
        %vm848 = vmor %vm846, %vm847
        %v849 = vsel %vm848, %v840, %v845
        %v850 = vrsqrt.pop %v782
        %v851 = vmul.f32 %v850, %v782
        %v852 = vmul.f32 %v851, %v850
        %v853 = vmul.f32 0.5, %v852
        %v854 = vsub.f32 1.5, %v853
        %v855 = vmul.f32 %v850, %v854
        %vm856 = vweird.f32 %v782
        %vm857 = vweird.f32 %v850
        %vm858 = vmor %vm856, %vm857
        %v859 = vsel %vm858, %v850, %v855
        %v860 = vrsqrt.pop %v783
        %v861 = vmul.f32 %v860, %v783
        %v862 = vmul.f32 %v861, %v860
        %v863 = vmul.f32 0.5, %v862
        %v864 = vsub.f32 1.5, %v863
        %v865 = vmul.f32 %v860, %v864
        %vm866 = vweird.f32 %v783
        %vm867 = vweird.f32 %v860
        %vm868 = vmor %vm866, %vm867
        %v869 = vsel %vm868, %v860, %v865
        %v870 = vrsqrt.pop %v784
        %v871 = vmul.f32 %v870, %v784
        %v872 = vmul.f32 %v871, %v870
        %v873 = vmul.f32 0.5, %v872
        %v874 = vsub.f32 1.5, %v873
        %v875 = vmul.f32 %v870, %v874
        %vm876 = vweird.f32 %v784
        %vm877 = vweird.f32 %v870
        %vm878 = vmor %vm876, %vm877
        %v879 = vsel %vm878, %v870, %v875
        %v880 = vrsqrt.pop %v785
        %v881 = vmul.f32 %v880, %v785
        %v882 = vmul.f32 %v881, %v880
        %v883 = vmul.f32 0.5, %v882
        %v884 = vsub.f32 1.5, %v883
        %v885 = vmul.f32 %v880, %v884
        %vm886 = vweird.f32 %v785
        %vm887 = vweird.f32 %v880
        %vm888 = vmor %vm886, %vm887
        %v889 = vsel %vm888, %v880, %v885
        %v890 = vrsqrt.pop %v786
        %v891 = vmul.f32 %v890, %v786
        %v892 = vmul.f32 %v891, %v890
        %v893 = vmul.f32 0.5, %v892
        %v894 = vsub.f32 1.5, %v893
        %v895 = vmul.f32 %v890, %v894
        %vm896 = vweird.f32 %v786
        %vm897 = vweird.f32 %v890
        %vm898 = vmor %vm896, %vm897
        %v899 = vsel %vm898, %v890, %v895
        %v900 = vrsqrt.pop %v787
        %v901 = vmul.f32 %v900, %v787
        %v902 = vmul.f32 %v901, %v900
        %v903 = vmul.f32 0.5, %v902
        %v904 = vsub.f32 1.5, %v903
        %v905 = vmul.f32 %v900, %v904
        %vm906 = vweird.f32 %v787
        %vm907 = vweird.f32 %v900
        %vm908 = vmor %vm906, %vm907
        %v909 = vsel %vm908, %v900, %v905
        %v910 = vrsqrt.pop %v788
        %v911 = vmul.f32 %v910, %v788
        %v912 = vmul.f32 %v911, %v910
        %v913 = vmul.f32 0.5, %v912
        %v914 = vsub.f32 1.5, %v913
        %v915 = vmul.f32 %v910, %v914
        %vm916 = vweird.f32 %v788
        %vm917 = vweird.f32 %v910
        %vm918 = vmor %vm916, %vm917
        %v919 = vsel %vm918, %v910, %v915
        %v920 = vrsqrt.pop %v789
        %v921 = vmul.f32 %v920, %v789
        %v922 = vmul.f32 %v921, %v920
        %v923 = vmul.f32 0.5, %v922
        %v924 = vsub.f32 1.5, %v923
        %v925 = vmul.f32 %v920, %v924
        %vm926 = vweird.f32 %v789
        %vm927 = vweird.f32 %v920
        %vm928 = vmor %vm926, %vm927
        %v929 = vsel %vm928, %v920, %v925
        %v930 = vrsqrt.pop %v790
        %v931 = vmul.f32 %v930, %v790
        %v932 = vmul.f32 %v931, %v930
        %v933 = vmul.f32 0.5, %v932
        %v934 = vsub.f32 1.5, %v933
        %v935 = vmul.f32 %v930, %v934
        %vm936 = vweird.f32 %v790
        %vm937 = vweird.f32 %v930
        %vm938 = vmor %vm936, %vm937
        %v939 = vsel %vm938, %v930, %v935
        %v940 = vrsqrt.pop %v791
        %v941 = vmul.f32 %v940, %v791
        %v942 = vmul.f32 %v941, %v940
        %v943 = vmul.f32 0.5, %v942
        %v944 = vsub.f32 1.5, %v943
        %v945 = vmul.f32 %v940, %v944
        %vm946 = vweird.f32 %v791
        %vm947 = vweird.f32 %v940
        %vm948 = vmor %vm946, %vm947
        %v949 = vsel %vm948, %v940, %v945
        %v950 = vrsqrt.pop %v792
        %v951 = vmul.f32 %v950, %v792
        %v952 = vmul.f32 %v951, %v950
        %v953 = vmul.f32 0.5, %v952
        %v954 = vsub.f32 1.5, %v953
        %v955 = vmul.f32 %v950, %v954
        %vm956 = vweird.f32 %v792
        %vm957 = vweird.f32 %v950
        %vm958 = vmor %vm956, %vm957
        %v959 = vsel %vm958, %v950, %v955
        %v960 = vrsqrt.pop %v793
        %v961 = vmul.f32 %v960, %v793
        %v962 = vmul.f32 %v961, %v960
        %v963 = vmul.f32 0.5, %v962
        %v964 = vsub.f32 1.5, %v963
        %v965 = vmul.f32 %v960, %v964
        %vm966 = vweird.f32 %v793
        %vm967 = vweird.f32 %v960
        %vm968 = vmor %vm966, %vm967
        %v969 = vsel %vm968, %v960, %v965
        %v970 = vrsqrt.pop %v794
        %v971 = vmul.f32 %v970, %v794
        %v972 = vmul.f32 %v971, %v970
        %v973 = vmul.f32 0.5, %v972
        %v974 = vsub.f32 1.5, %v973
        %v975 = vmul.f32 %v970, %v974
        %vm976 = vweird.f32 %v794
        %vm977 = vweird.f32 %v970
        %vm978 = vmor %vm976, %vm977
        %v979 = vsel %vm978, %v970, %v975
        %v980 = vrsqrt.pop %v795
        %v981 = vmul.f32 %v980, %v795
        %v982 = vmul.f32 %v981, %v980
        %v983 = vmul.f32 0.5, %v982
        %v984 = vsub.f32 1.5, %v983
        %v985 = vmul.f32 %v980, %v984
        %vm986 = vweird.f32 %v795
        %vm987 = vweird.f32 %v980
        %vm988 = vmor %vm986, %vm987
        %v989 = vsel %vm988, %v980, %v985
        %v990 = vrsqrt.pop %v796
        %v991 = vmul.f32 %v990, %v796
        %v992 = vmul.f32 %v991, %v990
        %v993 = vmul.f32 0.5, %v992
        %v994 = vsub.f32 1.5, %v993
        %v995 = vmul.f32 %v990, %v994
        %vm996 = vweird.f32 %v796
        %vm997 = vweird.f32 %v990
        %vm998 = vmor %vm996, %vm997
        %v999 = vsel %vm998, %v990, %v995
        %v1000 = vrsqrt.pop %v797
        %v1001 = vmul.f32 %v1000, %v797
        %v1002 = vmul.f32 %v1001, %v1000
        %v1003 = vmul.f32 0.5, %v1002
        %v1004 = vsub.f32 1.5, %v1003
        %v1005 = vmul.f32 %v1000, %v1004
        %vm1006 = vweird.f32 %v797
        %vm1007 = vweird.f32 %v1000
        %vm1008 = vmor %vm1006, %vm1007
        %v1009 = vsel %vm1008, %v1000, %v1005
        %v1010 = vrsqrt.pop %v798
        %v1011 = vmul.f32 %v1010, %v798
        %v1012 = vmul.f32 %v1011, %v1010
        %v1013 = vmul.f32 0.5, %v1012
        %v1014 = vsub.f32 1.5, %v1013
        %v1015 = vmul.f32 %v1010, %v1014
        %vm1016 = vweird.f32 %v798
        %vm1017 = vweird.f32 %v1010
        %vm1018 = vmor %vm1016, %vm1017
        %v1019 = vsel %vm1018, %v1010, %v1015
        %v1020 = vrsqrt.pop %v799
        %v1021 = vmul.f32 %v1020, %v799
        %v1022 = vmul.f32 %v1021, %v1020
        %v1023 = vmul.f32 0.5, %v1022
        %v1024 = vsub.f32 1.5, %v1023
        %v1025 = vmul.f32 %v1020, %v1024
        %vm1026 = vweird.f32 %v799
        %vm1027 = vweird.f32 %v1020
        %vm1028 = vmor %vm1026, %vm1027
        %v1029 = vsel %vm1028, %v1020, %v1025
        %v1030 = vrsqrt.pop %v800
        %v1031 = vmul.f32 %v1030, %v800
        %v1032 = vmul.f32 %v1031, %v1030
        %v1033 = vmul.f32 0.5, %v1032
        %v1034 = vsub.f32 1.5, %v1033
        %v1035 = vmul.f32 %v1030, %v1034
        %vm1036 = vweird.f32 %v800
        %vm1037 = vweird.f32 %v1030
        %vm1038 = vmor %vm1036, %vm1037
        %v1039 = vsel %vm1038, %v1030, %v1035
        %v1040 = vrsqrt.pop %v801
        %v1041 = vmul.f32 %v1040, %v801
        %v1042 = vmul.f32 %v1041, %v1040
        %v1043 = vmul.f32 0.5, %v1042
        %v1044 = vsub.f32 1.5, %v1043
        %v1045 = vmul.f32 %v1040, %v1044
        %vm1046 = vweird.f32 %v801
        %vm1047 = vweird.f32 %v1040
        %vm1048 = vmor %vm1046, %vm1047
        %v1049 = vsel %vm1048, %v1040, %v1045
        %v1050 = vrsqrt.pop %v802
        %v1051 = vmul.f32 %v1050, %v802
        %v1052 = vmul.f32 %v1051, %v1050
        %v1053 = vmul.f32 0.5, %v1052
        %v1054 = vsub.f32 1.5, %v1053
        %v1055 = vmul.f32 %v1050, %v1054
        %vm1056 = vweird.f32 %v802
        %vm1057 = vweird.f32 %v1050
        %vm1058 = vmor %vm1056, %vm1057
        %v1059 = vsel %vm1058, %v1050, %v1055
        %v1060 = vrsqrt.pop %v803
        %v1061 = vmul.f32 %v1060, %v803
        %v1062 = vmul.f32 %v1061, %v1060
        %v1063 = vmul.f32 0.5, %v1062
        %v1064 = vsub.f32 1.5, %v1063
        %v1065 = vmul.f32 %v1060, %v1064
        %vm1066 = vweird.f32 %v803
        %vm1067 = vweird.f32 %v1060
        %vm1068 = vmor %vm1066, %vm1067
        %v1069 = vsel %vm1068, %v1060, %v1065
        %v1070 = vrsqrt.pop %v804
        %v1071 = vmul.f32 %v1070, %v804
        %v1072 = vmul.f32 %v1071, %v1070
        %v1073 = vmul.f32 0.5, %v1072
        %v1074 = vsub.f32 1.5, %v1073
        %v1075 = vmul.f32 %v1070, %v1074
        %vm1076 = vweird.f32 %v804
        %vm1077 = vweird.f32 %v1070
        %vm1078 = vmor %vm1076, %vm1077
        %v1079 = vsel %vm1078, %v1070, %v1075
        %v1080 = vrsqrt.pop %v805
        %v1081 = vmul.f32 %v1080, %v805
        %v1082 = vmul.f32 %v1081, %v1080
        %v1083 = vmul.f32 0.5, %v1082
        %v1084 = vsub.f32 1.5, %v1083
        %v1085 = vmul.f32 %v1080, %v1084
        %vm1086 = vweird.f32 %v805
        %vm1087 = vweird.f32 %v1080
        %vm1088 = vmor %vm1086, %vm1087
        %v1089 = vsel %vm1088, %v1080, %v1085
        %v1090 = vrsqrt.pop %v806
        %v1091 = vmul.f32 %v1090, %v806
        %v1092 = vmul.f32 %v1091, %v1090
        %v1093 = vmul.f32 0.5, %v1092
        %v1094 = vsub.f32 1.5, %v1093
        %v1095 = vmul.f32 %v1090, %v1094
        %vm1096 = vweird.f32 %v806
        %vm1097 = vweird.f32 %v1090
        %vm1098 = vmor %vm1096, %vm1097
        %v1099 = vsel %vm1098, %v1090, %v1095
        %v1100 = vrsqrt.pop %v807
        %v1101 = vmul.f32 %v1100, %v807
        %v1102 = vmul.f32 %v1101, %v1100
        %v1103 = vmul.f32 0.5, %v1102
        %v1104 = vsub.f32 1.5, %v1103
        %v1105 = vmul.f32 %v1100, %v1104
        %vm1106 = vweird.f32 %v807
        %vm1107 = vweird.f32 %v1100
        %vm1108 = vmor %vm1106, %vm1107
        %v1109 = vsel %vm1108, %v1100, %v1105
        %v1110 = vrsqrt.pop %v808
        %v1111 = vmul.f32 %v1110, %v808
        %v1112 = vmul.f32 %v1111, %v1110
        %v1113 = vmul.f32 0.5, %v1112
        %v1114 = vsub.f32 1.5, %v1113
        %v1115 = vmul.f32 %v1110, %v1114
        %vm1116 = vweird.f32 %v808
        %vm1117 = vweird.f32 %v1110
        %vm1118 = vmor %vm1116, %vm1117
        %v1119 = vsel %vm1118, %v1110, %v1115
        %v1120 = vrsqrt.pop %v809
        %v1121 = vmul.f32 %v1120, %v809
        %v1122 = vmul.f32 %v1121, %v1120
        %v1123 = vmul.f32 0.5, %v1122
        %v1124 = vsub.f32 1.5, %v1123
        %v1125 = vmul.f32 %v1120, %v1124
        %vm1126 = vweird.f32 %v809
        %vm1127 = vweird.f32 %v1120
        %vm1128 = vmor %vm1126, %vm1127
        %v1129 = vsel %vm1128, %v1120, %v1125
        %v1130 = vmul.f32 %v618, %v819
        %v1131 = vmul.f32 %v619, %v829
        %v1132 = vmul.f32 %v620, %v839
        %v1133 = vmul.f32 %v621, %v849
        %v1134 = vmul.f32 %v622, %v859
        %v1135 = vmul.f32 %v623, %v869
        %v1136 = vmul.f32 %v624, %v879
        %v1137 = vmul.f32 %v625, %v889
        %v1138 = vmul.f32 %v626, %v899
        %v1139 = vmul.f32 %v627, %v909
        %v1140 = vmul.f32 %v628, %v919
        %v1141 = vmul.f32 %v629, %v929
        %v1142 = vmul.f32 %v630, %v939
        %v1143 = vmul.f32 %v631, %v949
        %v1144 = vmul.f32 %v632, %v959
        %v1145 = vmul.f32 %v633, %v969
        %v1146 = vmul.f32 %v634, %v979
        %v1147 = vmul.f32 %v635, %v989
        %v1148 = vmul.f32 %v636, %v999
        %v1149 = vmul.f32 %v637, %v1009
        %v1150 = vmul.f32 %v638, %v1019
        %v1151 = vmul.f32 %v639, %v1029
        %v1152 = vmul.f32 %v640, %v1039
        %v1153 = vmul.f32 %v641, %v1049
        %v1154 = vmul.f32 %v642, %v1059
        %v1155 = vmul.f32 %v643, %v1069
        %v1156 = vmul.f32 %v644, %v1079
        %v1157 = vmul.f32 %v645, %v1089
        %v1158 = vmul.f32 %v646, %v1099
        %v1159 = vmul.f32 %v647, %v1109
        %v1160 = vmul.f32 %v648, %v1119
        %v1161 = vmul.f32 %v649, %v1129
        %v1162 = vperm.slane %v481, 0
        %v1163 = vmul.f32 %v1130, %v1162
        %v1164 = vmul.f32 %v1131, %v1162
        %v1165 = vmul.f32 %v1132, %v1162
        %v1166 = vmul.f32 %v1133, %v1162
        %v1167 = vmul.f32 %v1134, %v1162
        %v1168 = vmul.f32 %v1135, %v1162
        %v1169 = vmul.f32 %v1136, %v1162
        %v1170 = vmul.f32 %v1137, %v1162
        %v1171 = vmul.f32 %v1138, %v1162
        %v1172 = vmul.f32 %v1139, %v1162
        %v1173 = vmul.f32 %v1140, %v1162
        %v1174 = vmul.f32 %v1141, %v1162
        %v1175 = vmul.f32 %v1142, %v1162
        %v1176 = vmul.f32 %v1143, %v1162
        %v1177 = vmul.f32 %v1144, %v1162
        %v1178 = vmul.f32 %v1145, %v1162
        %v1179 = vmul.f32 %v1146, %v1162
        %v1180 = vmul.f32 %v1147, %v1162
        %v1181 = vmul.f32 %v1148, %v1162
        %v1182 = vmul.f32 %v1149, %v1162
        %v1183 = vmul.f32 %v1150, %v1162
        %v1184 = vmul.f32 %v1151, %v1162
        %v1185 = vmul.f32 %v1152, %v1162
        %v1186 = vmul.f32 %v1153, %v1162
        %v1187 = vmul.f32 %v1154, %v1162
        %v1188 = vmul.f32 %v1155, %v1162
        %v1189 = vmul.f32 %v1156, %v1162
        %v1190 = vmul.f32 %v1157, %v1162
        %v1191 = vmul.f32 %v1158, %v1162
        %v1192 = vmul.f32 %v1159, %v1162
        %v1193 = vmul.f32 %v1160, %v1162
        %v1194 = vmul.f32 %v1161, %v1162
        %v1195 = vperm.slane %v481, 1
        %v1196 = vadd.f32 %v1163, %v1195
        %v1197 = vadd.f32 %v1164, %v1195
        %v1198 = vadd.f32 %v1165, %v1195
        %v1199 = vadd.f32 %v1166, %v1195
        %v1200 = vadd.f32 %v1167, %v1195
        %v1201 = vadd.f32 %v1168, %v1195
        %v1202 = vadd.f32 %v1169, %v1195
        %v1203 = vadd.f32 %v1170, %v1195
        %v1204 = vadd.f32 %v1171, %v1195
        %v1205 = vadd.f32 %v1172, %v1195
        %v1206 = vadd.f32 %v1173, %v1195
        %v1207 = vadd.f32 %v1174, %v1195
        %v1208 = vadd.f32 %v1175, %v1195
        %v1209 = vadd.f32 %v1176, %v1195
        %v1210 = vadd.f32 %v1177, %v1195
        %v1211 = vadd.f32 %v1178, %v1195
        %v1212 = vadd.f32 %v1179, %v1195
        %v1213 = vadd.f32 %v1180, %v1195
        %v1214 = vadd.f32 %v1181, %v1195
        %v1215 = vadd.f32 %v1182, %v1195
        %v1216 = vadd.f32 %v1183, %v1195
        %v1217 = vadd.f32 %v1184, %v1195
        %v1218 = vadd.f32 %v1185, %v1195
        %v1219 = vadd.f32 %v1186, %v1195
        %v1220 = vadd.f32 %v1187, %v1195
        %v1221 = vadd.f32 %v1188, %v1195
        %v1222 = vadd.f32 %v1189, %v1195
        %v1223 = vadd.f32 %v1190, %v1195
        %v1224 = vadd.f32 %v1191, %v1195
        %v1225 = vadd.f32 %v1192, %v1195
        %v1226 = vadd.f32 %v1193, %v1195
        %v1227 = vadd.f32 %v1194, %v1195
        %v1228 = vld [vmem:[#allocation4] sm:$0xff]
        %v1229 = vld [vmem:[#allocation4 + $0x8] sm:$0xff]
        %v1230 = vld [vmem:[#allocation4 + $0x10] sm:$0xff]
        %v1231 = vld [vmem:[#allocation4 + $0x18] sm:$0xff]
        %v1232 = vld [vmem:[#allocation4 + $0x20] sm:$0xff]
        %v1233 = vld [vmem:[#allocation4 + $0x28] sm:$0xff]
        %v1234 = vld [vmem:[#allocation4 + $0x30] sm:$0xff]
        %v1235 = vld [vmem:[#allocation4 + $0x38] sm:$0xff]
        %v1236 = vld [vmem:[#allocation4 + $0x40] sm:$0xff]
        %v1237 = vld [vmem:[#allocation4 + $0x48] sm:$0xff]
        %v1238 = vld [vmem:[#allocation4 + $0x50] sm:$0xff]
        %v1239 = vld [vmem:[#allocation4 + $0x58] sm:$0xff]
        %v1240 = vld [vmem:[#allocation4 + $0x60] sm:$0xff]
        %v1241 = vld [vmem:[#allocation4 + $0x68] sm:$0xff]
        %v1242 = vld [vmem:[#allocation4 + $0x70] sm:$0xff]
        %v1243 = vld [vmem:[#allocation4 + $0x78] sm:$0xff]
        %v1244 = vperm.slane %v481, 2
        %1245 = vmatpush.msra.mxu0 %v1243
        %1246 = vmatpush.msra.mxu0 %v1242
        %1247 = vmatpush.msra.mxu0 %v1241
        %1248 = vmatpush.msra.mxu0 %v1240
        %1249 = vmatpush.msra.mxu0 %v1239
        %1250 = vmatpush.msra.mxu0 %v1238
        %1251 = vmatpush.msra.mxu0 %v1237
        %1252 = vmatpush.msra.mxu0 %v1236
        %1253 = vmatpush.msra.mxu0 %v1235
        %1254 = vmatpush.msra.mxu0 %v1234
        %1255 = vmatpush.msra.mxu0 %v1233
        %1256 = vmatpush.msra.mxu0 %v1232
        %1257 = vmatpush.msra.mxu0 %v1231
        %1258 = vmatpush.msra.mxu0 %v1230
        %1259 = vmatpush.msra.mxu0 %v1229
        %1260 = vmatpush.msra.mxu0 %v1228
        %1261 = vmatmul.f32.gmra.mxu0 %v1196
        %v1262 = vpop.f32.mrf.mxu0
        %v1263 = vadd.f32 %v1244, %v1262
        %1264 = vmatmul.f32.gmra.mxu0 %v1197
        %v1265 = vpop.f32.mrf.mxu0
        %v1266 = vadd.f32 %v1244, %v1265
        %1267 = vmatmul.f32.gmra.mxu0 %v1198
        %v1268 = vpop.f32.mrf.mxu0
        %v1269 = vadd.f32 %v1244, %v1268
        %1270 = vmatmul.f32.gmra.mxu0 %v1199
        %v1271 = vpop.f32.mrf.mxu0
        %v1272 = vadd.f32 %v1244, %v1271
        %1273 = vmatmul.f32.gmra.mxu0 %v1200
        %v1274 = vpop.f32.mrf.mxu0
        %v1275 = vadd.f32 %v1244, %v1274
        %1276 = vmatmul.f32.gmra.mxu0 %v1201
        %v1277 = vpop.f32.mrf.mxu0
        %v1278 = vadd.f32 %v1244, %v1277
        %1279 = vmatmul.f32.gmra.mxu0 %v1202
        %v1280 = vpop.f32.mrf.mxu0
        %v1281 = vadd.f32 %v1244, %v1280
        %1282 = vmatmul.f32.gmra.mxu0 %v1203
        %v1283 = vpop.f32.mrf.mxu0
        %v1284 = vadd.f32 %v1244, %v1283
        %1285 = vmatmul.f32.gmra.mxu0 %v1204
        %v1286 = vpop.f32.mrf.mxu0
        %v1287 = vadd.f32 %v1244, %v1286
        %1288 = vmatmul.f32.gmra.mxu0 %v1205
        %v1289 = vpop.f32.mrf.mxu0
        %v1290 = vadd.f32 %v1244, %v1289
        %1291 = vmatmul.f32.gmra.mxu0 %v1206
        %v1292 = vpop.f32.mrf.mxu0
        %v1293 = vadd.f32 %v1244, %v1292
        %1294 = vmatmul.f32.gmra.mxu0 %v1207
        %v1295 = vpop.f32.mrf.mxu0
        %v1296 = vadd.f32 %v1244, %v1295
        %1297 = vmatmul.f32.gmra.mxu0 %v1208
        %v1298 = vpop.f32.mrf.mxu0
        %v1299 = vadd.f32 %v1244, %v1298
        %1300 = vmatmul.f32.gmra.mxu0 %v1209
        %v1301 = vpop.f32.mrf.mxu0
        %v1302 = vadd.f32 %v1244, %v1301
        %1303 = vmatmul.f32.gmra.mxu0 %v1210
        %v1304 = vpop.f32.mrf.mxu0
        %v1305 = vadd.f32 %v1244, %v1304
        %1306 = vmatmul.f32.gmra.mxu0 %v1211
        %v1307 = vpop.f32.mrf.mxu0
        %v1308 = vadd.f32 %v1244, %v1307
        %1309 = vmatmul.f32.gmra.mxu0 %v1212
        %v1310 = vpop.f32.mrf.mxu0
        %v1311 = vadd.f32 %v1244, %v1310
        %1312 = vmatmul.f32.gmra.mxu0 %v1213
        %v1313 = vpop.f32.mrf.mxu0
        %v1314 = vadd.f32 %v1244, %v1313
        %1315 = vmatmul.f32.gmra.mxu0 %v1214
        %v1316 = vpop.f32.mrf.mxu0
        %v1317 = vadd.f32 %v1244, %v1316
        %1318 = vmatmul.f32.gmra.mxu0 %v1215
        %v1319 = vpop.f32.mrf.mxu0
        %v1320 = vadd.f32 %v1244, %v1319
        %1321 = vmatmul.f32.gmra.mxu0 %v1216
        %v1322 = vpop.f32.mrf.mxu0
        %v1323 = vadd.f32 %v1244, %v1322
        %1324 = vmatmul.f32.gmra.mxu0 %v1217
        %v1325 = vpop.f32.mrf.mxu0
        %v1326 = vadd.f32 %v1244, %v1325
        %1327 = vmatmul.f32.gmra.mxu0 %v1218
        %v1328 = vpop.f32.mrf.mxu0
        %v1329 = vadd.f32 %v1244, %v1328
        %1330 = vmatmul.f32.gmra.mxu0 %v1219
        %v1331 = vpop.f32.mrf.mxu0
        %v1332 = vadd.f32 %v1244, %v1331
        %1333 = vmatmul.f32.gmra.mxu0 %v1220
        %v1334 = vpop.f32.mrf.mxu0
        %v1335 = vadd.f32 %v1244, %v1334
        %1336 = vmatmul.f32.gmra.mxu0 %v1221
        %v1337 = vpop.f32.mrf.mxu0
        %v1338 = vadd.f32 %v1244, %v1337
        %1339 = vmatmul.f32.gmra.mxu0 %v1222
        %v1340 = vpop.f32.mrf.mxu0
        %v1341 = vadd.f32 %v1244, %v1340
        %1342 = vmatmul.f32.gmra.mxu0 %v1223
        %v1343 = vpop.f32.mrf.mxu0
        %v1344 = vadd.f32 %v1244, %v1343
        %1345 = vmatmul.f32.gmra.mxu0 %v1224
        %v1346 = vpop.f32.mrf.mxu0
        %v1347 = vadd.f32 %v1244, %v1346
        %1348 = vmatmul.f32.gmra.mxu0 %v1225
        %v1349 = vpop.f32.mrf.mxu0
        %v1350 = vadd.f32 %v1244, %v1349
        %1351 = vmatmul.f32.gmra.mxu0 %v1226
        %v1352 = vpop.f32.mrf.mxu0
        %v1353 = vadd.f32 %v1244, %v1352
        %1354 = vmatmul.f32.gmra.mxu0 %v1227
        %v1355 = vpop.f32.mrf.mxu0
        %v1356 = vadd.f32 %v1244, %v1355
        %1357 = vdwg.mxu0
        %v1358 = vmax.f32 %v1263, 0.0
        %v1359 = vmax.f32 %v1266, 0.0
        %v1360 = vmax.f32 %v1269, 0.0
        %v1361 = vmax.f32 %v1272, 0.0
        %v1362 = vmax.f32 %v1275, 0.0
        %v1363 = vmax.f32 %v1278, 0.0
        %v1364 = vmax.f32 %v1281, 0.0
        %v1365 = vmax.f32 %v1284, 0.0
        %v1366 = vmax.f32 %v1287, 0.0
        %v1367 = vmax.f32 %v1290, 0.0
        %v1368 = vmax.f32 %v1293, 0.0
        %v1369 = vmax.f32 %v1296, 0.0
        %v1370 = vmax.f32 %v1299, 0.0
        %v1371 = vmax.f32 %v1302, 0.0
        %v1372 = vmax.f32 %v1305, 0.0
        %v1373 = vmax.f32 %v1308, 0.0
        %v1374 = vmax.f32 %v1311, 0.0
        %v1375 = vmax.f32 %v1314, 0.0
        %v1376 = vmax.f32 %v1317, 0.0
        %v1377 = vmax.f32 %v1320, 0.0
        %v1378 = vmax.f32 %v1323, 0.0
        %v1379 = vmax.f32 %v1326, 0.0
        %v1380 = vmax.f32 %v1329, 0.0
        %v1381 = vmax.f32 %v1332, 0.0
        %v1382 = vmax.f32 %v1335, 0.0
        %v1383 = vmax.f32 %v1338, 0.0
        %v1384 = vmax.f32 %v1341, 0.0
        %v1385 = vmax.f32 %v1344, 0.0
        %v1386 = vmax.f32 %v1347, 0.0
        %v1387 = vmax.f32 %v1350, 0.0
        %v1388 = vmax.f32 %v1353, 0.0
        %v1389 = vmax.f32 %v1356, 0.0
        %1390 = vadd.xlane.f32.xlu0 %v1358
        %v1391 = vpop.xlane.xlu0 %1390
        %1392 = vadd.xlane.f32.xlu0 %v1359
        %v1393 = vpop.xlane.xlu0 %1392
        %1394 = vadd.xlane.f32.xlu0 %v1360
        %v1395 = vpop.xlane.xlu0 %1394
        %1396 = vadd.xlane.f32.xlu0 %v1361
        %v1397 = vpop.xlane.xlu0 %1396
        %1398 = vadd.xlane.f32.xlu0 %v1362
        %v1399 = vpop.xlane.xlu0 %1398
        %1400 = vadd.xlane.f32.xlu0 %v1363
        %v1401 = vpop.xlane.xlu0 %1400
        %1402 = vadd.xlane.f32.xlu0 %v1364
        %v1403 = vpop.xlane.xlu0 %1402
        %1404 = vadd.xlane.f32.xlu0 %v1365
        %v1405 = vpop.xlane.xlu0 %1404
        %1406 = vadd.xlane.f32.xlu0 %v1366
        %v1407 = vpop.xlane.xlu0 %1406
        %1408 = vadd.xlane.f32.xlu0 %v1367
        %v1409 = vpop.xlane.xlu0 %1408
        %1410 = vadd.xlane.f32.xlu0 %v1368
        %v1411 = vpop.xlane.xlu0 %1410
        %1412 = vadd.xlane.f32.xlu0 %v1369
        %v1413 = vpop.xlane.xlu0 %1412
        %1414 = vadd.xlane.f32.xlu0 %v1370
        %v1415 = vpop.xlane.xlu0 %1414
        %1416 = vadd.xlane.f32.xlu0 %v1371
        %v1417 = vpop.xlane.xlu0 %1416
        %1418 = vadd.xlane.f32.xlu0 %v1372
        %v1419 = vpop.xlane.xlu0 %1418
        %1420 = vadd.xlane.f32.xlu0 %v1373
        %v1421 = vpop.xlane.xlu0 %1420
        %1422 = vadd.xlane.f32.xlu0 %v1374
        %v1423 = vpop.xlane.xlu0 %1422
        %1424 = vadd.xlane.f32.xlu0 %v1375
        %v1425 = vpop.xlane.xlu0 %1424
        %1426 = vadd.xlane.f32.xlu0 %v1376
        %v1427 = vpop.xlane.xlu0 %1426
        %1428 = vadd.xlane.f32.xlu0 %v1377
        %v1429 = vpop.xlane.xlu0 %1428
        %1430 = vadd.xlane.f32.xlu0 %v1378
        %v1431 = vpop.xlane.xlu0 %1430
        %1432 = vadd.xlane.f32.xlu0 %v1379
        %v1433 = vpop.xlane.xlu0 %1432
        %1434 = vadd.xlane.f32.xlu0 %v1380
        %v1435 = vpop.xlane.xlu0 %1434
        %1436 = vadd.xlane.f32.xlu0 %v1381
        %v1437 = vpop.xlane.xlu0 %1436
        %1438 = vadd.xlane.f32.xlu0 %v1382
        %v1439 = vpop.xlane.xlu0 %1438
        %1440 = vadd.xlane.f32.xlu0 %v1383
        %v1441 = vpop.xlane.xlu0 %1440
        %1442 = vadd.xlane.f32.xlu0 %v1384
        %v1443 = vpop.xlane.xlu0 %1442
        %1444 = vadd.xlane.f32.xlu0 %v1385
        %v1445 = vpop.xlane.xlu0 %1444
        %1446 = vadd.xlane.f32.xlu0 %v1386
        %v1447 = vpop.xlane.xlu0 %1446
        %1448 = vadd.xlane.f32.xlu0 %v1387
        %v1449 = vpop.xlane.xlu0 %1448
        %1450 = vadd.xlane.f32.xlu0 %v1388
        %v1451 = vpop.xlane.xlu0 %1450
        %1452 = vadd.xlane.f32.xlu0 %v1389
        %v1453 = vpop.xlane.xlu0 %1452
        %v1454 = vmul.f32 %v1391, %v585
        %v1455 = vmul.f32 %v1393, %v585
        %v1456 = vmul.f32 %v1395, %v585
        %v1457 = vmul.f32 %v1397, %v585
        %v1458 = vmul.f32 %v1399, %v585
        %v1459 = vmul.f32 %v1401, %v585
        %v1460 = vmul.f32 %v1403, %v585
        %v1461 = vmul.f32 %v1405, %v585
        %v1462 = vmul.f32 %v1407, %v585
        %v1463 = vmul.f32 %v1409, %v585
        %v1464 = vmul.f32 %v1411, %v585
        %v1465 = vmul.f32 %v1413, %v585
        %v1466 = vmul.f32 %v1415, %v585
        %v1467 = vmul.f32 %v1417, %v585
        %v1468 = vmul.f32 %v1419, %v585
        %v1469 = vmul.f32 %v1421, %v585
        %v1470 = vmul.f32 %v1423, %v585
        %v1471 = vmul.f32 %v1425, %v585
        %v1472 = vmul.f32 %v1427, %v585
        %v1473 = vmul.f32 %v1429, %v585
        %v1474 = vmul.f32 %v1431, %v585
        %v1475 = vmul.f32 %v1433, %v585
        %v1476 = vmul.f32 %v1435, %v585
        %v1477 = vmul.f32 %v1437, %v585
        %v1478 = vmul.f32 %v1439, %v585
        %v1479 = vmul.f32 %v1441, %v585
        %v1480 = vmul.f32 %v1443, %v585
        %v1481 = vmul.f32 %v1445, %v585
        %v1482 = vmul.f32 %v1447, %v585
        %v1483 = vmul.f32 %v1449, %v585
        %v1484 = vmul.f32 %v1451, %v585
        %v1485 = vmul.f32 %v1453, %v585
        %v1486 = vsub.f32 %v1358, %v1454
        %v1487 = vsub.f32 %v1359, %v1455
        %v1488 = vsub.f32 %v1360, %v1456
        %v1489 = vsub.f32 %v1361, %v1457
        %v1490 = vsub.f32 %v1362, %v1458
        %v1491 = vsub.f32 %v1363, %v1459
        %v1492 = vsub.f32 %v1364, %v1460
        %v1493 = vsub.f32 %v1365, %v1461
        %v1494 = vsub.f32 %v1366, %v1462
        %v1495 = vsub.f32 %v1367, %v1463
        %v1496 = vsub.f32 %v1368, %v1464
        %v1497 = vsub.f32 %v1369, %v1465
        %v1498 = vsub.f32 %v1370, %v1466
        %v1499 = vsub.f32 %v1371, %v1467
        %v1500 = vsub.f32 %v1372, %v1468
        %v1501 = vsub.f32 %v1373, %v1469
        %v1502 = vsub.f32 %v1374, %v1470
        %v1503 = vsub.f32 %v1375, %v1471
        %v1504 = vsub.f32 %v1376, %v1472
        %v1505 = vsub.f32 %v1377, %v1473
        %v1506 = vsub.f32 %v1378, %v1474
        %v1507 = vsub.f32 %v1379, %v1475
        %v1508 = vsub.f32 %v1380, %v1476
        %v1509 = vsub.f32 %v1381, %v1477
        %v1510 = vsub.f32 %v1382, %v1478
        %v1511 = vsub.f32 %v1383, %v1479
        %v1512 = vsub.f32 %v1384, %v1480
        %v1513 = vsub.f32 %v1385, %v1481
        %v1514 = vsub.f32 %v1386, %v1482
        %v1515 = vsub.f32 %v1387, %v1483
        %v1516 = vsub.f32 %v1388, %v1484
        %v1517 = vsub.f32 %v1389, %v1485
        %v1518 = vmul.f32 %v1486, %v1486
        %v1519 = vmul.f32 %v1487, %v1487
        %v1520 = vmul.f32 %v1488, %v1488
        %v1521 = vmul.f32 %v1489, %v1489
        %v1522 = vmul.f32 %v1490, %v1490
        %v1523 = vmul.f32 %v1491, %v1491
        %v1524 = vmul.f32 %v1492, %v1492
        %v1525 = vmul.f32 %v1493, %v1493
        %v1526 = vmul.f32 %v1494, %v1494
        %v1527 = vmul.f32 %v1495, %v1495
        %v1528 = vmul.f32 %v1496, %v1496
        %v1529 = vmul.f32 %v1497, %v1497
        %v1530 = vmul.f32 %v1498, %v1498
        %v1531 = vmul.f32 %v1499, %v1499
        %v1532 = vmul.f32 %v1500, %v1500
        %v1533 = vmul.f32 %v1501, %v1501
        %v1534 = vmul.f32 %v1502, %v1502
        %v1535 = vmul.f32 %v1503, %v1503
        %v1536 = vmul.f32 %v1504, %v1504
        %v1537 = vmul.f32 %v1505, %v1505
        %v1538 = vmul.f32 %v1506, %v1506
        %v1539 = vmul.f32 %v1507, %v1507
        %v1540 = vmul.f32 %v1508, %v1508
        %v1541 = vmul.f32 %v1509, %v1509
        %v1542 = vmul.f32 %v1510, %v1510
        %v1543 = vmul.f32 %v1511, %v1511
        %v1544 = vmul.f32 %v1512, %v1512
        %v1545 = vmul.f32 %v1513, %v1513
        %v1546 = vmul.f32 %v1514, %v1514
        %v1547 = vmul.f32 %v1515, %v1515
        %v1548 = vmul.f32 %v1516, %v1516
        %v1549 = vmul.f32 %v1517, %v1517
        %1550 = vadd.xlane.f32.xlu0 %v1518
        %v1551 = vpop.xlane.xlu0 %1550
        %1552 = vadd.xlane.f32.xlu0 %v1519
        %v1553 = vpop.xlane.xlu0 %1552
        %1554 = vadd.xlane.f32.xlu0 %v1520
        %v1555 = vpop.xlane.xlu0 %1554
        %1556 = vadd.xlane.f32.xlu0 %v1521
        %v1557 = vpop.xlane.xlu0 %1556
        %1558 = vadd.xlane.f32.xlu0 %v1522
        %v1559 = vpop.xlane.xlu0 %1558
        %1560 = vadd.xlane.f32.xlu0 %v1523
        %v1561 = vpop.xlane.xlu0 %1560
        %1562 = vadd.xlane.f32.xlu0 %v1524
        %v1563 = vpop.xlane.xlu0 %1562
        %1564 = vadd.xlane.f32.xlu0 %v1525
        %v1565 = vpop.xlane.xlu0 %1564
        %1566 = vadd.xlane.f32.xlu0 %v1526
        %v1567 = vpop.xlane.xlu0 %1566
        %1568 = vadd.xlane.f32.xlu0 %v1527
        %v1569 = vpop.xlane.xlu0 %1568
        %1570 = vadd.xlane.f32.xlu0 %v1528
        %v1571 = vpop.xlane.xlu0 %1570
        %1572 = vadd.xlane.f32.xlu0 %v1529
        %v1573 = vpop.xlane.xlu0 %1572
        %1574 = vadd.xlane.f32.xlu0 %v1530
        %v1575 = vpop.xlane.xlu0 %1574
        %1576 = vadd.xlane.f32.xlu0 %v1531
        %v1577 = vpop.xlane.xlu0 %1576
        %1578 = vadd.xlane.f32.xlu0 %v1532
        %v1579 = vpop.xlane.xlu0 %1578
        %1580 = vadd.xlane.f32.xlu0 %v1533
        %v1581 = vpop.xlane.xlu0 %1580
        %1582 = vadd.xlane.f32.xlu0 %v1534
        %v1583 = vpop.xlane.xlu0 %1582
        %1584 = vadd.xlane.f32.xlu0 %v1535
        %v1585 = vpop.xlane.xlu0 %1584
        %1586 = vadd.xlane.f32.xlu0 %v1536
        %v1587 = vpop.xlane.xlu0 %1586
        %1588 = vadd.xlane.f32.xlu0 %v1537
        %v1589 = vpop.xlane.xlu0 %1588
        %1590 = vadd.xlane.f32.xlu0 %v1538
        %v1591 = vpop.xlane.xlu0 %1590
        %1592 = vadd.xlane.f32.xlu0 %v1539
        %v1593 = vpop.xlane.xlu0 %1592
        %1594 = vadd.xlane.f32.xlu0 %v1540
        %v1595 = vpop.xlane.xlu0 %1594
        %1596 = vadd.xlane.f32.xlu0 %v1541
        %v1597 = vpop.xlane.xlu0 %1596
        %1598 = vadd.xlane.f32.xlu0 %v1542
        %v1599 = vpop.xlane.xlu0 %1598
        %1600 = vadd.xlane.f32.xlu0 %v1543
        %v1601 = vpop.xlane.xlu0 %1600
        %1602 = vadd.xlane.f32.xlu0 %v1544
        %v1603 = vpop.xlane.xlu0 %1602
        %1604 = vadd.xlane.f32.xlu0 %v1545
        %v1605 = vpop.xlane.xlu0 %1604
        %1606 = vadd.xlane.f32.xlu0 %v1546
        %v1607 = vpop.xlane.xlu0 %1606
        %1608 = vadd.xlane.f32.xlu0 %v1547
        %v1609 = vpop.xlane.xlu0 %1608
        %1610 = vadd.xlane.f32.xlu0 %v1548
        %v1611 = vpop.xlane.xlu0 %1610
        %1612 = vadd.xlane.f32.xlu0 %v1549
        %v1613 = vpop.xlane.xlu0 %1612
        %v1614 = vmul.f32 %v1551, %v585
        %v1615 = vmul.f32 %v1553, %v585
        %v1616 = vmul.f32 %v1555, %v585
        %v1617 = vmul.f32 %v1557, %v585
        %v1618 = vmul.f32 %v1559, %v585
        %v1619 = vmul.f32 %v1561, %v585
        %v1620 = vmul.f32 %v1563, %v585
        %v1621 = vmul.f32 %v1565, %v585
        %v1622 = vmul.f32 %v1567, %v585
        %v1623 = vmul.f32 %v1569, %v585
        %v1624 = vmul.f32 %v1571, %v585
        %v1625 = vmul.f32 %v1573, %v585
        %v1626 = vmul.f32 %v1575, %v585
        %v1627 = vmul.f32 %v1577, %v585
        %v1628 = vmul.f32 %v1579, %v585
        %v1629 = vmul.f32 %v1581, %v585
        %v1630 = vmul.f32 %v1583, %v585
        %v1631 = vmul.f32 %v1585, %v585
        %v1632 = vmul.f32 %v1587, %v585
        %v1633 = vmul.f32 %v1589, %v585
        %v1634 = vmul.f32 %v1591, %v585
        %v1635 = vmul.f32 %v1593, %v585
        %v1636 = vmul.f32 %v1595, %v585
        %v1637 = vmul.f32 %v1597, %v585
        %v1638 = vmul.f32 %v1599, %v585
        %v1639 = vmul.f32 %v1601, %v585
        %v1640 = vmul.f32 %v1603, %v585
        %v1641 = vmul.f32 %v1605, %v585
        %v1642 = vmul.f32 %v1607, %v585
        %v1643 = vmul.f32 %v1609, %v585
        %v1644 = vmul.f32 %v1611, %v585
        %v1645 = vmul.f32 %v1613, %v585
        %v1646 = vadd.f32 %v1614, 1e-05
        %v1647 = vadd.f32 %v1615, 1e-05
        %v1648 = vadd.f32 %v1616, 1e-05
        %v1649 = vadd.f32 %v1617, 1e-05
        %v1650 = vadd.f32 %v1618, 1e-05
        %v1651 = vadd.f32 %v1619, 1e-05
        %v1652 = vadd.f32 %v1620, 1e-05
        %v1653 = vadd.f32 %v1621, 1e-05
        %v1654 = vadd.f32 %v1622, 1e-05
        %v1655 = vadd.f32 %v1623, 1e-05
        %v1656 = vadd.f32 %v1624, 1e-05
        %v1657 = vadd.f32 %v1625, 1e-05
        %v1658 = vadd.f32 %v1626, 1e-05
        %v1659 = vadd.f32 %v1627, 1e-05
        %v1660 = vadd.f32 %v1628, 1e-05
        %v1661 = vadd.f32 %v1629, 1e-05
        %v1662 = vadd.f32 %v1630, 1e-05
        %v1663 = vadd.f32 %v1631, 1e-05
        %v1664 = vadd.f32 %v1632, 1e-05
        %v1665 = vadd.f32 %v1633, 1e-05
        %v1666 = vadd.f32 %v1634, 1e-05
        %v1667 = vadd.f32 %v1635, 1e-05
        %v1668 = vadd.f32 %v1636, 1e-05
        %v1669 = vadd.f32 %v1637, 1e-05
        %v1670 = vadd.f32 %v1638, 1e-05
        %v1671 = vadd.f32 %v1639, 1e-05
        %v1672 = vadd.f32 %v1640, 1e-05
        %v1673 = vadd.f32 %v1641, 1e-05
        %v1674 = vadd.f32 %v1642, 1e-05
        %v1675 = vadd.f32 %v1643, 1e-05
        %v1676 = vadd.f32 %v1644, 1e-05
        %v1677 = vadd.f32 %v1645, 1e-05
        %v1678 = vrsqrt.pop %v1646
        %v1679 = vmul.f32 %v1678, %v1646
        %v1680 = vmul.f32 %v1679, %v1678
        %v1681 = vmul.f32 0.5, %v1680
        %v1682 = vsub.f32 1.5, %v1681
        %v1683 = vmul.f32 %v1678, %v1682
        %vm1684 = vweird.f32 %v1646
        %vm1685 = vweird.f32 %v1678
        %vm1686 = vmor %vm1684, %vm1685
        %v1687 = vsel %vm1686, %v1678, %v1683
        %v1688 = vrsqrt.pop %v1647
        %v1689 = vmul.f32 %v1688, %v1647
        %v1690 = vmul.f32 %v1689, %v1688
        %v1691 = vmul.f32 0.5, %v1690
        %v1692 = vsub.f32 1.5, %v1691
        %v1693 = vmul.f32 %v1688, %v1692
        %vm1694 = vweird.f32 %v1647
        %vm1695 = vweird.f32 %v1688
        %vm1696 = vmor %vm1694, %vm1695
        %v1697 = vsel %vm1696, %v1688, %v1693
        %v1698 = vrsqrt.pop %v1648
        %v1699 = vmul.f32 %v1698, %v1648
        %v1700 = vmul.f32 %v1699, %v1698
        %v1701 = vmul.f32 0.5, %v1700
        %v1702 = vsub.f32 1.5, %v1701
        %v1703 = vmul.f32 %v1698, %v1702
        %vm1704 = vweird.f32 %v1648
        %vm1705 = vweird.f32 %v1698
        %vm1706 = vmor %vm1704, %vm1705
        %v1707 = vsel %vm1706, %v1698, %v1703
        %v1708 = vrsqrt.pop %v1649
        %v1709 = vmul.f32 %v1708, %v1649
        %v1710 = vmul.f32 %v1709, %v1708
        %v1711 = vmul.f32 0.5, %v1710
        %v1712 = vsub.f32 1.5, %v1711
        %v1713 = vmul.f32 %v1708, %v1712
        %vm1714 = vweird.f32 %v1649
        %vm1715 = vweird.f32 %v1708
        %vm1716 = vmor %vm1714, %vm1715
        %v1717 = vsel %vm1716, %v1708, %v1713
        %v1718 = vrsqrt.pop %v1650
        %v1719 = vmul.f32 %v1718, %v1650
        %v1720 = vmul.f32 %v1719, %v1718
        %v1721 = vmul.f32 0.5, %v1720
        %v1722 = vsub.f32 1.5, %v1721
        %v1723 = vmul.f32 %v1718, %v1722
        %vm1724 = vweird.f32 %v1650
        %vm1725 = vweird.f32 %v1718
        %vm1726 = vmor %vm1724, %vm1725
        %v1727 = vsel %vm1726, %v1718, %v1723
        %v1728 = vrsqrt.pop %v1651
        %v1729 = vmul.f32 %v1728, %v1651
        %v1730 = vmul.f32 %v1729, %v1728
        %v1731 = vmul.f32 0.5, %v1730
        %v1732 = vsub.f32 1.5, %v1731
        %v1733 = vmul.f32 %v1728, %v1732
        %vm1734 = vweird.f32 %v1651
        %vm1735 = vweird.f32 %v1728
        %vm1736 = vmor %vm1734, %vm1735
        %v1737 = vsel %vm1736, %v1728, %v1733
        %v1738 = vrsqrt.pop %v1652
        %v1739 = vmul.f32 %v1738, %v1652
        %v1740 = vmul.f32 %v1739, %v1738
        %v1741 = vmul.f32 0.5, %v1740
        %v1742 = vsub.f32 1.5, %v1741
        %v1743 = vmul.f32 %v1738, %v1742
        %vm1744 = vweird.f32 %v1652
        %vm1745 = vweird.f32 %v1738
        %vm1746 = vmor %vm1744, %vm1745
        %v1747 = vsel %vm1746, %v1738, %v1743
        %v1748 = vrsqrt.pop %v1653
        %v1749 = vmul.f32 %v1748, %v1653
        %v1750 = vmul.f32 %v1749, %v1748
        %v1751 = vmul.f32 0.5, %v1750
        %v1752 = vsub.f32 1.5, %v1751
        %v1753 = vmul.f32 %v1748, %v1752
        %vm1754 = vweird.f32 %v1653
        %vm1755 = vweird.f32 %v1748
        %vm1756 = vmor %vm1754, %vm1755
        %v1757 = vsel %vm1756, %v1748, %v1753
        %v1758 = vrsqrt.pop %v1654
        %v1759 = vmul.f32 %v1758, %v1654
        %v1760 = vmul.f32 %v1759, %v1758
        %v1761 = vmul.f32 0.5, %v1760
        %v1762 = vsub.f32 1.5, %v1761
        %v1763 = vmul.f32 %v1758, %v1762
        %vm1764 = vweird.f32 %v1654
        %vm1765 = vweird.f32 %v1758
        %vm1766 = vmor %vm1764, %vm1765
        %v1767 = vsel %vm1766, %v1758, %v1763
        %v1768 = vrsqrt.pop %v1655
        %v1769 = vmul.f32 %v1768, %v1655
        %v1770 = vmul.f32 %v1769, %v1768
        %v1771 = vmul.f32 0.5, %v1770
        %v1772 = vsub.f32 1.5, %v1771
        %v1773 = vmul.f32 %v1768, %v1772
        %vm1774 = vweird.f32 %v1655
        %vm1775 = vweird.f32 %v1768
        %vm1776 = vmor %vm1774, %vm1775
        %v1777 = vsel %vm1776, %v1768, %v1773
        %v1778 = vrsqrt.pop %v1656
        %v1779 = vmul.f32 %v1778, %v1656
        %v1780 = vmul.f32 %v1779, %v1778
        %v1781 = vmul.f32 0.5, %v1780
        %v1782 = vsub.f32 1.5, %v1781
        %v1783 = vmul.f32 %v1778, %v1782
        %vm1784 = vweird.f32 %v1656
        %vm1785 = vweird.f32 %v1778
        %vm1786 = vmor %vm1784, %vm1785
        %v1787 = vsel %vm1786, %v1778, %v1783
        %v1788 = vrsqrt.pop %v1657
        %v1789 = vmul.f32 %v1788, %v1657
        %v1790 = vmul.f32 %v1789, %v1788
        %v1791 = vmul.f32 0.5, %v1790
        %v1792 = vsub.f32 1.5, %v1791
        %v1793 = vmul.f32 %v1788, %v1792
        %vm1794 = vweird.f32 %v1657
        %vm1795 = vweird.f32 %v1788
        %vm1796 = vmor %vm1794, %vm1795
        %v1797 = vsel %vm1796, %v1788, %v1793
        %v1798 = vrsqrt.pop %v1658
        %v1799 = vmul.f32 %v1798, %v1658
        %v1800 = vmul.f32 %v1799, %v1798
        %v1801 = vmul.f32 0.5, %v1800
        %v1802 = vsub.f32 1.5, %v1801
        %v1803 = vmul.f32 %v1798, %v1802
        %vm1804 = vweird.f32 %v1658
        %vm1805 = vweird.f32 %v1798
        %vm1806 = vmor %vm1804, %vm1805
        %v1807 = vsel %vm1806, %v1798, %v1803
        %v1808 = vrsqrt.pop %v1659
        %v1809 = vmul.f32 %v1808, %v1659
        %v1810 = vmul.f32 %v1809, %v1808
        %v1811 = vmul.f32 0.5, %v1810
        %v1812 = vsub.f32 1.5, %v1811
        %v1813 = vmul.f32 %v1808, %v1812
        %vm1814 = vweird.f32 %v1659
        %vm1815 = vweird.f32 %v1808
        %vm1816 = vmor %vm1814, %vm1815
        %v1817 = vsel %vm1816, %v1808, %v1813
        %v1818 = vrsqrt.pop %v1660
        %v1819 = vmul.f32 %v1818, %v1660
        %v1820 = vmul.f32 %v1819, %v1818
        %v1821 = vmul.f32 0.5, %v1820
        %v1822 = vsub.f32 1.5, %v1821
        %v1823 = vmul.f32 %v1818, %v1822
        %vm1824 = vweird.f32 %v1660
        %vm1825 = vweird.f32 %v1818
        %vm1826 = vmor %vm1824, %vm1825
        %v1827 = vsel %vm1826, %v1818, %v1823
        %v1828 = vrsqrt.pop %v1661
        %v1829 = vmul.f32 %v1828, %v1661
        %v1830 = vmul.f32 %v1829, %v1828
        %v1831 = vmul.f32 0.5, %v1830
        %v1832 = vsub.f32 1.5, %v1831
        %v1833 = vmul.f32 %v1828, %v1832
        %vm1834 = vweird.f32 %v1661
        %vm1835 = vweird.f32 %v1828
        %vm1836 = vmor %vm1834, %vm1835
        %v1837 = vsel %vm1836, %v1828, %v1833
        %v1838 = vrsqrt.pop %v1662
        %v1839 = vmul.f32 %v1838, %v1662
        %v1840 = vmul.f32 %v1839, %v1838
        %v1841 = vmul.f32 0.5, %v1840
        %v1842 = vsub.f32 1.5, %v1841
        %v1843 = vmul.f32 %v1838, %v1842
        %vm1844 = vweird.f32 %v1662
        %vm1845 = vweird.f32 %v1838
        %vm1846 = vmor %vm1844, %vm1845
        %v1847 = vsel %vm1846, %v1838, %v1843
        %v1848 = vrsqrt.pop %v1663
        %v1849 = vmul.f32 %v1848, %v1663
        %v1850 = vmul.f32 %v1849, %v1848
        %v1851 = vmul.f32 0.5, %v1850
        %v1852 = vsub.f32 1.5, %v1851
        %v1853 = vmul.f32 %v1848, %v1852
        %vm1854 = vweird.f32 %v1663
        %vm1855 = vweird.f32 %v1848
        %vm1856 = vmor %vm1854, %vm1855
        %v1857 = vsel %vm1856, %v1848, %v1853
        %v1858 = vrsqrt.pop %v1664
        %v1859 = vmul.f32 %v1858, %v1664
        %v1860 = vmul.f32 %v1859, %v1858
        %v1861 = vmul.f32 0.5, %v1860
        %v1862 = vsub.f32 1.5, %v1861
        %v1863 = vmul.f32 %v1858, %v1862
        %vm1864 = vweird.f32 %v1664
        %vm1865 = vweird.f32 %v1858
        %vm1866 = vmor %vm1864, %vm1865
        %v1867 = vsel %vm1866, %v1858, %v1863
        %v1868 = vrsqrt.pop %v1665
        %v1869 = vmul.f32 %v1868, %v1665
        %v1870 = vmul.f32 %v1869, %v1868
        %v1871 = vmul.f32 0.5, %v1870
        %v1872 = vsub.f32 1.5, %v1871
        %v1873 = vmul.f32 %v1868, %v1872
        %vm1874 = vweird.f32 %v1665
        %vm1875 = vweird.f32 %v1868
        %vm1876 = vmor %vm1874, %vm1875
        %v1877 = vsel %vm1876, %v1868, %v1873
        %v1878 = vrsqrt.pop %v1666
        %v1879 = vmul.f32 %v1878, %v1666
        %v1880 = vmul.f32 %v1879, %v1878
        %v1881 = vmul.f32 0.5, %v1880
        %v1882 = vsub.f32 1.5, %v1881
        %v1883 = vmul.f32 %v1878, %v1882
        %vm1884 = vweird.f32 %v1666
        %vm1885 = vweird.f32 %v1878
        %vm1886 = vmor %vm1884, %vm1885
        %v1887 = vsel %vm1886, %v1878, %v1883
        %v1888 = vrsqrt.pop %v1667
        %v1889 = vmul.f32 %v1888, %v1667
        %v1890 = vmul.f32 %v1889, %v1888
        %v1891 = vmul.f32 0.5, %v1890
        %v1892 = vsub.f32 1.5, %v1891
        %v1893 = vmul.f32 %v1888, %v1892
        %vm1894 = vweird.f32 %v1667
        %vm1895 = vweird.f32 %v1888
        %vm1896 = vmor %vm1894, %vm1895
        %v1897 = vsel %vm1896, %v1888, %v1893
        %v1898 = vrsqrt.pop %v1668
        %v1899 = vmul.f32 %v1898, %v1668
        %v1900 = vmul.f32 %v1899, %v1898
        %v1901 = vmul.f32 0.5, %v1900
        %v1902 = vsub.f32 1.5, %v1901
        %v1903 = vmul.f32 %v1898, %v1902
        %vm1904 = vweird.f32 %v1668
        %vm1905 = vweird.f32 %v1898
        %vm1906 = vmor %vm1904, %vm1905
        %v1907 = vsel %vm1906, %v1898, %v1903
        %v1908 = vrsqrt.pop %v1669
        %v1909 = vmul.f32 %v1908, %v1669
        %v1910 = vmul.f32 %v1909, %v1908
        %v1911 = vmul.f32 0.5, %v1910
        %v1912 = vsub.f32 1.5, %v1911
        %v1913 = vmul.f32 %v1908, %v1912
        %vm1914 = vweird.f32 %v1669
        %vm1915 = vweird.f32 %v1908
        %vm1916 = vmor %vm1914, %vm1915
        %v1917 = vsel %vm1916, %v1908, %v1913
        %v1918 = vrsqrt.pop %v1670
        %v1919 = vmul.f32 %v1918, %v1670
        %v1920 = vmul.f32 %v1919, %v1918
        %v1921 = vmul.f32 0.5, %v1920
        %v1922 = vsub.f32 1.5, %v1921
        %v1923 = vmul.f32 %v1918, %v1922
        %vm1924 = vweird.f32 %v1670
        %vm1925 = vweird.f32 %v1918
        %vm1926 = vmor %vm1924, %vm1925
        %v1927 = vsel %vm1926, %v1918, %v1923
        %v1928 = vrsqrt.pop %v1671
        %v1929 = vmul.f32 %v1928, %v1671
        %v1930 = vmul.f32 %v1929, %v1928
        %v1931 = vmul.f32 0.5, %v1930
        %v1932 = vsub.f32 1.5, %v1931
        %v1933 = vmul.f32 %v1928, %v1932
        %vm1934 = vweird.f32 %v1671
        %vm1935 = vweird.f32 %v1928
        %vm1936 = vmor %vm1934, %vm1935
        %v1937 = vsel %vm1936, %v1928, %v1933
        %v1938 = vrsqrt.pop %v1672
        %v1939 = vmul.f32 %v1938, %v1672
        %v1940 = vmul.f32 %v1939, %v1938
        %v1941 = vmul.f32 0.5, %v1940
        %v1942 = vsub.f32 1.5, %v1941
        %v1943 = vmul.f32 %v1938, %v1942
        %vm1944 = vweird.f32 %v1672
        %vm1945 = vweird.f32 %v1938
        %vm1946 = vmor %vm1944, %vm1945
        %v1947 = vsel %vm1946, %v1938, %v1943
        %v1948 = vrsqrt.pop %v1673
        %v1949 = vmul.f32 %v1948, %v1673
        %v1950 = vmul.f32 %v1949, %v1948
        %v1951 = vmul.f32 0.5, %v1950
        %v1952 = vsub.f32 1.5, %v1951
        %v1953 = vmul.f32 %v1948, %v1952
        %vm1954 = vweird.f32 %v1673
        %vm1955 = vweird.f32 %v1948
        %vm1956 = vmor %vm1954, %vm1955
        %v1957 = vsel %vm1956, %v1948, %v1953
        %v1958 = vrsqrt.pop %v1674
        %v1959 = vmul.f32 %v1958, %v1674
        %v1960 = vmul.f32 %v1959, %v1958
        %v1961 = vmul.f32 0.5, %v1960
        %v1962 = vsub.f32 1.5, %v1961
        %v1963 = vmul.f32 %v1958, %v1962
        %vm1964 = vweird.f32 %v1674
        %vm1965 = vweird.f32 %v1958
        %vm1966 = vmor %vm1964, %vm1965
        %v1967 = vsel %vm1966, %v1958, %v1963
        %v1968 = vrsqrt.pop %v1675
        %v1969 = vmul.f32 %v1968, %v1675
        %v1970 = vmul.f32 %v1969, %v1968
        %v1971 = vmul.f32 0.5, %v1970
        %v1972 = vsub.f32 1.5, %v1971
        %v1973 = vmul.f32 %v1968, %v1972
        %vm1974 = vweird.f32 %v1675
        %vm1975 = vweird.f32 %v1968
        %vm1976 = vmor %vm1974, %vm1975
        %v1977 = vsel %vm1976, %v1968, %v1973
        %v1978 = vrsqrt.pop %v1676
        %v1979 = vmul.f32 %v1978, %v1676
        %v1980 = vmul.f32 %v1979, %v1978
        %v1981 = vmul.f32 0.5, %v1980
        %v1982 = vsub.f32 1.5, %v1981
        %v1983 = vmul.f32 %v1978, %v1982
        %vm1984 = vweird.f32 %v1676
        %vm1985 = vweird.f32 %v1978
        %vm1986 = vmor %vm1984, %vm1985
        %v1987 = vsel %vm1986, %v1978, %v1983
        %v1988 = vrsqrt.pop %v1677
        %v1989 = vmul.f32 %v1988, %v1677
        %v1990 = vmul.f32 %v1989, %v1988
        %v1991 = vmul.f32 0.5, %v1990
        %v1992 = vsub.f32 1.5, %v1991
        %v1993 = vmul.f32 %v1988, %v1992
        %vm1994 = vweird.f32 %v1677
        %vm1995 = vweird.f32 %v1988
        %vm1996 = vmor %vm1994, %vm1995
        %v1997 = vsel %vm1996, %v1988, %v1993
        %v1998 = vmul.f32 %v1486, %v1687
        %v1999 = vmul.f32 %v1487, %v1697
        %v2000 = vmul.f32 %v1488, %v1707
        %v2001 = vmul.f32 %v1489, %v1717
        %v2002 = vmul.f32 %v1490, %v1727
        %v2003 = vmul.f32 %v1491, %v1737
        %v2004 = vmul.f32 %v1492, %v1747
        %v2005 = vmul.f32 %v1493, %v1757
        %v2006 = vmul.f32 %v1494, %v1767
        %v2007 = vmul.f32 %v1495, %v1777
        %v2008 = vmul.f32 %v1496, %v1787
        %v2009 = vmul.f32 %v1497, %v1797
        %v2010 = vmul.f32 %v1498, %v1807
        %v2011 = vmul.f32 %v1499, %v1817
        %v2012 = vmul.f32 %v1500, %v1827
        %v2013 = vmul.f32 %v1501, %v1837
        %v2014 = vmul.f32 %v1502, %v1847
        %v2015 = vmul.f32 %v1503, %v1857
        %v2016 = vmul.f32 %v1504, %v1867
        %v2017 = vmul.f32 %v1505, %v1877
        %v2018 = vmul.f32 %v1506, %v1887
        %v2019 = vmul.f32 %v1507, %v1897
        %v2020 = vmul.f32 %v1508, %v1907
        %v2021 = vmul.f32 %v1509, %v1917
        %v2022 = vmul.f32 %v1510, %v1927
        %v2023 = vmul.f32 %v1511, %v1937
        %v2024 = vmul.f32 %v1512, %v1947
        %v2025 = vmul.f32 %v1513, %v1957
        %v2026 = vmul.f32 %v1514, %v1967
        %v2027 = vmul.f32 %v1515, %v1977
        %v2028 = vmul.f32 %v1516, %v1987
        %v2029 = vmul.f32 %v1517, %v1997
        %v2030 = vperm.slane %v481, 3
        %v2031 = vmul.f32 %v1998, %v2030
        %v2032 = vmul.f32 %v1999, %v2030
        %v2033 = vmul.f32 %v2000, %v2030
        %v2034 = vmul.f32 %v2001, %v2030
        %v2035 = vmul.f32 %v2002, %v2030
        %v2036 = vmul.f32 %v2003, %v2030
        %v2037 = vmul.f32 %v2004, %v2030
        %v2038 = vmul.f32 %v2005, %v2030
        %v2039 = vmul.f32 %v2006, %v2030
        %v2040 = vmul.f32 %v2007, %v2030
        %v2041 = vmul.f32 %v2008, %v2030
        %v2042 = vmul.f32 %v2009, %v2030
        %v2043 = vmul.f32 %v2010, %v2030
        %v2044 = vmul.f32 %v2011, %v2030
        %v2045 = vmul.f32 %v2012, %v2030
        %v2046 = vmul.f32 %v2013, %v2030
        %v2047 = vmul.f32 %v2014, %v2030
        %v2048 = vmul.f32 %v2015, %v2030
        %v2049 = vmul.f32 %v2016, %v2030
        %v2050 = vmul.f32 %v2017, %v2030
        %v2051 = vmul.f32 %v2018, %v2030
        %v2052 = vmul.f32 %v2019, %v2030
        %v2053 = vmul.f32 %v2020, %v2030
        %v2054 = vmul.f32 %v2021, %v2030
        %v2055 = vmul.f32 %v2022, %v2030
        %v2056 = vmul.f32 %v2023, %v2030
        %v2057 = vmul.f32 %v2024, %v2030
        %v2058 = vmul.f32 %v2025, %v2030
        %v2059 = vmul.f32 %v2026, %v2030
        %v2060 = vmul.f32 %v2027, %v2030
        %v2061 = vmul.f32 %v2028, %v2030
        %v2062 = vmul.f32 %v2029, %v2030
        %v2063 = vperm.slane %v481, 4
        %v2064 = vadd.f32 %v2031, %v2063
        %v2065 = vadd.f32 %v2032, %v2063
        %v2066 = vadd.f32 %v2033, %v2063
        %v2067 = vadd.f32 %v2034, %v2063
        %v2068 = vadd.f32 %v2035, %v2063
        %v2069 = vadd.f32 %v2036, %v2063
        %v2070 = vadd.f32 %v2037, %v2063
        %v2071 = vadd.f32 %v2038, %v2063
        %v2072 = vadd.f32 %v2039, %v2063
        %v2073 = vadd.f32 %v2040, %v2063
        %v2074 = vadd.f32 %v2041, %v2063
        %v2075 = vadd.f32 %v2042, %v2063
        %v2076 = vadd.f32 %v2043, %v2063
        %v2077 = vadd.f32 %v2044, %v2063
        %v2078 = vadd.f32 %v2045, %v2063
        %v2079 = vadd.f32 %v2046, %v2063
        %v2080 = vadd.f32 %v2047, %v2063
        %v2081 = vadd.f32 %v2048, %v2063
        %v2082 = vadd.f32 %v2049, %v2063
        %v2083 = vadd.f32 %v2050, %v2063
        %v2084 = vadd.f32 %v2051, %v2063
        %v2085 = vadd.f32 %v2052, %v2063
        %v2086 = vadd.f32 %v2053, %v2063
        %v2087 = vadd.f32 %v2054, %v2063
        %v2088 = vadd.f32 %v2055, %v2063
        %v2089 = vadd.f32 %v2056, %v2063
        %v2090 = vadd.f32 %v2057, %v2063
        %v2091 = vadd.f32 %v2058, %v2063
        %v2092 = vadd.f32 %v2059, %v2063
        %v2093 = vadd.f32 %v2060, %v2063
        %v2094 = vadd.f32 %v2061, %v2063
        %v2095 = vadd.f32 %v2062, %v2063
        %v2096 = vld [vmem:[%s461] sm:$0xff]
        %v2097 = vld [vmem:[%s461 + $0x8] sm:$0xff]
        %v2098 = vld [vmem:[%s461 + $0x10] sm:$0xff]
        %v2099 = vld [vmem:[%s461 + $0x18] sm:$0xff]
        %v2100 = vld [vmem:[%s461 + $0x20] sm:$0xff]
        %v2101 = vld [vmem:[%s461 + $0x28] sm:$0xff]
        %v2102 = vld [vmem:[%s461 + $0x30] sm:$0xff]
        %v2103 = vld [vmem:[%s461 + $0x38] sm:$0xff]
        %v2104 = vld [vmem:[%s461 + $0x40] sm:$0xff]
        %v2105 = vld [vmem:[%s461 + $0x48] sm:$0xff]
        %v2106 = vld [vmem:[%s461 + $0x50] sm:$0xff]
        %v2107 = vld [vmem:[%s461 + $0x58] sm:$0xff]
        %v2108 = vld [vmem:[%s461 + $0x60] sm:$0xff]
        %v2109 = vld [vmem:[%s461 + $0x68] sm:$0xff]
        %v2110 = vld [vmem:[%s461 + $0x70] sm:$0xff]
        %v2111 = vld [vmem:[%s461 + $0x78] sm:$0xff]
        %v2112 = vld [vmem:[%s461 + $0x80] sm:$0xff]
        %v2113 = vld [vmem:[%s461 + $0x88] sm:$0xff]
        %v2114 = vld [vmem:[%s461 + $0x90] sm:$0xff]
        %v2115 = vld [vmem:[%s461 + $0x98] sm:$0xff]
        %v2116 = vld [vmem:[%s461 + $0xa0] sm:$0xff]
        %v2117 = vld [vmem:[%s461 + $0xa8] sm:$0xff]
        %v2118 = vld [vmem:[%s461 + $0xb0] sm:$0xff]
        %v2119 = vld [vmem:[%s461 + $0xb8] sm:$0xff]
        %v2120 = vld [vmem:[%s461 + $0xc0] sm:$0xff]
        %v2121 = vld [vmem:[%s461 + $0xc8] sm:$0xff]
        %v2122 = vld [vmem:[%s461 + $0xd0] sm:$0xff]
        %v2123 = vld [vmem:[%s461 + $0xd8] sm:$0xff]
        %v2124 = vld [vmem:[%s461 + $0xe0] sm:$0xff]
        %v2125 = vld [vmem:[%s461 + $0xe8] sm:$0xff]
        %v2126 = vld [vmem:[%s461 + $0xf0] sm:$0xff]
        %v2127 = vld [vmem:[%s461 + $0xf8] sm:$0xff]
        %v2128 = vld [vmem:[%s467] sm:$0xff]
        %v2129 = vld [vmem:[%s467 + $0x8] sm:$0xff]
        %v2130 = vld [vmem:[%s467 + $0x10] sm:$0xff]
        %v2131 = vld [vmem:[%s467 + $0x18] sm:$0xff]
        %v2132 = vld [vmem:[%s467 + $0x20] sm:$0xff]
        %v2133 = vld [vmem:[%s467 + $0x28] sm:$0xff]
        %v2134 = vld [vmem:[%s467 + $0x30] sm:$0xff]
        %v2135 = vld [vmem:[%s467 + $0x38] sm:$0xff]
        %v2136 = vld [vmem:[%s467 + $0x40] sm:$0xff]
        %v2137 = vld [vmem:[%s467 + $0x48] sm:$0xff]
        %v2138 = vld [vmem:[%s467 + $0x50] sm:$0xff]
        %v2139 = vld [vmem:[%s467 + $0x58] sm:$0xff]
        %v2140 = vld [vmem:[%s467 + $0x60] sm:$0xff]
        %v2141 = vld [vmem:[%s467 + $0x68] sm:$0xff]
        %v2142 = vld [vmem:[%s467 + $0x70] sm:$0xff]
        %v2143 = vld [vmem:[%s467 + $0x78] sm:$0xff]
        %v2144 = vld [vmem:[%s467 + $0x80] sm:$0xff]
        %v2145 = vld [vmem:[%s467 + $0x88] sm:$0xff]
        %v2146 = vld [vmem:[%s467 + $0x90] sm:$0xff]
        %v2147 = vld [vmem:[%s467 + $0x98] sm:$0xff]
        %v2148 = vld [vmem:[%s467 + $0xa0] sm:$0xff]
        %v2149 = vld [vmem:[%s467 + $0xa8] sm:$0xff]
        %v2150 = vld [vmem:[%s467 + $0xb0] sm:$0xff]
        %v2151 = vld [vmem:[%s467 + $0xb8] sm:$0xff]
        %v2152 = vld [vmem:[%s467 + $0xc0] sm:$0xff]
        %v2153 = vld [vmem:[%s467 + $0xc8] sm:$0xff]
        %v2154 = vld [vmem:[%s467 + $0xd0] sm:$0xff]
        %v2155 = vld [vmem:[%s467 + $0xd8] sm:$0xff]
        %v2156 = vld [vmem:[%s467 + $0xe0] sm:$0xff]
        %v2157 = vld [vmem:[%s467 + $0xe8] sm:$0xff]
        %v2158 = vld [vmem:[%s467 + $0xf0] sm:$0xff]
        %v2159 = vld [vmem:[%s467 + $0xf8] sm:$0xff]
        %2161 = vset.pattern.permute.xlu0 0
        %2162 = vperm.xlu0 %2161, %v2128
        %v2163 = vpop.permute.xlu0 %2162
        %2166 = vset.pattern.permute.xlu0 0
        %2167 = vperm.xlu0 %2166, %v2129
        %v2168 = vpop.permute.xlu0 %2167
        %2171 = vset.pattern.permute.xlu0 0
        %2172 = vperm.xlu0 %2171, %v2130
        %v2173 = vpop.permute.xlu0 %2172
        %2176 = vset.pattern.permute.xlu0 0
        %2177 = vperm.xlu0 %2176, %v2131
        %v2178 = vpop.permute.xlu0 %2177
        %2181 = vset.pattern.permute.xlu0 0
        %2182 = vperm.xlu0 %2181, %v2132
        %v2183 = vpop.permute.xlu0 %2182
        %2186 = vset.pattern.permute.xlu0 0
        %2187 = vperm.xlu0 %2186, %v2133
        %v2188 = vpop.permute.xlu0 %2187
        %2191 = vset.pattern.permute.xlu0 0
        %2192 = vperm.xlu0 %2191, %v2134
        %v2193 = vpop.permute.xlu0 %2192
        %2196 = vset.pattern.permute.xlu0 0
        %2197 = vperm.xlu0 %2196, %v2135
        %v2198 = vpop.permute.xlu0 %2197
        %2201 = vset.pattern.permute.xlu0 0
        %2202 = vperm.xlu0 %2201, %v2136
        %v2203 = vpop.permute.xlu0 %2202
        %2206 = vset.pattern.permute.xlu0 0
        %2207 = vperm.xlu0 %2206, %v2137
        %v2208 = vpop.permute.xlu0 %2207
        %2211 = vset.pattern.permute.xlu0 0
        %2212 = vperm.xlu0 %2211, %v2138
        %v2213 = vpop.permute.xlu0 %2212
        %2216 = vset.pattern.permute.xlu0 0
        %2217 = vperm.xlu0 %2216, %v2139
        %v2218 = vpop.permute.xlu0 %2217
        %2221 = vset.pattern.permute.xlu0 0
        %2222 = vperm.xlu0 %2221, %v2140
        %v2223 = vpop.permute.xlu0 %2222
        %2226 = vset.pattern.permute.xlu0 0
        %2227 = vperm.xlu0 %2226, %v2141
        %v2228 = vpop.permute.xlu0 %2227
        %2231 = vset.pattern.permute.xlu0 0
        %2232 = vperm.xlu0 %2231, %v2142
        %v2233 = vpop.permute.xlu0 %2232
        %2236 = vset.pattern.permute.xlu0 0
        %2237 = vperm.xlu0 %2236, %v2143
        %v2238 = vpop.permute.xlu0 %2237
        %2241 = vset.pattern.permute.xlu0 0
        %2242 = vperm.xlu0 %2241, %v2144
        %v2243 = vpop.permute.xlu0 %2242
        %2246 = vset.pattern.permute.xlu0 0
        %2247 = vperm.xlu0 %2246, %v2145
        %v2248 = vpop.permute.xlu0 %2247
        %2251 = vset.pattern.permute.xlu0 0
        %2252 = vperm.xlu0 %2251, %v2146
        %v2253 = vpop.permute.xlu0 %2252
        %2256 = vset.pattern.permute.xlu0 0
        %2257 = vperm.xlu0 %2256, %v2147
        %v2258 = vpop.permute.xlu0 %2257
        %2261 = vset.pattern.permute.xlu0 0
        %2262 = vperm.xlu0 %2261, %v2148
        %v2263 = vpop.permute.xlu0 %2262
        %2266 = vset.pattern.permute.xlu0 0
        %2267 = vperm.xlu0 %2266, %v2149
        %v2268 = vpop.permute.xlu0 %2267
        %2271 = vset.pattern.permute.xlu0 0
        %2272 = vperm.xlu0 %2271, %v2150
        %v2273 = vpop.permute.xlu0 %2272
        %2276 = vset.pattern.permute.xlu0 0
        %2277 = vperm.xlu0 %2276, %v2151
        %v2278 = vpop.permute.xlu0 %2277
        %2281 = vset.pattern.permute.xlu0 0
        %2282 = vperm.xlu0 %2281, %v2152
        %v2283 = vpop.permute.xlu0 %2282
        %2286 = vset.pattern.permute.xlu0 0
        %2287 = vperm.xlu0 %2286, %v2153
        %v2288 = vpop.permute.xlu0 %2287
        %2291 = vset.pattern.permute.xlu0 0
        %2292 = vperm.xlu0 %2291, %v2154
        %v2293 = vpop.permute.xlu0 %2292
        %2296 = vset.pattern.permute.xlu0 0
        %2297 = vperm.xlu0 %2296, %v2155
        %v2298 = vpop.permute.xlu0 %2297
        %2301 = vset.pattern.permute.xlu0 0
        %2302 = vperm.xlu0 %2301, %v2156
        %v2303 = vpop.permute.xlu0 %2302
        %2306 = vset.pattern.permute.xlu0 0
        %2307 = vperm.xlu0 %2306, %v2157
        %v2308 = vpop.permute.xlu0 %2307
        %2311 = vset.pattern.permute.xlu0 0
        %2312 = vperm.xlu0 %2311, %v2158
        %v2313 = vpop.permute.xlu0 %2312
        %2316 = vset.pattern.permute.xlu0 0
        %2317 = vperm.xlu0 %2316, %v2159
        %v2318 = vpop.permute.xlu0 %2317
        %v2320 = vmul.f32 %v2096, %v2163
        %v2321 = vmul.f32 %v2097, %v2168
        %v2322 = vmul.f32 %v2098, %v2173
        %v2323 = vmul.f32 %v2099, %v2178
        %v2324 = vmul.f32 %v2100, %v2183
        %v2325 = vmul.f32 %v2101, %v2188
        %v2326 = vmul.f32 %v2102, %v2193
        %v2327 = vmul.f32 %v2103, %v2198
        %v2328 = vmul.f32 %v2104, %v2203
        %v2329 = vmul.f32 %v2105, %v2208
        %v2330 = vmul.f32 %v2106, %v2213
        %v2331 = vmul.f32 %v2107, %v2218
        %v2332 = vmul.f32 %v2108, %v2223
        %v2333 = vmul.f32 %v2109, %v2228
        %v2334 = vmul.f32 %v2110, %v2233
        %v2335 = vmul.f32 %v2111, %v2238
        %v2336 = vmul.f32 %v2112, %v2243
        %v2337 = vmul.f32 %v2113, %v2248
        %v2338 = vmul.f32 %v2114, %v2253
        %v2339 = vmul.f32 %v2115, %v2258
        %v2340 = vmul.f32 %v2116, %v2263
        %v2341 = vmul.f32 %v2117, %v2268
        %v2342 = vmul.f32 %v2118, %v2273
        %v2343 = vmul.f32 %v2119, %v2278
        %v2344 = vmul.f32 %v2120, %v2283
        %v2345 = vmul.f32 %v2121, %v2288
        %v2346 = vmul.f32 %v2122, %v2293
        %v2347 = vmul.f32 %v2123, %v2298
        %v2348 = vmul.f32 %v2124, %v2303
        %v2349 = vmul.f32 %v2125, %v2308
        %v2350 = vmul.f32 %v2126, %v2313
        %v2351 = vmul.f32 %v2127, %v2318
        %v2352 = vld [vmem:[%s4] sm:$0xff]
        %v2353 = vld [vmem:[%s4 + $0x8] sm:$0xff]
        %v2354 = vld [vmem:[%s4 + $0x10] sm:$0xff]
        %v2355 = vld [vmem:[%s4 + $0x18] sm:$0xff]
        %v2356 = vld [vmem:[%s4 + $0x20] sm:$0xff]
        %v2357 = vld [vmem:[%s4 + $0x28] sm:$0xff]
        %v2358 = vld [vmem:[%s4 + $0x30] sm:$0xff]
        %v2359 = vld [vmem:[%s4 + $0x38] sm:$0xff]
        %v2360 = vld [vmem:[%s4 + $0x40] sm:$0xff]
        %v2361 = vld [vmem:[%s4 + $0x48] sm:$0xff]
        %v2362 = vld [vmem:[%s4 + $0x50] sm:$0xff]
        %v2363 = vld [vmem:[%s4 + $0x58] sm:$0xff]
        %v2364 = vld [vmem:[%s4 + $0x60] sm:$0xff]
        %v2365 = vld [vmem:[%s4 + $0x68] sm:$0xff]
        %v2366 = vld [vmem:[%s4 + $0x70] sm:$0xff]
        %v2367 = vld [vmem:[%s4 + $0x78] sm:$0xff]
        %v2368 = vld [vmem:[%s4 + $0x80] sm:$0xff]
        %v2369 = vld [vmem:[%s4 + $0x88] sm:$0xff]
        %v2370 = vld [vmem:[%s4 + $0x90] sm:$0xff]
        %v2371 = vld [vmem:[%s4 + $0x98] sm:$0xff]
        %v2372 = vld [vmem:[%s4 + $0xa0] sm:$0xff]
        %v2373 = vld [vmem:[%s4 + $0xa8] sm:$0xff]
        %v2374 = vld [vmem:[%s4 + $0xb0] sm:$0xff]
        %v2375 = vld [vmem:[%s4 + $0xb8] sm:$0xff]
        %v2376 = vld [vmem:[%s4 + $0xc0] sm:$0xff]
        %v2377 = vld [vmem:[%s4 + $0xc8] sm:$0xff]
        %v2378 = vld [vmem:[%s4 + $0xd0] sm:$0xff]
        %v2379 = vld [vmem:[%s4 + $0xd8] sm:$0xff]
        %v2380 = vld [vmem:[%s4 + $0xe0] sm:$0xff]
        %v2381 = vld [vmem:[%s4 + $0xe8] sm:$0xff]
        %v2382 = vld [vmem:[%s4 + $0xf0] sm:$0xff]
        %v2383 = vld [vmem:[%s4 + $0xf8] sm:$0xff]
        %v2384 = vld [vmem:[%s4 + $0x100] sm:$0xff]
        %v2385 = vld [vmem:[%s4 + $0x108] sm:$0xff]
        %v2386 = vld [vmem:[%s4 + $0x110] sm:$0xff]
        %v2387 = vld [vmem:[%s4 + $0x118] sm:$0xff]
        %v2388 = vld [vmem:[%s4 + $0x120] sm:$0xff]
        %v2389 = vld [vmem:[%s4 + $0x128] sm:$0xff]
        %v2390 = vld [vmem:[%s4 + $0x130] sm:$0xff]
        %v2391 = vld [vmem:[%s4 + $0x138] sm:$0xff]
        %v2392 = vld [vmem:[%s4 + $0x140] sm:$0xff]
        %v2393 = vld [vmem:[%s4 + $0x148] sm:$0xff]
        %v2394 = vld [vmem:[%s4 + $0x150] sm:$0xff]
        %v2395 = vld [vmem:[%s4 + $0x158] sm:$0xff]
        %v2396 = vld [vmem:[%s4 + $0x160] sm:$0xff]
        %v2397 = vld [vmem:[%s4 + $0x168] sm:$0xff]
        %v2398 = vld [vmem:[%s4 + $0x170] sm:$0xff]
        %v2399 = vld [vmem:[%s4 + $0x178] sm:$0xff]
        %v2400 = vld [vmem:[%s4 + $0x180] sm:$0xff]
        %v2401 = vld [vmem:[%s4 + $0x188] sm:$0xff]
        %v2402 = vld [vmem:[%s4 + $0x190] sm:$0xff]
        %v2403 = vld [vmem:[%s4 + $0x198] sm:$0xff]
        %v2404 = vld [vmem:[%s4 + $0x1a0] sm:$0xff]
        %v2405 = vld [vmem:[%s4 + $0x1a8] sm:$0xff]
        %v2406 = vld [vmem:[%s4 + $0x1b0] sm:$0xff]
        %v2407 = vld [vmem:[%s4 + $0x1b8] sm:$0xff]
        %v2408 = vld [vmem:[%s4 + $0x1c0] sm:$0xff]
        %v2409 = vld [vmem:[%s4 + $0x1c8] sm:$0xff]
        %v2410 = vld [vmem:[%s4 + $0x1d0] sm:$0xff]
        %v2411 = vld [vmem:[%s4 + $0x1d8] sm:$0xff]
        %v2412 = vld [vmem:[%s4 + $0x1e0] sm:$0xff]
        %v2413 = vld [vmem:[%s4 + $0x1e8] sm:$0xff]
        %v2414 = vld [vmem:[%s4 + $0x1f0] sm:$0xff]
        %v2415 = vld [vmem:[%s4 + $0x1f8] sm:$0xff]
        %v2416 = vld [vmem:[%s4 + $0x200] sm:$0xff]
        %v2417 = vld [vmem:[%s4 + $0x208] sm:$0xff]
        %v2418 = vld [vmem:[%s4 + $0x210] sm:$0xff]
        %v2419 = vld [vmem:[%s4 + $0x218] sm:$0xff]
        %v2420 = vld [vmem:[%s4 + $0x220] sm:$0xff]
        %v2421 = vld [vmem:[%s4 + $0x228] sm:$0xff]
        %v2422 = vld [vmem:[%s4 + $0x230] sm:$0xff]
        %v2423 = vld [vmem:[%s4 + $0x238] sm:$0xff]
        %v2424 = vld [vmem:[%s4 + $0x240] sm:$0xff]
        %v2425 = vld [vmem:[%s4 + $0x248] sm:$0xff]
        %v2426 = vld [vmem:[%s4 + $0x250] sm:$0xff]
        %v2427 = vld [vmem:[%s4 + $0x258] sm:$0xff]
        %v2428 = vld [vmem:[%s4 + $0x260] sm:$0xff]
        %v2429 = vld [vmem:[%s4 + $0x268] sm:$0xff]
        %v2430 = vld [vmem:[%s4 + $0x270] sm:$0xff]
        %v2431 = vld [vmem:[%s4 + $0x278] sm:$0xff]
        %v2432 = vld [vmem:[%s4 + $0x280] sm:$0xff]
        %v2433 = vld [vmem:[%s4 + $0x288] sm:$0xff]
        %v2434 = vld [vmem:[%s4 + $0x290] sm:$0xff]
        %v2435 = vld [vmem:[%s4 + $0x298] sm:$0xff]
        %v2436 = vld [vmem:[%s4 + $0x2a0] sm:$0xff]
        %v2437 = vld [vmem:[%s4 + $0x2a8] sm:$0xff]
        %v2438 = vld [vmem:[%s4 + $0x2b0] sm:$0xff]
        %v2439 = vld [vmem:[%s4 + $0x2b8] sm:$0xff]
        %v2440 = vld [vmem:[%s4 + $0x2c0] sm:$0xff]
        %v2441 = vld [vmem:[%s4 + $0x2c8] sm:$0xff]
        %v2442 = vld [vmem:[%s4 + $0x2d0] sm:$0xff]
        %v2443 = vld [vmem:[%s4 + $0x2d8] sm:$0xff]
        %v2444 = vld [vmem:[%s4 + $0x2e0] sm:$0xff]
        %v2445 = vld [vmem:[%s4 + $0x2e8] sm:$0xff]
        %v2446 = vld [vmem:[%s4 + $0x2f0] sm:$0xff]
        %v2447 = vld [vmem:[%s4 + $0x2f8] sm:$0xff]
        %v2448 = vld [vmem:[%s4 + $0x300] sm:$0xff]
        %v2449 = vld [vmem:[%s4 + $0x308] sm:$0xff]
        %v2450 = vld [vmem:[%s4 + $0x310] sm:$0xff]
        %v2451 = vld [vmem:[%s4 + $0x318] sm:$0xff]
        %v2452 = vld [vmem:[%s4 + $0x320] sm:$0xff]
        %v2453 = vld [vmem:[%s4 + $0x328] sm:$0xff]
        %v2454 = vld [vmem:[%s4 + $0x330] sm:$0xff]
        %v2455 = vld [vmem:[%s4 + $0x338] sm:$0xff]
        %v2456 = vld [vmem:[%s4 + $0x340] sm:$0xff]
        %v2457 = vld [vmem:[%s4 + $0x348] sm:$0xff]
        %v2458 = vld [vmem:[%s4 + $0x350] sm:$0xff]
        %v2459 = vld [vmem:[%s4 + $0x358] sm:$0xff]
        %v2460 = vld [vmem:[%s4 + $0x360] sm:$0xff]
        %v2461 = vld [vmem:[%s4 + $0x368] sm:$0xff]
        %v2462 = vld [vmem:[%s4 + $0x370] sm:$0xff]
        %v2463 = vld [vmem:[%s4 + $0x378] sm:$0xff]
        %v2464 = vld [vmem:[%s4 + $0x380] sm:$0xff]
        %v2465 = vld [vmem:[%s4 + $0x388] sm:$0xff]
        %v2466 = vld [vmem:[%s4 + $0x390] sm:$0xff]
        %v2467 = vld [vmem:[%s4 + $0x398] sm:$0xff]
        %v2468 = vld [vmem:[%s4 + $0x3a0] sm:$0xff]
        %v2469 = vld [vmem:[%s4 + $0x3a8] sm:$0xff]
        %v2470 = vld [vmem:[%s4 + $0x3b0] sm:$0xff]
        %v2471 = vld [vmem:[%s4 + $0x3b8] sm:$0xff]
        %v2472 = vld [vmem:[%s4 + $0x3c0] sm:$0xff]
        %v2473 = vld [vmem:[%s4 + $0x3c8] sm:$0xff]
        %v2474 = vld [vmem:[%s4 + $0x3d0] sm:$0xff]
        %v2475 = vld [vmem:[%s4 + $0x3d8] sm:$0xff]
        %v2476 = vld [vmem:[%s4 + $0x3e0] sm:$0xff]
        %v2477 = vld [vmem:[%s4 + $0x3e8] sm:$0xff]
        %v2478 = vld [vmem:[%s4 + $0x3f0] sm:$0xff]
        %v2479 = vld [vmem:[%s4 + $0x3f8] sm:$0xff]
        %2480 = vmatpush.msra.mxu0 %v2412
        %2481 = vmatpush.msra.mxu0 %v2408
        %2482 = vmatpush.msra.mxu0 %v2404
        %2483 = vmatpush.msra.mxu0 %v2400
        %2484 = vmatpush.msra.mxu0 %v2396
        %2485 = vmatpush.msra.mxu0 %v2392
        %2486 = vmatpush.msra.mxu0 %v2388
        %2487 = vmatpush.msra.mxu0 %v2384
        %2488 = vmatpush.msra.mxu0 %v2380
        %2489 = vmatpush.msra.mxu0 %v2376
        %2490 = vmatpush.msra.mxu0 %v2372
        %2491 = vmatpush.msra.mxu0 %v2368
        %2492 = vmatpush.msra.mxu0 %v2364
        %2493 = vmatpush.msra.mxu0 %v2360
        %2494 = vmatpush.msra.mxu0 %v2356
        %2495 = vmatpush.msra.mxu0 %v2352
        %2496 = vmatmul.f32.gmra.mxu0 %v2064
        %v2497 = vpop.f32.mrf.mxu0
        %v2498 = vadd.f32 0.0, %v2497
        %2499 = vmatmul.f32.gmra.mxu0 %v2065
        %v2500 = vpop.f32.mrf.mxu0
        %v2501 = vadd.f32 0.0, %v2500
        %2502 = vmatmul.f32.gmra.mxu0 %v2066
        %v2503 = vpop.f32.mrf.mxu0
        %v2504 = vadd.f32 0.0, %v2503
        %2505 = vmatmul.f32.gmra.mxu0 %v2067
        %v2506 = vpop.f32.mrf.mxu0
        %v2507 = vadd.f32 0.0, %v2506
        %2508 = vmatmul.f32.gmra.mxu0 %v2068
        %v2509 = vpop.f32.mrf.mxu0
        %v2510 = vadd.f32 0.0, %v2509
        %2511 = vmatmul.f32.gmra.mxu0 %v2069
        %v2512 = vpop.f32.mrf.mxu0
        %v2513 = vadd.f32 0.0, %v2512
        %2514 = vmatmul.f32.gmra.mxu0 %v2070
        %v2515 = vpop.f32.mrf.mxu0
        %v2516 = vadd.f32 0.0, %v2515
        %2517 = vmatmul.f32.gmra.mxu0 %v2071
        %v2518 = vpop.f32.mrf.mxu0
        %v2519 = vadd.f32 0.0, %v2518
        %2520 = vmatmul.f32.gmra.mxu0 %v2072
        %v2521 = vpop.f32.mrf.mxu0
        %v2522 = vadd.f32 0.0, %v2521
        %2523 = vmatmul.f32.gmra.mxu0 %v2073
        %v2524 = vpop.f32.mrf.mxu0
        %v2525 = vadd.f32 0.0, %v2524
        %2526 = vmatmul.f32.gmra.mxu0 %v2074
        %v2527 = vpop.f32.mrf.mxu0
        %v2528 = vadd.f32 0.0, %v2527
        %2529 = vmatmul.f32.gmra.mxu0 %v2075
        %v2530 = vpop.f32.mrf.mxu0
        %v2531 = vadd.f32 0.0, %v2530
        %2532 = vmatmul.f32.gmra.mxu0 %v2076
        %v2533 = vpop.f32.mrf.mxu0
        %v2534 = vadd.f32 0.0, %v2533
        %2535 = vmatmul.f32.gmra.mxu0 %v2077
        %v2536 = vpop.f32.mrf.mxu0
        %v2537 = vadd.f32 0.0, %v2536
        %2538 = vmatmul.f32.gmra.mxu0 %v2078
        %v2539 = vpop.f32.mrf.mxu0
        %v2540 = vadd.f32 0.0, %v2539
        %2541 = vmatmul.f32.gmra.mxu0 %v2079
        %v2542 = vpop.f32.mrf.mxu0
        %v2543 = vadd.f32 0.0, %v2542
        %2544 = vmatmul.f32.gmra.mxu0 %v2080
        %v2545 = vpop.f32.mrf.mxu0
        %v2546 = vadd.f32 0.0, %v2545
        %2547 = vmatmul.f32.gmra.mxu0 %v2081
        %v2548 = vpop.f32.mrf.mxu0
        %v2549 = vadd.f32 0.0, %v2548
        %2550 = vmatmul.f32.gmra.mxu0 %v2082
        %v2551 = vpop.f32.mrf.mxu0
        %v2552 = vadd.f32 0.0, %v2551
        %2553 = vmatmul.f32.gmra.mxu0 %v2083
        %v2554 = vpop.f32.mrf.mxu0
        %v2555 = vadd.f32 0.0, %v2554
        %2556 = vmatmul.f32.gmra.mxu0 %v2084
        %v2557 = vpop.f32.mrf.mxu0
        %v2558 = vadd.f32 0.0, %v2557
        %2559 = vmatmul.f32.gmra.mxu0 %v2085
        %v2560 = vpop.f32.mrf.mxu0
        %v2561 = vadd.f32 0.0, %v2560
        %2562 = vmatmul.f32.gmra.mxu0 %v2086
        %v2563 = vpop.f32.mrf.mxu0
        %v2564 = vadd.f32 0.0, %v2563
        %2565 = vmatmul.f32.gmra.mxu0 %v2087
        %v2566 = vpop.f32.mrf.mxu0
        %v2567 = vadd.f32 0.0, %v2566
        %2568 = vmatmul.f32.gmra.mxu0 %v2088
        %v2569 = vpop.f32.mrf.mxu0
        %v2570 = vadd.f32 0.0, %v2569
        %2571 = vmatmul.f32.gmra.mxu0 %v2089
        %v2572 = vpop.f32.mrf.mxu0
        %v2573 = vadd.f32 0.0, %v2572
        %2574 = vmatmul.f32.gmra.mxu0 %v2090
        %v2575 = vpop.f32.mrf.mxu0
        %v2576 = vadd.f32 0.0, %v2575
        %2577 = vmatmul.f32.gmra.mxu0 %v2091
        %v2578 = vpop.f32.mrf.mxu0
        %v2579 = vadd.f32 0.0, %v2578
        %2580 = vmatmul.f32.gmra.mxu0 %v2092
        %v2581 = vpop.f32.mrf.mxu0
        %v2582 = vadd.f32 0.0, %v2581
        %2583 = vmatmul.f32.gmra.mxu0 %v2093
        %v2584 = vpop.f32.mrf.mxu0
        %v2585 = vadd.f32 0.0, %v2584
        %2586 = vmatmul.f32.gmra.mxu0 %v2094
        %v2587 = vpop.f32.mrf.mxu0
        %v2588 = vadd.f32 0.0, %v2587
        %2589 = vmatmul.f32.gmra.mxu0 %v2095
        %v2590 = vpop.f32.mrf.mxu0
        %v2591 = vadd.f32 0.0, %v2590
        %2592 = vdwg.mxu0
        %2593 = vmatpush.msra.mxu0 %v2476
        %2594 = vmatpush.msra.mxu0 %v2472
        %2595 = vmatpush.msra.mxu0 %v2468
        %2596 = vmatpush.msra.mxu0 %v2464
        %2597 = vmatpush.msra.mxu0 %v2460
        %2598 = vmatpush.msra.mxu0 %v2456
        %2599 = vmatpush.msra.mxu0 %v2452
        %2600 = vmatpush.msra.mxu0 %v2448
        %2601 = vmatpush.msra.mxu0 %v2444
        %2602 = vmatpush.msra.mxu0 %v2440
        %2603 = vmatpush.msra.mxu0 %v2436
        %2604 = vmatpush.msra.mxu0 %v2432
        %2605 = vmatpush.msra.mxu0 %v2428
        %2606 = vmatpush.msra.mxu0 %v2424
        %2607 = vmatpush.msra.mxu0 %v2420
        %2608 = vmatpush.msra.mxu0 %v2416
        %2609 = vmatmul.f32.gmra.mxu0 %v2320
        %v2610 = vpop.f32.mrf.mxu0
        %v2611 = vadd.f32 %v2498, %v2610
        %2612 = vmatmul.f32.gmra.mxu0 %v2321
        %v2613 = vpop.f32.mrf.mxu0
        %v2614 = vadd.f32 %v2501, %v2613
        %2615 = vmatmul.f32.gmra.mxu0 %v2322
        %v2616 = vpop.f32.mrf.mxu0
        %v2617 = vadd.f32 %v2504, %v2616
        %2618 = vmatmul.f32.gmra.mxu0 %v2323
        %v2619 = vpop.f32.mrf.mxu0
        %v2620 = vadd.f32 %v2507, %v2619
        %2621 = vmatmul.f32.gmra.mxu0 %v2324
        %v2622 = vpop.f32.mrf.mxu0
        %v2623 = vadd.f32 %v2510, %v2622
        %2624 = vmatmul.f32.gmra.mxu0 %v2325
        %v2625 = vpop.f32.mrf.mxu0
        %v2626 = vadd.f32 %v2513, %v2625
        %2627 = vmatmul.f32.gmra.mxu0 %v2326
        %v2628 = vpop.f32.mrf.mxu0
        %v2629 = vadd.f32 %v2516, %v2628
        %2630 = vmatmul.f32.gmra.mxu0 %v2327
        %v2631 = vpop.f32.mrf.mxu0
        %v2632 = vadd.f32 %v2519, %v2631
        %2633 = vmatmul.f32.gmra.mxu0 %v2328
        %v2634 = vpop.f32.mrf.mxu0
        %v2635 = vadd.f32 %v2522, %v2634
        %2636 = vmatmul.f32.gmra.mxu0 %v2329
        %v2637 = vpop.f32.mrf.mxu0
        %v2638 = vadd.f32 %v2525, %v2637
        %2639 = vmatmul.f32.gmra.mxu0 %v2330
        %v2640 = vpop.f32.mrf.mxu0
        %v2641 = vadd.f32 %v2528, %v2640
        %2642 = vmatmul.f32.gmra.mxu0 %v2331
        %v2643 = vpop.f32.mrf.mxu0
        %v2644 = vadd.f32 %v2531, %v2643
        %2645 = vmatmul.f32.gmra.mxu0 %v2332
        %v2646 = vpop.f32.mrf.mxu0
        %v2647 = vadd.f32 %v2534, %v2646
        %2648 = vmatmul.f32.gmra.mxu0 %v2333
        %v2649 = vpop.f32.mrf.mxu0
        %v2650 = vadd.f32 %v2537, %v2649
        %2651 = vmatmul.f32.gmra.mxu0 %v2334
        %v2652 = vpop.f32.mrf.mxu0
        %v2653 = vadd.f32 %v2540, %v2652
        %2654 = vmatmul.f32.gmra.mxu0 %v2335
        %v2655 = vpop.f32.mrf.mxu0
        %v2656 = vadd.f32 %v2543, %v2655
        %2657 = vmatmul.f32.gmra.mxu0 %v2336
        %v2658 = vpop.f32.mrf.mxu0
        %v2659 = vadd.f32 %v2546, %v2658
        %2660 = vmatmul.f32.gmra.mxu0 %v2337
        %v2661 = vpop.f32.mrf.mxu0
        %v2662 = vadd.f32 %v2549, %v2661
        %2663 = vmatmul.f32.gmra.mxu0 %v2338
        %v2664 = vpop.f32.mrf.mxu0
        %v2665 = vadd.f32 %v2552, %v2664
        %2666 = vmatmul.f32.gmra.mxu0 %v2339
        %v2667 = vpop.f32.mrf.mxu0
        %v2668 = vadd.f32 %v2555, %v2667
        %2669 = vmatmul.f32.gmra.mxu0 %v2340
        %v2670 = vpop.f32.mrf.mxu0
        %v2671 = vadd.f32 %v2558, %v2670
        %2672 = vmatmul.f32.gmra.mxu0 %v2341
        %v2673 = vpop.f32.mrf.mxu0
        %v2674 = vadd.f32 %v2561, %v2673
        %2675 = vmatmul.f32.gmra.mxu0 %v2342
        %v2676 = vpop.f32.mrf.mxu0
        %v2677 = vadd.f32 %v2564, %v2676
        %2678 = vmatmul.f32.gmra.mxu0 %v2343
        %v2679 = vpop.f32.mrf.mxu0
        %v2680 = vadd.f32 %v2567, %v2679
        %2681 = vmatmul.f32.gmra.mxu0 %v2344
        %v2682 = vpop.f32.mrf.mxu0
        %v2683 = vadd.f32 %v2570, %v2682
        %2684 = vmatmul.f32.gmra.mxu0 %v2345
        %v2685 = vpop.f32.mrf.mxu0
        %v2686 = vadd.f32 %v2573, %v2685
        %2687 = vmatmul.f32.gmra.mxu0 %v2346
        %v2688 = vpop.f32.mrf.mxu0
        %v2689 = vadd.f32 %v2576, %v2688
        %2690 = vmatmul.f32.gmra.mxu0 %v2347
        %v2691 = vpop.f32.mrf.mxu0
        %v2692 = vadd.f32 %v2579, %v2691
        %2693 = vmatmul.f32.gmra.mxu0 %v2348
        %v2694 = vpop.f32.mrf.mxu0
        %v2695 = vadd.f32 %v2582, %v2694
        %2696 = vmatmul.f32.gmra.mxu0 %v2349
        %v2697 = vpop.f32.mrf.mxu0
        %v2698 = vadd.f32 %v2585, %v2697
        %2699 = vmatmul.f32.gmra.mxu0 %v2350
        %v2700 = vpop.f32.mrf.mxu0
        %v2701 = vadd.f32 %v2588, %v2700
        %2702 = vmatmul.f32.gmra.mxu0 %v2351
        %v2703 = vpop.f32.mrf.mxu0
        %v2704 = vadd.f32 %v2591, %v2703
        %2705 = vdwg.mxu0
        %2706 = vmatpush.msra.mxu0 %v2413
        %2707 = vmatpush.msra.mxu0 %v2409
        %2708 = vmatpush.msra.mxu0 %v2405
        %2709 = vmatpush.msra.mxu0 %v2401
        %2710 = vmatpush.msra.mxu0 %v2397
        %2711 = vmatpush.msra.mxu0 %v2393
        %2712 = vmatpush.msra.mxu0 %v2389
        %2713 = vmatpush.msra.mxu0 %v2385
        %2714 = vmatpush.msra.mxu0 %v2381
        %2715 = vmatpush.msra.mxu0 %v2377
        %2716 = vmatpush.msra.mxu0 %v2373
        %2717 = vmatpush.msra.mxu0 %v2369
        %2718 = vmatpush.msra.mxu0 %v2365
        %2719 = vmatpush.msra.mxu0 %v2361
        %2720 = vmatpush.msra.mxu0 %v2357
        %2721 = vmatpush.msra.mxu0 %v2353
        %2722 = vmatmul.f32.gmra.mxu0 %v2064
        %v2723 = vpop.f32.mrf.mxu0
        %v2724 = vadd.f32 0.0, %v2723
        %2725 = vmatmul.f32.gmra.mxu0 %v2065
        %v2726 = vpop.f32.mrf.mxu0
        %v2727 = vadd.f32 0.0, %v2726
        %2728 = vmatmul.f32.gmra.mxu0 %v2066
        %v2729 = vpop.f32.mrf.mxu0
        %v2730 = vadd.f32 0.0, %v2729
        %2731 = vmatmul.f32.gmra.mxu0 %v2067
        %v2732 = vpop.f32.mrf.mxu0
        %v2733 = vadd.f32 0.0, %v2732
        %2734 = vmatmul.f32.gmra.mxu0 %v2068
        %v2735 = vpop.f32.mrf.mxu0
        %v2736 = vadd.f32 0.0, %v2735
        %2737 = vmatmul.f32.gmra.mxu0 %v2069
        %v2738 = vpop.f32.mrf.mxu0
        %v2739 = vadd.f32 0.0, %v2738
        %2740 = vmatmul.f32.gmra.mxu0 %v2070
        %v2741 = vpop.f32.mrf.mxu0
        %v2742 = vadd.f32 0.0, %v2741
        %2743 = vmatmul.f32.gmra.mxu0 %v2071
        %v2744 = vpop.f32.mrf.mxu0
        %v2745 = vadd.f32 0.0, %v2744
        %2746 = vmatmul.f32.gmra.mxu0 %v2072
        %v2747 = vpop.f32.mrf.mxu0
        %v2748 = vadd.f32 0.0, %v2747
        %2749 = vmatmul.f32.gmra.mxu0 %v2073
        %v2750 = vpop.f32.mrf.mxu0
        %v2751 = vadd.f32 0.0, %v2750
        %2752 = vmatmul.f32.gmra.mxu0 %v2074
        %v2753 = vpop.f32.mrf.mxu0
        %v2754 = vadd.f32 0.0, %v2753
        %2755 = vmatmul.f32.gmra.mxu0 %v2075
        %v2756 = vpop.f32.mrf.mxu0
        %v2757 = vadd.f32 0.0, %v2756
        %2758 = vmatmul.f32.gmra.mxu0 %v2076
        %v2759 = vpop.f32.mrf.mxu0
        %v2760 = vadd.f32 0.0, %v2759
        %2761 = vmatmul.f32.gmra.mxu0 %v2077
        %v2762 = vpop.f32.mrf.mxu0
        %v2763 = vadd.f32 0.0, %v2762
        %2764 = vmatmul.f32.gmra.mxu0 %v2078
        %v2765 = vpop.f32.mrf.mxu0
        %v2766 = vadd.f32 0.0, %v2765
        %2767 = vmatmul.f32.gmra.mxu0 %v2079
        %v2768 = vpop.f32.mrf.mxu0
        %v2769 = vadd.f32 0.0, %v2768
        %2770 = vmatmul.f32.gmra.mxu0 %v2080
        %v2771 = vpop.f32.mrf.mxu0
        %v2772 = vadd.f32 0.0, %v2771
        %2773 = vmatmul.f32.gmra.mxu0 %v2081
        %v2774 = vpop.f32.mrf.mxu0
        %v2775 = vadd.f32 0.0, %v2774
        %2776 = vmatmul.f32.gmra.mxu0 %v2082
        %v2777 = vpop.f32.mrf.mxu0
        %v2778 = vadd.f32 0.0, %v2777
        %2779 = vmatmul.f32.gmra.mxu0 %v2083
        %v2780 = vpop.f32.mrf.mxu0
        %v2781 = vadd.f32 0.0, %v2780
        %2782 = vmatmul.f32.gmra.mxu0 %v2084
        %v2783 = vpop.f32.mrf.mxu0
        %v2784 = vadd.f32 0.0, %v2783
        %2785 = vmatmul.f32.gmra.mxu0 %v2085
        %v2786 = vpop.f32.mrf.mxu0
        %v2787 = vadd.f32 0.0, %v2786
        %2788 = vmatmul.f32.gmra.mxu0 %v2086
        %v2789 = vpop.f32.mrf.mxu0
        %v2790 = vadd.f32 0.0, %v2789
        %2791 = vmatmul.f32.gmra.mxu0 %v2087
        %v2792 = vpop.f32.mrf.mxu0
        %v2793 = vadd.f32 0.0, %v2792
        %2794 = vmatmul.f32.gmra.mxu0 %v2088
        %v2795 = vpop.f32.mrf.mxu0
        %v2796 = vadd.f32 0.0, %v2795
        %2797 = vmatmul.f32.gmra.mxu0 %v2089
        %v2798 = vpop.f32.mrf.mxu0
        %v2799 = vadd.f32 0.0, %v2798
        %2800 = vmatmul.f32.gmra.mxu0 %v2090
        %v2801 = vpop.f32.mrf.mxu0
        %v2802 = vadd.f32 0.0, %v2801
        %2803 = vmatmul.f32.gmra.mxu0 %v2091
        %v2804 = vpop.f32.mrf.mxu0
        %v2805 = vadd.f32 0.0, %v2804
        %2806 = vmatmul.f32.gmra.mxu0 %v2092
        %v2807 = vpop.f32.mrf.mxu0
        %v2808 = vadd.f32 0.0, %v2807
        %2809 = vmatmul.f32.gmra.mxu0 %v2093
        %v2810 = vpop.f32.mrf.mxu0
        %v2811 = vadd.f32 0.0, %v2810
        %2812 = vmatmul.f32.gmra.mxu0 %v2094
        %v2813 = vpop.f32.mrf.mxu0
        %v2814 = vadd.f32 0.0, %v2813
        %2815 = vmatmul.f32.gmra.mxu0 %v2095
        %v2816 = vpop.f32.mrf.mxu0
        %v2817 = vadd.f32 0.0, %v2816
        %2818 = vdwg.mxu0
        %2819 = vmatpush.msra.mxu0 %v2477
        %2820 = vmatpush.msra.mxu0 %v2473
        %2821 = vmatpush.msra.mxu0 %v2469
        %2822 = vmatpush.msra.mxu0 %v2465
        %2823 = vmatpush.msra.mxu0 %v2461
        %2824 = vmatpush.msra.mxu0 %v2457
        %2825 = vmatpush.msra.mxu0 %v2453
        %2826 = vmatpush.msra.mxu0 %v2449
        %2827 = vmatpush.msra.mxu0 %v2445
        %2828 = vmatpush.msra.mxu0 %v2441
        %2829 = vmatpush.msra.mxu0 %v2437
        %2830 = vmatpush.msra.mxu0 %v2433
        %2831 = vmatpush.msra.mxu0 %v2429
        %2832 = vmatpush.msra.mxu0 %v2425
        %2833 = vmatpush.msra.mxu0 %v2421
        %2834 = vmatpush.msra.mxu0 %v2417
        %2835 = vmatmul.f32.gmra.mxu0 %v2320
        %v2836 = vpop.f32.mrf.mxu0
        %v2837 = vadd.f32 %v2724, %v2836
        %2838 = vmatmul.f32.gmra.mxu0 %v2321
        %v2839 = vpop.f32.mrf.mxu0
        %v2840 = vadd.f32 %v2727, %v2839
        %2841 = vmatmul.f32.gmra.mxu0 %v2322
        %v2842 = vpop.f32.mrf.mxu0
        %v2843 = vadd.f32 %v2730, %v2842
        %2844 = vmatmul.f32.gmra.mxu0 %v2323
        %v2845 = vpop.f32.mrf.mxu0
        %v2846 = vadd.f32 %v2733, %v2845
        %2847 = vmatmul.f32.gmra.mxu0 %v2324
        %v2848 = vpop.f32.mrf.mxu0
        %v2849 = vadd.f32 %v2736, %v2848
        %2850 = vmatmul.f32.gmra.mxu0 %v2325
        %v2851 = vpop.f32.mrf.mxu0
        %v2852 = vadd.f32 %v2739, %v2851
        %2853 = vmatmul.f32.gmra.mxu0 %v2326
        %v2854 = vpop.f32.mrf.mxu0
        %v2855 = vadd.f32 %v2742, %v2854
        %2856 = vmatmul.f32.gmra.mxu0 %v2327
        %v2857 = vpop.f32.mrf.mxu0
        %v2858 = vadd.f32 %v2745, %v2857
        %2859 = vmatmul.f32.gmra.mxu0 %v2328
        %v2860 = vpop.f32.mrf.mxu0
        %v2861 = vadd.f32 %v2748, %v2860
        %2862 = vmatmul.f32.gmra.mxu0 %v2329
        %v2863 = vpop.f32.mrf.mxu0
        %v2864 = vadd.f32 %v2751, %v2863
        %2865 = vmatmul.f32.gmra.mxu0 %v2330
        %v2866 = vpop.f32.mrf.mxu0
        %v2867 = vadd.f32 %v2754, %v2866
        %2868 = vmatmul.f32.gmra.mxu0 %v2331
        %v2869 = vpop.f32.mrf.mxu0
        %v2870 = vadd.f32 %v2757, %v2869
        %2871 = vmatmul.f32.gmra.mxu0 %v2332
        %v2872 = vpop.f32.mrf.mxu0
        %v2873 = vadd.f32 %v2760, %v2872
        %2874 = vmatmul.f32.gmra.mxu0 %v2333
        %v2875 = vpop.f32.mrf.mxu0
        %v2876 = vadd.f32 %v2763, %v2875
        %2877 = vmatmul.f32.gmra.mxu0 %v2334
        %v2878 = vpop.f32.mrf.mxu0
        %v2879 = vadd.f32 %v2766, %v2878
        %2880 = vmatmul.f32.gmra.mxu0 %v2335
        %v2881 = vpop.f32.mrf.mxu0
        %v2882 = vadd.f32 %v2769, %v2881
        %2883 = vmatmul.f32.gmra.mxu0 %v2336
        %v2884 = vpop.f32.mrf.mxu0
        %v2885 = vadd.f32 %v2772, %v2884
        %2886 = vmatmul.f32.gmra.mxu0 %v2337
        %v2887 = vpop.f32.mrf.mxu0
        %v2888 = vadd.f32 %v2775, %v2887
        %2889 = vmatmul.f32.gmra.mxu0 %v2338
        %v2890 = vpop.f32.mrf.mxu0
        %v2891 = vadd.f32 %v2778, %v2890
        %2892 = vmatmul.f32.gmra.mxu0 %v2339
        %v2893 = vpop.f32.mrf.mxu0
        %v2894 = vadd.f32 %v2781, %v2893
        %2895 = vmatmul.f32.gmra.mxu0 %v2340
        %v2896 = vpop.f32.mrf.mxu0
        %v2897 = vadd.f32 %v2784, %v2896
        %2898 = vmatmul.f32.gmra.mxu0 %v2341
        %v2899 = vpop.f32.mrf.mxu0
        %v2900 = vadd.f32 %v2787, %v2899
        %2901 = vmatmul.f32.gmra.mxu0 %v2342
        %v2902 = vpop.f32.mrf.mxu0
        %v2903 = vadd.f32 %v2790, %v2902
        %2904 = vmatmul.f32.gmra.mxu0 %v2343
        %v2905 = vpop.f32.mrf.mxu0
        %v2906 = vadd.f32 %v2793, %v2905
        %2907 = vmatmul.f32.gmra.mxu0 %v2344
        %v2908 = vpop.f32.mrf.mxu0
        %v2909 = vadd.f32 %v2796, %v2908
        %2910 = vmatmul.f32.gmra.mxu0 %v2345
        %v2911 = vpop.f32.mrf.mxu0
        %v2912 = vadd.f32 %v2799, %v2911
        %2913 = vmatmul.f32.gmra.mxu0 %v2346
        %v2914 = vpop.f32.mrf.mxu0
        %v2915 = vadd.f32 %v2802, %v2914
        %2916 = vmatmul.f32.gmra.mxu0 %v2347
        %v2917 = vpop.f32.mrf.mxu0
        %v2918 = vadd.f32 %v2805, %v2917
        %2919 = vmatmul.f32.gmra.mxu0 %v2348
        %v2920 = vpop.f32.mrf.mxu0
        %v2921 = vadd.f32 %v2808, %v2920
        %2922 = vmatmul.f32.gmra.mxu0 %v2349
        %v2923 = vpop.f32.mrf.mxu0
        %v2924 = vadd.f32 %v2811, %v2923
        %2925 = vmatmul.f32.gmra.mxu0 %v2350
        %v2926 = vpop.f32.mrf.mxu0
        %v2927 = vadd.f32 %v2814, %v2926
        %2928 = vmatmul.f32.gmra.mxu0 %v2351
        %v2929 = vpop.f32.mrf.mxu0
        %v2930 = vadd.f32 %v2817, %v2929
        %2931 = vdwg.mxu0
        %2932 = vmatpush.msra.mxu0 %v2414
        %2933 = vmatpush.msra.mxu0 %v2410
        %2934 = vmatpush.msra.mxu0 %v2406
        %2935 = vmatpush.msra.mxu0 %v2402
        %2936 = vmatpush.msra.mxu0 %v2398
        %2937 = vmatpush.msra.mxu0 %v2394
        %2938 = vmatpush.msra.mxu0 %v2390
        %2939 = vmatpush.msra.mxu0 %v2386
        %2940 = vmatpush.msra.mxu0 %v2382
        %2941 = vmatpush.msra.mxu0 %v2378
        %2942 = vmatpush.msra.mxu0 %v2374
        %2943 = vmatpush.msra.mxu0 %v2370
        %2944 = vmatpush.msra.mxu0 %v2366
        %2945 = vmatpush.msra.mxu0 %v2362
        %2946 = vmatpush.msra.mxu0 %v2358
        %2947 = vmatpush.msra.mxu0 %v2354
        %2948 = vmatmul.f32.gmra.mxu0 %v2064
        %v2949 = vpop.f32.mrf.mxu0
        %v2950 = vadd.f32 0.0, %v2949
        %2951 = vmatmul.f32.gmra.mxu0 %v2065
        %v2952 = vpop.f32.mrf.mxu0
        %v2953 = vadd.f32 0.0, %v2952
        %2954 = vmatmul.f32.gmra.mxu0 %v2066
        %v2955 = vpop.f32.mrf.mxu0
        %v2956 = vadd.f32 0.0, %v2955
        %2957 = vmatmul.f32.gmra.mxu0 %v2067
        %v2958 = vpop.f32.mrf.mxu0
        %v2959 = vadd.f32 0.0, %v2958
        %2960 = vmatmul.f32.gmra.mxu0 %v2068
        %v2961 = vpop.f32.mrf.mxu0
        %v2962 = vadd.f32 0.0, %v2961
        %2963 = vmatmul.f32.gmra.mxu0 %v2069
        %v2964 = vpop.f32.mrf.mxu0
        %v2965 = vadd.f32 0.0, %v2964
        %2966 = vmatmul.f32.gmra.mxu0 %v2070
        %v2967 = vpop.f32.mrf.mxu0
        %v2968 = vadd.f32 0.0, %v2967
        %2969 = vmatmul.f32.gmra.mxu0 %v2071
        %v2970 = vpop.f32.mrf.mxu0
        %v2971 = vadd.f32 0.0, %v2970
        %2972 = vmatmul.f32.gmra.mxu0 %v2072
        %v2973 = vpop.f32.mrf.mxu0
        %v2974 = vadd.f32 0.0, %v2973
        %2975 = vmatmul.f32.gmra.mxu0 %v2073
        %v2976 = vpop.f32.mrf.mxu0
        %v2977 = vadd.f32 0.0, %v2976
        %2978 = vmatmul.f32.gmra.mxu0 %v2074
        %v2979 = vpop.f32.mrf.mxu0
        %v2980 = vadd.f32 0.0, %v2979
        %2981 = vmatmul.f32.gmra.mxu0 %v2075
        %v2982 = vpop.f32.mrf.mxu0
        %v2983 = vadd.f32 0.0, %v2982
        %2984 = vmatmul.f32.gmra.mxu0 %v2076
        %v2985 = vpop.f32.mrf.mxu0
        %v2986 = vadd.f32 0.0, %v2985
        %2987 = vmatmul.f32.gmra.mxu0 %v2077
        %v2988 = vpop.f32.mrf.mxu0
        %v2989 = vadd.f32 0.0, %v2988
        %2990 = vmatmul.f32.gmra.mxu0 %v2078
        %v2991 = vpop.f32.mrf.mxu0
        %v2992 = vadd.f32 0.0, %v2991
        %2993 = vmatmul.f32.gmra.mxu0 %v2079
        %v2994 = vpop.f32.mrf.mxu0
        %v2995 = vadd.f32 0.0, %v2994
        %2996 = vmatmul.f32.gmra.mxu0 %v2080
        %v2997 = vpop.f32.mrf.mxu0
        %v2998 = vadd.f32 0.0, %v2997
        %2999 = vmatmul.f32.gmra.mxu0 %v2081
        %v3000 = vpop.f32.mrf.mxu0
        %v3001 = vadd.f32 0.0, %v3000
        %3002 = vmatmul.f32.gmra.mxu0 %v2082
        %v3003 = vpop.f32.mrf.mxu0
        %v3004 = vadd.f32 0.0, %v3003
        %3005 = vmatmul.f32.gmra.mxu0 %v2083
        %v3006 = vpop.f32.mrf.mxu0
        %v3007 = vadd.f32 0.0, %v3006
        %3008 = vmatmul.f32.gmra.mxu0 %v2084
        %v3009 = vpop.f32.mrf.mxu0
        %v3010 = vadd.f32 0.0, %v3009
        %3011 = vmatmul.f32.gmra.mxu0 %v2085
        %v3012 = vpop.f32.mrf.mxu0
        %v3013 = vadd.f32 0.0, %v3012
        %3014 = vmatmul.f32.gmra.mxu0 %v2086
        %v3015 = vpop.f32.mrf.mxu0
        %v3016 = vadd.f32 0.0, %v3015
        %3017 = vmatmul.f32.gmra.mxu0 %v2087
        %v3018 = vpop.f32.mrf.mxu0
        %v3019 = vadd.f32 0.0, %v3018
        %3020 = vmatmul.f32.gmra.mxu0 %v2088
        %v3021 = vpop.f32.mrf.mxu0
        %v3022 = vadd.f32 0.0, %v3021
        %3023 = vmatmul.f32.gmra.mxu0 %v2089
        %v3024 = vpop.f32.mrf.mxu0
        %v3025 = vadd.f32 0.0, %v3024
        %3026 = vmatmul.f32.gmra.mxu0 %v2090
        %v3027 = vpop.f32.mrf.mxu0
        %v3028 = vadd.f32 0.0, %v3027
        %3029 = vmatmul.f32.gmra.mxu0 %v2091
        %v3030 = vpop.f32.mrf.mxu0
        %v3031 = vadd.f32 0.0, %v3030
        %3032 = vmatmul.f32.gmra.mxu0 %v2092
        %v3033 = vpop.f32.mrf.mxu0
        %v3034 = vadd.f32 0.0, %v3033
        %3035 = vmatmul.f32.gmra.mxu0 %v2093
        %v3036 = vpop.f32.mrf.mxu0
        %v3037 = vadd.f32 0.0, %v3036
        %3038 = vmatmul.f32.gmra.mxu0 %v2094
        %v3039 = vpop.f32.mrf.mxu0
        %v3040 = vadd.f32 0.0, %v3039
        %3041 = vmatmul.f32.gmra.mxu0 %v2095
        %v3042 = vpop.f32.mrf.mxu0
        %v3043 = vadd.f32 0.0, %v3042
        %3044 = vdwg.mxu0
        %3045 = vmatpush.msra.mxu0 %v2478
        %3046 = vmatpush.msra.mxu0 %v2474
        %3047 = vmatpush.msra.mxu0 %v2470
        %3048 = vmatpush.msra.mxu0 %v2466
        %3049 = vmatpush.msra.mxu0 %v2462
        %3050 = vmatpush.msra.mxu0 %v2458
        %3051 = vmatpush.msra.mxu0 %v2454
        %3052 = vmatpush.msra.mxu0 %v2450
        %3053 = vmatpush.msra.mxu0 %v2446
        %3054 = vmatpush.msra.mxu0 %v2442
        %3055 = vmatpush.msra.mxu0 %v2438
        %3056 = vmatpush.msra.mxu0 %v2434
        %3057 = vmatpush.msra.mxu0 %v2430
        %3058 = vmatpush.msra.mxu0 %v2426
        %3059 = vmatpush.msra.mxu0 %v2422
        %3060 = vmatpush.msra.mxu0 %v2418
        %3061 = vmatmul.f32.gmra.mxu0 %v2320
        %v3062 = vpop.f32.mrf.mxu0
        %v3063 = vadd.f32 %v2950, %v3062
        %3064 = vmatmul.f32.gmra.mxu0 %v2321
        %v3065 = vpop.f32.mrf.mxu0
        %v3066 = vadd.f32 %v2953, %v3065
        %3067 = vmatmul.f32.gmra.mxu0 %v2322
        %v3068 = vpop.f32.mrf.mxu0
        %v3069 = vadd.f32 %v2956, %v3068
        %3070 = vmatmul.f32.gmra.mxu0 %v2323
        %v3071 = vpop.f32.mrf.mxu0
        %v3072 = vadd.f32 %v2959, %v3071
        %3073 = vmatmul.f32.gmra.mxu0 %v2324
        %v3074 = vpop.f32.mrf.mxu0
        %v3075 = vadd.f32 %v2962, %v3074
        %3076 = vmatmul.f32.gmra.mxu0 %v2325
        %v3077 = vpop.f32.mrf.mxu0
        %v3078 = vadd.f32 %v2965, %v3077
        %3079 = vmatmul.f32.gmra.mxu0 %v2326
        %v3080 = vpop.f32.mrf.mxu0
        %v3081 = vadd.f32 %v2968, %v3080
        %3082 = vmatmul.f32.gmra.mxu0 %v2327
        %v3083 = vpop.f32.mrf.mxu0
        %v3084 = vadd.f32 %v2971, %v3083
        %3085 = vmatmul.f32.gmra.mxu0 %v2328
        %v3086 = vpop.f32.mrf.mxu0
        %v3087 = vadd.f32 %v2974, %v3086
        %3088 = vmatmul.f32.gmra.mxu0 %v2329
        %v3089 = vpop.f32.mrf.mxu0
        %v3090 = vadd.f32 %v2977, %v3089
        %3091 = vmatmul.f32.gmra.mxu0 %v2330
        %v3092 = vpop.f32.mrf.mxu0
        %v3093 = vadd.f32 %v2980, %v3092
        %3094 = vmatmul.f32.gmra.mxu0 %v2331
        %v3095 = vpop.f32.mrf.mxu0
        %v3096 = vadd.f32 %v2983, %v3095
        %3097 = vmatmul.f32.gmra.mxu0 %v2332
        %v3098 = vpop.f32.mrf.mxu0
        %v3099 = vadd.f32 %v2986, %v3098
        %3100 = vmatmul.f32.gmra.mxu0 %v2333
        %v3101 = vpop.f32.mrf.mxu0
        %v3102 = vadd.f32 %v2989, %v3101
        %3103 = vmatmul.f32.gmra.mxu0 %v2334
        %v3104 = vpop.f32.mrf.mxu0
        %v3105 = vadd.f32 %v2992, %v3104
        %3106 = vmatmul.f32.gmra.mxu0 %v2335
        %v3107 = vpop.f32.mrf.mxu0
        %v3108 = vadd.f32 %v2995, %v3107
        %3109 = vmatmul.f32.gmra.mxu0 %v2336
        %v3110 = vpop.f32.mrf.mxu0
        %v3111 = vadd.f32 %v2998, %v3110
        %3112 = vmatmul.f32.gmra.mxu0 %v2337
        %v3113 = vpop.f32.mrf.mxu0
        %v3114 = vadd.f32 %v3001, %v3113
        %3115 = vmatmul.f32.gmra.mxu0 %v2338
        %v3116 = vpop.f32.mrf.mxu0
        %v3117 = vadd.f32 %v3004, %v3116
        %3118 = vmatmul.f32.gmra.mxu0 %v2339
        %v3119 = vpop.f32.mrf.mxu0
        %v3120 = vadd.f32 %v3007, %v3119
        %3121 = vmatmul.f32.gmra.mxu0 %v2340
        %v3122 = vpop.f32.mrf.mxu0
        %v3123 = vadd.f32 %v3010, %v3122
        %3124 = vmatmul.f32.gmra.mxu0 %v2341
        %v3125 = vpop.f32.mrf.mxu0
        %v3126 = vadd.f32 %v3013, %v3125
        %3127 = vmatmul.f32.gmra.mxu0 %v2342
        %v3128 = vpop.f32.mrf.mxu0
        %v3129 = vadd.f32 %v3016, %v3128
        %3130 = vmatmul.f32.gmra.mxu0 %v2343
        %v3131 = vpop.f32.mrf.mxu0
        %v3132 = vadd.f32 %v3019, %v3131
        %3133 = vmatmul.f32.gmra.mxu0 %v2344
        %v3134 = vpop.f32.mrf.mxu0
        %v3135 = vadd.f32 %v3022, %v3134
        %3136 = vmatmul.f32.gmra.mxu0 %v2345
        %v3137 = vpop.f32.mrf.mxu0
        %v3138 = vadd.f32 %v3025, %v3137
        %3139 = vmatmul.f32.gmra.mxu0 %v2346
        %v3140 = vpop.f32.mrf.mxu0
        %v3141 = vadd.f32 %v3028, %v3140
        %3142 = vmatmul.f32.gmra.mxu0 %v2347
        %v3143 = vpop.f32.mrf.mxu0
        %v3144 = vadd.f32 %v3031, %v3143
        %3145 = vmatmul.f32.gmra.mxu0 %v2348
        %v3146 = vpop.f32.mrf.mxu0
        %v3147 = vadd.f32 %v3034, %v3146
        %3148 = vmatmul.f32.gmra.mxu0 %v2349
        %v3149 = vpop.f32.mrf.mxu0
        %v3150 = vadd.f32 %v3037, %v3149
        %3151 = vmatmul.f32.gmra.mxu0 %v2350
        %v3152 = vpop.f32.mrf.mxu0
        %v3153 = vadd.f32 %v3040, %v3152
        %3154 = vmatmul.f32.gmra.mxu0 %v2351
        %v3155 = vpop.f32.mrf.mxu0
        %v3156 = vadd.f32 %v3043, %v3155
        %3157 = vdwg.mxu0
        %3158 = vmatpush.msra.mxu0 %v2415
        %3159 = vmatpush.msra.mxu0 %v2411
        %3160 = vmatpush.msra.mxu0 %v2407
        %3161 = vmatpush.msra.mxu0 %v2403
        %3162 = vmatpush.msra.mxu0 %v2399
        %3163 = vmatpush.msra.mxu0 %v2395
        %3164 = vmatpush.msra.mxu0 %v2391
        %3165 = vmatpush.msra.mxu0 %v2387
        %3166 = vmatpush.msra.mxu0 %v2383
        %3167 = vmatpush.msra.mxu0 %v2379
        %3168 = vmatpush.msra.mxu0 %v2375
        %3169 = vmatpush.msra.mxu0 %v2371
        %3170 = vmatpush.msra.mxu0 %v2367
        %3171 = vmatpush.msra.mxu0 %v2363
        %3172 = vmatpush.msra.mxu0 %v2359
        %3173 = vmatpush.msra.mxu0 %v2355
        %3174 = vmatmul.f32.gmra.mxu0 %v2064
        %v3175 = vpop.f32.mrf.mxu0
        %v3176 = vadd.f32 0.0, %v3175
        %3177 = vmatmul.f32.gmra.mxu0 %v2065
        %v3178 = vpop.f32.mrf.mxu0
        %v3179 = vadd.f32 0.0, %v3178
        %3180 = vmatmul.f32.gmra.mxu0 %v2066
        %v3181 = vpop.f32.mrf.mxu0
        %v3182 = vadd.f32 0.0, %v3181
        %3183 = vmatmul.f32.gmra.mxu0 %v2067
        %v3184 = vpop.f32.mrf.mxu0
        %v3185 = vadd.f32 0.0, %v3184
        %3186 = vmatmul.f32.gmra.mxu0 %v2068
        %v3187 = vpop.f32.mrf.mxu0
        %v3188 = vadd.f32 0.0, %v3187
        %3189 = vmatmul.f32.gmra.mxu0 %v2069
        %v3190 = vpop.f32.mrf.mxu0
        %v3191 = vadd.f32 0.0, %v3190
        %3192 = vmatmul.f32.gmra.mxu0 %v2070
        %v3193 = vpop.f32.mrf.mxu0
        %v3194 = vadd.f32 0.0, %v3193
        %3195 = vmatmul.f32.gmra.mxu0 %v2071
        %v3196 = vpop.f32.mrf.mxu0
        %v3197 = vadd.f32 0.0, %v3196
        %3198 = vmatmul.f32.gmra.mxu0 %v2072
        %v3199 = vpop.f32.mrf.mxu0
        %v3200 = vadd.f32 0.0, %v3199
        %3201 = vmatmul.f32.gmra.mxu0 %v2073
        %v3202 = vpop.f32.mrf.mxu0
        %v3203 = vadd.f32 0.0, %v3202
        %3204 = vmatmul.f32.gmra.mxu0 %v2074
        %v3205 = vpop.f32.mrf.mxu0
        %v3206 = vadd.f32 0.0, %v3205
        %3207 = vmatmul.f32.gmra.mxu0 %v2075
        %v3208 = vpop.f32.mrf.mxu0
        %v3209 = vadd.f32 0.0, %v3208
        %3210 = vmatmul.f32.gmra.mxu0 %v2076
        %v3211 = vpop.f32.mrf.mxu0
        %v3212 = vadd.f32 0.0, %v3211
        %3213 = vmatmul.f32.gmra.mxu0 %v2077
        %v3214 = vpop.f32.mrf.mxu0
        %v3215 = vadd.f32 0.0, %v3214
        %3216 = vmatmul.f32.gmra.mxu0 %v2078
        %v3217 = vpop.f32.mrf.mxu0
        %v3218 = vadd.f32 0.0, %v3217
        %3219 = vmatmul.f32.gmra.mxu0 %v2079
        %v3220 = vpop.f32.mrf.mxu0
        %v3221 = vadd.f32 0.0, %v3220
        %3222 = vmatmul.f32.gmra.mxu0 %v2080
        %v3223 = vpop.f32.mrf.mxu0
        %v3224 = vadd.f32 0.0, %v3223
        %3225 = vmatmul.f32.gmra.mxu0 %v2081
        %v3226 = vpop.f32.mrf.mxu0
        %v3227 = vadd.f32 0.0, %v3226
        %3228 = vmatmul.f32.gmra.mxu0 %v2082
        %v3229 = vpop.f32.mrf.mxu0
        %v3230 = vadd.f32 0.0, %v3229
        %3231 = vmatmul.f32.gmra.mxu0 %v2083
        %v3232 = vpop.f32.mrf.mxu0
        %v3233 = vadd.f32 0.0, %v3232
        %3234 = vmatmul.f32.gmra.mxu0 %v2084
        %v3235 = vpop.f32.mrf.mxu0
        %v3236 = vadd.f32 0.0, %v3235
        %3237 = vmatmul.f32.gmra.mxu0 %v2085
        %v3238 = vpop.f32.mrf.mxu0
        %v3239 = vadd.f32 0.0, %v3238
        %3240 = vmatmul.f32.gmra.mxu0 %v2086
        %v3241 = vpop.f32.mrf.mxu0
        %v3242 = vadd.f32 0.0, %v3241
        %3243 = vmatmul.f32.gmra.mxu0 %v2087
        %v3244 = vpop.f32.mrf.mxu0
        %v3245 = vadd.f32 0.0, %v3244
        %3246 = vmatmul.f32.gmra.mxu0 %v2088
        %v3247 = vpop.f32.mrf.mxu0
        %v3248 = vadd.f32 0.0, %v3247
        %3249 = vmatmul.f32.gmra.mxu0 %v2089
        %v3250 = vpop.f32.mrf.mxu0
        %v3251 = vadd.f32 0.0, %v3250
        %3252 = vmatmul.f32.gmra.mxu0 %v2090
        %v3253 = vpop.f32.mrf.mxu0
        %v3254 = vadd.f32 0.0, %v3253
        %3255 = vmatmul.f32.gmra.mxu0 %v2091
        %v3256 = vpop.f32.mrf.mxu0
        %v3257 = vadd.f32 0.0, %v3256
        %3258 = vmatmul.f32.gmra.mxu0 %v2092
        %v3259 = vpop.f32.mrf.mxu0
        %v3260 = vadd.f32 0.0, %v3259
        %3261 = vmatmul.f32.gmra.mxu0 %v2093
        %v3262 = vpop.f32.mrf.mxu0
        %v3263 = vadd.f32 0.0, %v3262
        %3264 = vmatmul.f32.gmra.mxu0 %v2094
        %v3265 = vpop.f32.mrf.mxu0
        %v3266 = vadd.f32 0.0, %v3265
        %3267 = vmatmul.f32.gmra.mxu0 %v2095
        %v3268 = vpop.f32.mrf.mxu0
        %v3269 = vadd.f32 0.0, %v3268
        %3270 = vdwg.mxu0
        %3271 = vmatpush.msra.mxu0 %v2479
        %3272 = vmatpush.msra.mxu0 %v2475
        %3273 = vmatpush.msra.mxu0 %v2471
        %3274 = vmatpush.msra.mxu0 %v2467
        %3275 = vmatpush.msra.mxu0 %v2463
        %3276 = vmatpush.msra.mxu0 %v2459
        %3277 = vmatpush.msra.mxu0 %v2455
        %3278 = vmatpush.msra.mxu0 %v2451
        %3279 = vmatpush.msra.mxu0 %v2447
        %3280 = vmatpush.msra.mxu0 %v2443
        %3281 = vmatpush.msra.mxu0 %v2439
        %3282 = vmatpush.msra.mxu0 %v2435
        %3283 = vmatpush.msra.mxu0 %v2431
        %3284 = vmatpush.msra.mxu0 %v2427
        %3285 = vmatpush.msra.mxu0 %v2423
        %3286 = vmatpush.msra.mxu0 %v2419
        %3287 = vmatmul.f32.gmra.mxu0 %v2320
        %v3288 = vpop.f32.mrf.mxu0
        %v3289 = vadd.f32 %v3176, %v3288
        %3290 = vmatmul.f32.gmra.mxu0 %v2321
        %v3291 = vpop.f32.mrf.mxu0
        %v3292 = vadd.f32 %v3179, %v3291
        %3293 = vmatmul.f32.gmra.mxu0 %v2322
        %v3294 = vpop.f32.mrf.mxu0
        %v3295 = vadd.f32 %v3182, %v3294
        %3296 = vmatmul.f32.gmra.mxu0 %v2323
        %v3297 = vpop.f32.mrf.mxu0
        %v3298 = vadd.f32 %v3185, %v3297
        %3299 = vmatmul.f32.gmra.mxu0 %v2324
        %v3300 = vpop.f32.mrf.mxu0
        %v3301 = vadd.f32 %v3188, %v3300
        %3302 = vmatmul.f32.gmra.mxu0 %v2325
        %v3303 = vpop.f32.mrf.mxu0
        %v3304 = vadd.f32 %v3191, %v3303
        %3305 = vmatmul.f32.gmra.mxu0 %v2326
        %v3306 = vpop.f32.mrf.mxu0
        %v3307 = vadd.f32 %v3194, %v3306
        %3308 = vmatmul.f32.gmra.mxu0 %v2327
        %v3309 = vpop.f32.mrf.mxu0
        %v3310 = vadd.f32 %v3197, %v3309
        %3311 = vmatmul.f32.gmra.mxu0 %v2328
        %v3312 = vpop.f32.mrf.mxu0
        %v3313 = vadd.f32 %v3200, %v3312
        %3314 = vmatmul.f32.gmra.mxu0 %v2329
        %v3315 = vpop.f32.mrf.mxu0
        %v3316 = vadd.f32 %v3203, %v3315
        %3317 = vmatmul.f32.gmra.mxu0 %v2330
        %v3318 = vpop.f32.mrf.mxu0
        %v3319 = vadd.f32 %v3206, %v3318
        %3320 = vmatmul.f32.gmra.mxu0 %v2331
        %v3321 = vpop.f32.mrf.mxu0
        %v3322 = vadd.f32 %v3209, %v3321
        %3323 = vmatmul.f32.gmra.mxu0 %v2332
        %v3324 = vpop.f32.mrf.mxu0
        %v3325 = vadd.f32 %v3212, %v3324
        %3326 = vmatmul.f32.gmra.mxu0 %v2333
        %v3327 = vpop.f32.mrf.mxu0
        %v3328 = vadd.f32 %v3215, %v3327
        %3329 = vmatmul.f32.gmra.mxu0 %v2334
        %v3330 = vpop.f32.mrf.mxu0
        %v3331 = vadd.f32 %v3218, %v3330
        %3332 = vmatmul.f32.gmra.mxu0 %v2335
        %v3333 = vpop.f32.mrf.mxu0
        %v3334 = vadd.f32 %v3221, %v3333
        %3335 = vmatmul.f32.gmra.mxu0 %v2336
        %v3336 = vpop.f32.mrf.mxu0
        %v3337 = vadd.f32 %v3224, %v3336
        %3338 = vmatmul.f32.gmra.mxu0 %v2337
        %v3339 = vpop.f32.mrf.mxu0
        %v3340 = vadd.f32 %v3227, %v3339
        %3341 = vmatmul.f32.gmra.mxu0 %v2338
        %v3342 = vpop.f32.mrf.mxu0
        %v3343 = vadd.f32 %v3230, %v3342
        %3344 = vmatmul.f32.gmra.mxu0 %v2339
        %v3345 = vpop.f32.mrf.mxu0
        %v3346 = vadd.f32 %v3233, %v3345
        %3347 = vmatmul.f32.gmra.mxu0 %v2340
        %v3348 = vpop.f32.mrf.mxu0
        %v3349 = vadd.f32 %v3236, %v3348
        %3350 = vmatmul.f32.gmra.mxu0 %v2341
        %v3351 = vpop.f32.mrf.mxu0
        %v3352 = vadd.f32 %v3239, %v3351
        %3353 = vmatmul.f32.gmra.mxu0 %v2342
        %v3354 = vpop.f32.mrf.mxu0
        %v3355 = vadd.f32 %v3242, %v3354
        %3356 = vmatmul.f32.gmra.mxu0 %v2343
        %v3357 = vpop.f32.mrf.mxu0
        %v3358 = vadd.f32 %v3245, %v3357
        %3359 = vmatmul.f32.gmra.mxu0 %v2344
        %v3360 = vpop.f32.mrf.mxu0
        %v3361 = vadd.f32 %v3248, %v3360
        %3362 = vmatmul.f32.gmra.mxu0 %v2345
        %v3363 = vpop.f32.mrf.mxu0
        %v3364 = vadd.f32 %v3251, %v3363
        %3365 = vmatmul.f32.gmra.mxu0 %v2346
        %v3366 = vpop.f32.mrf.mxu0
        %v3367 = vadd.f32 %v3254, %v3366
        %3368 = vmatmul.f32.gmra.mxu0 %v2347
        %v3369 = vpop.f32.mrf.mxu0
        %v3370 = vadd.f32 %v3257, %v3369
        %3371 = vmatmul.f32.gmra.mxu0 %v2348
        %v3372 = vpop.f32.mrf.mxu0
        %v3373 = vadd.f32 %v3260, %v3372
        %3374 = vmatmul.f32.gmra.mxu0 %v2349
        %v3375 = vpop.f32.mrf.mxu0
        %v3376 = vadd.f32 %v3263, %v3375
        %3377 = vmatmul.f32.gmra.mxu0 %v2350
        %v3378 = vpop.f32.mrf.mxu0
        %v3379 = vadd.f32 %v3266, %v3378
        %3380 = vmatmul.f32.gmra.mxu0 %v2351
        %v3381 = vpop.f32.mrf.mxu0
        %v3382 = vadd.f32 %v3269, %v3381
        %3383 = vdwg.mxu0
        %v3384 = vperm.slane %v482, 3
        %v3385 = vadd.f32 %v2611, %v3384
        %v3386 = vadd.f32 %v2614, %v3384
        %v3387 = vadd.f32 %v2617, %v3384
        %v3388 = vadd.f32 %v2620, %v3384
        %v3389 = vadd.f32 %v2623, %v3384
        %v3390 = vadd.f32 %v2626, %v3384
        %v3391 = vadd.f32 %v2629, %v3384
        %v3392 = vadd.f32 %v2632, %v3384
        %v3393 = vadd.f32 %v2635, %v3384
        %v3394 = vadd.f32 %v2638, %v3384
        %v3395 = vadd.f32 %v2641, %v3384
        %v3396 = vadd.f32 %v2644, %v3384
        %v3397 = vadd.f32 %v2647, %v3384
        %v3398 = vadd.f32 %v2650, %v3384
        %v3399 = vadd.f32 %v2653, %v3384
        %v3400 = vadd.f32 %v2656, %v3384
        %v3401 = vadd.f32 %v2659, %v3384
        %v3402 = vadd.f32 %v2662, %v3384
        %v3403 = vadd.f32 %v2665, %v3384
        %v3404 = vadd.f32 %v2668, %v3384
        %v3405 = vadd.f32 %v2671, %v3384
        %v3406 = vadd.f32 %v2674, %v3384
        %v3407 = vadd.f32 %v2677, %v3384
        %v3408 = vadd.f32 %v2680, %v3384
        %v3409 = vadd.f32 %v2683, %v3384
        %v3410 = vadd.f32 %v2686, %v3384
        %v3411 = vadd.f32 %v2689, %v3384
        %v3412 = vadd.f32 %v2692, %v3384
        %v3413 = vadd.f32 %v2695, %v3384
        %v3414 = vadd.f32 %v2698, %v3384
        %v3415 = vadd.f32 %v2701, %v3384
        %v3416 = vadd.f32 %v2704, %v3384
        %v3417 = vxor.u32 %v3385, 2147483648
        %v3418 = vxor.u32 %v3386, 2147483648
        %v3419 = vxor.u32 %v3387, 2147483648
        %v3420 = vxor.u32 %v3388, 2147483648
        %v3421 = vxor.u32 %v3389, 2147483648
        %v3422 = vxor.u32 %v3390, 2147483648
        %v3423 = vxor.u32 %v3391, 2147483648
        %v3424 = vxor.u32 %v3392, 2147483648
        %v3425 = vxor.u32 %v3393, 2147483648
        %v3426 = vxor.u32 %v3394, 2147483648
        %v3427 = vxor.u32 %v3395, 2147483648
        %v3428 = vxor.u32 %v3396, 2147483648
        %v3429 = vxor.u32 %v3397, 2147483648
        %v3430 = vxor.u32 %v3398, 2147483648
        %v3431 = vxor.u32 %v3399, 2147483648
        %v3432 = vxor.u32 %v3400, 2147483648
        %v3433 = vxor.u32 %v3401, 2147483648
        %v3434 = vxor.u32 %v3402, 2147483648
        %v3435 = vxor.u32 %v3403, 2147483648
        %v3436 = vxor.u32 %v3404, 2147483648
        %v3437 = vxor.u32 %v3405, 2147483648
        %v3438 = vxor.u32 %v3406, 2147483648
        %v3439 = vxor.u32 %v3407, 2147483648
        %v3440 = vxor.u32 %v3408, 2147483648
        %v3441 = vxor.u32 %v3409, 2147483648
        %v3442 = vxor.u32 %v3410, 2147483648
        %v3443 = vxor.u32 %v3411, 2147483648
        %v3444 = vxor.u32 %v3412, 2147483648
        %v3445 = vxor.u32 %v3413, 2147483648
        %v3446 = vxor.u32 %v3414, 2147483648
        %v3447 = vxor.u32 %v3415, 2147483648
        %v3448 = vxor.u32 %v3416, 2147483648
        %v3449 = vmul.f32 %v3417, 1.442695
        %v3450 = vpow.pop %v3449
        %v3451 = vmul.f32 %v3418, 1.442695
        %v3452 = vpow.pop %v3451
        %v3453 = vmul.f32 %v3419, 1.442695
        %v3454 = vpow.pop %v3453
        %v3455 = vmul.f32 %v3420, 1.442695
        %v3456 = vpow.pop %v3455
        %v3457 = vmul.f32 %v3421, 1.442695
        %v3458 = vpow.pop %v3457
        %v3459 = vmul.f32 %v3422, 1.442695
        %v3460 = vpow.pop %v3459
        %v3461 = vmul.f32 %v3423, 1.442695
        %v3462 = vpow.pop %v3461
        %v3463 = vmul.f32 %v3424, 1.442695
        %v3464 = vpow.pop %v3463
        %v3465 = vmul.f32 %v3425, 1.442695
        %v3466 = vpow.pop %v3465
        %v3467 = vmul.f32 %v3426, 1.442695
        %v3468 = vpow.pop %v3467
        %v3469 = vmul.f32 %v3427, 1.442695
        %v3470 = vpow.pop %v3469
        %v3471 = vmul.f32 %v3428, 1.442695
        %v3472 = vpow.pop %v3471
        %v3473 = vmul.f32 %v3429, 1.442695
        %v3474 = vpow.pop %v3473
        %v3475 = vmul.f32 %v3430, 1.442695
        %v3476 = vpow.pop %v3475
        %v3477 = vmul.f32 %v3431, 1.442695
        %v3478 = vpow.pop %v3477
        %v3479 = vmul.f32 %v3432, 1.442695
        %v3480 = vpow.pop %v3479
        %v3481 = vmul.f32 %v3433, 1.442695
        %v3482 = vpow.pop %v3481
        %v3483 = vmul.f32 %v3434, 1.442695
        %v3484 = vpow.pop %v3483
        %v3485 = vmul.f32 %v3435, 1.442695
        %v3486 = vpow.pop %v3485
        %v3487 = vmul.f32 %v3436, 1.442695
        %v3488 = vpow.pop %v3487
        %v3489 = vmul.f32 %v3437, 1.442695
        %v3490 = vpow.pop %v3489
        %v3491 = vmul.f32 %v3438, 1.442695
        %v3492 = vpow.pop %v3491
        %v3493 = vmul.f32 %v3439, 1.442695
        %v3494 = vpow.pop %v3493
        %v3495 = vmul.f32 %v3440, 1.442695
        %v3496 = vpow.pop %v3495
        %v3497 = vmul.f32 %v3441, 1.442695
        %v3498 = vpow.pop %v3497
        %v3499 = vmul.f32 %v3442, 1.442695
        %v3500 = vpow.pop %v3499
        %v3501 = vmul.f32 %v3443, 1.442695
        %v3502 = vpow.pop %v3501
        %v3503 = vmul.f32 %v3444, 1.442695
        %v3504 = vpow.pop %v3503
        %v3505 = vmul.f32 %v3445, 1.442695
        %v3506 = vpow.pop %v3505
        %v3507 = vmul.f32 %v3446, 1.442695
        %v3508 = vpow.pop %v3507
        %v3509 = vmul.f32 %v3447, 1.442695
        %v3510 = vpow.pop %v3509
        %v3511 = vmul.f32 %v3448, 1.442695
        %v3512 = vpow.pop %v3511
        %v3513 = vadd.f32 %v3450, 1.0
        %v3514 = vadd.f32 %v3452, 1.0
        %v3515 = vadd.f32 %v3454, 1.0
        %v3516 = vadd.f32 %v3456, 1.0
        %v3517 = vadd.f32 %v3458, 1.0
        %v3518 = vadd.f32 %v3460, 1.0
        %v3519 = vadd.f32 %v3462, 1.0
        %v3520 = vadd.f32 %v3464, 1.0
        %v3521 = vadd.f32 %v3466, 1.0
        %v3522 = vadd.f32 %v3468, 1.0
        %v3523 = vadd.f32 %v3470, 1.0
        %v3524 = vadd.f32 %v3472, 1.0
        %v3525 = vadd.f32 %v3474, 1.0
        %v3526 = vadd.f32 %v3476, 1.0
        %v3527 = vadd.f32 %v3478, 1.0
        %v3528 = vadd.f32 %v3480, 1.0
        %v3529 = vadd.f32 %v3482, 1.0
        %v3530 = vadd.f32 %v3484, 1.0
        %v3531 = vadd.f32 %v3486, 1.0
        %v3532 = vadd.f32 %v3488, 1.0
        %v3533 = vadd.f32 %v3490, 1.0
        %v3534 = vadd.f32 %v3492, 1.0
        %v3535 = vadd.f32 %v3494, 1.0
        %v3536 = vadd.f32 %v3496, 1.0
        %v3537 = vadd.f32 %v3498, 1.0
        %v3538 = vadd.f32 %v3500, 1.0
        %v3539 = vadd.f32 %v3502, 1.0
        %v3540 = vadd.f32 %v3504, 1.0
        %v3541 = vadd.f32 %v3506, 1.0
        %v3542 = vadd.f32 %v3508, 1.0
        %v3543 = vadd.f32 %v3510, 1.0
        %v3544 = vadd.f32 %v3512, 1.0
        %v3545 = vrcp.pop %v3513
        %v3546 = vmul.f32 %v3513, %v3545
        %v3547 = vsub.f32 1.0, %v3546
        %v3548 = vmul.f32 %v3545, %v3547
        %v3549 = vadd.f32 %v3545, %v3548
        %vm3550 = vweird.f32 %v3513
        %vm3551 = vweird.f32 %v3545
        %vm3552 = vmor %vm3550, %vm3551
        %v3553 = vsel %vm3552, %v3545, %v3549
        %v3554 = vand.u32 2147483647, %v3513
        %vm3555 = vcmp.eq.f32.partialorder %v3554, 8.507059e+37
        %v3556 = vand.u32 %v3513, 2147483648
        %v3557 = vor.u32 1.1754944e-38, %v3556
        %v3558 = vsel %vm3555, %v3557, %v3553
        %v3559 = vmul.f32 1.0, %v3558
        %v3560 = vrcp.pop %v3514
        %v3561 = vmul.f32 %v3514, %v3560
        %v3562 = vsub.f32 1.0, %v3561
        %v3563 = vmul.f32 %v3560, %v3562
        %v3564 = vadd.f32 %v3560, %v3563
        %vm3565 = vweird.f32 %v3514
        %vm3566 = vweird.f32 %v3560
        %vm3567 = vmor %vm3565, %vm3566
        %v3568 = vsel %vm3567, %v3560, %v3564
        %v3569 = vand.u32 2147483647, %v3514
        %vm3570 = vcmp.eq.f32.partialorder %v3569, 8.507059e+37
        %v3571 = vand.u32 %v3514, 2147483648
        %v3572 = vor.u32 1.1754944e-38, %v3571
        %v3573 = vsel %vm3570, %v3572, %v3568
        %v3574 = vmul.f32 1.0, %v3573
        %v3575 = vrcp.pop %v3515
        %v3576 = vmul.f32 %v3515, %v3575
        %v3577 = vsub.f32 1.0, %v3576
        %v3578 = vmul.f32 %v3575, %v3577
        %v3579 = vadd.f32 %v3575, %v3578
        %vm3580 = vweird.f32 %v3515
        %vm3581 = vweird.f32 %v3575
        %vm3582 = vmor %vm3580, %vm3581
        %v3583 = vsel %vm3582, %v3575, %v3579
        %v3584 = vand.u32 2147483647, %v3515
        %vm3585 = vcmp.eq.f32.partialorder %v3584, 8.507059e+37
        %v3586 = vand.u32 %v3515, 2147483648
        %v3587 = vor.u32 1.1754944e-38, %v3586
        %v3588 = vsel %vm3585, %v3587, %v3583
        %v3589 = vmul.f32 1.0, %v3588
        %v3590 = vrcp.pop %v3516
        %v3591 = vmul.f32 %v3516, %v3590
        %v3592 = vsub.f32 1.0, %v3591
        %v3593 = vmul.f32 %v3590, %v3592
        %v3594 = vadd.f32 %v3590, %v3593
        %vm3595 = vweird.f32 %v3516
        %vm3596 = vweird.f32 %v3590
        %vm3597 = vmor %vm3595, %vm3596
        %v3598 = vsel %vm3597, %v3590, %v3594
        %v3599 = vand.u32 2147483647, %v3516
        %vm3600 = vcmp.eq.f32.partialorder %v3599, 8.507059e+37
        %v3601 = vand.u32 %v3516, 2147483648
        %v3602 = vor.u32 1.1754944e-38, %v3601
        %v3603 = vsel %vm3600, %v3602, %v3598
        %v3604 = vmul.f32 1.0, %v3603
        %v3605 = vrcp.pop %v3517
        %v3606 = vmul.f32 %v3517, %v3605
        %v3607 = vsub.f32 1.0, %v3606
        %v3608 = vmul.f32 %v3605, %v3607
        %v3609 = vadd.f32 %v3605, %v3608
        %vm3610 = vweird.f32 %v3517
        %vm3611 = vweird.f32 %v3605
        %vm3612 = vmor %vm3610, %vm3611
        %v3613 = vsel %vm3612, %v3605, %v3609
        %v3614 = vand.u32 2147483647, %v3517
        %vm3615 = vcmp.eq.f32.partialorder %v3614, 8.507059e+37
        %v3616 = vand.u32 %v3517, 2147483648
        %v3617 = vor.u32 1.1754944e-38, %v3616
        %v3618 = vsel %vm3615, %v3617, %v3613
        %v3619 = vmul.f32 1.0, %v3618
        %v3620 = vrcp.pop %v3518
        %v3621 = vmul.f32 %v3518, %v3620
        %v3622 = vsub.f32 1.0, %v3621
        %v3623 = vmul.f32 %v3620, %v3622
        %v3624 = vadd.f32 %v3620, %v3623
        %vm3625 = vweird.f32 %v3518
        %vm3626 = vweird.f32 %v3620
        %vm3627 = vmor %vm3625, %vm3626
        %v3628 = vsel %vm3627, %v3620, %v3624
        %v3629 = vand.u32 2147483647, %v3518
        %vm3630 = vcmp.eq.f32.partialorder %v3629, 8.507059e+37
        %v3631 = vand.u32 %v3518, 2147483648
        %v3632 = vor.u32 1.1754944e-38, %v3631
        %v3633 = vsel %vm3630, %v3632, %v3628
        %v3634 = vmul.f32 1.0, %v3633
        %v3635 = vrcp.pop %v3519
        %v3636 = vmul.f32 %v3519, %v3635
        %v3637 = vsub.f32 1.0, %v3636
        %v3638 = vmul.f32 %v3635, %v3637
        %v3639 = vadd.f32 %v3635, %v3638
        %vm3640 = vweird.f32 %v3519
        %vm3641 = vweird.f32 %v3635
        %vm3642 = vmor %vm3640, %vm3641
        %v3643 = vsel %vm3642, %v3635, %v3639
        %v3644 = vand.u32 2147483647, %v3519
        %vm3645 = vcmp.eq.f32.partialorder %v3644, 8.507059e+37
        %v3646 = vand.u32 %v3519, 2147483648
        %v3647 = vor.u32 1.1754944e-38, %v3646
        %v3648 = vsel %vm3645, %v3647, %v3643
        %v3649 = vmul.f32 1.0, %v3648
        %v3650 = vrcp.pop %v3520
        %v3651 = vmul.f32 %v3520, %v3650
        %v3652 = vsub.f32 1.0, %v3651
        %v3653 = vmul.f32 %v3650, %v3652
        %v3654 = vadd.f32 %v3650, %v3653
        %vm3655 = vweird.f32 %v3520
        %vm3656 = vweird.f32 %v3650
        %vm3657 = vmor %vm3655, %vm3656
        %v3658 = vsel %vm3657, %v3650, %v3654
        %v3659 = vand.u32 2147483647, %v3520
        %vm3660 = vcmp.eq.f32.partialorder %v3659, 8.507059e+37
        %v3661 = vand.u32 %v3520, 2147483648
        %v3662 = vor.u32 1.1754944e-38, %v3661
        %v3663 = vsel %vm3660, %v3662, %v3658
        %v3664 = vmul.f32 1.0, %v3663
        %v3665 = vrcp.pop %v3521
        %v3666 = vmul.f32 %v3521, %v3665
        %v3667 = vsub.f32 1.0, %v3666
        %v3668 = vmul.f32 %v3665, %v3667
        %v3669 = vadd.f32 %v3665, %v3668
        %vm3670 = vweird.f32 %v3521
        %vm3671 = vweird.f32 %v3665
        %vm3672 = vmor %vm3670, %vm3671
        %v3673 = vsel %vm3672, %v3665, %v3669
        %v3674 = vand.u32 2147483647, %v3521
        %vm3675 = vcmp.eq.f32.partialorder %v3674, 8.507059e+37
        %v3676 = vand.u32 %v3521, 2147483648
        %v3677 = vor.u32 1.1754944e-38, %v3676
        %v3678 = vsel %vm3675, %v3677, %v3673
        %v3679 = vmul.f32 1.0, %v3678
        %v3680 = vrcp.pop %v3522
        %v3681 = vmul.f32 %v3522, %v3680
        %v3682 = vsub.f32 1.0, %v3681
        %v3683 = vmul.f32 %v3680, %v3682
        %v3684 = vadd.f32 %v3680, %v3683
        %vm3685 = vweird.f32 %v3522
        %vm3686 = vweird.f32 %v3680
        %vm3687 = vmor %vm3685, %vm3686
        %v3688 = vsel %vm3687, %v3680, %v3684
        %v3689 = vand.u32 2147483647, %v3522
        %vm3690 = vcmp.eq.f32.partialorder %v3689, 8.507059e+37
        %v3691 = vand.u32 %v3522, 2147483648
        %v3692 = vor.u32 1.1754944e-38, %v3691
        %v3693 = vsel %vm3690, %v3692, %v3688
        %v3694 = vmul.f32 1.0, %v3693
        %v3695 = vrcp.pop %v3523
        %v3696 = vmul.f32 %v3523, %v3695
        %v3697 = vsub.f32 1.0, %v3696
        %v3698 = vmul.f32 %v3695, %v3697
        %v3699 = vadd.f32 %v3695, %v3698
        %vm3700 = vweird.f32 %v3523
        %vm3701 = vweird.f32 %v3695
        %vm3702 = vmor %vm3700, %vm3701
        %v3703 = vsel %vm3702, %v3695, %v3699
        %v3704 = vand.u32 2147483647, %v3523
        %vm3705 = vcmp.eq.f32.partialorder %v3704, 8.507059e+37
        %v3706 = vand.u32 %v3523, 2147483648
        %v3707 = vor.u32 1.1754944e-38, %v3706
        %v3708 = vsel %vm3705, %v3707, %v3703
        %v3709 = vmul.f32 1.0, %v3708
        %v3710 = vrcp.pop %v3524
        %v3711 = vmul.f32 %v3524, %v3710
        %v3712 = vsub.f32 1.0, %v3711
        %v3713 = vmul.f32 %v3710, %v3712
        %v3714 = vadd.f32 %v3710, %v3713
        %vm3715 = vweird.f32 %v3524
        %vm3716 = vweird.f32 %v3710
        %vm3717 = vmor %vm3715, %vm3716
        %v3718 = vsel %vm3717, %v3710, %v3714
        %v3719 = vand.u32 2147483647, %v3524
        %vm3720 = vcmp.eq.f32.partialorder %v3719, 8.507059e+37
        %v3721 = vand.u32 %v3524, 2147483648
        %v3722 = vor.u32 1.1754944e-38, %v3721
        %v3723 = vsel %vm3720, %v3722, %v3718
        %v3724 = vmul.f32 1.0, %v3723
        %v3725 = vrcp.pop %v3525
        %v3726 = vmul.f32 %v3525, %v3725
        %v3727 = vsub.f32 1.0, %v3726
        %v3728 = vmul.f32 %v3725, %v3727
        %v3729 = vadd.f32 %v3725, %v3728
        %vm3730 = vweird.f32 %v3525
        %vm3731 = vweird.f32 %v3725
        %vm3732 = vmor %vm3730, %vm3731
        %v3733 = vsel %vm3732, %v3725, %v3729
        %v3734 = vand.u32 2147483647, %v3525
        %vm3735 = vcmp.eq.f32.partialorder %v3734, 8.507059e+37
        %v3736 = vand.u32 %v3525, 2147483648
        %v3737 = vor.u32 1.1754944e-38, %v3736
        %v3738 = vsel %vm3735, %v3737, %v3733
        %v3739 = vmul.f32 1.0, %v3738
        %v3740 = vrcp.pop %v3526
        %v3741 = vmul.f32 %v3526, %v3740
        %v3742 = vsub.f32 1.0, %v3741
        %v3743 = vmul.f32 %v3740, %v3742
        %v3744 = vadd.f32 %v3740, %v3743
        %vm3745 = vweird.f32 %v3526
        %vm3746 = vweird.f32 %v3740
        %vm3747 = vmor %vm3745, %vm3746
        %v3748 = vsel %vm3747, %v3740, %v3744
        %v3749 = vand.u32 2147483647, %v3526
        %vm3750 = vcmp.eq.f32.partialorder %v3749, 8.507059e+37
        %v3751 = vand.u32 %v3526, 2147483648
        %v3752 = vor.u32 1.1754944e-38, %v3751
        %v3753 = vsel %vm3750, %v3752, %v3748
        %v3754 = vmul.f32 1.0, %v3753
        %v3755 = vrcp.pop %v3527
        %v3756 = vmul.f32 %v3527, %v3755
        %v3757 = vsub.f32 1.0, %v3756
        %v3758 = vmul.f32 %v3755, %v3757
        %v3759 = vadd.f32 %v3755, %v3758
        %vm3760 = vweird.f32 %v3527
        %vm3761 = vweird.f32 %v3755
        %vm3762 = vmor %vm3760, %vm3761
        %v3763 = vsel %vm3762, %v3755, %v3759
        %v3764 = vand.u32 2147483647, %v3527
        %vm3765 = vcmp.eq.f32.partialorder %v3764, 8.507059e+37
        %v3766 = vand.u32 %v3527, 2147483648
        %v3767 = vor.u32 1.1754944e-38, %v3766
        %v3768 = vsel %vm3765, %v3767, %v3763
        %v3769 = vmul.f32 1.0, %v3768
        %v3770 = vrcp.pop %v3528
        %v3771 = vmul.f32 %v3528, %v3770
        %v3772 = vsub.f32 1.0, %v3771
        %v3773 = vmul.f32 %v3770, %v3772
        %v3774 = vadd.f32 %v3770, %v3773
        %vm3775 = vweird.f32 %v3528
        %vm3776 = vweird.f32 %v3770
        %vm3777 = vmor %vm3775, %vm3776
        %v3778 = vsel %vm3777, %v3770, %v3774
        %v3779 = vand.u32 2147483647, %v3528
        %vm3780 = vcmp.eq.f32.partialorder %v3779, 8.507059e+37
        %v3781 = vand.u32 %v3528, 2147483648
        %v3782 = vor.u32 1.1754944e-38, %v3781
        %v3783 = vsel %vm3780, %v3782, %v3778
        %v3784 = vmul.f32 1.0, %v3783
        %v3785 = vrcp.pop %v3529
        %v3786 = vmul.f32 %v3529, %v3785
        %v3787 = vsub.f32 1.0, %v3786
        %v3788 = vmul.f32 %v3785, %v3787
        %v3789 = vadd.f32 %v3785, %v3788
        %vm3790 = vweird.f32 %v3529
        %vm3791 = vweird.f32 %v3785
        %vm3792 = vmor %vm3790, %vm3791
        %v3793 = vsel %vm3792, %v3785, %v3789
        %v3794 = vand.u32 2147483647, %v3529
        %vm3795 = vcmp.eq.f32.partialorder %v3794, 8.507059e+37
        %v3796 = vand.u32 %v3529, 2147483648
        %v3797 = vor.u32 1.1754944e-38, %v3796
        %v3798 = vsel %vm3795, %v3797, %v3793
        %v3799 = vmul.f32 1.0, %v3798
        %v3800 = vrcp.pop %v3530
        %v3801 = vmul.f32 %v3530, %v3800
        %v3802 = vsub.f32 1.0, %v3801
        %v3803 = vmul.f32 %v3800, %v3802
        %v3804 = vadd.f32 %v3800, %v3803
        %vm3805 = vweird.f32 %v3530
        %vm3806 = vweird.f32 %v3800
        %vm3807 = vmor %vm3805, %vm3806
        %v3808 = vsel %vm3807, %v3800, %v3804
        %v3809 = vand.u32 2147483647, %v3530
        %vm3810 = vcmp.eq.f32.partialorder %v3809, 8.507059e+37
        %v3811 = vand.u32 %v3530, 2147483648
        %v3812 = vor.u32 1.1754944e-38, %v3811
        %v3813 = vsel %vm3810, %v3812, %v3808
        %v3814 = vmul.f32 1.0, %v3813
        %v3815 = vrcp.pop %v3531
        %v3816 = vmul.f32 %v3531, %v3815
        %v3817 = vsub.f32 1.0, %v3816
        %v3818 = vmul.f32 %v3815, %v3817
        %v3819 = vadd.f32 %v3815, %v3818
        %vm3820 = vweird.f32 %v3531
        %vm3821 = vweird.f32 %v3815
        %vm3822 = vmor %vm3820, %vm3821
        %v3823 = vsel %vm3822, %v3815, %v3819
        %v3824 = vand.u32 2147483647, %v3531
        %vm3825 = vcmp.eq.f32.partialorder %v3824, 8.507059e+37
        %v3826 = vand.u32 %v3531, 2147483648
        %v3827 = vor.u32 1.1754944e-38, %v3826
        %v3828 = vsel %vm3825, %v3827, %v3823
        %v3829 = vmul.f32 1.0, %v3828
        %v3830 = vrcp.pop %v3532
        %v3831 = vmul.f32 %v3532, %v3830
        %v3832 = vsub.f32 1.0, %v3831
        %v3833 = vmul.f32 %v3830, %v3832
        %v3834 = vadd.f32 %v3830, %v3833
        %vm3835 = vweird.f32 %v3532
        %vm3836 = vweird.f32 %v3830
        %vm3837 = vmor %vm3835, %vm3836
        %v3838 = vsel %vm3837, %v3830, %v3834
        %v3839 = vand.u32 2147483647, %v3532
        %vm3840 = vcmp.eq.f32.partialorder %v3839, 8.507059e+37
        %v3841 = vand.u32 %v3532, 2147483648
        %v3842 = vor.u32 1.1754944e-38, %v3841
        %v3843 = vsel %vm3840, %v3842, %v3838
        %v3844 = vmul.f32 1.0, %v3843
        %v3845 = vrcp.pop %v3533
        %v3846 = vmul.f32 %v3533, %v3845
        %v3847 = vsub.f32 1.0, %v3846
        %v3848 = vmul.f32 %v3845, %v3847
        %v3849 = vadd.f32 %v3845, %v3848
        %vm3850 = vweird.f32 %v3533
        %vm3851 = vweird.f32 %v3845
        %vm3852 = vmor %vm3850, %vm3851
        %v3853 = vsel %vm3852, %v3845, %v3849
        %v3854 = vand.u32 2147483647, %v3533
        %vm3855 = vcmp.eq.f32.partialorder %v3854, 8.507059e+37
        %v3856 = vand.u32 %v3533, 2147483648
        %v3857 = vor.u32 1.1754944e-38, %v3856
        %v3858 = vsel %vm3855, %v3857, %v3853
        %v3859 = vmul.f32 1.0, %v3858
        %v3860 = vrcp.pop %v3534
        %v3861 = vmul.f32 %v3534, %v3860
        %v3862 = vsub.f32 1.0, %v3861
        %v3863 = vmul.f32 %v3860, %v3862
        %v3864 = vadd.f32 %v3860, %v3863
        %vm3865 = vweird.f32 %v3534
        %vm3866 = vweird.f32 %v3860
        %vm3867 = vmor %vm3865, %vm3866
        %v3868 = vsel %vm3867, %v3860, %v3864
        %v3869 = vand.u32 2147483647, %v3534
        %vm3870 = vcmp.eq.f32.partialorder %v3869, 8.507059e+37
        %v3871 = vand.u32 %v3534, 2147483648
        %v3872 = vor.u32 1.1754944e-38, %v3871
        %v3873 = vsel %vm3870, %v3872, %v3868
        %v3874 = vmul.f32 1.0, %v3873
        %v3875 = vrcp.pop %v3535
        %v3876 = vmul.f32 %v3535, %v3875
        %v3877 = vsub.f32 1.0, %v3876
        %v3878 = vmul.f32 %v3875, %v3877
        %v3879 = vadd.f32 %v3875, %v3878
        %vm3880 = vweird.f32 %v3535
        %vm3881 = vweird.f32 %v3875
        %vm3882 = vmor %vm3880, %vm3881
        %v3883 = vsel %vm3882, %v3875, %v3879
        %v3884 = vand.u32 2147483647, %v3535
        %vm3885 = vcmp.eq.f32.partialorder %v3884, 8.507059e+37
        %v3886 = vand.u32 %v3535, 2147483648
        %v3887 = vor.u32 1.1754944e-38, %v3886
        %v3888 = vsel %vm3885, %v3887, %v3883
        %v3889 = vmul.f32 1.0, %v3888
        %v3890 = vrcp.pop %v3536
        %v3891 = vmul.f32 %v3536, %v3890
        %v3892 = vsub.f32 1.0, %v3891
        %v3893 = vmul.f32 %v3890, %v3892
        %v3894 = vadd.f32 %v3890, %v3893
        %vm3895 = vweird.f32 %v3536
        %vm3896 = vweird.f32 %v3890
        %vm3897 = vmor %vm3895, %vm3896
        %v3898 = vsel %vm3897, %v3890, %v3894
        %v3899 = vand.u32 2147483647, %v3536
        %vm3900 = vcmp.eq.f32.partialorder %v3899, 8.507059e+37
        %v3901 = vand.u32 %v3536, 2147483648
        %v3902 = vor.u32 1.1754944e-38, %v3901
        %v3903 = vsel %vm3900, %v3902, %v3898
        %v3904 = vmul.f32 1.0, %v3903
        %v3905 = vrcp.pop %v3537
        %v3906 = vmul.f32 %v3537, %v3905
        %v3907 = vsub.f32 1.0, %v3906
        %v3908 = vmul.f32 %v3905, %v3907
        %v3909 = vadd.f32 %v3905, %v3908
        %vm3910 = vweird.f32 %v3537
        %vm3911 = vweird.f32 %v3905
        %vm3912 = vmor %vm3910, %vm3911
        %v3913 = vsel %vm3912, %v3905, %v3909
        %v3914 = vand.u32 2147483647, %v3537
        %vm3915 = vcmp.eq.f32.partialorder %v3914, 8.507059e+37
        %v3916 = vand.u32 %v3537, 2147483648
        %v3917 = vor.u32 1.1754944e-38, %v3916
        %v3918 = vsel %vm3915, %v3917, %v3913
        %v3919 = vmul.f32 1.0, %v3918
        %v3920 = vrcp.pop %v3538
        %v3921 = vmul.f32 %v3538, %v3920
        %v3922 = vsub.f32 1.0, %v3921
        %v3923 = vmul.f32 %v3920, %v3922
        %v3924 = vadd.f32 %v3920, %v3923
        %vm3925 = vweird.f32 %v3538
        %vm3926 = vweird.f32 %v3920
        %vm3927 = vmor %vm3925, %vm3926
        %v3928 = vsel %vm3927, %v3920, %v3924
        %v3929 = vand.u32 2147483647, %v3538
        %vm3930 = vcmp.eq.f32.partialorder %v3929, 8.507059e+37
        %v3931 = vand.u32 %v3538, 2147483648
        %v3932 = vor.u32 1.1754944e-38, %v3931
        %v3933 = vsel %vm3930, %v3932, %v3928
        %v3934 = vmul.f32 1.0, %v3933
        %v3935 = vrcp.pop %v3539
        %v3936 = vmul.f32 %v3539, %v3935
        %v3937 = vsub.f32 1.0, %v3936
        %v3938 = vmul.f32 %v3935, %v3937
        %v3939 = vadd.f32 %v3935, %v3938
        %vm3940 = vweird.f32 %v3539
        %vm3941 = vweird.f32 %v3935
        %vm3942 = vmor %vm3940, %vm3941
        %v3943 = vsel %vm3942, %v3935, %v3939
        %v3944 = vand.u32 2147483647, %v3539
        %vm3945 = vcmp.eq.f32.partialorder %v3944, 8.507059e+37
        %v3946 = vand.u32 %v3539, 2147483648
        %v3947 = vor.u32 1.1754944e-38, %v3946
        %v3948 = vsel %vm3945, %v3947, %v3943
        %v3949 = vmul.f32 1.0, %v3948
        %v3950 = vrcp.pop %v3540
        %v3951 = vmul.f32 %v3540, %v3950
        %v3952 = vsub.f32 1.0, %v3951
        %v3953 = vmul.f32 %v3950, %v3952
        %v3954 = vadd.f32 %v3950, %v3953
        %vm3955 = vweird.f32 %v3540
        %vm3956 = vweird.f32 %v3950
        %vm3957 = vmor %vm3955, %vm3956
        %v3958 = vsel %vm3957, %v3950, %v3954
        %v3959 = vand.u32 2147483647, %v3540
        %vm3960 = vcmp.eq.f32.partialorder %v3959, 8.507059e+37
        %v3961 = vand.u32 %v3540, 2147483648
        %v3962 = vor.u32 1.1754944e-38, %v3961
        %v3963 = vsel %vm3960, %v3962, %v3958
        %v3964 = vmul.f32 1.0, %v3963
        %v3965 = vrcp.pop %v3541
        %v3966 = vmul.f32 %v3541, %v3965
        %v3967 = vsub.f32 1.0, %v3966
        %v3968 = vmul.f32 %v3965, %v3967
        %v3969 = vadd.f32 %v3965, %v3968
        %vm3970 = vweird.f32 %v3541
        %vm3971 = vweird.f32 %v3965
        %vm3972 = vmor %vm3970, %vm3971
        %v3973 = vsel %vm3972, %v3965, %v3969
        %v3974 = vand.u32 2147483647, %v3541
        %vm3975 = vcmp.eq.f32.partialorder %v3974, 8.507059e+37
        %v3976 = vand.u32 %v3541, 2147483648
        %v3977 = vor.u32 1.1754944e-38, %v3976
        %v3978 = vsel %vm3975, %v3977, %v3973
        %v3979 = vmul.f32 1.0, %v3978
        %v3980 = vrcp.pop %v3542
        %v3981 = vmul.f32 %v3542, %v3980
        %v3982 = vsub.f32 1.0, %v3981
        %v3983 = vmul.f32 %v3980, %v3982
        %v3984 = vadd.f32 %v3980, %v3983
        %vm3985 = vweird.f32 %v3542
        %vm3986 = vweird.f32 %v3980
        %vm3987 = vmor %vm3985, %vm3986
        %v3988 = vsel %vm3987, %v3980, %v3984
        %v3989 = vand.u32 2147483647, %v3542
        %vm3990 = vcmp.eq.f32.partialorder %v3989, 8.507059e+37
        %v3991 = vand.u32 %v3542, 2147483648
        %v3992 = vor.u32 1.1754944e-38, %v3991
        %v3993 = vsel %vm3990, %v3992, %v3988
        %v3994 = vmul.f32 1.0, %v3993
        %v3995 = vrcp.pop %v3543
        %v3996 = vmul.f32 %v3543, %v3995
        %v3997 = vsub.f32 1.0, %v3996
        %v3998 = vmul.f32 %v3995, %v3997
        %v3999 = vadd.f32 %v3995, %v3998
        %vm4000 = vweird.f32 %v3543
        %vm4001 = vweird.f32 %v3995
        %vm4002 = vmor %vm4000, %vm4001
        %v4003 = vsel %vm4002, %v3995, %v3999
        %v4004 = vand.u32 2147483647, %v3543
        %vm4005 = vcmp.eq.f32.partialorder %v4004, 8.507059e+37
        %v4006 = vand.u32 %v3543, 2147483648
        %v4007 = vor.u32 1.1754944e-38, %v4006
        %v4008 = vsel %vm4005, %v4007, %v4003
        %v4009 = vmul.f32 1.0, %v4008
        %v4010 = vrcp.pop %v3544
        %v4011 = vmul.f32 %v3544, %v4010
        %v4012 = vsub.f32 1.0, %v4011
        %v4013 = vmul.f32 %v4010, %v4012
        %v4014 = vadd.f32 %v4010, %v4013
        %vm4015 = vweird.f32 %v3544
        %vm4016 = vweird.f32 %v4010
        %vm4017 = vmor %vm4015, %vm4016
        %v4018 = vsel %vm4017, %v4010, %v4014
        %v4019 = vand.u32 2147483647, %v3544
        %vm4020 = vcmp.eq.f32.partialorder %v4019, 8.507059e+37
        %v4021 = vand.u32 %v3544, 2147483648
        %v4022 = vor.u32 1.1754944e-38, %v4021
        %v4023 = vsel %vm4020, %v4022, %v4018
        %v4024 = vmul.f32 1.0, %v4023
        %v4025 = vperm.slane %v482, 4
        %v4026 = vadd.f32 %v2837, %v4025
        %v4027 = vadd.f32 %v2840, %v4025
        %v4028 = vadd.f32 %v2843, %v4025
        %v4029 = vadd.f32 %v2846, %v4025
        %v4030 = vadd.f32 %v2849, %v4025
        %v4031 = vadd.f32 %v2852, %v4025
        %v4032 = vadd.f32 %v2855, %v4025
        %v4033 = vadd.f32 %v2858, %v4025
        %v4034 = vadd.f32 %v2861, %v4025
        %v4035 = vadd.f32 %v2864, %v4025
        %v4036 = vadd.f32 %v2867, %v4025
        %v4037 = vadd.f32 %v2870, %v4025
        %v4038 = vadd.f32 %v2873, %v4025
        %v4039 = vadd.f32 %v2876, %v4025
        %v4040 = vadd.f32 %v2879, %v4025
        %v4041 = vadd.f32 %v2882, %v4025
        %v4042 = vadd.f32 %v2885, %v4025
        %v4043 = vadd.f32 %v2888, %v4025
        %v4044 = vadd.f32 %v2891, %v4025
        %v4045 = vadd.f32 %v2894, %v4025
        %v4046 = vadd.f32 %v2897, %v4025
        %v4047 = vadd.f32 %v2900, %v4025
        %v4048 = vadd.f32 %v2903, %v4025
        %v4049 = vadd.f32 %v2906, %v4025
        %v4050 = vadd.f32 %v2909, %v4025
        %v4051 = vadd.f32 %v2912, %v4025
        %v4052 = vadd.f32 %v2915, %v4025
        %v4053 = vadd.f32 %v2918, %v4025
        %v4054 = vadd.f32 %v2921, %v4025
        %v4055 = vadd.f32 %v2924, %v4025
        %v4056 = vadd.f32 %v2927, %v4025
        %v4057 = vadd.f32 %v2930, %v4025
        %v4058 = vxor.u32 %v4026, 2147483648
        %v4059 = vxor.u32 %v4027, 2147483648
        %v4060 = vxor.u32 %v4028, 2147483648
        %v4061 = vxor.u32 %v4029, 2147483648
        %v4062 = vxor.u32 %v4030, 2147483648
        %v4063 = vxor.u32 %v4031, 2147483648
        %v4064 = vxor.u32 %v4032, 2147483648
        %v4065 = vxor.u32 %v4033, 2147483648
        %v4066 = vxor.u32 %v4034, 2147483648
        %v4067 = vxor.u32 %v4035, 2147483648
        %v4068 = vxor.u32 %v4036, 2147483648
        %v4069 = vxor.u32 %v4037, 2147483648
        %v4070 = vxor.u32 %v4038, 2147483648
        %v4071 = vxor.u32 %v4039, 2147483648
        %v4072 = vxor.u32 %v4040, 2147483648
        %v4073 = vxor.u32 %v4041, 2147483648
        %v4074 = vxor.u32 %v4042, 2147483648
        %v4075 = vxor.u32 %v4043, 2147483648
        %v4076 = vxor.u32 %v4044, 2147483648
        %v4077 = vxor.u32 %v4045, 2147483648
        %v4078 = vxor.u32 %v4046, 2147483648
        %v4079 = vxor.u32 %v4047, 2147483648
        %v4080 = vxor.u32 %v4048, 2147483648
        %v4081 = vxor.u32 %v4049, 2147483648
        %v4082 = vxor.u32 %v4050, 2147483648
        %v4083 = vxor.u32 %v4051, 2147483648
        %v4084 = vxor.u32 %v4052, 2147483648
        %v4085 = vxor.u32 %v4053, 2147483648
        %v4086 = vxor.u32 %v4054, 2147483648
        %v4087 = vxor.u32 %v4055, 2147483648
        %v4088 = vxor.u32 %v4056, 2147483648
        %v4089 = vxor.u32 %v4057, 2147483648
        %v4090 = vmul.f32 %v4058, 1.442695
        %v4091 = vpow.pop %v4090
        %v4092 = vmul.f32 %v4059, 1.442695
        %v4093 = vpow.pop %v4092
        %v4094 = vmul.f32 %v4060, 1.442695
        %v4095 = vpow.pop %v4094
        %v4096 = vmul.f32 %v4061, 1.442695
        %v4097 = vpow.pop %v4096
        %v4098 = vmul.f32 %v4062, 1.442695
        %v4099 = vpow.pop %v4098
        %v4100 = vmul.f32 %v4063, 1.442695
        %v4101 = vpow.pop %v4100
        %v4102 = vmul.f32 %v4064, 1.442695
        %v4103 = vpow.pop %v4102
        %v4104 = vmul.f32 %v4065, 1.442695
        %v4105 = vpow.pop %v4104
        %v4106 = vmul.f32 %v4066, 1.442695
        %v4107 = vpow.pop %v4106
        %v4108 = vmul.f32 %v4067, 1.442695
        %v4109 = vpow.pop %v4108
        %v4110 = vmul.f32 %v4068, 1.442695
        %v4111 = vpow.pop %v4110
        %v4112 = vmul.f32 %v4069, 1.442695
        %v4113 = vpow.pop %v4112
        %v4114 = vmul.f32 %v4070, 1.442695
        %v4115 = vpow.pop %v4114
        %v4116 = vmul.f32 %v4071, 1.442695
        %v4117 = vpow.pop %v4116
        %v4118 = vmul.f32 %v4072, 1.442695
        %v4119 = vpow.pop %v4118
        %v4120 = vmul.f32 %v4073, 1.442695
        %v4121 = vpow.pop %v4120
        %v4122 = vmul.f32 %v4074, 1.442695
        %v4123 = vpow.pop %v4122
        %v4124 = vmul.f32 %v4075, 1.442695
        %v4125 = vpow.pop %v4124
        %v4126 = vmul.f32 %v4076, 1.442695
        %v4127 = vpow.pop %v4126
        %v4128 = vmul.f32 %v4077, 1.442695
        %v4129 = vpow.pop %v4128
        %v4130 = vmul.f32 %v4078, 1.442695
        %v4131 = vpow.pop %v4130
        %v4132 = vmul.f32 %v4079, 1.442695
        %v4133 = vpow.pop %v4132
        %v4134 = vmul.f32 %v4080, 1.442695
        %v4135 = vpow.pop %v4134
        %v4136 = vmul.f32 %v4081, 1.442695
        %v4137 = vpow.pop %v4136
        %v4138 = vmul.f32 %v4082, 1.442695
        %v4139 = vpow.pop %v4138
        %v4140 = vmul.f32 %v4083, 1.442695
        %v4141 = vpow.pop %v4140
        %v4142 = vmul.f32 %v4084, 1.442695
        %v4143 = vpow.pop %v4142
        %v4144 = vmul.f32 %v4085, 1.442695
        %v4145 = vpow.pop %v4144
        %v4146 = vmul.f32 %v4086, 1.442695
        %v4147 = vpow.pop %v4146
        %v4148 = vmul.f32 %v4087, 1.442695
        %v4149 = vpow.pop %v4148
        %v4150 = vmul.f32 %v4088, 1.442695
        %v4151 = vpow.pop %v4150
        %v4152 = vmul.f32 %v4089, 1.442695
        %v4153 = vpow.pop %v4152
        %v4154 = vadd.f32 %v4091, 1.0
        %v4155 = vadd.f32 %v4093, 1.0
        %v4156 = vadd.f32 %v4095, 1.0
        %v4157 = vadd.f32 %v4097, 1.0
        %v4158 = vadd.f32 %v4099, 1.0
        %v4159 = vadd.f32 %v4101, 1.0
        %v4160 = vadd.f32 %v4103, 1.0
        %v4161 = vadd.f32 %v4105, 1.0
        %v4162 = vadd.f32 %v4107, 1.0
        %v4163 = vadd.f32 %v4109, 1.0
        %v4164 = vadd.f32 %v4111, 1.0
        %v4165 = vadd.f32 %v4113, 1.0
        %v4166 = vadd.f32 %v4115, 1.0
        %v4167 = vadd.f32 %v4117, 1.0
        %v4168 = vadd.f32 %v4119, 1.0
        %v4169 = vadd.f32 %v4121, 1.0
        %v4170 = vadd.f32 %v4123, 1.0
        %v4171 = vadd.f32 %v4125, 1.0
        %v4172 = vadd.f32 %v4127, 1.0
        %v4173 = vadd.f32 %v4129, 1.0
        %v4174 = vadd.f32 %v4131, 1.0
        %v4175 = vadd.f32 %v4133, 1.0
        %v4176 = vadd.f32 %v4135, 1.0
        %v4177 = vadd.f32 %v4137, 1.0
        %v4178 = vadd.f32 %v4139, 1.0
        %v4179 = vadd.f32 %v4141, 1.0
        %v4180 = vadd.f32 %v4143, 1.0
        %v4181 = vadd.f32 %v4145, 1.0
        %v4182 = vadd.f32 %v4147, 1.0
        %v4183 = vadd.f32 %v4149, 1.0
        %v4184 = vadd.f32 %v4151, 1.0
        %v4185 = vadd.f32 %v4153, 1.0
        %v4186 = vrcp.pop %v4154
        %v4187 = vmul.f32 %v4154, %v4186
        %v4188 = vsub.f32 1.0, %v4187
        %v4189 = vmul.f32 %v4186, %v4188
        %v4190 = vadd.f32 %v4186, %v4189
        %vm4191 = vweird.f32 %v4154
        %vm4192 = vweird.f32 %v4186
        %vm4193 = vmor %vm4191, %vm4192
        %v4194 = vsel %vm4193, %v4186, %v4190
        %v4195 = vand.u32 2147483647, %v4154
        %vm4196 = vcmp.eq.f32.partialorder %v4195, 8.507059e+37
        %v4197 = vand.u32 %v4154, 2147483648
        %v4198 = vor.u32 1.1754944e-38, %v4197
        %v4199 = vsel %vm4196, %v4198, %v4194
        %v4200 = vmul.f32 1.0, %v4199
        %v4201 = vrcp.pop %v4155
        %v4202 = vmul.f32 %v4155, %v4201
        %v4203 = vsub.f32 1.0, %v4202
        %v4204 = vmul.f32 %v4201, %v4203
        %v4205 = vadd.f32 %v4201, %v4204
        %vm4206 = vweird.f32 %v4155
        %vm4207 = vweird.f32 %v4201
        %vm4208 = vmor %vm4206, %vm4207
        %v4209 = vsel %vm4208, %v4201, %v4205
        %v4210 = vand.u32 2147483647, %v4155
        %vm4211 = vcmp.eq.f32.partialorder %v4210, 8.507059e+37
        %v4212 = vand.u32 %v4155, 2147483648
        %v4213 = vor.u32 1.1754944e-38, %v4212
        %v4214 = vsel %vm4211, %v4213, %v4209
        %v4215 = vmul.f32 1.0, %v4214
        %v4216 = vrcp.pop %v4156
        %v4217 = vmul.f32 %v4156, %v4216
        %v4218 = vsub.f32 1.0, %v4217
        %v4219 = vmul.f32 %v4216, %v4218
        %v4220 = vadd.f32 %v4216, %v4219
        %vm4221 = vweird.f32 %v4156
        %vm4222 = vweird.f32 %v4216
        %vm4223 = vmor %vm4221, %vm4222
        %v4224 = vsel %vm4223, %v4216, %v4220
        %v4225 = vand.u32 2147483647, %v4156
        %vm4226 = vcmp.eq.f32.partialorder %v4225, 8.507059e+37
        %v4227 = vand.u32 %v4156, 2147483648
        %v4228 = vor.u32 1.1754944e-38, %v4227
        %v4229 = vsel %vm4226, %v4228, %v4224
        %v4230 = vmul.f32 1.0, %v4229
        %v4231 = vrcp.pop %v4157
        %v4232 = vmul.f32 %v4157, %v4231
        %v4233 = vsub.f32 1.0, %v4232
        %v4234 = vmul.f32 %v4231, %v4233
        %v4235 = vadd.f32 %v4231, %v4234
        %vm4236 = vweird.f32 %v4157
        %vm4237 = vweird.f32 %v4231
        %vm4238 = vmor %vm4236, %vm4237
        %v4239 = vsel %vm4238, %v4231, %v4235
        %v4240 = vand.u32 2147483647, %v4157
        %vm4241 = vcmp.eq.f32.partialorder %v4240, 8.507059e+37
        %v4242 = vand.u32 %v4157, 2147483648
        %v4243 = vor.u32 1.1754944e-38, %v4242
        %v4244 = vsel %vm4241, %v4243, %v4239
        %v4245 = vmul.f32 1.0, %v4244
        %v4246 = vrcp.pop %v4158
        %v4247 = vmul.f32 %v4158, %v4246
        %v4248 = vsub.f32 1.0, %v4247
        %v4249 = vmul.f32 %v4246, %v4248
        %v4250 = vadd.f32 %v4246, %v4249
        %vm4251 = vweird.f32 %v4158
        %vm4252 = vweird.f32 %v4246
        %vm4253 = vmor %vm4251, %vm4252
        %v4254 = vsel %vm4253, %v4246, %v4250
        %v4255 = vand.u32 2147483647, %v4158
        %vm4256 = vcmp.eq.f32.partialorder %v4255, 8.507059e+37
        %v4257 = vand.u32 %v4158, 2147483648
        %v4258 = vor.u32 1.1754944e-38, %v4257
        %v4259 = vsel %vm4256, %v4258, %v4254
        %v4260 = vmul.f32 1.0, %v4259
        %v4261 = vrcp.pop %v4159
        %v4262 = vmul.f32 %v4159, %v4261
        %v4263 = vsub.f32 1.0, %v4262
        %v4264 = vmul.f32 %v4261, %v4263
        %v4265 = vadd.f32 %v4261, %v4264
        %vm4266 = vweird.f32 %v4159
        %vm4267 = vweird.f32 %v4261
        %vm4268 = vmor %vm4266, %vm4267
        %v4269 = vsel %vm4268, %v4261, %v4265
        %v4270 = vand.u32 2147483647, %v4159
        %vm4271 = vcmp.eq.f32.partialorder %v4270, 8.507059e+37
        %v4272 = vand.u32 %v4159, 2147483648
        %v4273 = vor.u32 1.1754944e-38, %v4272
        %v4274 = vsel %vm4271, %v4273, %v4269
        %v4275 = vmul.f32 1.0, %v4274
        %v4276 = vrcp.pop %v4160
        %v4277 = vmul.f32 %v4160, %v4276
        %v4278 = vsub.f32 1.0, %v4277
        %v4279 = vmul.f32 %v4276, %v4278
        %v4280 = vadd.f32 %v4276, %v4279
        %vm4281 = vweird.f32 %v4160
        %vm4282 = vweird.f32 %v4276
        %vm4283 = vmor %vm4281, %vm4282
        %v4284 = vsel %vm4283, %v4276, %v4280
        %v4285 = vand.u32 2147483647, %v4160
        %vm4286 = vcmp.eq.f32.partialorder %v4285, 8.507059e+37
        %v4287 = vand.u32 %v4160, 2147483648
        %v4288 = vor.u32 1.1754944e-38, %v4287
        %v4289 = vsel %vm4286, %v4288, %v4284
        %v4290 = vmul.f32 1.0, %v4289
        %v4291 = vrcp.pop %v4161
        %v4292 = vmul.f32 %v4161, %v4291
        %v4293 = vsub.f32 1.0, %v4292
        %v4294 = vmul.f32 %v4291, %v4293
        %v4295 = vadd.f32 %v4291, %v4294
        %vm4296 = vweird.f32 %v4161
        %vm4297 = vweird.f32 %v4291
        %vm4298 = vmor %vm4296, %vm4297
        %v4299 = vsel %vm4298, %v4291, %v4295
        %v4300 = vand.u32 2147483647, %v4161
        %vm4301 = vcmp.eq.f32.partialorder %v4300, 8.507059e+37
        %v4302 = vand.u32 %v4161, 2147483648
        %v4303 = vor.u32 1.1754944e-38, %v4302
        %v4304 = vsel %vm4301, %v4303, %v4299
        %v4305 = vmul.f32 1.0, %v4304
        %v4306 = vrcp.pop %v4162
        %v4307 = vmul.f32 %v4162, %v4306
        %v4308 = vsub.f32 1.0, %v4307
        %v4309 = vmul.f32 %v4306, %v4308
        %v4310 = vadd.f32 %v4306, %v4309
        %vm4311 = vweird.f32 %v4162
        %vm4312 = vweird.f32 %v4306
        %vm4313 = vmor %vm4311, %vm4312
        %v4314 = vsel %vm4313, %v4306, %v4310
        %v4315 = vand.u32 2147483647, %v4162
        %vm4316 = vcmp.eq.f32.partialorder %v4315, 8.507059e+37
        %v4317 = vand.u32 %v4162, 2147483648
        %v4318 = vor.u32 1.1754944e-38, %v4317
        %v4319 = vsel %vm4316, %v4318, %v4314
        %v4320 = vmul.f32 1.0, %v4319
        %v4321 = vrcp.pop %v4163
        %v4322 = vmul.f32 %v4163, %v4321
        %v4323 = vsub.f32 1.0, %v4322
        %v4324 = vmul.f32 %v4321, %v4323
        %v4325 = vadd.f32 %v4321, %v4324
        %vm4326 = vweird.f32 %v4163
        %vm4327 = vweird.f32 %v4321
        %vm4328 = vmor %vm4326, %vm4327
        %v4329 = vsel %vm4328, %v4321, %v4325
        %v4330 = vand.u32 2147483647, %v4163
        %vm4331 = vcmp.eq.f32.partialorder %v4330, 8.507059e+37
        %v4332 = vand.u32 %v4163, 2147483648
        %v4333 = vor.u32 1.1754944e-38, %v4332
        %v4334 = vsel %vm4331, %v4333, %v4329
        %v4335 = vmul.f32 1.0, %v4334
        %v4336 = vrcp.pop %v4164
        %v4337 = vmul.f32 %v4164, %v4336
        %v4338 = vsub.f32 1.0, %v4337
        %v4339 = vmul.f32 %v4336, %v4338
        %v4340 = vadd.f32 %v4336, %v4339
        %vm4341 = vweird.f32 %v4164
        %vm4342 = vweird.f32 %v4336
        %vm4343 = vmor %vm4341, %vm4342
        %v4344 = vsel %vm4343, %v4336, %v4340
        %v4345 = vand.u32 2147483647, %v4164
        %vm4346 = vcmp.eq.f32.partialorder %v4345, 8.507059e+37
        %v4347 = vand.u32 %v4164, 2147483648
        %v4348 = vor.u32 1.1754944e-38, %v4347
        %v4349 = vsel %vm4346, %v4348, %v4344
        %v4350 = vmul.f32 1.0, %v4349
        %v4351 = vrcp.pop %v4165
        %v4352 = vmul.f32 %v4165, %v4351
        %v4353 = vsub.f32 1.0, %v4352
        %v4354 = vmul.f32 %v4351, %v4353
        %v4355 = vadd.f32 %v4351, %v4354
        %vm4356 = vweird.f32 %v4165
        %vm4357 = vweird.f32 %v4351
        %vm4358 = vmor %vm4356, %vm4357
        %v4359 = vsel %vm4358, %v4351, %v4355
        %v4360 = vand.u32 2147483647, %v4165
        %vm4361 = vcmp.eq.f32.partialorder %v4360, 8.507059e+37
        %v4362 = vand.u32 %v4165, 2147483648
        %v4363 = vor.u32 1.1754944e-38, %v4362
        %v4364 = vsel %vm4361, %v4363, %v4359
        %v4365 = vmul.f32 1.0, %v4364
        %v4366 = vrcp.pop %v4166
        %v4367 = vmul.f32 %v4166, %v4366
        %v4368 = vsub.f32 1.0, %v4367
        %v4369 = vmul.f32 %v4366, %v4368
        %v4370 = vadd.f32 %v4366, %v4369
        %vm4371 = vweird.f32 %v4166
        %vm4372 = vweird.f32 %v4366
        %vm4373 = vmor %vm4371, %vm4372
        %v4374 = vsel %vm4373, %v4366, %v4370
        %v4375 = vand.u32 2147483647, %v4166
        %vm4376 = vcmp.eq.f32.partialorder %v4375, 8.507059e+37
        %v4377 = vand.u32 %v4166, 2147483648
        %v4378 = vor.u32 1.1754944e-38, %v4377
        %v4379 = vsel %vm4376, %v4378, %v4374
        %v4380 = vmul.f32 1.0, %v4379
        %v4381 = vrcp.pop %v4167
        %v4382 = vmul.f32 %v4167, %v4381
        %v4383 = vsub.f32 1.0, %v4382
        %v4384 = vmul.f32 %v4381, %v4383
        %v4385 = vadd.f32 %v4381, %v4384
        %vm4386 = vweird.f32 %v4167
        %vm4387 = vweird.f32 %v4381
        %vm4388 = vmor %vm4386, %vm4387
        %v4389 = vsel %vm4388, %v4381, %v4385
        %v4390 = vand.u32 2147483647, %v4167
        %vm4391 = vcmp.eq.f32.partialorder %v4390, 8.507059e+37
        %v4392 = vand.u32 %v4167, 2147483648
        %v4393 = vor.u32 1.1754944e-38, %v4392
        %v4394 = vsel %vm4391, %v4393, %v4389
        %v4395 = vmul.f32 1.0, %v4394
        %v4396 = vrcp.pop %v4168
        %v4397 = vmul.f32 %v4168, %v4396
        %v4398 = vsub.f32 1.0, %v4397
        %v4399 = vmul.f32 %v4396, %v4398
        %v4400 = vadd.f32 %v4396, %v4399
        %vm4401 = vweird.f32 %v4168
        %vm4402 = vweird.f32 %v4396
        %vm4403 = vmor %vm4401, %vm4402
        %v4404 = vsel %vm4403, %v4396, %v4400
        %v4405 = vand.u32 2147483647, %v4168
        %vm4406 = vcmp.eq.f32.partialorder %v4405, 8.507059e+37
        %v4407 = vand.u32 %v4168, 2147483648
        %v4408 = vor.u32 1.1754944e-38, %v4407
        %v4409 = vsel %vm4406, %v4408, %v4404
        %v4410 = vmul.f32 1.0, %v4409
        %v4411 = vrcp.pop %v4169
        %v4412 = vmul.f32 %v4169, %v4411
        %v4413 = vsub.f32 1.0, %v4412
        %v4414 = vmul.f32 %v4411, %v4413
        %v4415 = vadd.f32 %v4411, %v4414
        %vm4416 = vweird.f32 %v4169
        %vm4417 = vweird.f32 %v4411
        %vm4418 = vmor %vm4416, %vm4417
        %v4419 = vsel %vm4418, %v4411, %v4415
        %v4420 = vand.u32 2147483647, %v4169
        %vm4421 = vcmp.eq.f32.partialorder %v4420, 8.507059e+37
        %v4422 = vand.u32 %v4169, 2147483648
        %v4423 = vor.u32 1.1754944e-38, %v4422
        %v4424 = vsel %vm4421, %v4423, %v4419
        %v4425 = vmul.f32 1.0, %v4424
        %v4426 = vrcp.pop %v4170
        %v4427 = vmul.f32 %v4170, %v4426
        %v4428 = vsub.f32 1.0, %v4427
        %v4429 = vmul.f32 %v4426, %v4428
        %v4430 = vadd.f32 %v4426, %v4429
        %vm4431 = vweird.f32 %v4170
        %vm4432 = vweird.f32 %v4426
        %vm4433 = vmor %vm4431, %vm4432
        %v4434 = vsel %vm4433, %v4426, %v4430
        %v4435 = vand.u32 2147483647, %v4170
        %vm4436 = vcmp.eq.f32.partialorder %v4435, 8.507059e+37
        %v4437 = vand.u32 %v4170, 2147483648
        %v4438 = vor.u32 1.1754944e-38, %v4437
        %v4439 = vsel %vm4436, %v4438, %v4434
        %v4440 = vmul.f32 1.0, %v4439
        %v4441 = vrcp.pop %v4171
        %v4442 = vmul.f32 %v4171, %v4441
        %v4443 = vsub.f32 1.0, %v4442
        %v4444 = vmul.f32 %v4441, %v4443
        %v4445 = vadd.f32 %v4441, %v4444
        %vm4446 = vweird.f32 %v4171
        %vm4447 = vweird.f32 %v4441
        %vm4448 = vmor %vm4446, %vm4447
        %v4449 = vsel %vm4448, %v4441, %v4445
        %v4450 = vand.u32 2147483647, %v4171
        %vm4451 = vcmp.eq.f32.partialorder %v4450, 8.507059e+37
        %v4452 = vand.u32 %v4171, 2147483648
        %v4453 = vor.u32 1.1754944e-38, %v4452
        %v4454 = vsel %vm4451, %v4453, %v4449
        %v4455 = vmul.f32 1.0, %v4454
        %v4456 = vrcp.pop %v4172
        %v4457 = vmul.f32 %v4172, %v4456
        %v4458 = vsub.f32 1.0, %v4457
        %v4459 = vmul.f32 %v4456, %v4458
        %v4460 = vadd.f32 %v4456, %v4459
        %vm4461 = vweird.f32 %v4172
        %vm4462 = vweird.f32 %v4456
        %vm4463 = vmor %vm4461, %vm4462
        %v4464 = vsel %vm4463, %v4456, %v4460
        %v4465 = vand.u32 2147483647, %v4172
        %vm4466 = vcmp.eq.f32.partialorder %v4465, 8.507059e+37
        %v4467 = vand.u32 %v4172, 2147483648
        %v4468 = vor.u32 1.1754944e-38, %v4467
        %v4469 = vsel %vm4466, %v4468, %v4464
        %v4470 = vmul.f32 1.0, %v4469
        %v4471 = vrcp.pop %v4173
        %v4472 = vmul.f32 %v4173, %v4471
        %v4473 = vsub.f32 1.0, %v4472
        %v4474 = vmul.f32 %v4471, %v4473
        %v4475 = vadd.f32 %v4471, %v4474
        %vm4476 = vweird.f32 %v4173
        %vm4477 = vweird.f32 %v4471
        %vm4478 = vmor %vm4476, %vm4477
        %v4479 = vsel %vm4478, %v4471, %v4475
        %v4480 = vand.u32 2147483647, %v4173
        %vm4481 = vcmp.eq.f32.partialorder %v4480, 8.507059e+37
        %v4482 = vand.u32 %v4173, 2147483648
        %v4483 = vor.u32 1.1754944e-38, %v4482
        %v4484 = vsel %vm4481, %v4483, %v4479
        %v4485 = vmul.f32 1.0, %v4484
        %v4486 = vrcp.pop %v4174
        %v4487 = vmul.f32 %v4174, %v4486
        %v4488 = vsub.f32 1.0, %v4487
        %v4489 = vmul.f32 %v4486, %v4488
        %v4490 = vadd.f32 %v4486, %v4489
        %vm4491 = vweird.f32 %v4174
        %vm4492 = vweird.f32 %v4486
        %vm4493 = vmor %vm4491, %vm4492
        %v4494 = vsel %vm4493, %v4486, %v4490
        %v4495 = vand.u32 2147483647, %v4174
        %vm4496 = vcmp.eq.f32.partialorder %v4495, 8.507059e+37
        %v4497 = vand.u32 %v4174, 2147483648
        %v4498 = vor.u32 1.1754944e-38, %v4497
        %v4499 = vsel %vm4496, %v4498, %v4494
        %v4500 = vmul.f32 1.0, %v4499
        %v4501 = vrcp.pop %v4175
        %v4502 = vmul.f32 %v4175, %v4501
        %v4503 = vsub.f32 1.0, %v4502
        %v4504 = vmul.f32 %v4501, %v4503
        %v4505 = vadd.f32 %v4501, %v4504
        %vm4506 = vweird.f32 %v4175
        %vm4507 = vweird.f32 %v4501
        %vm4508 = vmor %vm4506, %vm4507
        %v4509 = vsel %vm4508, %v4501, %v4505
        %v4510 = vand.u32 2147483647, %v4175
        %vm4511 = vcmp.eq.f32.partialorder %v4510, 8.507059e+37
        %v4512 = vand.u32 %v4175, 2147483648
        %v4513 = vor.u32 1.1754944e-38, %v4512
        %v4514 = vsel %vm4511, %v4513, %v4509
        %v4515 = vmul.f32 1.0, %v4514
        %v4516 = vrcp.pop %v4176
        %v4517 = vmul.f32 %v4176, %v4516
        %v4518 = vsub.f32 1.0, %v4517
        %v4519 = vmul.f32 %v4516, %v4518
        %v4520 = vadd.f32 %v4516, %v4519
        %vm4521 = vweird.f32 %v4176
        %vm4522 = vweird.f32 %v4516
        %vm4523 = vmor %vm4521, %vm4522
        %v4524 = vsel %vm4523, %v4516, %v4520
        %v4525 = vand.u32 2147483647, %v4176
        %vm4526 = vcmp.eq.f32.partialorder %v4525, 8.507059e+37
        %v4527 = vand.u32 %v4176, 2147483648
        %v4528 = vor.u32 1.1754944e-38, %v4527
        %v4529 = vsel %vm4526, %v4528, %v4524
        %v4530 = vmul.f32 1.0, %v4529
        %v4531 = vrcp.pop %v4177
        %v4532 = vmul.f32 %v4177, %v4531
        %v4533 = vsub.f32 1.0, %v4532
        %v4534 = vmul.f32 %v4531, %v4533
        %v4535 = vadd.f32 %v4531, %v4534
        %vm4536 = vweird.f32 %v4177
        %vm4537 = vweird.f32 %v4531
        %vm4538 = vmor %vm4536, %vm4537
        %v4539 = vsel %vm4538, %v4531, %v4535
        %v4540 = vand.u32 2147483647, %v4177
        %vm4541 = vcmp.eq.f32.partialorder %v4540, 8.507059e+37
        %v4542 = vand.u32 %v4177, 2147483648
        %v4543 = vor.u32 1.1754944e-38, %v4542
        %v4544 = vsel %vm4541, %v4543, %v4539
        %v4545 = vmul.f32 1.0, %v4544
        %v4546 = vrcp.pop %v4178
        %v4547 = vmul.f32 %v4178, %v4546
        %v4548 = vsub.f32 1.0, %v4547
        %v4549 = vmul.f32 %v4546, %v4548
        %v4550 = vadd.f32 %v4546, %v4549
        %vm4551 = vweird.f32 %v4178
        %vm4552 = vweird.f32 %v4546
        %vm4553 = vmor %vm4551, %vm4552
        %v4554 = vsel %vm4553, %v4546, %v4550
        %v4555 = vand.u32 2147483647, %v4178
        %vm4556 = vcmp.eq.f32.partialorder %v4555, 8.507059e+37
        %v4557 = vand.u32 %v4178, 2147483648
        %v4558 = vor.u32 1.1754944e-38, %v4557
        %v4559 = vsel %vm4556, %v4558, %v4554
        %v4560 = vmul.f32 1.0, %v4559
        %v4561 = vrcp.pop %v4179
        %v4562 = vmul.f32 %v4179, %v4561
        %v4563 = vsub.f32 1.0, %v4562
        %v4564 = vmul.f32 %v4561, %v4563
        %v4565 = vadd.f32 %v4561, %v4564
        %vm4566 = vweird.f32 %v4179
        %vm4567 = vweird.f32 %v4561
        %vm4568 = vmor %vm4566, %vm4567
        %v4569 = vsel %vm4568, %v4561, %v4565
        %v4570 = vand.u32 2147483647, %v4179
        %vm4571 = vcmp.eq.f32.partialorder %v4570, 8.507059e+37
        %v4572 = vand.u32 %v4179, 2147483648
        %v4573 = vor.u32 1.1754944e-38, %v4572
        %v4574 = vsel %vm4571, %v4573, %v4569
        %v4575 = vmul.f32 1.0, %v4574
        %v4576 = vrcp.pop %v4180
        %v4577 = vmul.f32 %v4180, %v4576
        %v4578 = vsub.f32 1.0, %v4577
        %v4579 = vmul.f32 %v4576, %v4578
        %v4580 = vadd.f32 %v4576, %v4579
        %vm4581 = vweird.f32 %v4180
        %vm4582 = vweird.f32 %v4576
        %vm4583 = vmor %vm4581, %vm4582
        %v4584 = vsel %vm4583, %v4576, %v4580
        %v4585 = vand.u32 2147483647, %v4180
        %vm4586 = vcmp.eq.f32.partialorder %v4585, 8.507059e+37
        %v4587 = vand.u32 %v4180, 2147483648
        %v4588 = vor.u32 1.1754944e-38, %v4587
        %v4589 = vsel %vm4586, %v4588, %v4584
        %v4590 = vmul.f32 1.0, %v4589
        %v4591 = vrcp.pop %v4181
        %v4592 = vmul.f32 %v4181, %v4591
        %v4593 = vsub.f32 1.0, %v4592
        %v4594 = vmul.f32 %v4591, %v4593
        %v4595 = vadd.f32 %v4591, %v4594
        %vm4596 = vweird.f32 %v4181
        %vm4597 = vweird.f32 %v4591
        %vm4598 = vmor %vm4596, %vm4597
        %v4599 = vsel %vm4598, %v4591, %v4595
        %v4600 = vand.u32 2147483647, %v4181
        %vm4601 = vcmp.eq.f32.partialorder %v4600, 8.507059e+37
        %v4602 = vand.u32 %v4181, 2147483648
        %v4603 = vor.u32 1.1754944e-38, %v4602
        %v4604 = vsel %vm4601, %v4603, %v4599
        %v4605 = vmul.f32 1.0, %v4604
        %v4606 = vrcp.pop %v4182
        %v4607 = vmul.f32 %v4182, %v4606
        %v4608 = vsub.f32 1.0, %v4607
        %v4609 = vmul.f32 %v4606, %v4608
        %v4610 = vadd.f32 %v4606, %v4609
        %vm4611 = vweird.f32 %v4182
        %vm4612 = vweird.f32 %v4606
        %vm4613 = vmor %vm4611, %vm4612
        %v4614 = vsel %vm4613, %v4606, %v4610
        %v4615 = vand.u32 2147483647, %v4182
        %vm4616 = vcmp.eq.f32.partialorder %v4615, 8.507059e+37
        %v4617 = vand.u32 %v4182, 2147483648
        %v4618 = vor.u32 1.1754944e-38, %v4617
        %v4619 = vsel %vm4616, %v4618, %v4614
        %v4620 = vmul.f32 1.0, %v4619
        %v4621 = vrcp.pop %v4183
        %v4622 = vmul.f32 %v4183, %v4621
        %v4623 = vsub.f32 1.0, %v4622
        %v4624 = vmul.f32 %v4621, %v4623
        %v4625 = vadd.f32 %v4621, %v4624
        %vm4626 = vweird.f32 %v4183
        %vm4627 = vweird.f32 %v4621
        %vm4628 = vmor %vm4626, %vm4627
        %v4629 = vsel %vm4628, %v4621, %v4625
        %v4630 = vand.u32 2147483647, %v4183
        %vm4631 = vcmp.eq.f32.partialorder %v4630, 8.507059e+37
        %v4632 = vand.u32 %v4183, 2147483648
        %v4633 = vor.u32 1.1754944e-38, %v4632
        %v4634 = vsel %vm4631, %v4633, %v4629
        %v4635 = vmul.f32 1.0, %v4634
        %v4636 = vrcp.pop %v4184
        %v4637 = vmul.f32 %v4184, %v4636
        %v4638 = vsub.f32 1.0, %v4637
        %v4639 = vmul.f32 %v4636, %v4638
        %v4640 = vadd.f32 %v4636, %v4639
        %vm4641 = vweird.f32 %v4184
        %vm4642 = vweird.f32 %v4636
        %vm4643 = vmor %vm4641, %vm4642
        %v4644 = vsel %vm4643, %v4636, %v4640
        %v4645 = vand.u32 2147483647, %v4184
        %vm4646 = vcmp.eq.f32.partialorder %v4645, 8.507059e+37
        %v4647 = vand.u32 %v4184, 2147483648
        %v4648 = vor.u32 1.1754944e-38, %v4647
        %v4649 = vsel %vm4646, %v4648, %v4644
        %v4650 = vmul.f32 1.0, %v4649
        %v4651 = vrcp.pop %v4185
        %v4652 = vmul.f32 %v4185, %v4651
        %v4653 = vsub.f32 1.0, %v4652
        %v4654 = vmul.f32 %v4651, %v4653
        %v4655 = vadd.f32 %v4651, %v4654
        %vm4656 = vweird.f32 %v4185
        %vm4657 = vweird.f32 %v4651
        %vm4658 = vmor %vm4656, %vm4657
        %v4659 = vsel %vm4658, %v4651, %v4655
        %v4660 = vand.u32 2147483647, %v4185
        %vm4661 = vcmp.eq.f32.partialorder %v4660, 8.507059e+37
        %v4662 = vand.u32 %v4185, 2147483648
        %v4663 = vor.u32 1.1754944e-38, %v4662
        %v4664 = vsel %vm4661, %v4663, %v4659
        %v4665 = vmul.f32 1.0, %v4664
        %v4666 = vperm.slane %v482, 5
        %v4667 = vadd.f32 %v3063, %v4666
        %v4668 = vadd.f32 %v3066, %v4666
        %v4669 = vadd.f32 %v3069, %v4666
        %v4670 = vadd.f32 %v3072, %v4666
        %v4671 = vadd.f32 %v3075, %v4666
        %v4672 = vadd.f32 %v3078, %v4666
        %v4673 = vadd.f32 %v3081, %v4666
        %v4674 = vadd.f32 %v3084, %v4666
        %v4675 = vadd.f32 %v3087, %v4666
        %v4676 = vadd.f32 %v3090, %v4666
        %v4677 = vadd.f32 %v3093, %v4666
        %v4678 = vadd.f32 %v3096, %v4666
        %v4679 = vadd.f32 %v3099, %v4666
        %v4680 = vadd.f32 %v3102, %v4666
        %v4681 = vadd.f32 %v3105, %v4666
        %v4682 = vadd.f32 %v3108, %v4666
        %v4683 = vadd.f32 %v3111, %v4666
        %v4684 = vadd.f32 %v3114, %v4666
        %v4685 = vadd.f32 %v3117, %v4666
        %v4686 = vadd.f32 %v3120, %v4666
        %v4687 = vadd.f32 %v3123, %v4666
        %v4688 = vadd.f32 %v3126, %v4666
        %v4689 = vadd.f32 %v3129, %v4666
        %v4690 = vadd.f32 %v3132, %v4666
        %v4691 = vadd.f32 %v3135, %v4666
        %v4692 = vadd.f32 %v3138, %v4666
        %v4693 = vadd.f32 %v3141, %v4666
        %v4694 = vadd.f32 %v3144, %v4666
        %v4695 = vadd.f32 %v3147, %v4666
        %v4696 = vadd.f32 %v3150, %v4666
        %v4697 = vadd.f32 %v3153, %v4666
        %v4698 = vadd.f32 %v3156, %v4666
        %v4699 = vperm.slane %v482, 6
        %v4700 = vadd.f32 %v3289, %v4699
        %v4701 = vadd.f32 %v3292, %v4699
        %v4702 = vadd.f32 %v3295, %v4699
        %v4703 = vadd.f32 %v3298, %v4699
        %v4704 = vadd.f32 %v3301, %v4699
        %v4705 = vadd.f32 %v3304, %v4699
        %v4706 = vadd.f32 %v3307, %v4699
        %v4707 = vadd.f32 %v3310, %v4699
        %v4708 = vadd.f32 %v3313, %v4699
        %v4709 = vadd.f32 %v3316, %v4699
        %v4710 = vadd.f32 %v3319, %v4699
        %v4711 = vadd.f32 %v3322, %v4699
        %v4712 = vadd.f32 %v3325, %v4699
        %v4713 = vadd.f32 %v3328, %v4699
        %v4714 = vadd.f32 %v3331, %v4699
        %v4715 = vadd.f32 %v3334, %v4699
        %v4716 = vadd.f32 %v3337, %v4699
        %v4717 = vadd.f32 %v3340, %v4699
        %v4718 = vadd.f32 %v3343, %v4699
        %v4719 = vadd.f32 %v3346, %v4699
        %v4720 = vadd.f32 %v3349, %v4699
        %v4721 = vadd.f32 %v3352, %v4699
        %v4722 = vadd.f32 %v3355, %v4699
        %v4723 = vadd.f32 %v3358, %v4699
        %v4724 = vadd.f32 %v3361, %v4699
        %v4725 = vadd.f32 %v3364, %v4699
        %v4726 = vadd.f32 %v3367, %v4699
        %v4727 = vadd.f32 %v3370, %v4699
        %v4728 = vadd.f32 %v3373, %v4699
        %v4729 = vadd.f32 %v3376, %v4699
        %v4730 = vadd.f32 %v3379, %v4699
        %v4731 = vadd.f32 %v3382, %v4699
        %v4732 = vmul.f32 %v3559, %v4700
        %v4733 = vmul.f32 %v3574, %v4701
        %v4734 = vmul.f32 %v3589, %v4702
        %v4735 = vmul.f32 %v3604, %v4703
        %v4736 = vmul.f32 %v3619, %v4704
        %v4737 = vmul.f32 %v3634, %v4705
        %v4738 = vmul.f32 %v3649, %v4706
        %v4739 = vmul.f32 %v3664, %v4707
        %v4740 = vmul.f32 %v3679, %v4708
        %v4741 = vmul.f32 %v3694, %v4709
        %v4742 = vmul.f32 %v3709, %v4710
        %v4743 = vmul.f32 %v3724, %v4711
        %v4744 = vmul.f32 %v3739, %v4712
        %v4745 = vmul.f32 %v3754, %v4713
        %v4746 = vmul.f32 %v3769, %v4714
        %v4747 = vmul.f32 %v3784, %v4715
        %v4748 = vmul.f32 %v3799, %v4716
        %v4749 = vmul.f32 %v3814, %v4717
        %v4750 = vmul.f32 %v3829, %v4718
        %v4751 = vmul.f32 %v3844, %v4719
        %v4752 = vmul.f32 %v3859, %v4720
        %v4753 = vmul.f32 %v3874, %v4721
        %v4754 = vmul.f32 %v3889, %v4722
        %v4755 = vmul.f32 %v3904, %v4723
        %v4756 = vmul.f32 %v3919, %v4724
        %v4757 = vmul.f32 %v3934, %v4725
        %v4758 = vmul.f32 %v3949, %v4726
        %v4759 = vmul.f32 %v3964, %v4727
        %v4760 = vmul.f32 %v3979, %v4728
        %v4761 = vmul.f32 %v3994, %v4729
        %v4762 = vmul.f32 %v4009, %v4730
        %v4763 = vmul.f32 %v4024, %v4731
        %v4764 = vadd.f32 %v4667, %v4732
        %v4765 = vadd.f32 %v4668, %v4733
        %v4766 = vadd.f32 %v4669, %v4734
        %v4767 = vadd.f32 %v4670, %v4735
        %v4768 = vadd.f32 %v4671, %v4736
        %v4769 = vadd.f32 %v4672, %v4737
        %v4770 = vadd.f32 %v4673, %v4738
        %v4771 = vadd.f32 %v4674, %v4739
        %v4772 = vadd.f32 %v4675, %v4740
        %v4773 = vadd.f32 %v4676, %v4741
        %v4774 = vadd.f32 %v4677, %v4742
        %v4775 = vadd.f32 %v4678, %v4743
        %v4776 = vadd.f32 %v4679, %v4744
        %v4777 = vadd.f32 %v4680, %v4745
        %v4778 = vadd.f32 %v4681, %v4746
        %v4779 = vadd.f32 %v4682, %v4747
        %v4780 = vadd.f32 %v4683, %v4748
        %v4781 = vadd.f32 %v4684, %v4749
        %v4782 = vadd.f32 %v4685, %v4750
        %v4783 = vadd.f32 %v4686, %v4751
        %v4784 = vadd.f32 %v4687, %v4752
        %v4785 = vadd.f32 %v4688, %v4753
        %v4786 = vadd.f32 %v4689, %v4754
        %v4787 = vadd.f32 %v4690, %v4755
        %v4788 = vadd.f32 %v4691, %v4756
        %v4789 = vadd.f32 %v4692, %v4757
        %v4790 = vadd.f32 %v4693, %v4758
        %v4791 = vadd.f32 %v4694, %v4759
        %v4792 = vadd.f32 %v4695, %v4760
        %v4793 = vadd.f32 %v4696, %v4761
        %v4794 = vadd.f32 %v4697, %v4762
        %v4795 = vadd.f32 %v4698, %v4763
        %v4796 = vtanh.pop %v4764
        %v4797 = vtanh.pop %v4765
        %v4798 = vtanh.pop %v4766
        %v4799 = vtanh.pop %v4767
        %v4800 = vtanh.pop %v4768
        %v4801 = vtanh.pop %v4769
        %v4802 = vtanh.pop %v4770
        %v4803 = vtanh.pop %v4771
        %v4804 = vtanh.pop %v4772
        %v4805 = vtanh.pop %v4773
        %v4806 = vtanh.pop %v4774
        %v4807 = vtanh.pop %v4775
        %v4808 = vtanh.pop %v4776
        %v4809 = vtanh.pop %v4777
        %v4810 = vtanh.pop %v4778
        %v4811 = vtanh.pop %v4779
        %v4812 = vtanh.pop %v4780
        %v4813 = vtanh.pop %v4781
        %v4814 = vtanh.pop %v4782
        %v4815 = vtanh.pop %v4783
        %v4816 = vtanh.pop %v4784
        %v4817 = vtanh.pop %v4785
        %v4818 = vtanh.pop %v4786
        %v4819 = vtanh.pop %v4787
        %v4820 = vtanh.pop %v4788
        %v4821 = vtanh.pop %v4789
        %v4822 = vtanh.pop %v4790
        %v4823 = vtanh.pop %v4791
        %v4824 = vtanh.pop %v4792
        %v4825 = vtanh.pop %v4793
        %v4826 = vtanh.pop %v4794
        %v4827 = vtanh.pop %v4795
        %v4828 = vsub.f32 1.0, %v4200
        %v4829 = vsub.f32 1.0, %v4215
        %v4830 = vsub.f32 1.0, %v4230
        %v4831 = vsub.f32 1.0, %v4245
        %v4832 = vsub.f32 1.0, %v4260
        %v4833 = vsub.f32 1.0, %v4275
        %v4834 = vsub.f32 1.0, %v4290
        %v4835 = vsub.f32 1.0, %v4305
        %v4836 = vsub.f32 1.0, %v4320
        %v4837 = vsub.f32 1.0, %v4335
        %v4838 = vsub.f32 1.0, %v4350
        %v4839 = vsub.f32 1.0, %v4365
        %v4840 = vsub.f32 1.0, %v4380
        %v4841 = vsub.f32 1.0, %v4395
        %v4842 = vsub.f32 1.0, %v4410
        %v4843 = vsub.f32 1.0, %v4425
        %v4844 = vsub.f32 1.0, %v4440
        %v4845 = vsub.f32 1.0, %v4455
        %v4846 = vsub.f32 1.0, %v4470
        %v4847 = vsub.f32 1.0, %v4485
        %v4848 = vsub.f32 1.0, %v4500
        %v4849 = vsub.f32 1.0, %v4515
        %v4850 = vsub.f32 1.0, %v4530
        %v4851 = vsub.f32 1.0, %v4545
        %v4852 = vsub.f32 1.0, %v4560
        %v4853 = vsub.f32 1.0, %v4575
        %v4854 = vsub.f32 1.0, %v4590
        %v4855 = vsub.f32 1.0, %v4605
        %v4856 = vsub.f32 1.0, %v4620
        %v4857 = vsub.f32 1.0, %v4635
        %v4858 = vsub.f32 1.0, %v4650
        %v4859 = vsub.f32 1.0, %v4665
        %v4860 = vmul.f32 %v4828, %v4796
        %v4861 = vmul.f32 %v4829, %v4797
        %v4862 = vmul.f32 %v4830, %v4798
        %v4863 = vmul.f32 %v4831, %v4799
        %v4864 = vmul.f32 %v4832, %v4800
        %v4865 = vmul.f32 %v4833, %v4801
        %v4866 = vmul.f32 %v4834, %v4802
        %v4867 = vmul.f32 %v4835, %v4803
        %v4868 = vmul.f32 %v4836, %v4804
        %v4869 = vmul.f32 %v4837, %v4805
        %v4870 = vmul.f32 %v4838, %v4806
        %v4871 = vmul.f32 %v4839, %v4807
        %v4872 = vmul.f32 %v4840, %v4808
        %v4873 = vmul.f32 %v4841, %v4809
        %v4874 = vmul.f32 %v4842, %v4810
        %v4875 = vmul.f32 %v4843, %v4811
        %v4876 = vmul.f32 %v4844, %v4812
        %v4877 = vmul.f32 %v4845, %v4813
        %v4878 = vmul.f32 %v4846, %v4814
        %v4879 = vmul.f32 %v4847, %v4815
        %v4880 = vmul.f32 %v4848, %v4816
        %v4881 = vmul.f32 %v4849, %v4817
        %v4882 = vmul.f32 %v4850, %v4818
        %v4883 = vmul.f32 %v4851, %v4819
        %v4884 = vmul.f32 %v4852, %v4820
        %v4885 = vmul.f32 %v4853, %v4821
        %v4886 = vmul.f32 %v4854, %v4822
        %v4887 = vmul.f32 %v4855, %v4823
        %v4888 = vmul.f32 %v4856, %v4824
        %v4889 = vmul.f32 %v4857, %v4825
        %v4890 = vmul.f32 %v4858, %v4826
        %v4891 = vmul.f32 %v4859, %v4827
        %v4892 = vmul.f32 %v4200, %v2320
        %v4893 = vmul.f32 %v4215, %v2321
        %v4894 = vmul.f32 %v4230, %v2322
        %v4895 = vmul.f32 %v4245, %v2323
        %v4896 = vmul.f32 %v4260, %v2324
        %v4897 = vmul.f32 %v4275, %v2325
        %v4898 = vmul.f32 %v4290, %v2326
        %v4899 = vmul.f32 %v4305, %v2327
        %v4900 = vmul.f32 %v4320, %v2328
        %v4901 = vmul.f32 %v4335, %v2329
        %v4902 = vmul.f32 %v4350, %v2330
        %v4903 = vmul.f32 %v4365, %v2331
        %v4904 = vmul.f32 %v4380, %v2332
        %v4905 = vmul.f32 %v4395, %v2333
        %v4906 = vmul.f32 %v4410, %v2334
        %v4907 = vmul.f32 %v4425, %v2335
        %v4908 = vmul.f32 %v4440, %v2336
        %v4909 = vmul.f32 %v4455, %v2337
        %v4910 = vmul.f32 %v4470, %v2338
        %v4911 = vmul.f32 %v4485, %v2339
        %v4912 = vmul.f32 %v4500, %v2340
        %v4913 = vmul.f32 %v4515, %v2341
        %v4914 = vmul.f32 %v4530, %v2342
        %v4915 = vmul.f32 %v4545, %v2343
        %v4916 = vmul.f32 %v4560, %v2344
        %v4917 = vmul.f32 %v4575, %v2345
        %v4918 = vmul.f32 %v4590, %v2346
        %v4919 = vmul.f32 %v4605, %v2347
        %v4920 = vmul.f32 %v4620, %v2348
        %v4921 = vmul.f32 %v4635, %v2349
        %v4922 = vmul.f32 %v4650, %v2350
        %v4923 = vmul.f32 %v4665, %v2351
        %v4924 = vadd.f32 %v4860, %v4892
        %v4925 = vadd.f32 %v4861, %v4893
        %v4926 = vadd.f32 %v4862, %v4894
        %v4927 = vadd.f32 %v4863, %v4895
        %v4928 = vadd.f32 %v4864, %v4896
        %v4929 = vadd.f32 %v4865, %v4897
        %v4930 = vadd.f32 %v4866, %v4898
        %v4931 = vadd.f32 %v4867, %v4899
        %v4932 = vadd.f32 %v4868, %v4900
        %v4933 = vadd.f32 %v4869, %v4901
        %v4934 = vadd.f32 %v4870, %v4902
        %v4935 = vadd.f32 %v4871, %v4903
        %v4936 = vadd.f32 %v4872, %v4904
        %v4937 = vadd.f32 %v4873, %v4905
        %v4938 = vadd.f32 %v4874, %v4906
        %v4939 = vadd.f32 %v4875, %v4907
        %v4940 = vadd.f32 %v4876, %v4908
        %v4941 = vadd.f32 %v4877, %v4909
        %v4942 = vadd.f32 %v4878, %v4910
        %v4943 = vadd.f32 %v4879, %v4911
        %v4944 = vadd.f32 %v4880, %v4912
        %v4945 = vadd.f32 %v4881, %v4913
        %v4946 = vadd.f32 %v4882, %v4914
        %v4947 = vadd.f32 %v4883, %v4915
        %v4948 = vadd.f32 %v4884, %v4916
        %v4949 = vadd.f32 %v4885, %v4917
        %v4950 = vadd.f32 %v4886, %v4918
        %v4951 = vadd.f32 %v4887, %v4919
        %v4952 = vadd.f32 %v4888, %v4920
        %v4953 = vadd.f32 %v4889, %v4921
        %v4954 = vadd.f32 %v4890, %v4922
        %v4955 = vadd.f32 %v4891, %v4923
        %4956 = vst [vmem:[%s479] sm:$0xff] %v4924
        %4957 = vst [vmem:[%s479 + $0x8] sm:$0xff] %v4925
        %4958 = vst [vmem:[%s479 + $0x10] sm:$0xff] %v4926
        %4959 = vst [vmem:[%s479 + $0x18] sm:$0xff] %v4927
        %4960 = vst [vmem:[%s479 + $0x20] sm:$0xff] %v4928
        %4961 = vst [vmem:[%s479 + $0x28] sm:$0xff] %v4929
        %4962 = vst [vmem:[%s479 + $0x30] sm:$0xff] %v4930
        %4963 = vst [vmem:[%s479 + $0x38] sm:$0xff] %v4931
        %4964 = vst [vmem:[%s479 + $0x40] sm:$0xff] %v4932
        %4965 = vst [vmem:[%s479 + $0x48] sm:$0xff] %v4933
        %4966 = vst [vmem:[%s479 + $0x50] sm:$0xff] %v4934
        %4967 = vst [vmem:[%s479 + $0x58] sm:$0xff] %v4935
        %4968 = vst [vmem:[%s479 + $0x60] sm:$0xff] %v4936
        %4969 = vst [vmem:[%s479 + $0x68] sm:$0xff] %v4937
        %4970 = vst [vmem:[%s479 + $0x70] sm:$0xff] %v4938
        %4971 = vst [vmem:[%s479 + $0x78] sm:$0xff] %v4939
        %4972 = vst [vmem:[%s479 + $0x80] sm:$0xff] %v4940
        %4973 = vst [vmem:[%s479 + $0x88] sm:$0xff] %v4941
        %4974 = vst [vmem:[%s479 + $0x90] sm:$0xff] %v4942
        %4975 = vst [vmem:[%s479 + $0x98] sm:$0xff] %v4943
        %4976 = vst [vmem:[%s479 + $0xa0] sm:$0xff] %v4944
        %4977 = vst [vmem:[%s479 + $0xa8] sm:$0xff] %v4945
        %4978 = vst [vmem:[%s479 + $0xb0] sm:$0xff] %v4946
        %4979 = vst [vmem:[%s479 + $0xb8] sm:$0xff] %v4947
        %4980 = vst [vmem:[%s479 + $0xc0] sm:$0xff] %v4948
        %4981 = vst [vmem:[%s479 + $0xc8] sm:$0xff] %v4949
        %4982 = vst [vmem:[%s479 + $0xd0] sm:$0xff] %v4950
        %4983 = vst [vmem:[%s479 + $0xd8] sm:$0xff] %v4951
        %4984 = vst [vmem:[%s479 + $0xe0] sm:$0xff] %v4952
        %4985 = vst [vmem:[%s479 + $0xe8] sm:$0xff] %v4953
        %4986 = vst [vmem:[%s479 + $0xf0] sm:$0xff] %v4954
        %4987 = vst [vmem:[%s479 + $0xf8] sm:$0xff] %v4955
        %4988 = vadd.xlane.f32.xlu0 %v4924
        %v4989 = vpop.xlane.xlu0 %4988
        %4990 = vadd.xlane.f32.xlu0 %v4925
        %v4991 = vpop.xlane.xlu0 %4990
        %4992 = vadd.xlane.f32.xlu0 %v4926
        %v4993 = vpop.xlane.xlu0 %4992
        %4994 = vadd.xlane.f32.xlu0 %v4927
        %v4995 = vpop.xlane.xlu0 %4994
        %4996 = vadd.xlane.f32.xlu0 %v4928
        %v4997 = vpop.xlane.xlu0 %4996
        %4998 = vadd.xlane.f32.xlu0 %v4929
        %v4999 = vpop.xlane.xlu0 %4998
        %5000 = vadd.xlane.f32.xlu0 %v4930
        %v5001 = vpop.xlane.xlu0 %5000
        %5002 = vadd.xlane.f32.xlu0 %v4931
        %v5003 = vpop.xlane.xlu0 %5002
        %5004 = vadd.xlane.f32.xlu0 %v4932
        %v5005 = vpop.xlane.xlu0 %5004
        %5006 = vadd.xlane.f32.xlu0 %v4933
        %v5007 = vpop.xlane.xlu0 %5006
        %5008 = vadd.xlane.f32.xlu0 %v4934
        %v5009 = vpop.xlane.xlu0 %5008
        %5010 = vadd.xlane.f32.xlu0 %v4935
        %v5011 = vpop.xlane.xlu0 %5010
        %5012 = vadd.xlane.f32.xlu0 %v4936
        %v5013 = vpop.xlane.xlu0 %5012
        %5014 = vadd.xlane.f32.xlu0 %v4937
        %v5015 = vpop.xlane.xlu0 %5014
        %5016 = vadd.xlane.f32.xlu0 %v4938
        %v5017 = vpop.xlane.xlu0 %5016
        %5018 = vadd.xlane.f32.xlu0 %v4939
        %v5019 = vpop.xlane.xlu0 %5018
        %5020 = vadd.xlane.f32.xlu0 %v4940
        %v5021 = vpop.xlane.xlu0 %5020
        %5022 = vadd.xlane.f32.xlu0 %v4941
        %v5023 = vpop.xlane.xlu0 %5022
        %5024 = vadd.xlane.f32.xlu0 %v4942
        %v5025 = vpop.xlane.xlu0 %5024
        %5026 = vadd.xlane.f32.xlu0 %v4943
        %v5027 = vpop.xlane.xlu0 %5026
        %5028 = vadd.xlane.f32.xlu0 %v4944
        %v5029 = vpop.xlane.xlu0 %5028
        %5030 = vadd.xlane.f32.xlu0 %v4945
        %v5031 = vpop.xlane.xlu0 %5030
        %5032 = vadd.xlane.f32.xlu0 %v4946
        %v5033 = vpop.xlane.xlu0 %5032
        %5034 = vadd.xlane.f32.xlu0 %v4947
        %v5035 = vpop.xlane.xlu0 %5034
        %5036 = vadd.xlane.f32.xlu0 %v4948
        %v5037 = vpop.xlane.xlu0 %5036
        %5038 = vadd.xlane.f32.xlu0 %v4949
        %v5039 = vpop.xlane.xlu0 %5038
        %5040 = vadd.xlane.f32.xlu0 %v4950
        %v5041 = vpop.xlane.xlu0 %5040
        %5042 = vadd.xlane.f32.xlu0 %v4951
        %v5043 = vpop.xlane.xlu0 %5042
        %5044 = vadd.xlane.f32.xlu0 %v4952
        %v5045 = vpop.xlane.xlu0 %5044
        %5046 = vadd.xlane.f32.xlu0 %v4953
        %v5047 = vpop.xlane.xlu0 %5046
        %5048 = vadd.xlane.f32.xlu0 %v4954
        %v5049 = vpop.xlane.xlu0 %5048
        %5050 = vadd.xlane.f32.xlu0 %v4955
        %v5051 = vpop.xlane.xlu0 %5050
        %v5052 = vmul.f32 %v4989, %v585
        %v5053 = vmul.f32 %v4991, %v585
        %v5054 = vmul.f32 %v4993, %v585
        %v5055 = vmul.f32 %v4995, %v585
        %v5056 = vmul.f32 %v4997, %v585
        %v5057 = vmul.f32 %v4999, %v585
        %v5058 = vmul.f32 %v5001, %v585
        %v5059 = vmul.f32 %v5003, %v585
        %v5060 = vmul.f32 %v5005, %v585
        %v5061 = vmul.f32 %v5007, %v585
        %v5062 = vmul.f32 %v5009, %v585
        %v5063 = vmul.f32 %v5011, %v585
        %v5064 = vmul.f32 %v5013, %v585
        %v5065 = vmul.f32 %v5015, %v585
        %v5066 = vmul.f32 %v5017, %v585
        %v5067 = vmul.f32 %v5019, %v585
        %v5068 = vmul.f32 %v5021, %v585
        %v5069 = vmul.f32 %v5023, %v585
        %v5070 = vmul.f32 %v5025, %v585
        %v5071 = vmul.f32 %v5027, %v585
        %v5072 = vmul.f32 %v5029, %v585
        %v5073 = vmul.f32 %v5031, %v585
        %v5074 = vmul.f32 %v5033, %v585
        %v5075 = vmul.f32 %v5035, %v585
        %v5076 = vmul.f32 %v5037, %v585
        %v5077 = vmul.f32 %v5039, %v585
        %v5078 = vmul.f32 %v5041, %v585
        %v5079 = vmul.f32 %v5043, %v585
        %v5080 = vmul.f32 %v5045, %v585
        %v5081 = vmul.f32 %v5047, %v585
        %v5082 = vmul.f32 %v5049, %v585
        %v5083 = vmul.f32 %v5051, %v585
        %v5084 = vsub.f32 %v4924, %v5052
        %v5085 = vsub.f32 %v4925, %v5053
        %v5086 = vsub.f32 %v4926, %v5054
        %v5087 = vsub.f32 %v4927, %v5055
        %v5088 = vsub.f32 %v4928, %v5056
        %v5089 = vsub.f32 %v4929, %v5057
        %v5090 = vsub.f32 %v4930, %v5058
        %v5091 = vsub.f32 %v4931, %v5059
        %v5092 = vsub.f32 %v4932, %v5060
        %v5093 = vsub.f32 %v4933, %v5061
        %v5094 = vsub.f32 %v4934, %v5062
        %v5095 = vsub.f32 %v4935, %v5063
        %v5096 = vsub.f32 %v4936, %v5064
        %v5097 = vsub.f32 %v4937, %v5065
        %v5098 = vsub.f32 %v4938, %v5066
        %v5099 = vsub.f32 %v4939, %v5067
        %v5100 = vsub.f32 %v4940, %v5068
        %v5101 = vsub.f32 %v4941, %v5069
        %v5102 = vsub.f32 %v4942, %v5070
        %v5103 = vsub.f32 %v4943, %v5071
        %v5104 = vsub.f32 %v4944, %v5072
        %v5105 = vsub.f32 %v4945, %v5073
        %v5106 = vsub.f32 %v4946, %v5074
        %v5107 = vsub.f32 %v4947, %v5075
        %v5108 = vsub.f32 %v4948, %v5076
        %v5109 = vsub.f32 %v4949, %v5077
        %v5110 = vsub.f32 %v4950, %v5078
        %v5111 = vsub.f32 %v4951, %v5079
        %v5112 = vsub.f32 %v4952, %v5080
        %v5113 = vsub.f32 %v4953, %v5081
        %v5114 = vsub.f32 %v4954, %v5082
        %v5115 = vsub.f32 %v4955, %v5083
        %v5116 = vmul.f32 %v5084, %v5084
        %v5117 = vmul.f32 %v5085, %v5085
        %v5118 = vmul.f32 %v5086, %v5086
        %v5119 = vmul.f32 %v5087, %v5087
        %v5120 = vmul.f32 %v5088, %v5088
        %v5121 = vmul.f32 %v5089, %v5089
        %v5122 = vmul.f32 %v5090, %v5090
        %v5123 = vmul.f32 %v5091, %v5091
        %v5124 = vmul.f32 %v5092, %v5092
        %v5125 = vmul.f32 %v5093, %v5093
        %v5126 = vmul.f32 %v5094, %v5094
        %v5127 = vmul.f32 %v5095, %v5095
        %v5128 = vmul.f32 %v5096, %v5096
        %v5129 = vmul.f32 %v5097, %v5097
        %v5130 = vmul.f32 %v5098, %v5098
        %v5131 = vmul.f32 %v5099, %v5099
        %v5132 = vmul.f32 %v5100, %v5100
        %v5133 = vmul.f32 %v5101, %v5101
        %v5134 = vmul.f32 %v5102, %v5102
        %v5135 = vmul.f32 %v5103, %v5103
        %v5136 = vmul.f32 %v5104, %v5104
        %v5137 = vmul.f32 %v5105, %v5105
        %v5138 = vmul.f32 %v5106, %v5106
        %v5139 = vmul.f32 %v5107, %v5107
        %v5140 = vmul.f32 %v5108, %v5108
        %v5141 = vmul.f32 %v5109, %v5109
        %v5142 = vmul.f32 %v5110, %v5110
        %v5143 = vmul.f32 %v5111, %v5111
        %v5144 = vmul.f32 %v5112, %v5112
        %v5145 = vmul.f32 %v5113, %v5113
        %v5146 = vmul.f32 %v5114, %v5114
        %v5147 = vmul.f32 %v5115, %v5115
        %5148 = vadd.xlane.f32.xlu0 %v5116
        %v5149 = vpop.xlane.xlu0 %5148
        %5150 = vadd.xlane.f32.xlu0 %v5117
        %v5151 = vpop.xlane.xlu0 %5150
        %5152 = vadd.xlane.f32.xlu0 %v5118
        %v5153 = vpop.xlane.xlu0 %5152
        %5154 = vadd.xlane.f32.xlu0 %v5119
        %v5155 = vpop.xlane.xlu0 %5154
        %5156 = vadd.xlane.f32.xlu0 %v5120
        %v5157 = vpop.xlane.xlu0 %5156
        %5158 = vadd.xlane.f32.xlu0 %v5121
        %v5159 = vpop.xlane.xlu0 %5158
        %5160 = vadd.xlane.f32.xlu0 %v5122
        %v5161 = vpop.xlane.xlu0 %5160
        %5162 = vadd.xlane.f32.xlu0 %v5123
        %v5163 = vpop.xlane.xlu0 %5162
        %5164 = vadd.xlane.f32.xlu0 %v5124
        %v5165 = vpop.xlane.xlu0 %5164
        %5166 = vadd.xlane.f32.xlu0 %v5125
        %v5167 = vpop.xlane.xlu0 %5166
        %5168 = vadd.xlane.f32.xlu0 %v5126
        %v5169 = vpop.xlane.xlu0 %5168
        %5170 = vadd.xlane.f32.xlu0 %v5127
        %v5171 = vpop.xlane.xlu0 %5170
        %5172 = vadd.xlane.f32.xlu0 %v5128
        %v5173 = vpop.xlane.xlu0 %5172
        %5174 = vadd.xlane.f32.xlu0 %v5129
        %v5175 = vpop.xlane.xlu0 %5174
        %5176 = vadd.xlane.f32.xlu0 %v5130
        %v5177 = vpop.xlane.xlu0 %5176
        %5178 = vadd.xlane.f32.xlu0 %v5131
        %v5179 = vpop.xlane.xlu0 %5178
        %5180 = vadd.xlane.f32.xlu0 %v5132
        %v5181 = vpop.xlane.xlu0 %5180
        %5182 = vadd.xlane.f32.xlu0 %v5133
        %v5183 = vpop.xlane.xlu0 %5182
        %5184 = vadd.xlane.f32.xlu0 %v5134
        %v5185 = vpop.xlane.xlu0 %5184
        %5186 = vadd.xlane.f32.xlu0 %v5135
        %v5187 = vpop.xlane.xlu0 %5186
        %5188 = vadd.xlane.f32.xlu0 %v5136
        %v5189 = vpop.xlane.xlu0 %5188
        %5190 = vadd.xlane.f32.xlu0 %v5137
        %v5191 = vpop.xlane.xlu0 %5190
        %5192 = vadd.xlane.f32.xlu0 %v5138
        %v5193 = vpop.xlane.xlu0 %5192
        %5194 = vadd.xlane.f32.xlu0 %v5139
        %v5195 = vpop.xlane.xlu0 %5194
        %5196 = vadd.xlane.f32.xlu0 %v5140
        %v5197 = vpop.xlane.xlu0 %5196
        %5198 = vadd.xlane.f32.xlu0 %v5141
        %v5199 = vpop.xlane.xlu0 %5198
        %5200 = vadd.xlane.f32.xlu0 %v5142
        %v5201 = vpop.xlane.xlu0 %5200
        %5202 = vadd.xlane.f32.xlu0 %v5143
        %v5203 = vpop.xlane.xlu0 %5202
        %5204 = vadd.xlane.f32.xlu0 %v5144
        %v5205 = vpop.xlane.xlu0 %5204
        %5206 = vadd.xlane.f32.xlu0 %v5145
        %v5207 = vpop.xlane.xlu0 %5206
        %5208 = vadd.xlane.f32.xlu0 %v5146
        %v5209 = vpop.xlane.xlu0 %5208
        %5210 = vadd.xlane.f32.xlu0 %v5147
        %v5211 = vpop.xlane.xlu0 %5210
        %v5212 = vmul.f32 %v5149, %v585
        %v5213 = vmul.f32 %v5151, %v585
        %v5214 = vmul.f32 %v5153, %v585
        %v5215 = vmul.f32 %v5155, %v585
        %v5216 = vmul.f32 %v5157, %v585
        %v5217 = vmul.f32 %v5159, %v585
        %v5218 = vmul.f32 %v5161, %v585
        %v5219 = vmul.f32 %v5163, %v585
        %v5220 = vmul.f32 %v5165, %v585
        %v5221 = vmul.f32 %v5167, %v585
        %v5222 = vmul.f32 %v5169, %v585
        %v5223 = vmul.f32 %v5171, %v585
        %v5224 = vmul.f32 %v5173, %v585
        %v5225 = vmul.f32 %v5175, %v585
        %v5226 = vmul.f32 %v5177, %v585
        %v5227 = vmul.f32 %v5179, %v585
        %v5228 = vmul.f32 %v5181, %v585
        %v5229 = vmul.f32 %v5183, %v585
        %v5230 = vmul.f32 %v5185, %v585
        %v5231 = vmul.f32 %v5187, %v585
        %v5232 = vmul.f32 %v5189, %v585
        %v5233 = vmul.f32 %v5191, %v585
        %v5234 = vmul.f32 %v5193, %v585
        %v5235 = vmul.f32 %v5195, %v585
        %v5236 = vmul.f32 %v5197, %v585
        %v5237 = vmul.f32 %v5199, %v585
        %v5238 = vmul.f32 %v5201, %v585
        %v5239 = vmul.f32 %v5203, %v585
        %v5240 = vmul.f32 %v5205, %v585
        %v5241 = vmul.f32 %v5207, %v585
        %v5242 = vmul.f32 %v5209, %v585
        %v5243 = vmul.f32 %v5211, %v585
        %v5244 = vadd.f32 %v5212, 1e-05
        %v5245 = vadd.f32 %v5213, 1e-05
        %v5246 = vadd.f32 %v5214, 1e-05
        %v5247 = vadd.f32 %v5215, 1e-05
        %v5248 = vadd.f32 %v5216, 1e-05
        %v5249 = vadd.f32 %v5217, 1e-05
        %v5250 = vadd.f32 %v5218, 1e-05
        %v5251 = vadd.f32 %v5219, 1e-05
        %v5252 = vadd.f32 %v5220, 1e-05
        %v5253 = vadd.f32 %v5221, 1e-05
        %v5254 = vadd.f32 %v5222, 1e-05
        %v5255 = vadd.f32 %v5223, 1e-05
        %v5256 = vadd.f32 %v5224, 1e-05
        %v5257 = vadd.f32 %v5225, 1e-05
        %v5258 = vadd.f32 %v5226, 1e-05
        %v5259 = vadd.f32 %v5227, 1e-05
        %v5260 = vadd.f32 %v5228, 1e-05
        %v5261 = vadd.f32 %v5229, 1e-05
        %v5262 = vadd.f32 %v5230, 1e-05
        %v5263 = vadd.f32 %v5231, 1e-05
        %v5264 = vadd.f32 %v5232, 1e-05
        %v5265 = vadd.f32 %v5233, 1e-05
        %v5266 = vadd.f32 %v5234, 1e-05
        %v5267 = vadd.f32 %v5235, 1e-05
        %v5268 = vadd.f32 %v5236, 1e-05
        %v5269 = vadd.f32 %v5237, 1e-05
        %v5270 = vadd.f32 %v5238, 1e-05
        %v5271 = vadd.f32 %v5239, 1e-05
        %v5272 = vadd.f32 %v5240, 1e-05
        %v5273 = vadd.f32 %v5241, 1e-05
        %v5274 = vadd.f32 %v5242, 1e-05
        %v5275 = vadd.f32 %v5243, 1e-05
        %v5276 = vrsqrt.pop %v5244
        %v5277 = vmul.f32 %v5276, %v5244
        %v5278 = vmul.f32 %v5277, %v5276
        %v5279 = vmul.f32 0.5, %v5278
        %v5280 = vsub.f32 1.5, %v5279
        %v5281 = vmul.f32 %v5276, %v5280
        %vm5282 = vweird.f32 %v5244
        %vm5283 = vweird.f32 %v5276
        %vm5284 = vmor %vm5282, %vm5283
        %v5285 = vsel %vm5284, %v5276, %v5281
        %v5286 = vrsqrt.pop %v5245
        %v5287 = vmul.f32 %v5286, %v5245
        %v5288 = vmul.f32 %v5287, %v5286
        %v5289 = vmul.f32 0.5, %v5288
        %v5290 = vsub.f32 1.5, %v5289
        %v5291 = vmul.f32 %v5286, %v5290
        %vm5292 = vweird.f32 %v5245
        %vm5293 = vweird.f32 %v5286
        %vm5294 = vmor %vm5292, %vm5293
        %v5295 = vsel %vm5294, %v5286, %v5291
        %v5296 = vrsqrt.pop %v5246
        %v5297 = vmul.f32 %v5296, %v5246
        %v5298 = vmul.f32 %v5297, %v5296
        %v5299 = vmul.f32 0.5, %v5298
        %v5300 = vsub.f32 1.5, %v5299
        %v5301 = vmul.f32 %v5296, %v5300
        %vm5302 = vweird.f32 %v5246
        %vm5303 = vweird.f32 %v5296
        %vm5304 = vmor %vm5302, %vm5303
        %v5305 = vsel %vm5304, %v5296, %v5301
        %v5306 = vrsqrt.pop %v5247
        %v5307 = vmul.f32 %v5306, %v5247
        %v5308 = vmul.f32 %v5307, %v5306
        %v5309 = vmul.f32 0.5, %v5308
        %v5310 = vsub.f32 1.5, %v5309
        %v5311 = vmul.f32 %v5306, %v5310
        %vm5312 = vweird.f32 %v5247
        %vm5313 = vweird.f32 %v5306
        %vm5314 = vmor %vm5312, %vm5313
        %v5315 = vsel %vm5314, %v5306, %v5311
        %v5316 = vrsqrt.pop %v5248
        %v5317 = vmul.f32 %v5316, %v5248
        %v5318 = vmul.f32 %v5317, %v5316
        %v5319 = vmul.f32 0.5, %v5318
        %v5320 = vsub.f32 1.5, %v5319
        %v5321 = vmul.f32 %v5316, %v5320
        %vm5322 = vweird.f32 %v5248
        %vm5323 = vweird.f32 %v5316
        %vm5324 = vmor %vm5322, %vm5323
        %v5325 = vsel %vm5324, %v5316, %v5321
        %v5326 = vrsqrt.pop %v5249
        %v5327 = vmul.f32 %v5326, %v5249
        %v5328 = vmul.f32 %v5327, %v5326
        %v5329 = vmul.f32 0.5, %v5328
        %v5330 = vsub.f32 1.5, %v5329
        %v5331 = vmul.f32 %v5326, %v5330
        %vm5332 = vweird.f32 %v5249
        %vm5333 = vweird.f32 %v5326
        %vm5334 = vmor %vm5332, %vm5333
        %v5335 = vsel %vm5334, %v5326, %v5331
        %v5336 = vrsqrt.pop %v5250
        %v5337 = vmul.f32 %v5336, %v5250
        %v5338 = vmul.f32 %v5337, %v5336
        %v5339 = vmul.f32 0.5, %v5338
        %v5340 = vsub.f32 1.5, %v5339
        %v5341 = vmul.f32 %v5336, %v5340
        %vm5342 = vweird.f32 %v5250
        %vm5343 = vweird.f32 %v5336
        %vm5344 = vmor %vm5342, %vm5343
        %v5345 = vsel %vm5344, %v5336, %v5341
        %v5346 = vrsqrt.pop %v5251
        %v5347 = vmul.f32 %v5346, %v5251
        %v5348 = vmul.f32 %v5347, %v5346
        %v5349 = vmul.f32 0.5, %v5348
        %v5350 = vsub.f32 1.5, %v5349
        %v5351 = vmul.f32 %v5346, %v5350
        %vm5352 = vweird.f32 %v5251
        %vm5353 = vweird.f32 %v5346
        %vm5354 = vmor %vm5352, %vm5353
        %v5355 = vsel %vm5354, %v5346, %v5351
        %v5356 = vrsqrt.pop %v5252
        %v5357 = vmul.f32 %v5356, %v5252
        %v5358 = vmul.f32 %v5357, %v5356
        %v5359 = vmul.f32 0.5, %v5358
        %v5360 = vsub.f32 1.5, %v5359
        %v5361 = vmul.f32 %v5356, %v5360
        %vm5362 = vweird.f32 %v5252
        %vm5363 = vweird.f32 %v5356
        %vm5364 = vmor %vm5362, %vm5363
        %v5365 = vsel %vm5364, %v5356, %v5361
        %v5366 = vrsqrt.pop %v5253
        %v5367 = vmul.f32 %v5366, %v5253
        %v5368 = vmul.f32 %v5367, %v5366
        %v5369 = vmul.f32 0.5, %v5368
        %v5370 = vsub.f32 1.5, %v5369
        %v5371 = vmul.f32 %v5366, %v5370
        %vm5372 = vweird.f32 %v5253
        %vm5373 = vweird.f32 %v5366
        %vm5374 = vmor %vm5372, %vm5373
        %v5375 = vsel %vm5374, %v5366, %v5371
        %v5376 = vrsqrt.pop %v5254
        %v5377 = vmul.f32 %v5376, %v5254
        %v5378 = vmul.f32 %v5377, %v5376
        %v5379 = vmul.f32 0.5, %v5378
        %v5380 = vsub.f32 1.5, %v5379
        %v5381 = vmul.f32 %v5376, %v5380
        %vm5382 = vweird.f32 %v5254
        %vm5383 = vweird.f32 %v5376
        %vm5384 = vmor %vm5382, %vm5383
        %v5385 = vsel %vm5384, %v5376, %v5381
        %v5386 = vrsqrt.pop %v5255
        %v5387 = vmul.f32 %v5386, %v5255
        %v5388 = vmul.f32 %v5387, %v5386
        %v5389 = vmul.f32 0.5, %v5388
        %v5390 = vsub.f32 1.5, %v5389
        %v5391 = vmul.f32 %v5386, %v5390
        %vm5392 = vweird.f32 %v5255
        %vm5393 = vweird.f32 %v5386
        %vm5394 = vmor %vm5392, %vm5393
        %v5395 = vsel %vm5394, %v5386, %v5391
        %v5396 = vrsqrt.pop %v5256
        %v5397 = vmul.f32 %v5396, %v5256
        %v5398 = vmul.f32 %v5397, %v5396
        %v5399 = vmul.f32 0.5, %v5398
        %v5400 = vsub.f32 1.5, %v5399
        %v5401 = vmul.f32 %v5396, %v5400
        %vm5402 = vweird.f32 %v5256
        %vm5403 = vweird.f32 %v5396
        %vm5404 = vmor %vm5402, %vm5403
        %v5405 = vsel %vm5404, %v5396, %v5401
        %v5406 = vrsqrt.pop %v5257
        %v5407 = vmul.f32 %v5406, %v5257
        %v5408 = vmul.f32 %v5407, %v5406
        %v5409 = vmul.f32 0.5, %v5408
        %v5410 = vsub.f32 1.5, %v5409
        %v5411 = vmul.f32 %v5406, %v5410
        %vm5412 = vweird.f32 %v5257
        %vm5413 = vweird.f32 %v5406
        %vm5414 = vmor %vm5412, %vm5413
        %v5415 = vsel %vm5414, %v5406, %v5411
        %v5416 = vrsqrt.pop %v5258
        %v5417 = vmul.f32 %v5416, %v5258
        %v5418 = vmul.f32 %v5417, %v5416
        %v5419 = vmul.f32 0.5, %v5418
        %v5420 = vsub.f32 1.5, %v5419
        %v5421 = vmul.f32 %v5416, %v5420
        %vm5422 = vweird.f32 %v5258
        %vm5423 = vweird.f32 %v5416
        %vm5424 = vmor %vm5422, %vm5423
        %v5425 = vsel %vm5424, %v5416, %v5421
        %v5426 = vrsqrt.pop %v5259
        %v5427 = vmul.f32 %v5426, %v5259
        %v5428 = vmul.f32 %v5427, %v5426
        %v5429 = vmul.f32 0.5, %v5428
        %v5430 = vsub.f32 1.5, %v5429
        %v5431 = vmul.f32 %v5426, %v5430
        %vm5432 = vweird.f32 %v5259
        %vm5433 = vweird.f32 %v5426
        %vm5434 = vmor %vm5432, %vm5433
        %v5435 = vsel %vm5434, %v5426, %v5431
        %v5436 = vrsqrt.pop %v5260
        %v5437 = vmul.f32 %v5436, %v5260
        %v5438 = vmul.f32 %v5437, %v5436
        %v5439 = vmul.f32 0.5, %v5438
        %v5440 = vsub.f32 1.5, %v5439
        %v5441 = vmul.f32 %v5436, %v5440
        %vm5442 = vweird.f32 %v5260
        %vm5443 = vweird.f32 %v5436
        %vm5444 = vmor %vm5442, %vm5443
        %v5445 = vsel %vm5444, %v5436, %v5441
        %v5446 = vrsqrt.pop %v5261
        %v5447 = vmul.f32 %v5446, %v5261
        %v5448 = vmul.f32 %v5447, %v5446
        %v5449 = vmul.f32 0.5, %v5448
        %v5450 = vsub.f32 1.5, %v5449
        %v5451 = vmul.f32 %v5446, %v5450
        %vm5452 = vweird.f32 %v5261
        %vm5453 = vweird.f32 %v5446
        %vm5454 = vmor %vm5452, %vm5453
        %v5455 = vsel %vm5454, %v5446, %v5451
        %v5456 = vrsqrt.pop %v5262
        %v5457 = vmul.f32 %v5456, %v5262
        %v5458 = vmul.f32 %v5457, %v5456
        %v5459 = vmul.f32 0.5, %v5458
        %v5460 = vsub.f32 1.5, %v5459
        %v5461 = vmul.f32 %v5456, %v5460
        %vm5462 = vweird.f32 %v5262
        %vm5463 = vweird.f32 %v5456
        %vm5464 = vmor %vm5462, %vm5463
        %v5465 = vsel %vm5464, %v5456, %v5461
        %v5466 = vrsqrt.pop %v5263
        %v5467 = vmul.f32 %v5466, %v5263
        %v5468 = vmul.f32 %v5467, %v5466
        %v5469 = vmul.f32 0.5, %v5468
        %v5470 = vsub.f32 1.5, %v5469
        %v5471 = vmul.f32 %v5466, %v5470
        %vm5472 = vweird.f32 %v5263
        %vm5473 = vweird.f32 %v5466
        %vm5474 = vmor %vm5472, %vm5473
        %v5475 = vsel %vm5474, %v5466, %v5471
        %v5476 = vrsqrt.pop %v5264
        %v5477 = vmul.f32 %v5476, %v5264
        %v5478 = vmul.f32 %v5477, %v5476
        %v5479 = vmul.f32 0.5, %v5478
        %v5480 = vsub.f32 1.5, %v5479
        %v5481 = vmul.f32 %v5476, %v5480
        %vm5482 = vweird.f32 %v5264
        %vm5483 = vweird.f32 %v5476
        %vm5484 = vmor %vm5482, %vm5483
        %v5485 = vsel %vm5484, %v5476, %v5481
        %v5486 = vrsqrt.pop %v5265
        %v5487 = vmul.f32 %v5486, %v5265
        %v5488 = vmul.f32 %v5487, %v5486
        %v5489 = vmul.f32 0.5, %v5488
        %v5490 = vsub.f32 1.5, %v5489
        %v5491 = vmul.f32 %v5486, %v5490
        %vm5492 = vweird.f32 %v5265
        %vm5493 = vweird.f32 %v5486
        %vm5494 = vmor %vm5492, %vm5493
        %v5495 = vsel %vm5494, %v5486, %v5491
        %v5496 = vrsqrt.pop %v5266
        %v5497 = vmul.f32 %v5496, %v5266
        %v5498 = vmul.f32 %v5497, %v5496
        %v5499 = vmul.f32 0.5, %v5498
        %v5500 = vsub.f32 1.5, %v5499
        %v5501 = vmul.f32 %v5496, %v5500
        %vm5502 = vweird.f32 %v5266
        %vm5503 = vweird.f32 %v5496
        %vm5504 = vmor %vm5502, %vm5503
        %v5505 = vsel %vm5504, %v5496, %v5501
        %v5506 = vrsqrt.pop %v5267
        %v5507 = vmul.f32 %v5506, %v5267
        %v5508 = vmul.f32 %v5507, %v5506
        %v5509 = vmul.f32 0.5, %v5508
        %v5510 = vsub.f32 1.5, %v5509
        %v5511 = vmul.f32 %v5506, %v5510
        %vm5512 = vweird.f32 %v5267
        %vm5513 = vweird.f32 %v5506
        %vm5514 = vmor %vm5512, %vm5513
        %v5515 = vsel %vm5514, %v5506, %v5511
        %v5516 = vrsqrt.pop %v5268
        %v5517 = vmul.f32 %v5516, %v5268
        %v5518 = vmul.f32 %v5517, %v5516
        %v5519 = vmul.f32 0.5, %v5518
        %v5520 = vsub.f32 1.5, %v5519
        %v5521 = vmul.f32 %v5516, %v5520
        %vm5522 = vweird.f32 %v5268
        %vm5523 = vweird.f32 %v5516
        %vm5524 = vmor %vm5522, %vm5523
        %v5525 = vsel %vm5524, %v5516, %v5521
        %v5526 = vrsqrt.pop %v5269
        %v5527 = vmul.f32 %v5526, %v5269
        %v5528 = vmul.f32 %v5527, %v5526
        %v5529 = vmul.f32 0.5, %v5528
        %v5530 = vsub.f32 1.5, %v5529
        %v5531 = vmul.f32 %v5526, %v5530
        %vm5532 = vweird.f32 %v5269
        %vm5533 = vweird.f32 %v5526
        %vm5534 = vmor %vm5532, %vm5533
        %v5535 = vsel %vm5534, %v5526, %v5531
        %v5536 = vrsqrt.pop %v5270
        %v5537 = vmul.f32 %v5536, %v5270
        %v5538 = vmul.f32 %v5537, %v5536
        %v5539 = vmul.f32 0.5, %v5538
        %v5540 = vsub.f32 1.5, %v5539
        %v5541 = vmul.f32 %v5536, %v5540
        %vm5542 = vweird.f32 %v5270
        %vm5543 = vweird.f32 %v5536
        %vm5544 = vmor %vm5542, %vm5543
        %v5545 = vsel %vm5544, %v5536, %v5541
        %v5546 = vrsqrt.pop %v5271
        %v5547 = vmul.f32 %v5546, %v5271
        %v5548 = vmul.f32 %v5547, %v5546
        %v5549 = vmul.f32 0.5, %v5548
        %v5550 = vsub.f32 1.5, %v5549
        %v5551 = vmul.f32 %v5546, %v5550
        %vm5552 = vweird.f32 %v5271
        %vm5553 = vweird.f32 %v5546
        %vm5554 = vmor %vm5552, %vm5553
        %v5555 = vsel %vm5554, %v5546, %v5551
        %v5556 = vrsqrt.pop %v5272
        %v5557 = vmul.f32 %v5556, %v5272
        %v5558 = vmul.f32 %v5557, %v5556
        %v5559 = vmul.f32 0.5, %v5558
        %v5560 = vsub.f32 1.5, %v5559
        %v5561 = vmul.f32 %v5556, %v5560
        %vm5562 = vweird.f32 %v5272
        %vm5563 = vweird.f32 %v5556
        %vm5564 = vmor %vm5562, %vm5563
        %v5565 = vsel %vm5564, %v5556, %v5561
        %v5566 = vrsqrt.pop %v5273
        %v5567 = vmul.f32 %v5566, %v5273
        %v5568 = vmul.f32 %v5567, %v5566
        %v5569 = vmul.f32 0.5, %v5568
        %v5570 = vsub.f32 1.5, %v5569
        %v5571 = vmul.f32 %v5566, %v5570
        %vm5572 = vweird.f32 %v5273
        %vm5573 = vweird.f32 %v5566
        %vm5574 = vmor %vm5572, %vm5573
        %v5575 = vsel %vm5574, %v5566, %v5571
        %v5576 = vrsqrt.pop %v5274
        %v5577 = vmul.f32 %v5576, %v5274
        %v5578 = vmul.f32 %v5577, %v5576
        %v5579 = vmul.f32 0.5, %v5578
        %v5580 = vsub.f32 1.5, %v5579
        %v5581 = vmul.f32 %v5576, %v5580
        %vm5582 = vweird.f32 %v5274
        %vm5583 = vweird.f32 %v5576
        %vm5584 = vmor %vm5582, %vm5583
        %v5585 = vsel %vm5584, %v5576, %v5581
        %v5586 = vrsqrt.pop %v5275
        %v5587 = vmul.f32 %v5586, %v5275
        %v5588 = vmul.f32 %v5587, %v5586
        %v5589 = vmul.f32 0.5, %v5588
        %v5590 = vsub.f32 1.5, %v5589
        %v5591 = vmul.f32 %v5586, %v5590
        %vm5592 = vweird.f32 %v5275
        %vm5593 = vweird.f32 %v5586
        %vm5594 = vmor %vm5592, %vm5593
        %v5595 = vsel %vm5594, %v5586, %v5591
        %v5596 = vmul.f32 %v5084, %v5285
        %v5597 = vmul.f32 %v5085, %v5295
        %v5598 = vmul.f32 %v5086, %v5305
        %v5599 = vmul.f32 %v5087, %v5315
        %v5600 = vmul.f32 %v5088, %v5325
        %v5601 = vmul.f32 %v5089, %v5335
        %v5602 = vmul.f32 %v5090, %v5345
        %v5603 = vmul.f32 %v5091, %v5355
        %v5604 = vmul.f32 %v5092, %v5365
        %v5605 = vmul.f32 %v5093, %v5375
        %v5606 = vmul.f32 %v5094, %v5385
        %v5607 = vmul.f32 %v5095, %v5395
        %v5608 = vmul.f32 %v5096, %v5405
        %v5609 = vmul.f32 %v5097, %v5415
        %v5610 = vmul.f32 %v5098, %v5425
        %v5611 = vmul.f32 %v5099, %v5435
        %v5612 = vmul.f32 %v5100, %v5445
        %v5613 = vmul.f32 %v5101, %v5455
        %v5614 = vmul.f32 %v5102, %v5465
        %v5615 = vmul.f32 %v5103, %v5475
        %v5616 = vmul.f32 %v5104, %v5485
        %v5617 = vmul.f32 %v5105, %v5495
        %v5618 = vmul.f32 %v5106, %v5505
        %v5619 = vmul.f32 %v5107, %v5515
        %v5620 = vmul.f32 %v5108, %v5525
        %v5621 = vmul.f32 %v5109, %v5535
        %v5622 = vmul.f32 %v5110, %v5545
        %v5623 = vmul.f32 %v5111, %v5555
        %v5624 = vmul.f32 %v5112, %v5565
        %v5625 = vmul.f32 %v5113, %v5575
        %v5626 = vmul.f32 %v5114, %v5585
        %v5627 = vmul.f32 %v5115, %v5595
        %v5628 = vperm.slane %v481, 5
        %v5629 = vmul.f32 %v5596, %v5628
        %v5630 = vmul.f32 %v5597, %v5628
        %v5631 = vmul.f32 %v5598, %v5628
        %v5632 = vmul.f32 %v5599, %v5628
        %v5633 = vmul.f32 %v5600, %v5628
        %v5634 = vmul.f32 %v5601, %v5628
        %v5635 = vmul.f32 %v5602, %v5628
        %v5636 = vmul.f32 %v5603, %v5628
        %v5637 = vmul.f32 %v5604, %v5628
        %v5638 = vmul.f32 %v5605, %v5628
        %v5639 = vmul.f32 %v5606, %v5628
        %v5640 = vmul.f32 %v5607, %v5628
        %v5641 = vmul.f32 %v5608, %v5628
        %v5642 = vmul.f32 %v5609, %v5628
        %v5643 = vmul.f32 %v5610, %v5628
        %v5644 = vmul.f32 %v5611, %v5628
        %v5645 = vmul.f32 %v5612, %v5628
        %v5646 = vmul.f32 %v5613, %v5628
        %v5647 = vmul.f32 %v5614, %v5628
        %v5648 = vmul.f32 %v5615, %v5628
        %v5649 = vmul.f32 %v5616, %v5628
        %v5650 = vmul.f32 %v5617, %v5628
        %v5651 = vmul.f32 %v5618, %v5628
        %v5652 = vmul.f32 %v5619, %v5628
        %v5653 = vmul.f32 %v5620, %v5628
        %v5654 = vmul.f32 %v5621, %v5628
        %v5655 = vmul.f32 %v5622, %v5628
        %v5656 = vmul.f32 %v5623, %v5628
        %v5657 = vmul.f32 %v5624, %v5628
        %v5658 = vmul.f32 %v5625, %v5628
        %v5659 = vmul.f32 %v5626, %v5628
        %v5660 = vmul.f32 %v5627, %v5628
        %v5661 = vperm.slane %v481, 6
        %v5662 = vadd.f32 %v5629, %v5661
        %v5663 = vadd.f32 %v5630, %v5661
        %v5664 = vadd.f32 %v5631, %v5661
        %v5665 = vadd.f32 %v5632, %v5661
        %v5666 = vadd.f32 %v5633, %v5661
        %v5667 = vadd.f32 %v5634, %v5661
        %v5668 = vadd.f32 %v5635, %v5661
        %v5669 = vadd.f32 %v5636, %v5661
        %v5670 = vadd.f32 %v5637, %v5661
        %v5671 = vadd.f32 %v5638, %v5661
        %v5672 = vadd.f32 %v5639, %v5661
        %v5673 = vadd.f32 %v5640, %v5661
        %v5674 = vadd.f32 %v5641, %v5661
        %v5675 = vadd.f32 %v5642, %v5661
        %v5676 = vadd.f32 %v5643, %v5661
        %v5677 = vadd.f32 %v5644, %v5661
        %v5678 = vadd.f32 %v5645, %v5661
        %v5679 = vadd.f32 %v5646, %v5661
        %v5680 = vadd.f32 %v5647, %v5661
        %v5681 = vadd.f32 %v5648, %v5661
        %v5682 = vadd.f32 %v5649, %v5661
        %v5683 = vadd.f32 %v5650, %v5661
        %v5684 = vadd.f32 %v5651, %v5661
        %v5685 = vadd.f32 %v5652, %v5661
        %v5686 = vadd.f32 %v5653, %v5661
        %v5687 = vadd.f32 %v5654, %v5661
        %v5688 = vadd.f32 %v5655, %v5661
        %v5689 = vadd.f32 %v5656, %v5661
        %v5690 = vadd.f32 %v5657, %v5661
        %v5691 = vadd.f32 %v5658, %v5661
        %v5692 = vadd.f32 %v5659, %v5661
        %v5693 = vadd.f32 %v5660, %v5661
        %v5694 = vld [vmem:[#allocation6] sm:$0xff]
        %v5695 = vld [vmem:[#allocation6 + $0x8] sm:$0xff]
        %v5696 = vld [vmem:[#allocation6 + $0x10] sm:$0xff]
        %v5697 = vld [vmem:[#allocation6 + $0x18] sm:$0xff]
        %v5698 = vld [vmem:[#allocation6 + $0x20] sm:$0xff]
        %v5699 = vld [vmem:[#allocation6 + $0x28] sm:$0xff]
        %v5700 = vld [vmem:[#allocation6 + $0x30] sm:$0xff]
        %v5701 = vld [vmem:[#allocation6 + $0x38] sm:$0xff]
        %v5702 = vld [vmem:[#allocation6 + $0x40] sm:$0xff]
        %v5703 = vld [vmem:[#allocation6 + $0x48] sm:$0xff]
        %v5704 = vld [vmem:[#allocation6 + $0x50] sm:$0xff]
        %v5705 = vld [vmem:[#allocation6 + $0x58] sm:$0xff]
        %v5706 = vld [vmem:[#allocation6 + $0x60] sm:$0xff]
        %v5707 = vld [vmem:[#allocation6 + $0x68] sm:$0xff]
        %v5708 = vld [vmem:[#allocation6 + $0x70] sm:$0xff]
        %v5709 = vld [vmem:[#allocation6 + $0x78] sm:$0xff]
        %v5710 = vperm.slane %v481, 7
        %5711 = vmatpush.msra.mxu0 %v5709
        %5712 = vmatpush.msra.mxu0 %v5708
        %5713 = vmatpush.msra.mxu0 %v5707
        %5714 = vmatpush.msra.mxu0 %v5706
        %5715 = vmatpush.msra.mxu0 %v5705
        %5716 = vmatpush.msra.mxu0 %v5704
        %5717 = vmatpush.msra.mxu0 %v5703
        %5718 = vmatpush.msra.mxu0 %v5702
        %5719 = vmatpush.msra.mxu0 %v5701
        %5720 = vmatpush.msra.mxu0 %v5700
        %5721 = vmatpush.msra.mxu0 %v5699
        %5722 = vmatpush.msra.mxu0 %v5698
        %5723 = vmatpush.msra.mxu0 %v5697
        %5724 = vmatpush.msra.mxu0 %v5696
        %5725 = vmatpush.msra.mxu0 %v5695
        %5726 = vmatpush.msra.mxu0 %v5694
        %5727 = vmatmul.f32.gmra.mxu0 %v5662
        %v5728 = vpop.f32.mrf.mxu0
        %v5729 = vadd.f32 %v5710, %v5728
        %5730 = vmatmul.f32.gmra.mxu0 %v5663
        %v5731 = vpop.f32.mrf.mxu0
        %v5732 = vadd.f32 %v5710, %v5731
        %5733 = vmatmul.f32.gmra.mxu0 %v5664
        %v5734 = vpop.f32.mrf.mxu0
        %v5735 = vadd.f32 %v5710, %v5734
        %5736 = vmatmul.f32.gmra.mxu0 %v5665
        %v5737 = vpop.f32.mrf.mxu0
        %v5738 = vadd.f32 %v5710, %v5737
        %5739 = vmatmul.f32.gmra.mxu0 %v5666
        %v5740 = vpop.f32.mrf.mxu0
        %v5741 = vadd.f32 %v5710, %v5740
        %5742 = vmatmul.f32.gmra.mxu0 %v5667
        %v5743 = vpop.f32.mrf.mxu0
        %v5744 = vadd.f32 %v5710, %v5743
        %5745 = vmatmul.f32.gmra.mxu0 %v5668
        %v5746 = vpop.f32.mrf.mxu0
        %v5747 = vadd.f32 %v5710, %v5746
        %5748 = vmatmul.f32.gmra.mxu0 %v5669
        %v5749 = vpop.f32.mrf.mxu0
        %v5750 = vadd.f32 %v5710, %v5749
        %5751 = vmatmul.f32.gmra.mxu0 %v5670
        %v5752 = vpop.f32.mrf.mxu0
        %v5753 = vadd.f32 %v5710, %v5752
        %5754 = vmatmul.f32.gmra.mxu0 %v5671
        %v5755 = vpop.f32.mrf.mxu0
        %v5756 = vadd.f32 %v5710, %v5755
        %5757 = vmatmul.f32.gmra.mxu0 %v5672
        %v5758 = vpop.f32.mrf.mxu0
        %v5759 = vadd.f32 %v5710, %v5758
        %5760 = vmatmul.f32.gmra.mxu0 %v5673
        %v5761 = vpop.f32.mrf.mxu0
        %v5762 = vadd.f32 %v5710, %v5761
        %5763 = vmatmul.f32.gmra.mxu0 %v5674
        %v5764 = vpop.f32.mrf.mxu0
        %v5765 = vadd.f32 %v5710, %v5764
        %5766 = vmatmul.f32.gmra.mxu0 %v5675
        %v5767 = vpop.f32.mrf.mxu0
        %v5768 = vadd.f32 %v5710, %v5767
        %5769 = vmatmul.f32.gmra.mxu0 %v5676
        %v5770 = vpop.f32.mrf.mxu0
        %v5771 = vadd.f32 %v5710, %v5770
        %5772 = vmatmul.f32.gmra.mxu0 %v5677
        %v5773 = vpop.f32.mrf.mxu0
        %v5774 = vadd.f32 %v5710, %v5773
        %5775 = vmatmul.f32.gmra.mxu0 %v5678
        %v5776 = vpop.f32.mrf.mxu0
        %v5777 = vadd.f32 %v5710, %v5776
        %5778 = vmatmul.f32.gmra.mxu0 %v5679
        %v5779 = vpop.f32.mrf.mxu0
        %v5780 = vadd.f32 %v5710, %v5779
        %5781 = vmatmul.f32.gmra.mxu0 %v5680
        %v5782 = vpop.f32.mrf.mxu0
        %v5783 = vadd.f32 %v5710, %v5782
        %5784 = vmatmul.f32.gmra.mxu0 %v5681
        %v5785 = vpop.f32.mrf.mxu0
        %v5786 = vadd.f32 %v5710, %v5785
        %5787 = vmatmul.f32.gmra.mxu0 %v5682
        %v5788 = vpop.f32.mrf.mxu0
        %v5789 = vadd.f32 %v5710, %v5788
        %5790 = vmatmul.f32.gmra.mxu0 %v5683
        %v5791 = vpop.f32.mrf.mxu0
        %v5792 = vadd.f32 %v5710, %v5791
        %5793 = vmatmul.f32.gmra.mxu0 %v5684
        %v5794 = vpop.f32.mrf.mxu0
        %v5795 = vadd.f32 %v5710, %v5794
        %5796 = vmatmul.f32.gmra.mxu0 %v5685
        %v5797 = vpop.f32.mrf.mxu0
        %v5798 = vadd.f32 %v5710, %v5797
        %5799 = vmatmul.f32.gmra.mxu0 %v5686
        %v5800 = vpop.f32.mrf.mxu0
        %v5801 = vadd.f32 %v5710, %v5800
        %5802 = vmatmul.f32.gmra.mxu0 %v5687
        %v5803 = vpop.f32.mrf.mxu0
        %v5804 = vadd.f32 %v5710, %v5803
        %5805 = vmatmul.f32.gmra.mxu0 %v5688
        %v5806 = vpop.f32.mrf.mxu0
        %v5807 = vadd.f32 %v5710, %v5806
        %5808 = vmatmul.f32.gmra.mxu0 %v5689
        %v5809 = vpop.f32.mrf.mxu0
        %v5810 = vadd.f32 %v5710, %v5809
        %5811 = vmatmul.f32.gmra.mxu0 %v5690
        %v5812 = vpop.f32.mrf.mxu0
        %v5813 = vadd.f32 %v5710, %v5812
        %5814 = vmatmul.f32.gmra.mxu0 %v5691
        %v5815 = vpop.f32.mrf.mxu0
        %v5816 = vadd.f32 %v5710, %v5815
        %5817 = vmatmul.f32.gmra.mxu0 %v5692
        %v5818 = vpop.f32.mrf.mxu0
        %v5819 = vadd.f32 %v5710, %v5818
        %5820 = vmatmul.f32.gmra.mxu0 %v5693
        %v5821 = vpop.f32.mrf.mxu0
        %v5822 = vadd.f32 %v5710, %v5821
        %5823 = vdwg.mxu0
        %v5824 = vmax.f32 %v5729, 0.0
        %v5825 = vmax.f32 %v5732, 0.0
        %v5826 = vmax.f32 %v5735, 0.0
        %v5827 = vmax.f32 %v5738, 0.0
        %v5828 = vmax.f32 %v5741, 0.0
        %v5829 = vmax.f32 %v5744, 0.0
        %v5830 = vmax.f32 %v5747, 0.0
        %v5831 = vmax.f32 %v5750, 0.0
        %v5832 = vmax.f32 %v5753, 0.0
        %v5833 = vmax.f32 %v5756, 0.0
        %v5834 = vmax.f32 %v5759, 0.0
        %v5835 = vmax.f32 %v5762, 0.0
        %v5836 = vmax.f32 %v5765, 0.0
        %v5837 = vmax.f32 %v5768, 0.0
        %v5838 = vmax.f32 %v5771, 0.0
        %v5839 = vmax.f32 %v5774, 0.0
        %v5840 = vmax.f32 %v5777, 0.0
        %v5841 = vmax.f32 %v5780, 0.0
        %v5842 = vmax.f32 %v5783, 0.0
        %v5843 = vmax.f32 %v5786, 0.0
        %v5844 = vmax.f32 %v5789, 0.0
        %v5845 = vmax.f32 %v5792, 0.0
        %v5846 = vmax.f32 %v5795, 0.0
        %v5847 = vmax.f32 %v5798, 0.0
        %v5848 = vmax.f32 %v5801, 0.0
        %v5849 = vmax.f32 %v5804, 0.0
        %v5850 = vmax.f32 %v5807, 0.0
        %v5851 = vmax.f32 %v5810, 0.0
        %v5852 = vmax.f32 %v5813, 0.0
        %v5853 = vmax.f32 %v5816, 0.0
        %v5854 = vmax.f32 %v5819, 0.0
        %v5855 = vmax.f32 %v5822, 0.0
        %5856 = vadd.xlane.f32.xlu0 %v5824
        %v5857 = vpop.xlane.xlu0 %5856
        %5858 = vadd.xlane.f32.xlu0 %v5825
        %v5859 = vpop.xlane.xlu0 %5858
        %5860 = vadd.xlane.f32.xlu0 %v5826
        %v5861 = vpop.xlane.xlu0 %5860
        %5862 = vadd.xlane.f32.xlu0 %v5827
        %v5863 = vpop.xlane.xlu0 %5862
        %5864 = vadd.xlane.f32.xlu0 %v5828
        %v5865 = vpop.xlane.xlu0 %5864
        %5866 = vadd.xlane.f32.xlu0 %v5829
        %v5867 = vpop.xlane.xlu0 %5866
        %5868 = vadd.xlane.f32.xlu0 %v5830
        %v5869 = vpop.xlane.xlu0 %5868
        %5870 = vadd.xlane.f32.xlu0 %v5831
        %v5871 = vpop.xlane.xlu0 %5870
        %5872 = vadd.xlane.f32.xlu0 %v5832
        %v5873 = vpop.xlane.xlu0 %5872
        %5874 = vadd.xlane.f32.xlu0 %v5833
        %v5875 = vpop.xlane.xlu0 %5874
        %5876 = vadd.xlane.f32.xlu0 %v5834
        %v5877 = vpop.xlane.xlu0 %5876
        %5878 = vadd.xlane.f32.xlu0 %v5835
        %v5879 = vpop.xlane.xlu0 %5878
        %5880 = vadd.xlane.f32.xlu0 %v5836
        %v5881 = vpop.xlane.xlu0 %5880
        %5882 = vadd.xlane.f32.xlu0 %v5837
        %v5883 = vpop.xlane.xlu0 %5882
        %5884 = vadd.xlane.f32.xlu0 %v5838
        %v5885 = vpop.xlane.xlu0 %5884
        %5886 = vadd.xlane.f32.xlu0 %v5839
        %v5887 = vpop.xlane.xlu0 %5886
        %5888 = vadd.xlane.f32.xlu0 %v5840
        %v5889 = vpop.xlane.xlu0 %5888
        %5890 = vadd.xlane.f32.xlu0 %v5841
        %v5891 = vpop.xlane.xlu0 %5890
        %5892 = vadd.xlane.f32.xlu0 %v5842
        %v5893 = vpop.xlane.xlu0 %5892
        %5894 = vadd.xlane.f32.xlu0 %v5843
        %v5895 = vpop.xlane.xlu0 %5894
        %5896 = vadd.xlane.f32.xlu0 %v5844
        %v5897 = vpop.xlane.xlu0 %5896
        %5898 = vadd.xlane.f32.xlu0 %v5845
        %v5899 = vpop.xlane.xlu0 %5898
        %5900 = vadd.xlane.f32.xlu0 %v5846
        %v5901 = vpop.xlane.xlu0 %5900
        %5902 = vadd.xlane.f32.xlu0 %v5847
        %v5903 = vpop.xlane.xlu0 %5902
        %5904 = vadd.xlane.f32.xlu0 %v5848
        %v5905 = vpop.xlane.xlu0 %5904
        %5906 = vadd.xlane.f32.xlu0 %v5849
        %v5907 = vpop.xlane.xlu0 %5906
        %5908 = vadd.xlane.f32.xlu0 %v5850
        %v5909 = vpop.xlane.xlu0 %5908
        %5910 = vadd.xlane.f32.xlu0 %v5851
        %v5911 = vpop.xlane.xlu0 %5910
        %5912 = vadd.xlane.f32.xlu0 %v5852
        %v5913 = vpop.xlane.xlu0 %5912
        %5914 = vadd.xlane.f32.xlu0 %v5853
        %v5915 = vpop.xlane.xlu0 %5914
        %5916 = vadd.xlane.f32.xlu0 %v5854
        %v5917 = vpop.xlane.xlu0 %5916
        %5918 = vadd.xlane.f32.xlu0 %v5855
        %v5919 = vpop.xlane.xlu0 %5918
        %v5920 = vmul.f32 %v5857, %v585
        %v5921 = vmul.f32 %v5859, %v585
        %v5922 = vmul.f32 %v5861, %v585
        %v5923 = vmul.f32 %v5863, %v585
        %v5924 = vmul.f32 %v5865, %v585
        %v5925 = vmul.f32 %v5867, %v585
        %v5926 = vmul.f32 %v5869, %v585
        %v5927 = vmul.f32 %v5871, %v585
        %v5928 = vmul.f32 %v5873, %v585
        %v5929 = vmul.f32 %v5875, %v585
        %v5930 = vmul.f32 %v5877, %v585
        %v5931 = vmul.f32 %v5879, %v585
        %v5932 = vmul.f32 %v5881, %v585
        %v5933 = vmul.f32 %v5883, %v585
        %v5934 = vmul.f32 %v5885, %v585
        %v5935 = vmul.f32 %v5887, %v585
        %v5936 = vmul.f32 %v5889, %v585
        %v5937 = vmul.f32 %v5891, %v585
        %v5938 = vmul.f32 %v5893, %v585
        %v5939 = vmul.f32 %v5895, %v585
        %v5940 = vmul.f32 %v5897, %v585
        %v5941 = vmul.f32 %v5899, %v585
        %v5942 = vmul.f32 %v5901, %v585
        %v5943 = vmul.f32 %v5903, %v585
        %v5944 = vmul.f32 %v5905, %v585
        %v5945 = vmul.f32 %v5907, %v585
        %v5946 = vmul.f32 %v5909, %v585
        %v5947 = vmul.f32 %v5911, %v585
        %v5948 = vmul.f32 %v5913, %v585
        %v5949 = vmul.f32 %v5915, %v585
        %v5950 = vmul.f32 %v5917, %v585
        %v5951 = vmul.f32 %v5919, %v585
        %v5952 = vsub.f32 %v5824, %v5920
        %v5953 = vsub.f32 %v5825, %v5921
        %v5954 = vsub.f32 %v5826, %v5922
        %v5955 = vsub.f32 %v5827, %v5923
        %v5956 = vsub.f32 %v5828, %v5924
        %v5957 = vsub.f32 %v5829, %v5925
        %v5958 = vsub.f32 %v5830, %v5926
        %v5959 = vsub.f32 %v5831, %v5927
        %v5960 = vsub.f32 %v5832, %v5928
        %v5961 = vsub.f32 %v5833, %v5929
        %v5962 = vsub.f32 %v5834, %v5930
        %v5963 = vsub.f32 %v5835, %v5931
        %v5964 = vsub.f32 %v5836, %v5932
        %v5965 = vsub.f32 %v5837, %v5933
        %v5966 = vsub.f32 %v5838, %v5934
        %v5967 = vsub.f32 %v5839, %v5935
        %v5968 = vsub.f32 %v5840, %v5936
        %v5969 = vsub.f32 %v5841, %v5937
        %v5970 = vsub.f32 %v5842, %v5938
        %v5971 = vsub.f32 %v5843, %v5939
        %v5972 = vsub.f32 %v5844, %v5940
        %v5973 = vsub.f32 %v5845, %v5941
        %v5974 = vsub.f32 %v5846, %v5942
        %v5975 = vsub.f32 %v5847, %v5943
        %v5976 = vsub.f32 %v5848, %v5944
        %v5977 = vsub.f32 %v5849, %v5945
        %v5978 = vsub.f32 %v5850, %v5946
        %v5979 = vsub.f32 %v5851, %v5947
        %v5980 = vsub.f32 %v5852, %v5948
        %v5981 = vsub.f32 %v5853, %v5949
        %v5982 = vsub.f32 %v5854, %v5950
        %v5983 = vsub.f32 %v5855, %v5951
        %v5984 = vmul.f32 %v5952, %v5952
        %v5985 = vmul.f32 %v5953, %v5953
        %v5986 = vmul.f32 %v5954, %v5954
        %v5987 = vmul.f32 %v5955, %v5955
        %v5988 = vmul.f32 %v5956, %v5956
        %v5989 = vmul.f32 %v5957, %v5957
        %v5990 = vmul.f32 %v5958, %v5958
        %v5991 = vmul.f32 %v5959, %v5959
        %v5992 = vmul.f32 %v5960, %v5960
        %v5993 = vmul.f32 %v5961, %v5961
        %v5994 = vmul.f32 %v5962, %v5962
        %v5995 = vmul.f32 %v5963, %v5963
        %v5996 = vmul.f32 %v5964, %v5964
        %v5997 = vmul.f32 %v5965, %v5965
        %v5998 = vmul.f32 %v5966, %v5966
        %v5999 = vmul.f32 %v5967, %v5967
        %v6000 = vmul.f32 %v5968, %v5968
        %v6001 = vmul.f32 %v5969, %v5969
        %v6002 = vmul.f32 %v5970, %v5970
        %v6003 = vmul.f32 %v5971, %v5971
        %v6004 = vmul.f32 %v5972, %v5972
        %v6005 = vmul.f32 %v5973, %v5973
        %v6006 = vmul.f32 %v5974, %v5974
        %v6007 = vmul.f32 %v5975, %v5975
        %v6008 = vmul.f32 %v5976, %v5976
        %v6009 = vmul.f32 %v5977, %v5977
        %v6010 = vmul.f32 %v5978, %v5978
        %v6011 = vmul.f32 %v5979, %v5979
        %v6012 = vmul.f32 %v5980, %v5980
        %v6013 = vmul.f32 %v5981, %v5981
        %v6014 = vmul.f32 %v5982, %v5982
        %v6015 = vmul.f32 %v5983, %v5983
        %6016 = vadd.xlane.f32.xlu0 %v5984
        %v6017 = vpop.xlane.xlu0 %6016
        %6018 = vadd.xlane.f32.xlu0 %v5985
        %v6019 = vpop.xlane.xlu0 %6018
        %6020 = vadd.xlane.f32.xlu0 %v5986
        %v6021 = vpop.xlane.xlu0 %6020
        %6022 = vadd.xlane.f32.xlu0 %v5987
        %v6023 = vpop.xlane.xlu0 %6022
        %6024 = vadd.xlane.f32.xlu0 %v5988
        %v6025 = vpop.xlane.xlu0 %6024
        %6026 = vadd.xlane.f32.xlu0 %v5989
        %v6027 = vpop.xlane.xlu0 %6026
        %6028 = vadd.xlane.f32.xlu0 %v5990
        %v6029 = vpop.xlane.xlu0 %6028
        %6030 = vadd.xlane.f32.xlu0 %v5991
        %v6031 = vpop.xlane.xlu0 %6030
        %6032 = vadd.xlane.f32.xlu0 %v5992
        %v6033 = vpop.xlane.xlu0 %6032
        %6034 = vadd.xlane.f32.xlu0 %v5993
        %v6035 = vpop.xlane.xlu0 %6034
        %6036 = vadd.xlane.f32.xlu0 %v5994
        %v6037 = vpop.xlane.xlu0 %6036
        %6038 = vadd.xlane.f32.xlu0 %v5995
        %v6039 = vpop.xlane.xlu0 %6038
        %6040 = vadd.xlane.f32.xlu0 %v5996
        %v6041 = vpop.xlane.xlu0 %6040
        %6042 = vadd.xlane.f32.xlu0 %v5997
        %v6043 = vpop.xlane.xlu0 %6042
        %6044 = vadd.xlane.f32.xlu0 %v5998
        %v6045 = vpop.xlane.xlu0 %6044
        %6046 = vadd.xlane.f32.xlu0 %v5999
        %v6047 = vpop.xlane.xlu0 %6046
        %6048 = vadd.xlane.f32.xlu0 %v6000
        %v6049 = vpop.xlane.xlu0 %6048
        %6050 = vadd.xlane.f32.xlu0 %v6001
        %v6051 = vpop.xlane.xlu0 %6050
        %6052 = vadd.xlane.f32.xlu0 %v6002
        %v6053 = vpop.xlane.xlu0 %6052
        %6054 = vadd.xlane.f32.xlu0 %v6003
        %v6055 = vpop.xlane.xlu0 %6054
        %6056 = vadd.xlane.f32.xlu0 %v6004
        %v6057 = vpop.xlane.xlu0 %6056
        %6058 = vadd.xlane.f32.xlu0 %v6005
        %v6059 = vpop.xlane.xlu0 %6058
        %6060 = vadd.xlane.f32.xlu0 %v6006
        %v6061 = vpop.xlane.xlu0 %6060
        %6062 = vadd.xlane.f32.xlu0 %v6007
        %v6063 = vpop.xlane.xlu0 %6062
        %6064 = vadd.xlane.f32.xlu0 %v6008
        %v6065 = vpop.xlane.xlu0 %6064
        %6066 = vadd.xlane.f32.xlu0 %v6009
        %v6067 = vpop.xlane.xlu0 %6066
        %6068 = vadd.xlane.f32.xlu0 %v6010
        %v6069 = vpop.xlane.xlu0 %6068
        %6070 = vadd.xlane.f32.xlu0 %v6011
        %v6071 = vpop.xlane.xlu0 %6070
        %6072 = vadd.xlane.f32.xlu0 %v6012
        %v6073 = vpop.xlane.xlu0 %6072
        %6074 = vadd.xlane.f32.xlu0 %v6013
        %v6075 = vpop.xlane.xlu0 %6074
        %6076 = vadd.xlane.f32.xlu0 %v6014
        %v6077 = vpop.xlane.xlu0 %6076
        %6078 = vadd.xlane.f32.xlu0 %v6015
        %v6079 = vpop.xlane.xlu0 %6078
        %v6080 = vmul.f32 %v6017, %v585
        %v6081 = vmul.f32 %v6019, %v585
        %v6082 = vmul.f32 %v6021, %v585
        %v6083 = vmul.f32 %v6023, %v585
        %v6084 = vmul.f32 %v6025, %v585
        %v6085 = vmul.f32 %v6027, %v585
        %v6086 = vmul.f32 %v6029, %v585
        %v6087 = vmul.f32 %v6031, %v585
        %v6088 = vmul.f32 %v6033, %v585
        %v6089 = vmul.f32 %v6035, %v585
        %v6090 = vmul.f32 %v6037, %v585
        %v6091 = vmul.f32 %v6039, %v585
        %v6092 = vmul.f32 %v6041, %v585
        %v6093 = vmul.f32 %v6043, %v585
        %v6094 = vmul.f32 %v6045, %v585
        %v6095 = vmul.f32 %v6047, %v585
        %v6096 = vmul.f32 %v6049, %v585
        %v6097 = vmul.f32 %v6051, %v585
        %v6098 = vmul.f32 %v6053, %v585
        %v6099 = vmul.f32 %v6055, %v585
        %v6100 = vmul.f32 %v6057, %v585
        %v6101 = vmul.f32 %v6059, %v585
        %v6102 = vmul.f32 %v6061, %v585
        %v6103 = vmul.f32 %v6063, %v585
        %v6104 = vmul.f32 %v6065, %v585
        %v6105 = vmul.f32 %v6067, %v585
        %v6106 = vmul.f32 %v6069, %v585
        %v6107 = vmul.f32 %v6071, %v585
        %v6108 = vmul.f32 %v6073, %v585
        %v6109 = vmul.f32 %v6075, %v585
        %v6110 = vmul.f32 %v6077, %v585
        %v6111 = vmul.f32 %v6079, %v585
        %v6112 = vadd.f32 %v6080, 1e-05
        %v6113 = vadd.f32 %v6081, 1e-05
        %v6114 = vadd.f32 %v6082, 1e-05
        %v6115 = vadd.f32 %v6083, 1e-05
        %v6116 = vadd.f32 %v6084, 1e-05
        %v6117 = vadd.f32 %v6085, 1e-05
        %v6118 = vadd.f32 %v6086, 1e-05
        %v6119 = vadd.f32 %v6087, 1e-05
        %v6120 = vadd.f32 %v6088, 1e-05
        %v6121 = vadd.f32 %v6089, 1e-05
        %v6122 = vadd.f32 %v6090, 1e-05
        %v6123 = vadd.f32 %v6091, 1e-05
        %v6124 = vadd.f32 %v6092, 1e-05
        %v6125 = vadd.f32 %v6093, 1e-05
        %v6126 = vadd.f32 %v6094, 1e-05
        %v6127 = vadd.f32 %v6095, 1e-05
        %v6128 = vadd.f32 %v6096, 1e-05
        %v6129 = vadd.f32 %v6097, 1e-05
        %v6130 = vadd.f32 %v6098, 1e-05
        %v6131 = vadd.f32 %v6099, 1e-05
        %v6132 = vadd.f32 %v6100, 1e-05
        %v6133 = vadd.f32 %v6101, 1e-05
        %v6134 = vadd.f32 %v6102, 1e-05
        %v6135 = vadd.f32 %v6103, 1e-05
        %v6136 = vadd.f32 %v6104, 1e-05
        %v6137 = vadd.f32 %v6105, 1e-05
        %v6138 = vadd.f32 %v6106, 1e-05
        %v6139 = vadd.f32 %v6107, 1e-05
        %v6140 = vadd.f32 %v6108, 1e-05
        %v6141 = vadd.f32 %v6109, 1e-05
        %v6142 = vadd.f32 %v6110, 1e-05
        %v6143 = vadd.f32 %v6111, 1e-05
        %v6144 = vrsqrt.pop %v6112
        %v6145 = vmul.f32 %v6144, %v6112
        %v6146 = vmul.f32 %v6145, %v6144
        %v6147 = vmul.f32 0.5, %v6146
        %v6148 = vsub.f32 1.5, %v6147
        %v6149 = vmul.f32 %v6144, %v6148
        %vm6150 = vweird.f32 %v6112
        %vm6151 = vweird.f32 %v6144
        %vm6152 = vmor %vm6150, %vm6151
        %v6153 = vsel %vm6152, %v6144, %v6149
        %v6154 = vrsqrt.pop %v6113
        %v6155 = vmul.f32 %v6154, %v6113
        %v6156 = vmul.f32 %v6155, %v6154
        %v6157 = vmul.f32 0.5, %v6156
        %v6158 = vsub.f32 1.5, %v6157
        %v6159 = vmul.f32 %v6154, %v6158
        %vm6160 = vweird.f32 %v6113
        %vm6161 = vweird.f32 %v6154
        %vm6162 = vmor %vm6160, %vm6161
        %v6163 = vsel %vm6162, %v6154, %v6159
        %v6164 = vrsqrt.pop %v6114
        %v6165 = vmul.f32 %v6164, %v6114
        %v6166 = vmul.f32 %v6165, %v6164
        %v6167 = vmul.f32 0.5, %v6166
        %v6168 = vsub.f32 1.5, %v6167
        %v6169 = vmul.f32 %v6164, %v6168
        %vm6170 = vweird.f32 %v6114
        %vm6171 = vweird.f32 %v6164
        %vm6172 = vmor %vm6170, %vm6171
        %v6173 = vsel %vm6172, %v6164, %v6169
        %v6174 = vrsqrt.pop %v6115
        %v6175 = vmul.f32 %v6174, %v6115
        %v6176 = vmul.f32 %v6175, %v6174
        %v6177 = vmul.f32 0.5, %v6176
        %v6178 = vsub.f32 1.5, %v6177
        %v6179 = vmul.f32 %v6174, %v6178
        %vm6180 = vweird.f32 %v6115
        %vm6181 = vweird.f32 %v6174
        %vm6182 = vmor %vm6180, %vm6181
        %v6183 = vsel %vm6182, %v6174, %v6179
        %v6184 = vrsqrt.pop %v6116
        %v6185 = vmul.f32 %v6184, %v6116
        %v6186 = vmul.f32 %v6185, %v6184
        %v6187 = vmul.f32 0.5, %v6186
        %v6188 = vsub.f32 1.5, %v6187
        %v6189 = vmul.f32 %v6184, %v6188
        %vm6190 = vweird.f32 %v6116
        %vm6191 = vweird.f32 %v6184
        %vm6192 = vmor %vm6190, %vm6191
        %v6193 = vsel %vm6192, %v6184, %v6189
        %v6194 = vrsqrt.pop %v6117
        %v6195 = vmul.f32 %v6194, %v6117
        %v6196 = vmul.f32 %v6195, %v6194
        %v6197 = vmul.f32 0.5, %v6196
        %v6198 = vsub.f32 1.5, %v6197
        %v6199 = vmul.f32 %v6194, %v6198
        %vm6200 = vweird.f32 %v6117
        %vm6201 = vweird.f32 %v6194
        %vm6202 = vmor %vm6200, %vm6201
        %v6203 = vsel %vm6202, %v6194, %v6199
        %v6204 = vrsqrt.pop %v6118
        %v6205 = vmul.f32 %v6204, %v6118
        %v6206 = vmul.f32 %v6205, %v6204
        %v6207 = vmul.f32 0.5, %v6206
        %v6208 = vsub.f32 1.5, %v6207
        %v6209 = vmul.f32 %v6204, %v6208
        %vm6210 = vweird.f32 %v6118
        %vm6211 = vweird.f32 %v6204
        %vm6212 = vmor %vm6210, %vm6211
        %v6213 = vsel %vm6212, %v6204, %v6209
        %v6214 = vrsqrt.pop %v6119
        %v6215 = vmul.f32 %v6214, %v6119
        %v6216 = vmul.f32 %v6215, %v6214
        %v6217 = vmul.f32 0.5, %v6216
        %v6218 = vsub.f32 1.5, %v6217
        %v6219 = vmul.f32 %v6214, %v6218
        %vm6220 = vweird.f32 %v6119
        %vm6221 = vweird.f32 %v6214
        %vm6222 = vmor %vm6220, %vm6221
        %v6223 = vsel %vm6222, %v6214, %v6219
        %v6224 = vrsqrt.pop %v6120
        %v6225 = vmul.f32 %v6224, %v6120
        %v6226 = vmul.f32 %v6225, %v6224
        %v6227 = vmul.f32 0.5, %v6226
        %v6228 = vsub.f32 1.5, %v6227
        %v6229 = vmul.f32 %v6224, %v6228
        %vm6230 = vweird.f32 %v6120
        %vm6231 = vweird.f32 %v6224
        %vm6232 = vmor %vm6230, %vm6231
        %v6233 = vsel %vm6232, %v6224, %v6229
        %v6234 = vrsqrt.pop %v6121
        %v6235 = vmul.f32 %v6234, %v6121
        %v6236 = vmul.f32 %v6235, %v6234
        %v6237 = vmul.f32 0.5, %v6236
        %v6238 = vsub.f32 1.5, %v6237
        %v6239 = vmul.f32 %v6234, %v6238
        %vm6240 = vweird.f32 %v6121
        %vm6241 = vweird.f32 %v6234
        %vm6242 = vmor %vm6240, %vm6241
        %v6243 = vsel %vm6242, %v6234, %v6239
        %v6244 = vrsqrt.pop %v6122
        %v6245 = vmul.f32 %v6244, %v6122
        %v6246 = vmul.f32 %v6245, %v6244
        %v6247 = vmul.f32 0.5, %v6246
        %v6248 = vsub.f32 1.5, %v6247
        %v6249 = vmul.f32 %v6244, %v6248
        %vm6250 = vweird.f32 %v6122
        %vm6251 = vweird.f32 %v6244
        %vm6252 = vmor %vm6250, %vm6251
        %v6253 = vsel %vm6252, %v6244, %v6249
        %v6254 = vrsqrt.pop %v6123
        %v6255 = vmul.f32 %v6254, %v6123
        %v6256 = vmul.f32 %v6255, %v6254
        %v6257 = vmul.f32 0.5, %v6256
        %v6258 = vsub.f32 1.5, %v6257
        %v6259 = vmul.f32 %v6254, %v6258
        %vm6260 = vweird.f32 %v6123
        %vm6261 = vweird.f32 %v6254
        %vm6262 = vmor %vm6260, %vm6261
        %v6263 = vsel %vm6262, %v6254, %v6259
        %v6264 = vrsqrt.pop %v6124
        %v6265 = vmul.f32 %v6264, %v6124
        %v6266 = vmul.f32 %v6265, %v6264
        %v6267 = vmul.f32 0.5, %v6266
        %v6268 = vsub.f32 1.5, %v6267
        %v6269 = vmul.f32 %v6264, %v6268
        %vm6270 = vweird.f32 %v6124
        %vm6271 = vweird.f32 %v6264
        %vm6272 = vmor %vm6270, %vm6271
        %v6273 = vsel %vm6272, %v6264, %v6269
        %v6274 = vrsqrt.pop %v6125
        %v6275 = vmul.f32 %v6274, %v6125
        %v6276 = vmul.f32 %v6275, %v6274
        %v6277 = vmul.f32 0.5, %v6276
        %v6278 = vsub.f32 1.5, %v6277
        %v6279 = vmul.f32 %v6274, %v6278
        %vm6280 = vweird.f32 %v6125
        %vm6281 = vweird.f32 %v6274
        %vm6282 = vmor %vm6280, %vm6281
        %v6283 = vsel %vm6282, %v6274, %v6279
        %v6284 = vrsqrt.pop %v6126
        %v6285 = vmul.f32 %v6284, %v6126
        %v6286 = vmul.f32 %v6285, %v6284
        %v6287 = vmul.f32 0.5, %v6286
        %v6288 = vsub.f32 1.5, %v6287
        %v6289 = vmul.f32 %v6284, %v6288
        %vm6290 = vweird.f32 %v6126
        %vm6291 = vweird.f32 %v6284
        %vm6292 = vmor %vm6290, %vm6291
        %v6293 = vsel %vm6292, %v6284, %v6289
        %v6294 = vrsqrt.pop %v6127
        %v6295 = vmul.f32 %v6294, %v6127
        %v6296 = vmul.f32 %v6295, %v6294
        %v6297 = vmul.f32 0.5, %v6296
        %v6298 = vsub.f32 1.5, %v6297
        %v6299 = vmul.f32 %v6294, %v6298
        %vm6300 = vweird.f32 %v6127
        %vm6301 = vweird.f32 %v6294
        %vm6302 = vmor %vm6300, %vm6301
        %v6303 = vsel %vm6302, %v6294, %v6299
        %v6304 = vrsqrt.pop %v6128
        %v6305 = vmul.f32 %v6304, %v6128
        %v6306 = vmul.f32 %v6305, %v6304
        %v6307 = vmul.f32 0.5, %v6306
        %v6308 = vsub.f32 1.5, %v6307
        %v6309 = vmul.f32 %v6304, %v6308
        %vm6310 = vweird.f32 %v6128
        %vm6311 = vweird.f32 %v6304
        %vm6312 = vmor %vm6310, %vm6311
        %v6313 = vsel %vm6312, %v6304, %v6309
        %v6314 = vrsqrt.pop %v6129
        %v6315 = vmul.f32 %v6314, %v6129
        %v6316 = vmul.f32 %v6315, %v6314
        %v6317 = vmul.f32 0.5, %v6316
        %v6318 = vsub.f32 1.5, %v6317
        %v6319 = vmul.f32 %v6314, %v6318
        %vm6320 = vweird.f32 %v6129
        %vm6321 = vweird.f32 %v6314
        %vm6322 = vmor %vm6320, %vm6321
        %v6323 = vsel %vm6322, %v6314, %v6319
        %v6324 = vrsqrt.pop %v6130
        %v6325 = vmul.f32 %v6324, %v6130
        %v6326 = vmul.f32 %v6325, %v6324
        %v6327 = vmul.f32 0.5, %v6326
        %v6328 = vsub.f32 1.5, %v6327
        %v6329 = vmul.f32 %v6324, %v6328
        %vm6330 = vweird.f32 %v6130
        %vm6331 = vweird.f32 %v6324
        %vm6332 = vmor %vm6330, %vm6331
        %v6333 = vsel %vm6332, %v6324, %v6329
        %v6334 = vrsqrt.pop %v6131
        %v6335 = vmul.f32 %v6334, %v6131
        %v6336 = vmul.f32 %v6335, %v6334
        %v6337 = vmul.f32 0.5, %v6336
        %v6338 = vsub.f32 1.5, %v6337
        %v6339 = vmul.f32 %v6334, %v6338
        %vm6340 = vweird.f32 %v6131
        %vm6341 = vweird.f32 %v6334
        %vm6342 = vmor %vm6340, %vm6341
        %v6343 = vsel %vm6342, %v6334, %v6339
        %v6344 = vrsqrt.pop %v6132
        %v6345 = vmul.f32 %v6344, %v6132
        %v6346 = vmul.f32 %v6345, %v6344
        %v6347 = vmul.f32 0.5, %v6346
        %v6348 = vsub.f32 1.5, %v6347
        %v6349 = vmul.f32 %v6344, %v6348
        %vm6350 = vweird.f32 %v6132
        %vm6351 = vweird.f32 %v6344
        %vm6352 = vmor %vm6350, %vm6351
        %v6353 = vsel %vm6352, %v6344, %v6349
        %v6354 = vrsqrt.pop %v6133
        %v6355 = vmul.f32 %v6354, %v6133
        %v6356 = vmul.f32 %v6355, %v6354
        %v6357 = vmul.f32 0.5, %v6356
        %v6358 = vsub.f32 1.5, %v6357
        %v6359 = vmul.f32 %v6354, %v6358
        %vm6360 = vweird.f32 %v6133
        %vm6361 = vweird.f32 %v6354
        %vm6362 = vmor %vm6360, %vm6361
        %v6363 = vsel %vm6362, %v6354, %v6359
        %v6364 = vrsqrt.pop %v6134
        %v6365 = vmul.f32 %v6364, %v6134
        %v6366 = vmul.f32 %v6365, %v6364
        %v6367 = vmul.f32 0.5, %v6366
        %v6368 = vsub.f32 1.5, %v6367
        %v6369 = vmul.f32 %v6364, %v6368
        %vm6370 = vweird.f32 %v6134
        %vm6371 = vweird.f32 %v6364
        %vm6372 = vmor %vm6370, %vm6371
        %v6373 = vsel %vm6372, %v6364, %v6369
        %v6374 = vrsqrt.pop %v6135
        %v6375 = vmul.f32 %v6374, %v6135
        %v6376 = vmul.f32 %v6375, %v6374
        %v6377 = vmul.f32 0.5, %v6376
        %v6378 = vsub.f32 1.5, %v6377
        %v6379 = vmul.f32 %v6374, %v6378
        %vm6380 = vweird.f32 %v6135
        %vm6381 = vweird.f32 %v6374
        %vm6382 = vmor %vm6380, %vm6381
        %v6383 = vsel %vm6382, %v6374, %v6379
        %v6384 = vrsqrt.pop %v6136
        %v6385 = vmul.f32 %v6384, %v6136
        %v6386 = vmul.f32 %v6385, %v6384
        %v6387 = vmul.f32 0.5, %v6386
        %v6388 = vsub.f32 1.5, %v6387
        %v6389 = vmul.f32 %v6384, %v6388
        %vm6390 = vweird.f32 %v6136
        %vm6391 = vweird.f32 %v6384
        %vm6392 = vmor %vm6390, %vm6391
        %v6393 = vsel %vm6392, %v6384, %v6389
        %v6394 = vrsqrt.pop %v6137
        %v6395 = vmul.f32 %v6394, %v6137
        %v6396 = vmul.f32 %v6395, %v6394
        %v6397 = vmul.f32 0.5, %v6396
        %v6398 = vsub.f32 1.5, %v6397
        %v6399 = vmul.f32 %v6394, %v6398
        %vm6400 = vweird.f32 %v6137
        %vm6401 = vweird.f32 %v6394
        %vm6402 = vmor %vm6400, %vm6401
        %v6403 = vsel %vm6402, %v6394, %v6399
        %v6404 = vrsqrt.pop %v6138
        %v6405 = vmul.f32 %v6404, %v6138
        %v6406 = vmul.f32 %v6405, %v6404
        %v6407 = vmul.f32 0.5, %v6406
        %v6408 = vsub.f32 1.5, %v6407
        %v6409 = vmul.f32 %v6404, %v6408
        %vm6410 = vweird.f32 %v6138
        %vm6411 = vweird.f32 %v6404
        %vm6412 = vmor %vm6410, %vm6411
        %v6413 = vsel %vm6412, %v6404, %v6409
        %v6414 = vrsqrt.pop %v6139
        %v6415 = vmul.f32 %v6414, %v6139
        %v6416 = vmul.f32 %v6415, %v6414
        %v6417 = vmul.f32 0.5, %v6416
        %v6418 = vsub.f32 1.5, %v6417
        %v6419 = vmul.f32 %v6414, %v6418
        %vm6420 = vweird.f32 %v6139
        %vm6421 = vweird.f32 %v6414
        %vm6422 = vmor %vm6420, %vm6421
        %v6423 = vsel %vm6422, %v6414, %v6419
        %v6424 = vrsqrt.pop %v6140
        %v6425 = vmul.f32 %v6424, %v6140
        %v6426 = vmul.f32 %v6425, %v6424
        %v6427 = vmul.f32 0.5, %v6426
        %v6428 = vsub.f32 1.5, %v6427
        %v6429 = vmul.f32 %v6424, %v6428
        %vm6430 = vweird.f32 %v6140
        %vm6431 = vweird.f32 %v6424
        %vm6432 = vmor %vm6430, %vm6431
        %v6433 = vsel %vm6432, %v6424, %v6429
        %v6434 = vrsqrt.pop %v6141
        %v6435 = vmul.f32 %v6434, %v6141
        %v6436 = vmul.f32 %v6435, %v6434
        %v6437 = vmul.f32 0.5, %v6436
        %v6438 = vsub.f32 1.5, %v6437
        %v6439 = vmul.f32 %v6434, %v6438
        %vm6440 = vweird.f32 %v6141
        %vm6441 = vweird.f32 %v6434
        %vm6442 = vmor %vm6440, %vm6441
        %v6443 = vsel %vm6442, %v6434, %v6439
        %v6444 = vrsqrt.pop %v6142
        %v6445 = vmul.f32 %v6444, %v6142
        %v6446 = vmul.f32 %v6445, %v6444
        %v6447 = vmul.f32 0.5, %v6446
        %v6448 = vsub.f32 1.5, %v6447
        %v6449 = vmul.f32 %v6444, %v6448
        %vm6450 = vweird.f32 %v6142
        %vm6451 = vweird.f32 %v6444
        %vm6452 = vmor %vm6450, %vm6451
        %v6453 = vsel %vm6452, %v6444, %v6449
        %v6454 = vrsqrt.pop %v6143
        %v6455 = vmul.f32 %v6454, %v6143
        %v6456 = vmul.f32 %v6455, %v6454
        %v6457 = vmul.f32 0.5, %v6456
        %v6458 = vsub.f32 1.5, %v6457
        %v6459 = vmul.f32 %v6454, %v6458
        %vm6460 = vweird.f32 %v6143
        %vm6461 = vweird.f32 %v6454
        %vm6462 = vmor %vm6460, %vm6461
        %v6463 = vsel %vm6462, %v6454, %v6459
        %v6464 = vmul.f32 %v5952, %v6153
        %v6465 = vmul.f32 %v5953, %v6163
        %v6466 = vmul.f32 %v5954, %v6173
        %v6467 = vmul.f32 %v5955, %v6183
        %v6468 = vmul.f32 %v5956, %v6193
        %v6469 = vmul.f32 %v5957, %v6203
        %v6470 = vmul.f32 %v5958, %v6213
        %v6471 = vmul.f32 %v5959, %v6223
        %v6472 = vmul.f32 %v5960, %v6233
        %v6473 = vmul.f32 %v5961, %v6243
        %v6474 = vmul.f32 %v5962, %v6253
        %v6475 = vmul.f32 %v5963, %v6263
        %v6476 = vmul.f32 %v5964, %v6273
        %v6477 = vmul.f32 %v5965, %v6283
        %v6478 = vmul.f32 %v5966, %v6293
        %v6479 = vmul.f32 %v5967, %v6303
        %v6480 = vmul.f32 %v5968, %v6313
        %v6481 = vmul.f32 %v5969, %v6323
        %v6482 = vmul.f32 %v5970, %v6333
        %v6483 = vmul.f32 %v5971, %v6343
        %v6484 = vmul.f32 %v5972, %v6353
        %v6485 = vmul.f32 %v5973, %v6363
        %v6486 = vmul.f32 %v5974, %v6373
        %v6487 = vmul.f32 %v5975, %v6383
        %v6488 = vmul.f32 %v5976, %v6393
        %v6489 = vmul.f32 %v5977, %v6403
        %v6490 = vmul.f32 %v5978, %v6413
        %v6491 = vmul.f32 %v5979, %v6423
        %v6492 = vmul.f32 %v5980, %v6433
        %v6493 = vmul.f32 %v5981, %v6443
        %v6494 = vmul.f32 %v5982, %v6453
        %v6495 = vmul.f32 %v5983, %v6463
        %v6496 = vperm.slane %v482, 0
        %v6497 = vmul.f32 %v6464, %v6496
        %v6498 = vmul.f32 %v6465, %v6496
        %v6499 = vmul.f32 %v6466, %v6496
        %v6500 = vmul.f32 %v6467, %v6496
        %v6501 = vmul.f32 %v6468, %v6496
        %v6502 = vmul.f32 %v6469, %v6496
        %v6503 = vmul.f32 %v6470, %v6496
        %v6504 = vmul.f32 %v6471, %v6496
        %v6505 = vmul.f32 %v6472, %v6496
        %v6506 = vmul.f32 %v6473, %v6496
        %v6507 = vmul.f32 %v6474, %v6496
        %v6508 = vmul.f32 %v6475, %v6496
        %v6509 = vmul.f32 %v6476, %v6496
        %v6510 = vmul.f32 %v6477, %v6496
        %v6511 = vmul.f32 %v6478, %v6496
        %v6512 = vmul.f32 %v6479, %v6496
        %v6513 = vmul.f32 %v6480, %v6496
        %v6514 = vmul.f32 %v6481, %v6496
        %v6515 = vmul.f32 %v6482, %v6496
        %v6516 = vmul.f32 %v6483, %v6496
        %v6517 = vmul.f32 %v6484, %v6496
        %v6518 = vmul.f32 %v6485, %v6496
        %v6519 = vmul.f32 %v6486, %v6496
        %v6520 = vmul.f32 %v6487, %v6496
        %v6521 = vmul.f32 %v6488, %v6496
        %v6522 = vmul.f32 %v6489, %v6496
        %v6523 = vmul.f32 %v6490, %v6496
        %v6524 = vmul.f32 %v6491, %v6496
        %v6525 = vmul.f32 %v6492, %v6496
        %v6526 = vmul.f32 %v6493, %v6496
        %v6527 = vmul.f32 %v6494, %v6496
        %v6528 = vmul.f32 %v6495, %v6496
        %v6529 = vperm.slane %v482, 1
        %v6530 = vadd.f32 %v6497, %v6529
        %v6531 = vadd.f32 %v6498, %v6529
        %v6532 = vadd.f32 %v6499, %v6529
        %v6533 = vadd.f32 %v6500, %v6529
        %v6534 = vadd.f32 %v6501, %v6529
        %v6535 = vadd.f32 %v6502, %v6529
        %v6536 = vadd.f32 %v6503, %v6529
        %v6537 = vadd.f32 %v6504, %v6529
        %v6538 = vadd.f32 %v6505, %v6529
        %v6539 = vadd.f32 %v6506, %v6529
        %v6540 = vadd.f32 %v6507, %v6529
        %v6541 = vadd.f32 %v6508, %v6529
        %v6542 = vadd.f32 %v6509, %v6529
        %v6543 = vadd.f32 %v6510, %v6529
        %v6544 = vadd.f32 %v6511, %v6529
        %v6545 = vadd.f32 %v6512, %v6529
        %v6546 = vadd.f32 %v6513, %v6529
        %v6547 = vadd.f32 %v6514, %v6529
        %v6548 = vadd.f32 %v6515, %v6529
        %v6549 = vadd.f32 %v6516, %v6529
        %v6550 = vadd.f32 %v6517, %v6529
        %v6551 = vadd.f32 %v6518, %v6529
        %v6552 = vadd.f32 %v6519, %v6529
        %v6553 = vadd.f32 %v6520, %v6529
        %v6554 = vadd.f32 %v6521, %v6529
        %v6555 = vadd.f32 %v6522, %v6529
        %v6556 = vadd.f32 %v6523, %v6529
        %v6557 = vadd.f32 %v6524, %v6529
        %v6558 = vadd.f32 %v6525, %v6529
        %v6559 = vadd.f32 %v6526, %v6529
        %v6560 = vadd.f32 %v6527, %v6529
        %v6561 = vadd.f32 %v6528, %v6529
        %v6562 = vld [vmem:[#allocation7] sm:$0xff]
        %v6563 = vld [vmem:[#allocation7 + $0x8] sm:$0xff]
        %v6564 = vld [vmem:[#allocation7 + $0x10] sm:$0xff]
        %v6565 = vld [vmem:[#allocation7 + $0x18] sm:$0xff]
        %v6566 = vld [vmem:[#allocation7 + $0x20] sm:$0xff]
        %v6567 = vld [vmem:[#allocation7 + $0x28] sm:$0xff]
        %v6568 = vld [vmem:[#allocation7 + $0x30] sm:$0xff]
        %v6569 = vld [vmem:[#allocation7 + $0x38] sm:$0xff]
        %v6570 = vld [vmem:[#allocation7 + $0x40] sm:$0xff]
        %v6571 = vld [vmem:[#allocation7 + $0x48] sm:$0xff]
        %v6572 = vld [vmem:[#allocation7 + $0x50] sm:$0xff]
        %v6573 = vld [vmem:[#allocation7 + $0x58] sm:$0xff]
        %v6574 = vld [vmem:[#allocation7 + $0x60] sm:$0xff]
        %v6575 = vld [vmem:[#allocation7 + $0x68] sm:$0xff]
        %v6576 = vld [vmem:[#allocation7 + $0x70] sm:$0xff]
        %v6577 = vld [vmem:[#allocation7 + $0x78] sm:$0xff]
        %v6578 = vperm.slane %v482, 2
        %6579 = vmatpush.msra.mxu0 %v6577
        %6580 = vmatpush.msra.mxu0 %v6576
        %6581 = vmatpush.msra.mxu0 %v6575
        %6582 = vmatpush.msra.mxu0 %v6574
        %6583 = vmatpush.msra.mxu0 %v6573
        %6584 = vmatpush.msra.mxu0 %v6572
        %6585 = vmatpush.msra.mxu0 %v6571
        %6586 = vmatpush.msra.mxu0 %v6570
        %6587 = vmatpush.msra.mxu0 %v6569
        %6588 = vmatpush.msra.mxu0 %v6568
        %6589 = vmatpush.msra.mxu0 %v6567
        %6590 = vmatpush.msra.mxu0 %v6566
        %6591 = vmatpush.msra.mxu0 %v6565
        %6592 = vmatpush.msra.mxu0 %v6564
        %6593 = vmatpush.msra.mxu0 %v6563
        %6594 = vmatpush.msra.mxu0 %v6562
        %6595 = vmatmul.f32.gmra.mxu0 %v6530
        %v6596 = vpop.f32.mrf.mxu0
        %v6597 = vadd.f32 %v6578, %v6596
        %6598 = vmatmul.f32.gmra.mxu0 %v6531
        %v6599 = vpop.f32.mrf.mxu0
        %v6600 = vadd.f32 %v6578, %v6599
        %6601 = vmatmul.f32.gmra.mxu0 %v6532
        %v6602 = vpop.f32.mrf.mxu0
        %v6603 = vadd.f32 %v6578, %v6602
        %6604 = vmatmul.f32.gmra.mxu0 %v6533
        %v6605 = vpop.f32.mrf.mxu0
        %v6606 = vadd.f32 %v6578, %v6605
        %6607 = vmatmul.f32.gmra.mxu0 %v6534
        %v6608 = vpop.f32.mrf.mxu0
        %v6609 = vadd.f32 %v6578, %v6608
        %6610 = vmatmul.f32.gmra.mxu0 %v6535
        %v6611 = vpop.f32.mrf.mxu0
        %v6612 = vadd.f32 %v6578, %v6611
        %6613 = vmatmul.f32.gmra.mxu0 %v6536
        %v6614 = vpop.f32.mrf.mxu0
        %v6615 = vadd.f32 %v6578, %v6614
        %6616 = vmatmul.f32.gmra.mxu0 %v6537
        %v6617 = vpop.f32.mrf.mxu0
        %v6618 = vadd.f32 %v6578, %v6617
        %6619 = vmatmul.f32.gmra.mxu0 %v6538
        %v6620 = vpop.f32.mrf.mxu0
        %v6621 = vadd.f32 %v6578, %v6620
        %6622 = vmatmul.f32.gmra.mxu0 %v6539
        %v6623 = vpop.f32.mrf.mxu0
        %v6624 = vadd.f32 %v6578, %v6623
        %6625 = vmatmul.f32.gmra.mxu0 %v6540
        %v6626 = vpop.f32.mrf.mxu0
        %v6627 = vadd.f32 %v6578, %v6626
        %6628 = vmatmul.f32.gmra.mxu0 %v6541
        %v6629 = vpop.f32.mrf.mxu0
        %v6630 = vadd.f32 %v6578, %v6629
        %6631 = vmatmul.f32.gmra.mxu0 %v6542
        %v6632 = vpop.f32.mrf.mxu0
        %v6633 = vadd.f32 %v6578, %v6632
        %6634 = vmatmul.f32.gmra.mxu0 %v6543
        %v6635 = vpop.f32.mrf.mxu0
        %v6636 = vadd.f32 %v6578, %v6635
        %6637 = vmatmul.f32.gmra.mxu0 %v6544
        %v6638 = vpop.f32.mrf.mxu0
        %v6639 = vadd.f32 %v6578, %v6638
        %6640 = vmatmul.f32.gmra.mxu0 %v6545
        %v6641 = vpop.f32.mrf.mxu0
        %v6642 = vadd.f32 %v6578, %v6641
        %6643 = vmatmul.f32.gmra.mxu0 %v6546
        %v6644 = vpop.f32.mrf.mxu0
        %v6645 = vadd.f32 %v6578, %v6644
        %6646 = vmatmul.f32.gmra.mxu0 %v6547
        %v6647 = vpop.f32.mrf.mxu0
        %v6648 = vadd.f32 %v6578, %v6647
        %6649 = vmatmul.f32.gmra.mxu0 %v6548
        %v6650 = vpop.f32.mrf.mxu0
        %v6651 = vadd.f32 %v6578, %v6650
        %6652 = vmatmul.f32.gmra.mxu0 %v6549
        %v6653 = vpop.f32.mrf.mxu0
        %v6654 = vadd.f32 %v6578, %v6653
        %6655 = vmatmul.f32.gmra.mxu0 %v6550
        %v6656 = vpop.f32.mrf.mxu0
        %v6657 = vadd.f32 %v6578, %v6656
        %6658 = vmatmul.f32.gmra.mxu0 %v6551
        %v6659 = vpop.f32.mrf.mxu0
        %v6660 = vadd.f32 %v6578, %v6659
        %6661 = vmatmul.f32.gmra.mxu0 %v6552
        %v6662 = vpop.f32.mrf.mxu0
        %v6663 = vadd.f32 %v6578, %v6662
        %6664 = vmatmul.f32.gmra.mxu0 %v6553
        %v6665 = vpop.f32.mrf.mxu0
        %v6666 = vadd.f32 %v6578, %v6665
        %6667 = vmatmul.f32.gmra.mxu0 %v6554
        %v6668 = vpop.f32.mrf.mxu0
        %v6669 = vadd.f32 %v6578, %v6668
        %6670 = vmatmul.f32.gmra.mxu0 %v6555
        %v6671 = vpop.f32.mrf.mxu0
        %v6672 = vadd.f32 %v6578, %v6671
        %6673 = vmatmul.f32.gmra.mxu0 %v6556
        %v6674 = vpop.f32.mrf.mxu0
        %v6675 = vadd.f32 %v6578, %v6674
        %6676 = vmatmul.f32.gmra.mxu0 %v6557
        %v6677 = vpop.f32.mrf.mxu0
        %v6678 = vadd.f32 %v6578, %v6677
        %6679 = vmatmul.f32.gmra.mxu0 %v6558
        %v6680 = vpop.f32.mrf.mxu0
        %v6681 = vadd.f32 %v6578, %v6680
        %6682 = vmatmul.f32.gmra.mxu0 %v6559
        %v6683 = vpop.f32.mrf.mxu0
        %v6684 = vadd.f32 %v6578, %v6683
        %6685 = vmatmul.f32.gmra.mxu0 %v6560
        %v6686 = vpop.f32.mrf.mxu0
        %v6687 = vadd.f32 %v6578, %v6686
        %6688 = vmatmul.f32.gmra.mxu0 %v6561
        %v6689 = vpop.f32.mrf.mxu0
        %v6690 = vadd.f32 %v6578, %v6689
        %6691 = vdwg.mxu0
        %6692 = vst [vmem:[%s473] sm:$0xff] %v6597
        %6693 = vst [vmem:[%s473 + $0x8] sm:$0xff] %v6600
        %6694 = vst [vmem:[%s473 + $0x10] sm:$0xff] %v6603
        %6695 = vst [vmem:[%s473 + $0x18] sm:$0xff] %v6606
        %6696 = vst [vmem:[%s473 + $0x20] sm:$0xff] %v6609
        %6697 = vst [vmem:[%s473 + $0x28] sm:$0xff] %v6612
        %6698 = vst [vmem:[%s473 + $0x30] sm:$0xff] %v6615
        %6699 = vst [vmem:[%s473 + $0x38] sm:$0xff] %v6618
        %6700 = vst [vmem:[%s473 + $0x40] sm:$0xff] %v6621
        %6701 = vst [vmem:[%s473 + $0x48] sm:$0xff] %v6624
        %6702 = vst [vmem:[%s473 + $0x50] sm:$0xff] %v6627
        %6703 = vst [vmem:[%s473 + $0x58] sm:$0xff] %v6630
        %6704 = vst [vmem:[%s473 + $0x60] sm:$0xff] %v6633
        %6705 = vst [vmem:[%s473 + $0x68] sm:$0xff] %v6636
        %6706 = vst [vmem:[%s473 + $0x70] sm:$0xff] %v6639
        %6707 = vst [vmem:[%s473 + $0x78] sm:$0xff] %v6642
        %6708 = vst [vmem:[%s473 + $0x80] sm:$0xff] %v6645
        %6709 = vst [vmem:[%s473 + $0x88] sm:$0xff] %v6648
        %6710 = vst [vmem:[%s473 + $0x90] sm:$0xff] %v6651
        %6711 = vst [vmem:[%s473 + $0x98] sm:$0xff] %v6654
        %6712 = vst [vmem:[%s473 + $0xa0] sm:$0xff] %v6657
        %6713 = vst [vmem:[%s473 + $0xa8] sm:$0xff] %v6660
        %6714 = vst [vmem:[%s473 + $0xb0] sm:$0xff] %v6663
        %6715 = vst [vmem:[%s473 + $0xb8] sm:$0xff] %v6666
        %6716 = vst [vmem:[%s473 + $0xc0] sm:$0xff] %v6669
        %6717 = vst [vmem:[%s473 + $0xc8] sm:$0xff] %v6672
        %6718 = vst [vmem:[%s473 + $0xd0] sm:$0xff] %v6675
        %6719 = vst [vmem:[%s473 + $0xd8] sm:$0xff] %v6678
        %6720 = vst [vmem:[%s473 + $0xe0] sm:$0xff] %v6681
        %6721 = vst [vmem:[%s473 + $0xe8] sm:$0xff] %v6684
        %6722 = vst [vmem:[%s473 + $0xf0] sm:$0xff] %v6687
        %6723 = vst [vmem:[%s473 + $0xf8] sm:$0xff] %v6690
        %s6724 = smul.u32 32, %s26
        %p6725 = scmp.lt.s32.totalorder %s6724, 63
        %s6726 = scalar_select %p6725, %s6724, 63
        %s6727 = smul.addr %s6726, 8
        %s6728 = scalar_lea.vmem %s8, %s6727
        %s6729 = smul.u32 32, %s26
        %p6730 = scmp.lt.s32.totalorder %s6729, 63
        %s6731 = scalar_select %p6730, %s6729, 63
        %s6732 = smul.addr %s6731, 8
        %s6733 = scalar_lea.vmem %s9, %s6732
        // Predicated region
        $region73: #{_ppo_critic_forward.1} parent=51 // pred_check
          %p6734 = pneg %p227
        $region74: #{_ppo_critic_forward.1} parent=51 // pred_check_branch
          %6736 = sbr.rel (%p6734) target = $region76
        $region75: #{_ppo_critic_forward.1} parent=51 // pred_region
          %s6737 = smul.u32 32, %s26
        $region76: #{_ppo_critic_forward.1} parent=51 // pred_fallthru
          _
        // Predicated region
        $region77: #{_ppo_critic_forward.1} parent=51 // pred_check
          %p6738 = pneg %p253
        $region78: #{_ppo_critic_forward.1} parent=51 // pred_check_branch
          %6740 = sbr.rel (%p6738) target = $region80
        $region79: #{_ppo_critic_forward.1} parent=51 // pred_region
          %s6741 = smul.u32 32, %s26
        $region80: #{_ppo_critic_forward.1} parent=51 // pred_fallthru
          _
      $region52: #{_ppo_critic_forward.1} parent=5 // pred_fallthru
        _
      %p6742 = scmp.le.s32.totalorder 2, %s21
      // Predicated region
      $region81: #{_ppo_critic_forward.1} parent=5 // pred_check
        %p6743 = pneg %p6742
      $region82: #{_ppo_critic_forward.1} parent=5 // pred_check_branch
        %6745 = sbr.rel (%p6743) target = $region84
      $region83: #{_ppo_critic_forward.1} parent=5 // pred_region
        %s6746 = ssub.s32 %s21, 2
        // Predicated region
        $region85: #{_ppo_critic_forward.1} parent=83 // pred_check
          %p6747 = pneg %p233
        $region86: #{_ppo_critic_forward.1} parent=83 // pred_check_branch
          %6749 = sbr.rel (%p6747) target = $region88
        $region87: #{_ppo_critic_forward.1} parent=83 // pred_region
          %s6750 = smul.u32 32, %s27
          %p6751 = scmp.lt.s32.totalorder %s6750, 63
          %s6752 = scalar_select %p6751, %s6750, 63
          %s6753 = smul.addr %s6752, 8
          %s6754 = scalar_lea.vmem %s8, %s6753
        $region88: #{_ppo_critic_forward.1} parent=83 // pred_fallthru
          _
        // Predicated region
        $region89: #{_ppo_critic_forward.1} parent=83 // pred_check
          %p6755 = pneg %p259
        $region90: #{_ppo_critic_forward.1} parent=83 // pred_check_branch
          %6757 = sbr.rel (%p6755) target = $region92
        $region91: #{_ppo_critic_forward.1} parent=83 // pred_region
          %s6758 = smul.u32 32, %s27
          %p6759 = scmp.lt.s32.totalorder %s6758, 63
          %s6760 = scalar_select %p6759, %s6758, 63
          %s6761 = smul.addr %s6760, 8
          %s6762 = scalar_lea.vmem %s9, %s6761
        $region92: #{_ppo_critic_forward.1} parent=83 // pred_fallthru
          _
      $region84: #{_ppo_critic_forward.1} parent=5 // pred_fallthru
        _
    $region6: #{_ppo_critic_forward.1} parent=1 // loop_footer
      %s25 = sadd.s32 1, %s21
    $region7: #{_ppo_critic_forward.1} parent=1 // loop_footer_branch
      %20 = sbr.rel target = $region3
    $region8: #{_ppo_critic_forward.1} parent=1 // loop_exit
      _
    %6763 = vsyncpa [#allocation3], 1
    %s6764 = scalar_lea.sflag [#allocation3], 1
    %6765 = vsyncpa %s6764, 1
    %6766 = vsyncpa [#allocation5], 1
    %6767 = vsyncpa [#allocation8], 1

</llo_original>
